<compile_context>
chip_gen: v7x
topology: tpu7x:2x2x1
jax: 0.10.0
libtpu: 0.0.40
codegen_flags: <defaults>
</compile_context>

<pallas_src>
import jax
import jax.numpy as jnp
from jax.experimental import pallas as pl
from jax.experimental.pallas import tpu as pltpu

EPS = 1e-5
LANE = 128
# MXU-native dtype for matmul *inputs*; accumulation is f32 via
# preferred_element_type and all BN/ReLU math stays f32.
MXU_DTYPE = jnp.bfloat16


def _conv3x3_bn_relu(xpad, w2d, gamma, beta):
    """3x3 'SAME' conv (input already zero-padded by 1) + train-mode BN + ReLU.

    xpad : (N, H+2, W+2, C) f32  spatially padded NHWC input
    w2d  : (9*C, CP) bf16        HWIO weight flattened over (kh, kw, cin);
                                 CP = 128-padded Cout
    gamma, beta : (1, CP) f32    BN affine, zero-padded past the real Cout
    returns (N, H, W, CP) float32 (padded channels are exactly zero)
    """
    n, hp, wp, c = xpad.shape
    h, w = hp - 2, wp - 2
    cp = w2d.shape[-1]
    m = n * h * w

    # im2col: one lane-axis concat of the 9 shifted taps -> a single MXU matmul
    # with K = 9*C.  Inputs cast to bf16, accumulation stays f32.
    # TODO(synk): at production channel counts make Cin (hence 9*Cin) a multiple
    # of 128 so this K-concat is tile-aligned, or benchmark 3/9 accumulating
    # dots -- at tiny C the repack is XLU-bound, not MXU-bound.
    taps = [xpad[:, kh:kh + h, kw:kw + w, :] for kh in range(3) for kw in range(3)]
    cols = jnp.concatenate(taps, axis=-1).reshape(m, 9 * c).astype(MXU_DTYPE)
    acc = jnp.dot(cols, w2d, preferred_element_type=jnp.float32)   # (M, CP), f32

    # BatchNorm2d (training-mode, biased batch stats).  Conv bias is omitted (it
    # is exactly cancelled by the mean subtraction).  Centered two-pass variance
    # avoids the E[x^2]-E[x]^2 cancellation flagged in review; the affine is
    # still folded into a single scale FMA + ReLU (rsqrt -> EUP slot).
    inv_m = 1.0 / m
    mean = jnp.sum(acc, axis=0, keepdims=True) * inv_m
    centered = acc - mean
    var = jnp.sum(centered * centered, axis=0, keepdims=True) * inv_m
    scale = gamma * jax.lax.rsqrt(var + EPS)
    y = jnp.maximum(centered * scale + beta, 0.0)
    return y.reshape(n, h, w, cp)


def _zero_halo(ref):
    """Zero ONLY the 1-pixel halo strips of a padded scratch buffer.

    The interior is fully overwritten immediately afterwards, so zeroing the
    whole buffer would just burn vst slots (the scarcest VLIW slot)."""
    n, hp, wp, c = ref.shape
    z_row = jnp.zeros((n, 1, wp, c), ref.dtype)
    z_col = jnp.zeros((n, hp, 1, c), ref.dtype)
    ref[:, 0:1, :, :] = z_row
    ref[:, hp - 1:hp, :, :] = z_row
    ref[:, :, 0:1, :] = z_col
    ref[:, :, wp - 1:wp, :] = z_col


def upblock2d_kernel(xdil_ref, down_ref,
                     wt_ref, g0_ref, b0_ref,
                     w1_ref, g1_ref, b1_ref,
                     w2_ref, g2_ref, b2_ref,
                     o_ref, pad1_ref, pad2_ref):
    ho, wo, oc = down_ref.shape[1], down_ref.shape[2], down_ref.shape[3]

    # Halo-only zero init (conv 'SAME' padding); interiors are written below.
    _zero_halo(pad1_ref)
    _zero_halo(pad2_ref)

    # Stage 1: ConvTranspose2d(k=3, s=2, p=1, output_padding=1) + BN + ReLU.
    # The wrapper pre-built the zero-dilated, zero-padded input, so the
    # transposed conv is a plain 3x3 conv with the flipped/(in,out)-transposed
    # kernel.
    # TODO(synk): at production sizes build the 4-parity sub-pixel decomposition
    # in-kernel from the compact x instead: skips the ~75% zero multiplies and
    # the ~4.3x mostly-zero HBM transfer of the dilated tensor.
    up = _conv3x3_bn_relu(xdil_ref[...], wt_ref[...], g0_ref[...], b0_ref[...])

    # Stage 2: concat([up, down_features], channels) realized as two direct
    # channel-range stores into the padded VMEM scratch (no jnp.concatenate,
    # no extra activation copy), then Conv3x3 + BN + ReLU.
    pad1_ref[:, 1:ho + 1, 1:wo + 1, 0:oc] = up[..., :oc]
    pad1_ref[:, 1:ho + 1, 1:wo + 1, oc:2 * oc] = down_ref[...]
    y1 = _conv3x3_bn_relu(pad1_ref[...], w1_ref[...], g1_ref[...], b1_ref[...])

    # Stage 3: second Conv3x3 + BN + ReLU, again padded in VMEM.
    pad2_ref[:, 1:ho + 1, 1:wo + 1, :] = y1[..., :oc]
    y2 = _conv3x3_bn_relu(pad2_ref[...], w2_ref[...], g2_ref[...], b2_ref[...])

    # Only the real oc channels go back to HBM (masked store at the boundary is
    # far cheaper than a 16x-inflated lane-padded output + XLA re-slice).
    o_ref[...] = y2[..., :oc].astype(o_ref.dtype)


def _hwio_to_matmul(w_hwio, cp):
    kh, kw, ci, co = w_hwio.shape
    w2d = jnp.pad(w_hwio.reshape(kh * kw * ci, co), ((0, 0), (0, cp - co)))
    return w2d.astype(MXU_DTYPE)


def _pad_lanes(v, cp):
    v = v.reshape(1, -1).astype(jnp.float32)
    return jnp.pad(v, ((0, 0), (0, cp - v.shape[-1])))


@jax.jit
def upblock2d(x_nchw, down_nchw, params):
    """UpBlock2d forward. x / down_features / output are NCHW like PyTorch."""
    (wt_pt, _bt, g0, be0), (w1_pt, _b1, g1, be1), (w2_pt, _b2, g2, be2) = params
    n, cin, h, w = x_nchw.shape
    oc = down_nchw.shape[1]
    ho, wo = 2 * h, 2 * w
    cp = pl.cdiv(oc, LANE) * LANE   # lane-dense accumulator/BN width (VMEM only)
    # TODO(synk): on v6e/v7x with production Cout >= 128, tile/pad CP to a
    # multiple of 256 so the 2x256x256 MXU runs full-width (v5e stays at 128).

    # One-time graph-edge layout work: NCHW -> NHWC, plus the zero-dilated /
    # zero-padded pre-upsample tensor that turns ConvTranspose2d(k3,s2,p1,op1)
    # into a plain 3x3 conv.
    x = jnp.transpose(x_nchw, (0, 2, 3, 1))
    down = jnp.transpose(down_nchw, (0, 2, 3, 1))
    xdil = jnp.zeros((n, ho + 2, wo + 2, cin), x.dtype)
    xdil = xdil.at[:, 1:ho:2, 1:wo:2, :].set(x)

    # Weights -> HWIO, flattened to (9*Cin, Cout), Cout zero-padded to 128 lanes,
    # cast to bf16 for the MXU (halves weight DMA too).
    wt_hwio = jnp.flip(wt_pt, axis=(2, 3)).transpose(2, 3, 0, 1)   # ConvT -> fwd conv
    w1_hwio = jnp.transpose(w1_pt, (2, 3, 1, 0))
    w2_hwio = jnp.transpose(w2_pt, (2, 3, 1, 0))
    args = (xdil, down,
            _hwio_to_matmul(wt_hwio, cp), _pad_lanes(g0, cp), _pad_lanes(be0, cp),
            _hwio_to_matmul(w1_hwio, cp), _pad_lanes(g1, cp), _pad_lanes(be1, cp),
            _hwio_to_matmul(w2_hwio, cp), _pad_lanes(g2, cp), _pad_lanes(be2, cp))

    # Generation-aware VMEM budget: inputs + scratch + output + the transient
    # im2col/accumulator of the widest stage, 2x headroom, clamped to ~75% of
    # the physical VMEM (v7x = 64 MiB, v5e/v6e = 128 MiB).
    fp32 = 4
    m = n * ho * wo
    est = (sum(a.size * a.dtype.itemsize for a in args)
           + n * (ho + 2) * (wo + 2) * 3 * oc * fp32          # pad1 + pad2 scratch
           + n * ho * wo * oc * fp32                          # output
           + m * (9 * 2 * oc * 2 + 2 * cp * fp32))            # bf16 cols + f32 acc/up
    try:
        phys = pltpu.get_tpu_info().vmem_capacity_bytes
    except Exception:  # pragma: no cover - conservative fallback (v7x size)
        phys = 64 * 1024 * 1024
    vmem_limit = int(min(max(2 * est, 16 * 1024 * 1024), 0.75 * phys))

    # TODO(synk): production sizes / v7x need a grid over the (N*Ho) row axis
    # with dimension_semantics=("parallel", ...) (share across both v7x
    # TensorCores, bound per-step VMEM, enable double-buffered DMA) plus a
    # two-pass cross-tile BN (stats accumulate in persistent scratch over an
    # "arbitrary" pass axis, then a normalize pass).  At these toy sizes the
    # whole block fits in VMEM, so a single grid-less fused call minimizes HBM
    # traffic.
    out = pl.pallas_call(
        upblock2d_kernel,
        out_shape=jax.ShapeDtypeStruct((n, ho, wo, oc), jnp.float32),
        in_specs=[pl.BlockSpec(memory_space=pltpu.MemorySpace.VMEM)] * len(args),
        out_specs=pl.BlockSpec(memory_space=pltpu.MemorySpace.VMEM),
        scratch_shapes=[
            pltpu.VMEM((n, ho + 2, wo + 2, 2 * oc), jnp.float32),  # padded concat input
            pltpu.VMEM((n, ho + 2, wo + 2, oc), jnp.float32),      # padded conv2 input
        ],
        compiler_params=pltpu.CompilerParams(vmem_limit_bytes=vmem_limit),
    )(*args)

    # NHWC -> NCHW once, at the graph edge.
    return jnp.transpose(out, (0, 3, 1, 2))


# ----------------------------- pure-JAX reference -----------------------------
def _bn_relu_ref(y, gamma, beta):
    mean = jnp.mean(y, axis=(0, 2, 3), keepdims=True)
    var = jnp.mean((y - mean) ** 2, axis=(0, 2, 3), keepdims=True)
    y = (y - mean) / jnp.sqrt(var + EPS)
    return jnp.maximum(y * gamma.reshape(1, -1, 1, 1) + beta.reshape(1, -1, 1, 1), 0.0)


def upblock2d_ref(x, down, params):
    (wt, bt, g0, be0), (w1, b1, g1, be1), (w2, b2, g2, be2) = params
    # ConvTranspose2d(k=3, s=2, p=1, output_padding=1) == dilated conv with the
    # spatially flipped, (in,out)-transposed kernel; pad = (k-1-p, k-1-p+op).
    wt_conv = jnp.flip(wt, axis=(2, 3)).transpose(1, 0, 2, 3)      # (out, in, 3, 3)
    y = jax.lax.conv_general_dilated(
        x, wt_conv, window_strides=(1, 1), padding=((1, 2), (1, 2)),
        lhs_dilation=(2, 2), dimension_numbers=("NCHW", "OIHW", "NCHW"),
        precision=jax.lax.Precision.HIGHEST)
    y = _bn_relu_ref(y + bt.reshape(1, -1, 1, 1), g0, be0)
    y = jnp.concatenate([y, down], axis=1)
    for wgt, b, g, be in ((w1, b1, g1, be1), (w2, b2, g2, be2)):
        y = jax.lax.conv_general_dilated(
            y, wgt, window_strides=(1, 1), padding=((1, 1), (1, 1)),
            dimension_numbers=("NCHW", "OIHW", "NCHW"),
            precision=jax.lax.Precision.HIGHEST)
        y = _bn_relu_ref(y + b.reshape(1, -1, 1, 1), g, be)
    return y


# ---------------------------------- main --------------------------------------
if __name__ == "__main__":
    N, IN_CH, OUT_CH, H, W = 2, 4, 8, 8, 8          # output spatial = 2H = 16

    key = jax.random.PRNGKey(0)
    ks = jax.random.split(key, 14)

    x = jax.random.normal(ks[0], (N, IN_CH, H, W), jnp.float32)
    down = jax.random.normal(ks[1], (N, OUT_CH, 2 * H, 2 * W), jnp.float32)

    # up_conv: ConvTranspose2d(IN_CH, OUT_CH, 3, stride=2, padding=1, output_padding=1) + BN
    wt = 0.1 * jax.random.normal(ks[2], (IN_CH, OUT_CH, 3, 3), jnp.float32)
    bt = 0.1 * jax.random.normal(ks[3], (OUT_CH,), jnp.float32)
    g0 = 1.0 + 0.1 * jax.random.normal(ks[4], (OUT_CH,), jnp.float32)
    be0 = 0.1 * jax.random.normal(ks[5], (OUT_CH,), jnp.float32)

    # conv block 1: Conv2d(2*OUT_CH, OUT_CH, 3, padding=1) + BN
    w1 = 0.1 * jax.random.normal(ks[6], (OUT_CH, 2 * OUT_CH, 3, 3), jnp.float32)
    b1 = 0.1 * jax.random.normal(ks[7], (OUT_CH,), jnp.float32)
    g1 = 1.0 + 0.1 * jax.random.normal(ks[8], (OUT_CH,), jnp.float32)
    be1 = 0.1 * jax.random.normal(ks[9], (OUT_CH,), jnp.float32)

    # conv block 2: Conv2d(OUT_CH, OUT_CH, 3, padding=1) + BN
    w2 = 0.1 * jax.random.normal(ks[10], (OUT_CH, OUT_CH, 3, 3), jnp.float32)
    b2 = 0.1 * jax.random.normal(ks[11], (OUT_CH,), jnp.float32)
    g2 = 1.0 + 0.1 * jax.random.normal(ks[12], (OUT_CH,), jnp.float32)
    be2 = 0.1 * jax.random.normal(ks[13], (OUT_CH,), jnp.float32)

    params = ((wt, bt, g0, be0), (w1, b1, g1, be1), (w2, b2, g2, be2))

    out = jax.block_until_ready(upblock2d(x, down, params))
    ref = jax.block_until_ready(upblock2d_ref(x, down, params))

    assert out.shape == (N, OUT_CH, 2 * H, 2 * W), out.shape
    # Tolerance widened DELIBERATELY for bf16 MXU inputs (f32 accumulation /
    # f32 BN) vs. the f32 HIGHEST-precision reference across three conv+BN
    # stages; f32 MXU_DTYPE passes at 5e-4.
    max_err = float(jnp.max(jnp.abs(out - ref)))
    assert jnp.allclose(out, ref, rtol=5e-2, atol=5e-2), max_err

    print("KERNEL_OK")
</pallas_src>

<mosaic_0001>
module attributes {stable_mosaic.version = 11 : i64} {
  func.func @upblock2d_kernel(%arg0: memref<2x18x18x4xf32, #tpu.memory_space<vmem>>, %arg1: memref<2x16x16x8xf32, #tpu.memory_space<vmem>>, %arg2: memref<36x128xbf16, #tpu.memory_space<vmem>>, %arg3: memref<1x128xf32, #tpu.memory_space<vmem>>, %arg4: memref<1x128xf32, #tpu.memory_space<vmem>>, %arg5: memref<144x128xbf16, #tpu.memory_space<vmem>>, %arg6: memref<1x128xf32, #tpu.memory_space<vmem>>, %arg7: memref<1x128xf32, #tpu.memory_space<vmem>>, %arg8: memref<72x128xbf16, #tpu.memory_space<vmem>>, %arg9: memref<1x128xf32, #tpu.memory_space<vmem>>, %arg10: memref<1x128xf32, #tpu.memory_space<vmem>>, %arg11: memref<2x16x16x8xf32, #tpu.memory_space<vmem>>, %arg12: memref<2x18x18x16xf32, #tpu.memory_space<vmem>>, %arg13: memref<2x18x18x8xf32, #tpu.memory_space<vmem>>) attributes {dimension_semantics = [], scalar_prefetch = 0 : i64, scratch_operands = 2 : i64, tpu.core_type = #tpu.core_type<tc>} {
    %cst = arith.constant 0.000000e+00 : f32
    %0 = vector.broadcast %cst : f32 to vector<2x1x18x16xf32>
    %cst_0 = arith.constant 0.000000e+00 : f32
    %1 = vector.broadcast %cst_0 : f32 to vector<2x18x1x16xf32>
    %c0 = arith.constant 0 : index
    %c0_1 = arith.constant 0 : index
    %c0_2 = arith.constant 0 : index
    %c0_3 = arith.constant 0 : index
    %2 = vector.load %arg12[%c0, %c0_1, %c0_2, %c0_3] : memref<2x18x18x16xf32, #tpu.memory_space<vmem>>, vector<2x1x18x16xf32>
    tpu.vector_store %arg12[%c0, %c0_1, %c0_2, %c0_3], %0 {strides = array<i32>} : memref<2x18x18x16xf32, #tpu.memory_space<vmem>>, vector<2x1x18x16xf32>,
    %c0_4 = arith.constant 0 : index
    %c17 = arith.constant 17 : index
    %c0_5 = arith.constant 0 : index
    %c0_6 = arith.constant 0 : index
    %3 = vector.load %arg12[%c0_4, %c17, %c0_5, %c0_6] : memref<2x18x18x16xf32, #tpu.memory_space<vmem>>, vector<2x1x18x16xf32>
    tpu.vector_store %arg12[%c0_4, %c17, %c0_5, %c0_6], %0 {strides = array<i32>} : memref<2x18x18x16xf32, #tpu.memory_space<vmem>>, vector<2x1x18x16xf32>,
    %c0_7 = arith.constant 0 : index
    %c0_8 = arith.constant 0 : index
    %c0_9 = arith.constant 0 : index
    %c0_10 = arith.constant 0 : index
    %4 = vector.load %arg12[%c0_7, %c0_8, %c0_9, %c0_10] : memref<2x18x18x16xf32, #tpu.memory_space<vmem>>, vector<2x18x1x16xf32>
    tpu.vector_store %arg12[%c0_7, %c0_8, %c0_9, %c0_10], %1 {strides = array<i32>} : memref<2x18x18x16xf32, #tpu.memory_space<vmem>>, vector<2x18x1x16xf32>,
    %c0_11 = arith.constant 0 : index
    %c0_12 = arith.constant 0 : index
    %c17_13 = arith.constant 17 : index
    %c0_14 = arith.constant 0 : index
    %5 = vector.load %arg12[%c0_11, %c0_12, %c17_13, %c0_14] : memref<2x18x18x16xf32, #tpu.memory_space<vmem>>, vector<2x18x1x16xf32>
    tpu.vector_store %arg12[%c0_11, %c0_12, %c17_13, %c0_14], %1 {strides = array<i32>} : memref<2x18x18x16xf32, #tpu.memory_space<vmem>>, vector<2x18x1x16xf32>,
    %cst_15 = arith.constant 0.000000e+00 : f32
    %6 = vector.broadcast %cst_15 : f32 to vector<2x1x18x8xf32>
    %cst_16 = arith.constant 0.000000e+00 : f32
    %7 = vector.broadcast %cst_16 : f32 to vector<2x18x1x8xf32>
    %c0_17 = arith.constant 0 : index
    %c0_18 = arith.constant 0 : index
    %c0_19 = arith.constant 0 : index
    %c0_20 = arith.constant 0 : index
    %8 = vector.load %arg13[%c0_17, %c0_18, %c0_19, %c0_20] : memref<2x18x18x8xf32, #tpu.memory_space<vmem>>, vector<2x1x18x8xf32>
    tpu.vector_store %arg13[%c0_17, %c0_18, %c0_19, %c0_20], %6 {strides = array<i32>} : memref<2x18x18x8xf32, #tpu.memory_space<vmem>>, vector<2x1x18x8xf32>,
    %c0_21 = arith.constant 0 : index
    %c17_22 = arith.constant 17 : index
    %c0_23 = arith.constant 0 : index
    %c0_24 = arith.constant 0 : index
    %9 = vector.load %arg13[%c0_21, %c17_22, %c0_23, %c0_24] : memref<2x18x18x8xf32, #tpu.memory_space<vmem>>, vector<2x1x18x8xf32>
    tpu.vector_store %arg13[%c0_21, %c17_22, %c0_23, %c0_24], %6 {strides = array<i32>} : memref<2x18x18x8xf32, #tpu.memory_space<vmem>>, vector<2x1x18x8xf32>,
    %c0_25 = arith.constant 0 : index
    %c0_26 = arith.constant 0 : index
    %c0_27 = arith.constant 0 : index
    %c0_28 = arith.constant 0 : index
    %10 = vector.load %arg13[%c0_25, %c0_26, %c0_27, %c0_28] : memref<2x18x18x8xf32, #tpu.memory_space<vmem>>, vector<2x18x1x8xf32>
    tpu.vector_store %arg13[%c0_25, %c0_26, %c0_27, %c0_28], %7 {strides = array<i32>} : memref<2x18x18x8xf32, #tpu.memory_space<vmem>>, vector<2x18x1x8xf32>,
    %c0_29 = arith.constant 0 : index
    %c0_30 = arith.constant 0 : index
    %c17_31 = arith.constant 17 : index
    %c0_32 = arith.constant 0 : index
    %11 = vector.load %arg13[%c0_29, %c0_30, %c17_31, %c0_32] : memref<2x18x18x8xf32, #tpu.memory_space<vmem>>, vector<2x18x1x8xf32>
    tpu.vector_store %arg13[%c0_29, %c0_30, %c17_31, %c0_32], %7 {strides = array<i32>} : memref<2x18x18x8xf32, #tpu.memory_space<vmem>>, vector<2x18x1x8xf32>,
    %c0_33 = arith.constant 0 : index
    %c0_34 = arith.constant 0 : index
    %c0_35 = arith.constant 0 : index
    %c0_36 = arith.constant 0 : index
    %12 = vector.load %arg0[%c0_33, %c0_34, %c0_35, %c0_36] : memref<2x18x18x4xf32, #tpu.memory_space<vmem>>, vector<2x18x18x4xf32>
    %c0_37 = arith.constant 0 : index
    %c0_38 = arith.constant 0 : index
    %13 = vector.load %arg2[%c0_37, %c0_38] : memref<36x128xbf16, #tpu.memory_space<vmem>>, vector<36x128xbf16>
    %c0_39 = arith.constant 0 : index
    %c0_40 = arith.constant 0 : index
    %14 = vector.load %arg3[%c0_39, %c0_40] : memref<1x128xf32, #tpu.memory_space<vmem>>, vector<1x128xf32>
    %c0_41 = arith.constant 0 : index
    %c0_42 = arith.constant 0 : index
    %15 = vector.load %arg4[%c0_41, %c0_42] : memref<1x128xf32, #tpu.memory_space<vmem>>, vector<1x128xf32>
    %16 = vector.extract_strided_slice %12 {offsets = [0, 0, 0, 0], sizes = [2, 16, 16, 4], strides = [1, 1, 1, 1]} : vector<2x18x18x4xf32> to vector<2x16x16x4xf32>
    %17 = vector.extract_strided_slice %12 {offsets = [0, 0, 1, 0], sizes = [2, 16, 16, 4], strides = [1, 1, 1, 1]} : vector<2x18x18x4xf32> to vector<2x16x16x4xf32>
    %18 = vector.extract_strided_slice %12 {offsets = [0, 0, 2, 0], sizes = [2, 16, 16, 4], strides = [1, 1, 1, 1]} : vector<2x18x18x4xf32> to vector<2x16x16x4xf32>
    %19 = vector.extract_strided_slice %12 {offsets = [0, 1, 0, 0], sizes = [2, 16, 16, 4], strides = [1, 1, 1, 1]} : vector<2x18x18x4xf32> to vector<2x16x16x4xf32>
    %20 = vector.extract_strided_slice %12 {offsets = [0, 1, 1, 0], sizes = [2, 16, 16, 4], strides = [1, 1, 1, 1]} : vector<2x18x18x4xf32> to vector<2x16x16x4xf32>
    %21 = vector.extract_strided_slice %12 {offsets = [0, 1, 2, 0], sizes = [2, 16, 16, 4], strides = [1, 1, 1, 1]} : vector<2x18x18x4xf32> to vector<2x16x16x4xf32>
    %22 = vector.extract_strided_slice %12 {offsets = [0, 2, 0, 0], sizes = [2, 16, 16, 4], strides = [1, 1, 1, 1]} : vector<2x18x18x4xf32> to vector<2x16x16x4xf32>
    %23 = vector.extract_strided_slice %12 {offsets = [0, 2, 1, 0], sizes = [2, 16, 16, 4], strides = [1, 1, 1, 1]} : vector<2x18x18x4xf32> to vector<2x16x16x4xf32>
    %24 = vector.extract_strided_slice %12 {offsets = [0, 2, 2, 0], sizes = [2, 16, 16, 4], strides = [1, 1, 1, 1]} : vector<2x18x18x4xf32> to vector<2x16x16x4xf32>
    %25 = tpu.concatenate %16, %17, %18, %19, %20, %21, %22, %23, %24 in 3 : vector<2x16x16x4xf32>, vector<2x16x16x4xf32>, vector<2x16x16x4xf32>, vector<2x16x16x4xf32>, vector<2x16x16x4xf32>, vector<2x16x16x4xf32>, vector<2x16x16x4xf32>, vector<2x16x16x4xf32>, vector<2x16x16x4xf32> -> vector<2x16x16x36xf32>
    %26 = vector.shape_cast %25 : vector<2x16x16x36xf32> to vector<512x36xf32>
    %27 = arith.truncf %26 : vector<512x36xf32> to vector<512x36xbf16>
    %cst_43 = arith.constant dense<0.000000e+00> : vector<512x128xf32>
    %28 = tpu.matmul %27, %13, %cst_43 {dimension_numbers = #tpu.dot_dimension_numbers<[1], [0], [0], [1], [0, 0, 1, 1], [], []>} : vector<512x36xbf16>, vector<36x128xbf16>, vector<512x128xf32> -> vector<512x128xf32>
    %cst_44 = arith.constant dense<0.000000e+00> : vector<128xf32>
    %29 = vector.multi_reduction <add>, %28, %cst_44 [0] : vector<512x128xf32> to vector<128xf32>
    %30 = vector.shape_cast %29 : vector<128xf32> to vector<1x128xf32>
    %cst_45 = arith.constant 0.001953125 : f32
    %31 = vector.broadcast %cst_45 : f32 to vector<1x128xf32>
    %32 = arith.mulf %30, %31 : vector<1x128xf32>
    %33 = vector.broadcast %32 : vector<1x128xf32> to vector<512x128xf32>
    %34 = arith.subf %28, %33 : vector<512x128xf32>
    %35 = arith.mulf %34, %34 : vector<512x128xf32>
    %cst_46 = arith.constant dense<0.000000e+00> : vector<128xf32>
    %36 = vector.multi_reduction <add>, %35, %cst_46 [0] : vector<512x128xf32> to vector<128xf32>
    %37 = vector.shape_cast %36 : vector<128xf32> to vector<1x128xf32>
    %cst_47 = arith.constant 0.001953125 : f32
    %38 = vector.broadcast %cst_47 : f32 to vector<1x128xf32>
    %39 = arith.mulf %37, %38 : vector<1x128xf32>
    %cst_48 = arith.constant 9.99999974E-6 : f32
    %40 = vector.broadcast %cst_48 : f32 to vector<1x128xf32>
    %41 = arith.addf %39, %40 : vector<1x128xf32>
    %42 = math.rsqrt %41 : vector<1x128xf32>
    %43 = arith.mulf %14, %42 : vector<1x128xf32>
    %44 = vector.broadcast %43 : vector<1x128xf32> to vector<512x128xf32>
    %45 = arith.mulf %34, %44 : vector<512x128xf32>
    %46 = vector.broadcast %15 : vector<1x128xf32> to vector<512x128xf32>
    %47 = arith.addf %45, %46 : vector<512x128xf32>
    %cst_49 = arith.constant 0.000000e+00 : f32
    %48 = vector.broadcast %cst_49 : f32 to vector<512x128xf32>
    %49 = arith.maximumf %47, %48 : vector<512x128xf32>
    %50 = vector.shape_cast %49 : vector<512x128xf32> to vector<2x16x16x128xf32>
    %51 = vector.extract_strided_slice %50 {offsets = [0, 0, 0, 0], sizes = [2, 16, 16, 8], strides = [1, 1, 1, 1]} : vector<2x16x16x128xf32> to vector<2x16x16x8xf32>
    %c0_50 = arith.constant 0 : index
    %c1 = arith.constant 1 : index
    %c1_51 = arith.constant 1 : index
    %c0_52 = arith.constant 0 : index
    %52 = vector.load %arg12[%c0_50, %c1, %c1_51, %c0_52] : memref<2x18x18x16xf32, #tpu.memory_space<vmem>>, vector<2x16x16x8xf32>
    tpu.vector_store %arg12[%c0_50, %c1, %c1_51, %c0_52], %51 {strides = array<i32>} : memref<2x18x18x16xf32, #tpu.memory_space<vmem>>, vector<2x16x16x8xf32>,
    %c0_53 = arith.constant 0 : index
    %c0_54 = arith.constant 0 : index
    %c0_55 = arith.constant 0 : index
    %c0_56 = arith.constant 0 : index
    %53 = vector.load %arg1[%c0_53, %c0_54, %c0_55, %c0_56] : memref<2x16x16x8xf32, #tpu.memory_space<vmem>>, vector<2x16x16x8xf32>
    %c0_57 = arith.constant 0 : index
    %c1_58 = arith.constant 1 : index
    %c1_59 = arith.constant 1 : index
    %c8 = arith.constant 8 : index
    %54 = vector.load %arg12[%c0_57, %c1_58, %c1_59, %c8] : memref<2x18x18x16xf32, #tpu.memory_space<vmem>>, vector<2x16x16x8xf32>
    tpu.vector_store %arg12[%c0_57, %c1_58, %c1_59, %c8], %53 {strides = array<i32>} : memref<2x18x18x16xf32, #tpu.memory_space<vmem>>, vector<2x16x16x8xf32>,
    %c0_60 = arith.constant 0 : index
    %c0_61 = arith.constant 0 : index
    %c0_62 = arith.constant 0 : index
    %c0_63 = arith.constant 0 : index
    %55 = vector.load %arg12[%c0_60, %c0_61, %c0_62, %c0_63] : memref<2x18x18x16xf32, #tpu.memory_space<vmem>>, vector<2x18x18x16xf32>
    %c0_64 = arith.constant 0 : index
    %c0_65 = arith.constant 0 : index
    %56 = vector.load %arg5[%c0_64, %c0_65] : memref<144x128xbf16, #tpu.memory_space<vmem>>, vector<144x128xbf16>
    %c0_66 = arith.constant 0 : index
    %c0_67 = arith.constant 0 : index
    %57 = vector.load %arg6[%c0_66, %c0_67] : memref<1x128xf32, #tpu.memory_space<vmem>>, vector<1x128xf32>
    %c0_68 = arith.constant 0 : index
    %c0_69 = arith.constant 0 : index
    %58 = vector.load %arg7[%c0_68, %c0_69] : memref<1x128xf32, #tpu.memory_space<vmem>>, vector<1x128xf32>
    %59 = vector.extract_strided_slice %55 {offsets = [0, 0, 0, 0], sizes = [2, 16, 16, 16], strides = [1, 1, 1, 1]} : vector<2x18x18x16xf32> to vector<2x16x16x16xf32>
    %60 = vector.extract_strided_slice %55 {offsets = [0, 0, 1, 0], sizes = [2, 16, 16, 16], strides = [1, 1, 1, 1]} : vector<2x18x18x16xf32> to vector<2x16x16x16xf32>
    %61 = vector.extract_strided_slice %55 {offsets = [0, 0, 2, 0], sizes = [2, 16, 16, 16], strides = [1, 1, 1, 1]} : vector<2x18x18x16xf32> to vector<2x16x16x16xf32>
    %62 = vector.extract_strided_slice %55 {offsets = [0, 1, 0, 0], sizes = [2, 16, 16, 16], strides = [1, 1, 1, 1]} : vector<2x18x18x16xf32> to vector<2x16x16x16xf32>
    %63 = vector.extract_strided_slice %55 {offsets = [0, 1, 1, 0], sizes = [2, 16, 16, 16], strides = [1, 1, 1, 1]} : vector<2x18x18x16xf32> to vector<2x16x16x16xf32>
    %64 = vector.extract_strided_slice %55 {offsets = [0, 1, 2, 0], sizes = [2, 16, 16, 16], strides = [1, 1, 1, 1]} : vector<2x18x18x16xf32> to vector<2x16x16x16xf32>
    %65 = vector.extract_strided_slice %55 {offsets = [0, 2, 0, 0], sizes = [2, 16, 16, 16], strides = [1, 1, 1, 1]} : vector<2x18x18x16xf32> to vector<2x16x16x16xf32>
    %66 = vector.extract_strided_slice %55 {offsets = [0, 2, 1, 0], sizes = [2, 16, 16, 16], strides = [1, 1, 1, 1]} : vector<2x18x18x16xf32> to vector<2x16x16x16xf32>
    %67 = vector.extract_strided_slice %55 {offsets = [0, 2, 2, 0], sizes = [2, 16, 16, 16], strides = [1, 1, 1, 1]} : vector<2x18x18x16xf32> to vector<2x16x16x16xf32>
    %68 = tpu.concatenate %59, %60, %61, %62, %63, %64, %65, %66, %67 in 3 : vector<2x16x16x16xf32>, vector<2x16x16x16xf32>, vector<2x16x16x16xf32>, vector<2x16x16x16xf32>, vector<2x16x16x16xf32>, vector<2x16x16x16xf32>, vector<2x16x16x16xf32>, vector<2x16x16x16xf32>, vector<2x16x16x16xf32> -> vector<2x16x16x144xf32>
    %69 = vector.shape_cast %68 : vector<2x16x16x144xf32> to vector<512x144xf32>
    %70 = arith.truncf %69 : vector<512x144xf32> to vector<512x144xbf16>
    %cst_70 = arith.constant dense<0.000000e+00> : vector<512x128xf32>
    %71 = tpu.matmul %70, %56, %cst_70 {dimension_numbers = #tpu.dot_dimension_numbers<[1], [0], [0], [1], [0, 0, 1, 1], [], []>} : vector<512x144xbf16>, vector<144x128xbf16>, vector<512x128xf32> -> vector<512x128xf32>
    %cst_71 = arith.constant dense<0.000000e+00> : vector<128xf32>
    %72 = vector.multi_reduction <add>, %71, %cst_71 [0] : vector<512x128xf32> to vector<128xf32>
    %73 = vector.shape_cast %72 : vector<128xf32> to vector<1x128xf32>
    %cst_72 = arith.constant 0.001953125 : f32
    %74 = vector.broadcast %cst_72 : f32 to vector<1x128xf32>
    %75 = arith.mulf %73, %74 : vector<1x128xf32>
    %76 = vector.broadcast %75 : vector<1x128xf32> to vector<512x128xf32>
    %77 = arith.subf %71, %76 : vector<512x128xf32>
    %78 = arith.mulf %77, %77 : vector<512x128xf32>
    %cst_73 = arith.constant dense<0.000000e+00> : vector<128xf32>
    %79 = vector.multi_reduction <add>, %78, %cst_73 [0] : vector<512x128xf32> to vector<128xf32>
    %80 = vector.shape_cast %79 : vector<128xf32> to vector<1x128xf32>
    %cst_74 = arith.constant 0.001953125 : f32
    %81 = vector.broadcast %cst_74 : f32 to vector<1x128xf32>
    %82 = arith.mulf %80, %81 : vector<1x128xf32>
    %cst_75 = arith.constant 9.99999974E-6 : f32
    %83 = vector.broadcast %cst_75 : f32 to vector<1x128xf32>
    %84 = arith.addf %82, %83 : vector<1x128xf32>
    %85 = math.rsqrt %84 : vector<1x128xf32>
    %86 = arith.mulf %57, %85 : vector<1x128xf32>
    %87 = vector.broadcast %86 : vector<1x128xf32> to vector<512x128xf32>
    %88 = arith.mulf %77, %87 : vector<512x128xf32>
    %89 = vector.broadcast %58 : vector<1x128xf32> to vector<512x128xf32>
    %90 = arith.addf %88, %89 : vector<512x128xf32>
    %cst_76 = arith.constant 0.000000e+00 : f32
    %91 = vector.broadcast %cst_76 : f32 to vector<512x128xf32>
    %92 = arith.maximumf %90, %91 : vector<512x128xf32>
    %93 = vector.shape_cast %92 : vector<512x128xf32> to vector<2x16x16x128xf32>
    %94 = vector.extract_strided_slice %93 {offsets = [0, 0, 0, 0], sizes = [2, 16, 16, 8], strides = [1, 1, 1, 1]} : vector<2x16x16x128xf32> to vector<2x16x16x8xf32>
    %c0_77 = arith.constant 0 : index
    %c1_78 = arith.constant 1 : index
    %c1_79 = arith.constant 1 : index
    %c0_80 = arith.constant 0 : index
    %95 = vector.load %arg13[%c0_77, %c1_78, %c1_79, %c0_80] : memref<2x18x18x8xf32, #tpu.memory_space<vmem>>, vector<2x16x16x8xf32>
    tpu.vector_store %arg13[%c0_77, %c1_78, %c1_79, %c0_80], %94 {strides = array<i32>} : memref<2x18x18x8xf32, #tpu.memory_space<vmem>>, vector<2x16x16x8xf32>,
    %c0_81 = arith.constant 0 : index
    %c0_82 = arith.constant 0 : index
    %c0_83 = arith.constant 0 : index
    %c0_84 = arith.constant 0 : index
    %96 = vector.load %arg13[%c0_81, %c0_82, %c0_83, %c0_84] : memref<2x18x18x8xf32, #tpu.memory_space<vmem>>, vector<2x18x18x8xf32>
    %c0_85 = arith.constant 0 : index
    %c0_86 = arith.constant 0 : index
    %97 = vector.load %arg8[%c0_85, %c0_86] : memref<72x128xbf16, #tpu.memory_space<vmem>>, vector<72x128xbf16>
    %c0_87 = arith.constant 0 : index
    %c0_88 = arith.constant 0 : index
    %98 = vector.load %arg9[%c0_87, %c0_88] : memref<1x128xf32, #tpu.memory_space<vmem>>, vector<1x128xf32>
    %c0_89 = arith.constant 0 : index
    %c0_90 = arith.constant 0 : index
    %99 = vector.load %arg10[%c0_89, %c0_90] : memref<1x128xf32, #tpu.memory_space<vmem>>, vector<1x128xf32>
    %100 = vector.extract_strided_slice %96 {offsets = [0, 0, 0, 0], sizes = [2, 16, 16, 8], strides = [1, 1, 1, 1]} : vector<2x18x18x8xf32> to vector<2x16x16x8xf32>
    %101 = vector.extract_strided_slice %96 {offsets = [0, 0, 1, 0], sizes = [2, 16, 16, 8], strides = [1, 1, 1, 1]} : vector<2x18x18x8xf32> to vector<2x16x16x8xf32>
    %102 = vector.extract_strided_slice %96 {offsets = [0, 0, 2, 0], sizes = [2, 16, 16, 8], strides = [1, 1, 1, 1]} : vector<2x18x18x8xf32> to vector<2x16x16x8xf32>
    %103 = vector.extract_strided_slice %96 {offsets = [0, 1, 0, 0], sizes = [2, 16, 16, 8], strides = [1, 1, 1, 1]} : vector<2x18x18x8xf32> to vector<2x16x16x8xf32>
    %104 = vector.extract_strided_slice %96 {offsets = [0, 1, 1, 0], sizes = [2, 16, 16, 8], strides = [1, 1, 1, 1]} : vector<2x18x18x8xf32> to vector<2x16x16x8xf32>
    %105 = vector.extract_strided_slice %96 {offsets = [0, 1, 2, 0], sizes = [2, 16, 16, 8], strides = [1, 1, 1, 1]} : vector<2x18x18x8xf32> to vector<2x16x16x8xf32>
    %106 = vector.extract_strided_slice %96 {offsets = [0, 2, 0, 0], sizes = [2, 16, 16, 8], strides = [1, 1, 1, 1]} : vector<2x18x18x8xf32> to vector<2x16x16x8xf32>
    %107 = vector.extract_strided_slice %96 {offsets = [0, 2, 1, 0], sizes = [2, 16, 16, 8], strides = [1, 1, 1, 1]} : vector<2x18x18x8xf32> to vector<2x16x16x8xf32>
    %108 = vector.extract_strided_slice %96 {offsets = [0, 2, 2, 0], sizes = [2, 16, 16, 8], strides = [1, 1, 1, 1]} : vector<2x18x18x8xf32> to vector<2x16x16x8xf32>
    %109 = tpu.concatenate %100, %101, %102, %103, %104, %105, %106, %107, %108 in 3 : vector<2x16x16x8xf32>, vector<2x16x16x8xf32>, vector<2x16x16x8xf32>, vector<2x16x16x8xf32>, vector<2x16x16x8xf32>, vector<2x16x16x8xf32>, vector<2x16x16x8xf32>, vector<2x16x16x8xf32>, vector<2x16x16x8xf32> -> vector<2x16x16x72xf32>
    %110 = vector.shape_cast %109 : vector<2x16x16x72xf32> to vector<512x72xf32>
    %111 = arith.truncf %110 : vector<512x72xf32> to vector<512x72xbf16>
    %cst_91 = arith.constant dense<0.000000e+00> : vector<512x128xf32>
    %112 = tpu.matmul %111, %97, %cst_91 {dimension_numbers = #tpu.dot_dimension_numbers<[1], [0], [0], [1], [0, 0, 1, 1], [], []>} : vector<512x72xbf16>, vector<72x128xbf16>, vector<512x128xf32> -> vector<512x128xf32>
    %cst_92 = arith.constant dense<0.000000e+00> : vector<128xf32>
    %113 = vector.multi_reduction <add>, %112, %cst_92 [0] : vector<512x128xf32> to vector<128xf32>
    %114 = vector.shape_cast %113 : vector<128xf32> to vector<1x128xf32>
    %cst_93 = arith.constant 0.001953125 : f32
    %115 = vector.broadcast %cst_93 : f32 to vector<1x128xf32>
    %116 = arith.mulf %114, %115 : vector<1x128xf32>
    %117 = vector.broadcast %116 : vector<1x128xf32> to vector<512x128xf32>
    %118 = arith.subf %112, %117 : vector<512x128xf32>
    %119 = arith.mulf %118, %118 : vector<512x128xf32>
    %cst_94 = arith.constant dense<0.000000e+00> : vector<128xf32>
    %120 = vector.multi_reduction <add>, %119, %cst_94 [0] : vector<512x128xf32> to vector<128xf32>
    %121 = vector.shape_cast %120 : vector<128xf32> to vector<1x128xf32>
    %cst_95 = arith.constant 0.001953125 : f32
    %122 = vector.broadcast %cst_95 : f32 to vector<1x128xf32>
    %123 = arith.mulf %121, %122 : vector<1x128xf32>
    %cst_96 = arith.constant 9.99999974E-6 : f32
    %124 = vector.broadcast %cst_96 : f32 to vector<1x128xf32>
    %125 = arith.addf %123, %124 : vector<1x128xf32>
    %126 = math.rsqrt %125 : vector<1x128xf32>
    %127 = arith.mulf %98, %126 : vector<1x128xf32>
    %128 = vector.broadcast %127 : vector<1x128xf32> to vector<512x128xf32>
    %129 = arith.mulf %118, %128 : vector<512x128xf32>
    %130 = vector.broadcast %99 : vector<1x128xf32> to vector<512x128xf32>
    %131 = arith.addf %129, %130 : vector<512x128xf32>
    %cst_97 = arith.constant 0.000000e+00 : f32
    %132 = vector.broadcast %cst_97 : f32 to vector<512x128xf32>
    %133 = arith.maximumf %131, %132 : vector<512x128xf32>
    %134 = vector.shape_cast %133 : vector<512x128xf32> to vector<2x16x16x128xf32>
    %135 = vector.extract_strided_slice %134 {offsets = [0, 0, 0, 0], sizes = [2, 16, 16, 8], strides = [1, 1, 1, 1]} : vector<2x16x16x128xf32> to vector<2x16x16x8xf32>
    %c0_98 = arith.constant 0 : index
    %c0_99 = arith.constant 0 : index
    %c0_100 = arith.constant 0 : index
    %c0_101 = arith.constant 0 : index
    %136 = vector.load %arg11[%c0_98, %c0_99, %c0_100, %c0_101] : memref<2x16x16x8xf32, #tpu.memory_space<vmem>>, vector<2x16x16x8xf32>
    tpu.vector_store %arg11[%c0_98, %c0_99, %c0_100, %c0_101], %135 {strides = array<i32>} : memref<2x16x16x8xf32, #tpu.memory_space<vmem>>, vector<2x16x16x8xf32>,
    return
  }
}

</mosaic_0001>

<llo_original>
// kernel: upblock2d.1
$region0: #{upblock2d.1}
  #allocation0 [shape = 'u32[]', space=smem, size = 0x4, offset = 0x4, fixed_abs, tag = 'smem constant byte address 0x4 - core index']
  #allocation1 [shape = 'u32[144,128]{1,0:T(1,128)}', space=vmem, size = 0x12000, scoped, tag = 'internal scratch']
  #allocation2 [shape = 'f32[2,18,18,16]{3,2,1,0:T(8,128)}', space=vmem, size = 0x6c000, scoped, tag = 'scratch operand']
  #allocation3 [shape = 'f32[2,18,18,8]{3,2,1,0:T(8,128)}', space=vmem, size = 0x6c000, scoped, tag = 'scratch operand']
  %s0 = inlined_call_operand.vmem [shape: f32[2,18,18,4], index: 0, kind: input, shape index: {}]
  %s1 = inlined_call_operand.vmem [shape: f32[2,16,16,8], index: 1, kind: input, shape index: {}]
  %s2 = inlined_call_operand.vmem [shape: bf16[36,128], index: 2, kind: input, shape index: {}]
  %s3 = inlined_call_operand.vmem [shape: f32[1,128], index: 3, kind: input, shape index: {}]
  %s4 = inlined_call_operand.vmem [shape: f32[1,128], index: 4, kind: input, shape index: {}]
  %s5 = inlined_call_operand.vmem [shape: bf16[144,128], index: 5, kind: input, shape index: {}]
  %s6 = inlined_call_operand.vmem [shape: f32[1,128], index: 6, kind: input, shape index: {}]
  %s7 = inlined_call_operand.vmem [shape: f32[1,128], index: 7, kind: input, shape index: {}]
  %s8 = inlined_call_operand.vmem [shape: bf16[72,128], index: 8, kind: input, shape index: {}]
  %s9 = inlined_call_operand.vmem [shape: f32[1,128], index: 9, kind: input, shape index: {}]
  %s10 = inlined_call_operand.vmem [shape: f32[1,128], index: 10, kind: input, shape index: {}]
  %s11 = inlined_call_operand.vmem [shape: f32[2,16,16,8], index: 11, kind: output, shape index: {}]
  %s12 = sld [smem:[#allocation0]]
  $region54: #{upblock2d.1} parent=0
    _
  %s14 = ssub.s32 1, %s12
  %s15 = scalar_select 0, %s14, %s12
  // Predicated region
  $region2: #{upblock2d.1} parent=0 // pred_check
    _
  $region3: #{upblock2d.1} parent=0 // pred_check_branch
    %17 = sbr.rel (0) target = $region5
  $region4: #{upblock2d.1} parent=0 // pred_region
    _
  $region5: #{upblock2d.1} parent=0 // pred_fallthru
    _
  // Predicated region
  $region6: #{upblock2d.1} parent=0 // pred_check
    _
  $region7: #{upblock2d.1} parent=0 // pred_check_branch
    %19 = sbr.rel (0) target = $region9
  $region8: #{upblock2d.1} parent=0 // pred_region
    _
  $region9: #{upblock2d.1} parent=0 // pred_fallthru
    _
  // Predicated region
  $region10: #{upblock2d.1} parent=0 // pred_check
    _
  $region11: #{upblock2d.1} parent=0 // pred_check_branch
    %21 = sbr.rel (0) target = $region13
  $region12: #{upblock2d.1} parent=0 // pred_region
    _
  $region13: #{upblock2d.1} parent=0 // pred_fallthru
    _
  // Predicated region
  $region14: #{upblock2d.1} parent=0 // pred_check
    _
  $region15: #{upblock2d.1} parent=0 // pred_check_branch
    %23 = sbr.rel (0) target = $region17
  $region16: #{upblock2d.1} parent=0 // pred_region
    _
  $region17: #{upblock2d.1} parent=0 // pred_fallthru
    _
  // Predicated region
  $region18: #{upblock2d.1} parent=0 // pred_check
    _
  $region19: #{upblock2d.1} parent=0 // pred_check_branch
    %25 = sbr.rel (0) target = $region21
  $region20: #{upblock2d.1} parent=0 // pred_region
    _
  $region21: #{upblock2d.1} parent=0 // pred_fallthru
    _
  // Predicated region
  $region22: #{upblock2d.1} parent=0 // pred_check
    _
  $region23: #{upblock2d.1} parent=0 // pred_check_branch
    %27 = sbr.rel (0) target = $region25
  $region24: #{upblock2d.1} parent=0 // pred_region
    _
  $region25: #{upblock2d.1} parent=0 // pred_fallthru
    _
  // Predicated region
  $region26: #{upblock2d.1} parent=0 // pred_check
    _
  $region27: #{upblock2d.1} parent=0 // pred_check_branch
    %29 = sbr.rel (0) target = $region29
  $region28: #{upblock2d.1} parent=0 // pred_region
    _
  $region29: #{upblock2d.1} parent=0 // pred_fallthru
    _
  // Predicated region
  $region30: #{upblock2d.1} parent=0 // pred_check
    _
  $region31: #{upblock2d.1} parent=0 // pred_check_branch
    %31 = sbr.rel (0) target = $region33
  $region32: #{upblock2d.1} parent=0 // pred_region
    _
  $region33: #{upblock2d.1} parent=0 // pred_fallthru
    _
  // Predicated region
  $region34: #{upblock2d.1} parent=0 // pred_check
    _
  $region35: #{upblock2d.1} parent=0 // pred_check_branch
    %33 = sbr.rel (0) target = $region37
  $region36: #{upblock2d.1} parent=0 // pred_region
    _
  $region37: #{upblock2d.1} parent=0 // pred_fallthru
    _
  // Predicated region
  $region38: #{upblock2d.1} parent=0 // pred_check
    _
  $region39: #{upblock2d.1} parent=0 // pred_check_branch
    %35 = sbr.rel (0) target = $region41
  $region40: #{upblock2d.1} parent=0 // pred_region
    _
  $region41: #{upblock2d.1} parent=0 // pred_fallthru
    _
  // Predicated region
  $region42: #{upblock2d.1} parent=0 // pred_check
    _
  $region43: #{upblock2d.1} parent=0 // pred_check_branch
    %37 = sbr.rel (0) target = $region45
  $region44: #{upblock2d.1} parent=0 // pred_region
    _
  $region45: #{upblock2d.1} parent=0 // pred_fallthru
    _
  %vm39 = vcmask 130048
  %40 = vst.msk [vmem:[#allocation2] sm:$0xff] %vm39, 0.0
  %41 = vst.msk [vmem:[#allocation2 + $0x8] sm:$0xff] %vm39, 0.0
  %vm42 = vcmask 123904
  %43 = vst.msk [vmem:[#allocation2 + $0x10] sm:$0x3] %vm42, 0.0
  %44 = vst.msk [vmem:[#allocation2 + $0x1b0] sm:$0xff] %vm39, 0.0
  %45 = vst.msk [vmem:[#allocation2 + $0x1b8] sm:$0xff] %vm39, 0.0
  %46 = vst.msk [vmem:[#allocation2 + $0x1c0] sm:$0x3] %vm42, 0.0
  %s47 = scalar_lea.vmem [#allocation2], 408
  %48 = vst.msk [vmem:[%s47] sm:$0xff] %vm39, 0.0
  %49 = vst.msk [vmem:[%s47 + $0x8] sm:$0xff] %vm39, 0.0
  %50 = vst.msk [vmem:[%s47 + $0x10] sm:$0x3] %vm42, 0.0
  %51 = vst.msk [vmem:[%s47 + $0x1b0] sm:$0xff] %vm39, 0.0
  %52 = vst.msk [vmem:[%s47 + $0x1b8] sm:$0xff] %vm39, 0.0
  %53 = vst.msk [vmem:[%s47 + $0x1c0] sm:$0x3] %vm42, 0.0
  %vm54 = vcmask 122880
  %55 = vst.msk [vmem:[#allocation2] sm:$0x1] %vm54, 0.0
  %56 = vst.msk [vmem:[#allocation2 + $0x18] sm:$0x1] %vm54, 0.0
  %57 = vst.msk [vmem:[#allocation2 + $0x30] sm:$0x1] %vm54, 0.0
  %58 = vst.msk [vmem:[#allocation2 + $0x48] sm:$0x1] %vm54, 0.0
  %59 = vst.msk [vmem:[#allocation2 + $0x60] sm:$0x1] %vm54, 0.0
  %60 = vst.msk [vmem:[#allocation2 + $0x78] sm:$0x1] %vm54, 0.0
  %61 = vst.msk [vmem:[#allocation2 + $0x90] sm:$0x1] %vm54, 0.0
  %62 = vst.msk [vmem:[#allocation2 + $0xa8] sm:$0x1] %vm54, 0.0
  %63 = vst.msk [vmem:[#allocation2 + $0xc0] sm:$0x1] %vm54, 0.0
  %64 = vst.msk [vmem:[#allocation2 + $0xd8] sm:$0x1] %vm54, 0.0
  %65 = vst.msk [vmem:[#allocation2 + $0xf0] sm:$0x1] %vm54, 0.0
  %66 = vst.msk [vmem:[#allocation2 + $0x108] sm:$0x1] %vm54, 0.0
  %67 = vst.msk [vmem:[#allocation2 + $0x120] sm:$0x1] %vm54, 0.0
  %68 = vst.msk [vmem:[#allocation2 + $0x138] sm:$0x1] %vm54, 0.0
  %69 = vst.msk [vmem:[#allocation2 + $0x150] sm:$0x1] %vm54, 0.0
  %70 = vst.msk [vmem:[#allocation2 + $0x168] sm:$0x1] %vm54, 0.0
  %71 = vst.msk [vmem:[#allocation2 + $0x180] sm:$0x1] %vm54, 0.0
  %72 = vst.msk [vmem:[#allocation2 + $0x198] sm:$0x1] %vm54, 0.0
  %73 = vst.msk [vmem:[#allocation2 + $0x1b0] sm:$0x1] %vm54, 0.0
  %74 = vst.msk [vmem:[#allocation2 + $0x1c8] sm:$0x1] %vm54, 0.0
  %75 = vst.msk [vmem:[#allocation2 + $0x1e0] sm:$0x1] %vm54, 0.0
  %76 = vst.msk [vmem:[#allocation2 + $0x1f8] sm:$0x1] %vm54, 0.0
  %77 = vst.msk [vmem:[#allocation2 + $0x210] sm:$0x1] %vm54, 0.0
  %78 = vst.msk [vmem:[#allocation2 + $0x228] sm:$0x1] %vm54, 0.0
  %79 = vst.msk [vmem:[#allocation2 + $0x240] sm:$0x1] %vm54, 0.0
  %80 = vst.msk [vmem:[#allocation2 + $0x258] sm:$0x1] %vm54, 0.0
  %81 = vst.msk [vmem:[#allocation2 + $0x270] sm:$0x1] %vm54, 0.0
  %82 = vst.msk [vmem:[#allocation2 + $0x288] sm:$0x1] %vm54, 0.0
  %83 = vst.msk [vmem:[#allocation2 + $0x2a0] sm:$0x1] %vm54, 0.0
  %84 = vst.msk [vmem:[#allocation2 + $0x2b8] sm:$0x1] %vm54, 0.0
  %85 = vst.msk [vmem:[#allocation2 + $0x2d0] sm:$0x1] %vm54, 0.0
  %86 = vst.msk [vmem:[#allocation2 + $0x2e8] sm:$0x1] %vm54, 0.0
  %87 = vst.msk [vmem:[#allocation2 + $0x300] sm:$0x1] %vm54, 0.0
  %88 = vst.msk [vmem:[#allocation2 + $0x318] sm:$0x1] %vm54, 0.0
  %89 = vst.msk [vmem:[#allocation2 + $0x330] sm:$0x1] %vm54, 0.0
  %90 = vst.msk [vmem:[#allocation2 + $0x348] sm:$0x1] %vm54, 0.0
  %91 = vst.msk [vmem:[#allocation2 + $0x11] sm:$0x1] %vm54, 0.0
  %92 = vst.msk [vmem:[#allocation2 + $0x29] sm:$0x1] %vm54, 0.0
  %93 = vst.msk [vmem:[#allocation2 + $0x41] sm:$0x1] %vm54, 0.0
  %94 = vst.msk [vmem:[#allocation2 + $0x59] sm:$0x1] %vm54, 0.0
  %95 = vst.msk [vmem:[#allocation2 + $0x71] sm:$0x1] %vm54, 0.0
  %96 = vst.msk [vmem:[#allocation2 + $0x89] sm:$0x1] %vm54, 0.0
  %97 = vst.msk [vmem:[#allocation2 + $0xa1] sm:$0x1] %vm54, 0.0
  %98 = vst.msk [vmem:[#allocation2 + $0xb9] sm:$0x1] %vm54, 0.0
  %99 = vst.msk [vmem:[#allocation2 + $0xd1] sm:$0x1] %vm54, 0.0
  %100 = vst.msk [vmem:[#allocation2 + $0xe9] sm:$0x1] %vm54, 0.0
  %101 = vst.msk [vmem:[#allocation2 + $0x101] sm:$0x1] %vm54, 0.0
  %102 = vst.msk [vmem:[#allocation2 + $0x119] sm:$0x1] %vm54, 0.0
  %103 = vst.msk [vmem:[#allocation2 + $0x131] sm:$0x1] %vm54, 0.0
  %104 = vst.msk [vmem:[#allocation2 + $0x149] sm:$0x1] %vm54, 0.0
  %105 = vst.msk [vmem:[#allocation2 + $0x161] sm:$0x1] %vm54, 0.0
  %106 = vst.msk [vmem:[#allocation2 + $0x179] sm:$0x1] %vm54, 0.0
  %107 = vst.msk [vmem:[#allocation2 + $0x191] sm:$0x1] %vm54, 0.0
  %108 = vst.msk [vmem:[#allocation2 + $0x1a9] sm:$0x1] %vm54, 0.0
  %109 = vst.msk [vmem:[#allocation2 + $0x1c1] sm:$0x1] %vm54, 0.0
  %110 = vst.msk [vmem:[#allocation2 + $0x1d9] sm:$0x1] %vm54, 0.0
  %111 = vst.msk [vmem:[#allocation2 + $0x1f1] sm:$0x1] %vm54, 0.0
  %112 = vst.msk [vmem:[#allocation2 + $0x209] sm:$0x1] %vm54, 0.0
  %113 = vst.msk [vmem:[#allocation2 + $0x221] sm:$0x1] %vm54, 0.0
  %114 = vst.msk [vmem:[#allocation2 + $0x239] sm:$0x1] %vm54, 0.0
  %115 = vst.msk [vmem:[#allocation2 + $0x251] sm:$0x1] %vm54, 0.0
  %116 = vst.msk [vmem:[#allocation2 + $0x269] sm:$0x1] %vm54, 0.0
  %117 = vst.msk [vmem:[#allocation2 + $0x281] sm:$0x1] %vm54, 0.0
  %118 = vst.msk [vmem:[#allocation2 + $0x299] sm:$0x1] %vm54, 0.0
  %119 = vst.msk [vmem:[#allocation2 + $0x2b1] sm:$0x1] %vm54, 0.0
  %120 = vst.msk [vmem:[#allocation2 + $0x2c9] sm:$0x1] %vm54, 0.0
  %121 = vst.msk [vmem:[#allocation2 + $0x2e1] sm:$0x1] %vm54, 0.0
  %122 = vst.msk [vmem:[#allocation2 + $0x2f9] sm:$0x1] %vm54, 0.0
  %123 = vst.msk [vmem:[#allocation2 + $0x311] sm:$0x1] %vm54, 0.0
  %124 = vst.msk [vmem:[#allocation2 + $0x329] sm:$0x1] %vm54, 0.0
  %125 = vst.msk [vmem:[#allocation2 + $0x341] sm:$0x1] %vm54, 0.0
  %126 = vst.msk [vmem:[#allocation2 + $0x359] sm:$0x1] %vm54, 0.0
  %vm127 = vcmask 64512
  %128 = vst.msk [vmem:[#allocation3] sm:$0xff] %vm127, 0.0
  %129 = vst.msk [vmem:[#allocation3 + $0x8] sm:$0xff] %vm127, 0.0
  %vm130 = vcmask 58368
  %131 = vst.msk [vmem:[#allocation3 + $0x10] sm:$0x3] %vm130, 0.0
  %132 = vst.msk [vmem:[#allocation3 + $0x1b0] sm:$0xff] %vm127, 0.0
  %133 = vst.msk [vmem:[#allocation3 + $0x1b8] sm:$0xff] %vm127, 0.0
  %134 = vst.msk [vmem:[#allocation3 + $0x1c0] sm:$0x3] %vm130, 0.0
  %s135 = scalar_lea.vmem [#allocation3], 408
  %136 = vst.msk [vmem:[%s135] sm:$0xff] %vm127, 0.0
  %137 = vst.msk [vmem:[%s135 + $0x8] sm:$0xff] %vm127, 0.0
  %138 = vst.msk [vmem:[%s135 + $0x10] sm:$0x3] %vm130, 0.0
  %139 = vst.msk [vmem:[%s135 + $0x1b0] sm:$0xff] %vm127, 0.0
  %140 = vst.msk [vmem:[%s135 + $0x1b8] sm:$0xff] %vm127, 0.0
  %141 = vst.msk [vmem:[%s135 + $0x1c0] sm:$0x3] %vm130, 0.0
  %vm142 = vcmask 57344
  %143 = vst.msk [vmem:[#allocation3] sm:$0x1] %vm142, 0.0
  %144 = vst.msk [vmem:[#allocation3 + $0x18] sm:$0x1] %vm142, 0.0
  %145 = vst.msk [vmem:[#allocation3 + $0x30] sm:$0x1] %vm142, 0.0
  %146 = vst.msk [vmem:[#allocation3 + $0x48] sm:$0x1] %vm142, 0.0
  %147 = vst.msk [vmem:[#allocation3 + $0x60] sm:$0x1] %vm142, 0.0
  %148 = vst.msk [vmem:[#allocation3 + $0x78] sm:$0x1] %vm142, 0.0
  %149 = vst.msk [vmem:[#allocation3 + $0x90] sm:$0x1] %vm142, 0.0
  %150 = vst.msk [vmem:[#allocation3 + $0xa8] sm:$0x1] %vm142, 0.0
  %151 = vst.msk [vmem:[#allocation3 + $0xc0] sm:$0x1] %vm142, 0.0
  %152 = vst.msk [vmem:[#allocation3 + $0xd8] sm:$0x1] %vm142, 0.0
  %153 = vst.msk [vmem:[#allocation3 + $0xf0] sm:$0x1] %vm142, 0.0
  %154 = vst.msk [vmem:[#allocation3 + $0x108] sm:$0x1] %vm142, 0.0
  %155 = vst.msk [vmem:[#allocation3 + $0x120] sm:$0x1] %vm142, 0.0
  %156 = vst.msk [vmem:[#allocation3 + $0x138] sm:$0x1] %vm142, 0.0
  %157 = vst.msk [vmem:[#allocation3 + $0x150] sm:$0x1] %vm142, 0.0
  %158 = vst.msk [vmem:[#allocation3 + $0x168] sm:$0x1] %vm142, 0.0
  %159 = vst.msk [vmem:[#allocation3 + $0x180] sm:$0x1] %vm142, 0.0
  %160 = vst.msk [vmem:[#allocation3 + $0x198] sm:$0x1] %vm142, 0.0
  %161 = vst.msk [vmem:[#allocation3 + $0x1b0] sm:$0x1] %vm142, 0.0
  %162 = vst.msk [vmem:[#allocation3 + $0x1c8] sm:$0x1] %vm142, 0.0
  %163 = vst.msk [vmem:[#allocation3 + $0x1e0] sm:$0x1] %vm142, 0.0
  %164 = vst.msk [vmem:[#allocation3 + $0x1f8] sm:$0x1] %vm142, 0.0
  %165 = vst.msk [vmem:[#allocation3 + $0x210] sm:$0x1] %vm142, 0.0
  %166 = vst.msk [vmem:[#allocation3 + $0x228] sm:$0x1] %vm142, 0.0
  %167 = vst.msk [vmem:[#allocation3 + $0x240] sm:$0x1] %vm142, 0.0
  %168 = vst.msk [vmem:[#allocation3 + $0x258] sm:$0x1] %vm142, 0.0
  %169 = vst.msk [vmem:[#allocation3 + $0x270] sm:$0x1] %vm142, 0.0
  %170 = vst.msk [vmem:[#allocation3 + $0x288] sm:$0x1] %vm142, 0.0
  %171 = vst.msk [vmem:[#allocation3 + $0x2a0] sm:$0x1] %vm142, 0.0
  %172 = vst.msk [vmem:[#allocation3 + $0x2b8] sm:$0x1] %vm142, 0.0
  %173 = vst.msk [vmem:[#allocation3 + $0x2d0] sm:$0x1] %vm142, 0.0
  %174 = vst.msk [vmem:[#allocation3 + $0x2e8] sm:$0x1] %vm142, 0.0
  %175 = vst.msk [vmem:[#allocation3 + $0x300] sm:$0x1] %vm142, 0.0
  %176 = vst.msk [vmem:[#allocation3 + $0x318] sm:$0x1] %vm142, 0.0
  %177 = vst.msk [vmem:[#allocation3 + $0x330] sm:$0x1] %vm142, 0.0
  %178 = vst.msk [vmem:[#allocation3 + $0x348] sm:$0x1] %vm142, 0.0
  %179 = vst.msk [vmem:[#allocation3 + $0x11] sm:$0x1] %vm142, 0.0
  %180 = vst.msk [vmem:[#allocation3 + $0x29] sm:$0x1] %vm142, 0.0
  %181 = vst.msk [vmem:[#allocation3 + $0x41] sm:$0x1] %vm142, 0.0
  %182 = vst.msk [vmem:[#allocation3 + $0x59] sm:$0x1] %vm142, 0.0
  %183 = vst.msk [vmem:[#allocation3 + $0x71] sm:$0x1] %vm142, 0.0
  %184 = vst.msk [vmem:[#allocation3 + $0x89] sm:$0x1] %vm142, 0.0
  %185 = vst.msk [vmem:[#allocation3 + $0xa1] sm:$0x1] %vm142, 0.0
  %186 = vst.msk [vmem:[#allocation3 + $0xb9] sm:$0x1] %vm142, 0.0
  %187 = vst.msk [vmem:[#allocation3 + $0xd1] sm:$0x1] %vm142, 0.0
  %188 = vst.msk [vmem:[#allocation3 + $0xe9] sm:$0x1] %vm142, 0.0
  %189 = vst.msk [vmem:[#allocation3 + $0x101] sm:$0x1] %vm142, 0.0
  %190 = vst.msk [vmem:[#allocation3 + $0x119] sm:$0x1] %vm142, 0.0
  %191 = vst.msk [vmem:[#allocation3 + $0x131] sm:$0x1] %vm142, 0.0
  %192 = vst.msk [vmem:[#allocation3 + $0x149] sm:$0x1] %vm142, 0.0
  %193 = vst.msk [vmem:[#allocation3 + $0x161] sm:$0x1] %vm142, 0.0
  %194 = vst.msk [vmem:[#allocation3 + $0x179] sm:$0x1] %vm142, 0.0
  %195 = vst.msk [vmem:[#allocation3 + $0x191] sm:$0x1] %vm142, 0.0
  %196 = vst.msk [vmem:[#allocation3 + $0x1a9] sm:$0x1] %vm142, 0.0
  %197 = vst.msk [vmem:[#allocation3 + $0x1c1] sm:$0x1] %vm142, 0.0
  %198 = vst.msk [vmem:[#allocation3 + $0x1d9] sm:$0x1] %vm142, 0.0
  %199 = vst.msk [vmem:[#allocation3 + $0x1f1] sm:$0x1] %vm142, 0.0
  %200 = vst.msk [vmem:[#allocation3 + $0x209] sm:$0x1] %vm142, 0.0
  %201 = vst.msk [vmem:[#allocation3 + $0x221] sm:$0x1] %vm142, 0.0
  %202 = vst.msk [vmem:[#allocation3 + $0x239] sm:$0x1] %vm142, 0.0
  %203 = vst.msk [vmem:[#allocation3 + $0x251] sm:$0x1] %vm142, 0.0
  %204 = vst.msk [vmem:[#allocation3 + $0x269] sm:$0x1] %vm142, 0.0
  %205 = vst.msk [vmem:[#allocation3 + $0x281] sm:$0x1] %vm142, 0.0
  %206 = vst.msk [vmem:[#allocation3 + $0x299] sm:$0x1] %vm142, 0.0
  %207 = vst.msk [vmem:[#allocation3 + $0x2b1] sm:$0x1] %vm142, 0.0
  %208 = vst.msk [vmem:[#allocation3 + $0x2c9] sm:$0x1] %vm142, 0.0
  %209 = vst.msk [vmem:[#allocation3 + $0x2e1] sm:$0x1] %vm142, 0.0
  %210 = vst.msk [vmem:[#allocation3 + $0x2f9] sm:$0x1] %vm142, 0.0
  %211 = vst.msk [vmem:[#allocation3 + $0x311] sm:$0x1] %vm142, 0.0
  %212 = vst.msk [vmem:[#allocation3 + $0x329] sm:$0x1] %vm142, 0.0
  %213 = vst.msk [vmem:[#allocation3 + $0x341] sm:$0x1] %vm142, 0.0
  %214 = vst.msk [vmem:[#allocation3 + $0x359] sm:$0x1] %vm142, 0.0
  %v215 = vld [vmem:[%s0] sm:$0xff]
  %v216 = vld [vmem:[%s0 + $0x8] sm:$0xff]
  %v217 = vld [vmem:[%s0 + $0x10] sm:$0x3]
  %v218 = vld [vmem:[%s0 + $0x18] sm:$0xff]
  %v219 = vld [vmem:[%s0 + $0x20] sm:$0xff]
  %v220 = vld [vmem:[%s0 + $0x28] sm:$0x3]
  %v221 = vld [vmem:[%s0 + $0x30] sm:$0xff]
  %v222 = vld [vmem:[%s0 + $0x38] sm:$0xff]
  %v223 = vld [vmem:[%s0 + $0x40] sm:$0x3]
  %v224 = vld [vmem:[%s0 + $0x48] sm:$0xff]
  %v225 = vld [vmem:[%s0 + $0x50] sm:$0xff]
  %v226 = vld [vmem:[%s0 + $0x58] sm:$0x3]
  %v227 = vld [vmem:[%s0 + $0x60] sm:$0xff]
  %v228 = vld [vmem:[%s0 + $0x68] sm:$0xff]
  %v229 = vld [vmem:[%s0 + $0x70] sm:$0x3]
  %v230 = vld [vmem:[%s0 + $0x78] sm:$0xff]
  %v231 = vld [vmem:[%s0 + $0x80] sm:$0xff]
  %v232 = vld [vmem:[%s0 + $0x88] sm:$0x3]
  %v233 = vld [vmem:[%s0 + $0x90] sm:$0xff]
  %v234 = vld [vmem:[%s0 + $0x98] sm:$0xff]
  %v235 = vld [vmem:[%s0 + $0xa0] sm:$0x3]
  %v236 = vld [vmem:[%s0 + $0xa8] sm:$0xff]
  %v237 = vld [vmem:[%s0 + $0xb0] sm:$0xff]
  %v238 = vld [vmem:[%s0 + $0xb8] sm:$0x3]
  %v239 = vld [vmem:[%s0 + $0xc0] sm:$0xff]
  %v240 = vld [vmem:[%s0 + $0xc8] sm:$0xff]
  %v241 = vld [vmem:[%s0 + $0xd0] sm:$0x3]
  %v242 = vld [vmem:[%s0 + $0xd8] sm:$0xff]
  %v243 = vld [vmem:[%s0 + $0xe0] sm:$0xff]
  %v244 = vld [vmem:[%s0 + $0xe8] sm:$0x3]
  %v245 = vld [vmem:[%s0 + $0xf0] sm:$0xff]
  %v246 = vld [vmem:[%s0 + $0xf8] sm:$0xff]
  %v247 = vld [vmem:[%s0 + $0x100] sm:$0x3]
  %v248 = vld [vmem:[%s0 + $0x108] sm:$0xff]
  %v249 = vld [vmem:[%s0 + $0x110] sm:$0xff]
  %v250 = vld [vmem:[%s0 + $0x118] sm:$0x3]
  %v251 = vld [vmem:[%s0 + $0x120] sm:$0xff]
  %v252 = vld [vmem:[%s0 + $0x128] sm:$0xff]
  %v253 = vld [vmem:[%s0 + $0x130] sm:$0x3]
  %v254 = vld [vmem:[%s0 + $0x138] sm:$0xff]
  %v255 = vld [vmem:[%s0 + $0x140] sm:$0xff]
  %v256 = vld [vmem:[%s0 + $0x148] sm:$0x3]
  %v257 = vld [vmem:[%s0 + $0x150] sm:$0xff]
  %v258 = vld [vmem:[%s0 + $0x158] sm:$0xff]
  %v259 = vld [vmem:[%s0 + $0x160] sm:$0x3]
  %v260 = vld [vmem:[%s0 + $0x168] sm:$0xff]
  %v261 = vld [vmem:[%s0 + $0x170] sm:$0xff]
  %v262 = vld [vmem:[%s0 + $0x178] sm:$0x3]
  %v263 = vld [vmem:[%s0 + $0x180] sm:$0xff]
  %v264 = vld [vmem:[%s0 + $0x188] sm:$0xff]
  %v265 = vld [vmem:[%s0 + $0x190] sm:$0x3]
  %v266 = vld [vmem:[%s0 + $0x198] sm:$0xff]
  %v267 = vld [vmem:[%s0 + $0x1a0] sm:$0xff]
  %v268 = vld [vmem:[%s0 + $0x1a8] sm:$0x3]
  %v269 = vld [vmem:[%s0 + $0x1b0] sm:$0xff]
  %v270 = vld [vmem:[%s0 + $0x1b8] sm:$0xff]
  %v271 = vld [vmem:[%s0 + $0x1c0] sm:$0x3]
  %v272 = vld [vmem:[%s0 + $0x1c8] sm:$0xff]
  %v273 = vld [vmem:[%s0 + $0x1d0] sm:$0xff]
  %v274 = vld [vmem:[%s0 + $0x1d8] sm:$0x3]
  %v275 = vld [vmem:[%s0 + $0x1e0] sm:$0xff]
  %v276 = vld [vmem:[%s0 + $0x1e8] sm:$0xff]
  %v277 = vld [vmem:[%s0 + $0x1f0] sm:$0x3]
  %v278 = vld [vmem:[%s0 + $0x1f8] sm:$0xff]
  %v279 = vld [vmem:[%s0 + $0x200] sm:$0xff]
  %v280 = vld [vmem:[%s0 + $0x208] sm:$0x3]
  %v281 = vld [vmem:[%s0 + $0x210] sm:$0xff]
  %v282 = vld [vmem:[%s0 + $0x218] sm:$0xff]
  %v283 = vld [vmem:[%s0 + $0x220] sm:$0x3]
  %v284 = vld [vmem:[%s0 + $0x228] sm:$0xff]
  %v285 = vld [vmem:[%s0 + $0x230] sm:$0xff]
  %v286 = vld [vmem:[%s0 + $0x238] sm:$0x3]
  %v287 = vld [vmem:[%s0 + $0x240] sm:$0xff]
  %v288 = vld [vmem:[%s0 + $0x248] sm:$0xff]
  %v289 = vld [vmem:[%s0 + $0x250] sm:$0x3]
  %v290 = vld [vmem:[%s0 + $0x258] sm:$0xff]
  %v291 = vld [vmem:[%s0 + $0x260] sm:$0xff]
  %v292 = vld [vmem:[%s0 + $0x268] sm:$0x3]
  %v293 = vld [vmem:[%s0 + $0x270] sm:$0xff]
  %v294 = vld [vmem:[%s0 + $0x278] sm:$0xff]
  %v295 = vld [vmem:[%s0 + $0x280] sm:$0x3]
  %v296 = vld [vmem:[%s0 + $0x288] sm:$0xff]
  %v297 = vld [vmem:[%s0 + $0x290] sm:$0xff]
  %v298 = vld [vmem:[%s0 + $0x298] sm:$0x3]
  %v299 = vld [vmem:[%s0 + $0x2a0] sm:$0xff]
  %v300 = vld [vmem:[%s0 + $0x2a8] sm:$0xff]
  %v301 = vld [vmem:[%s0 + $0x2b0] sm:$0x3]
  %v302 = vld [vmem:[%s0 + $0x2b8] sm:$0xff]
  %v303 = vld [vmem:[%s0 + $0x2c0] sm:$0xff]
  %v304 = vld [vmem:[%s0 + $0x2c8] sm:$0x3]
  %v305 = vld [vmem:[%s0 + $0x2d0] sm:$0xff]
  %v306 = vld [vmem:[%s0 + $0x2d8] sm:$0xff]
  %v307 = vld [vmem:[%s0 + $0x2e0] sm:$0x3]
  %v308 = vld [vmem:[%s0 + $0x2e8] sm:$0xff]
  %v309 = vld [vmem:[%s0 + $0x2f0] sm:$0xff]
  %v310 = vld [vmem:[%s0 + $0x2f8] sm:$0x3]
  %v311 = vld [vmem:[%s0 + $0x300] sm:$0xff]
  %v312 = vld [vmem:[%s0 + $0x308] sm:$0xff]
  %v313 = vld [vmem:[%s0 + $0x310] sm:$0x3]
  %v314 = vld [vmem:[%s0 + $0x318] sm:$0xff]
  %v315 = vld [vmem:[%s0 + $0x320] sm:$0xff]
  %v316 = vld [vmem:[%s0 + $0x328] sm:$0x3]
  %v317 = vld [vmem:[%s0 + $0x330] sm:$0xff]
  %v318 = vld [vmem:[%s0 + $0x338] sm:$0xff]
  %v319 = vld [vmem:[%s0 + $0x340] sm:$0x3]
  %v320 = vld [vmem:[%s0 + $0x348] sm:$0xff]
  %v321 = vld [vmem:[%s0 + $0x350] sm:$0xff]
  %v322 = vld [vmem:[%s0 + $0x358] sm:$0x3]
  %v323 = vld [vmem:[%s2] sm:$0xf]
  %v324 = vld [vmem:[%s2 + $0x4] sm:$0xf]
  %v325 = vld [vmem:[%s2 + $0x8] sm:$0xf]
  %v326 = vld [vmem:[%s2 + $0xc] sm:$0xf]
  %v327 = vld [vmem:[%s2 + $0x10] sm:$0x3]
  %v328 = vld [vmem:[%s3] sm:$0x1]
  %v329 = vld [vmem:[%s4] sm:$0x1]
  %vm426 = vcmask 1046528
  %v427 = vrot.slane %v215, 1
  %v428 = vrot.slane %v216, 1
  %v429 = vsel %vm426, %v427, %v428
  %v430 = vrot.slane %v217, 1
  %v431 = vsel %vm426, %v428, %v430
  %v432 = vrot.slane %v218, 1
  %v433 = vrot.slane %v219, 1
  %v434 = vsel %vm426, %v432, %v433
  %v435 = vrot.slane %v220, 1
  %v436 = vsel %vm426, %v433, %v435
  %v437 = vrot.slane %v221, 1
  %v438 = vrot.slane %v222, 1
  %v439 = vsel %vm426, %v437, %v438
  %v440 = vrot.slane %v223, 1
  %v441 = vsel %vm426, %v438, %v440
  %v442 = vrot.slane %v224, 1
  %v443 = vrot.slane %v225, 1
  %v444 = vsel %vm426, %v442, %v443
  %v445 = vrot.slane %v226, 1
  %v446 = vsel %vm426, %v443, %v445
  %v447 = vrot.slane %v227, 1
  %v448 = vrot.slane %v228, 1
  %v449 = vsel %vm426, %v447, %v448
  %v450 = vrot.slane %v229, 1
  %v451 = vsel %vm426, %v448, %v450
  %v452 = vrot.slane %v230, 1
  %v453 = vrot.slane %v231, 1
  %v454 = vsel %vm426, %v452, %v453
  %v455 = vrot.slane %v232, 1
  %v456 = vsel %vm426, %v453, %v455
  %v457 = vrot.slane %v233, 1
  %v458 = vrot.slane %v234, 1
  %v459 = vsel %vm426, %v457, %v458
  %v460 = vrot.slane %v235, 1
  %v461 = vsel %vm426, %v458, %v460
  %v462 = vrot.slane %v236, 1
  %v463 = vrot.slane %v237, 1
  %v464 = vsel %vm426, %v462, %v463
  %v465 = vrot.slane %v238, 1
  %v466 = vsel %vm426, %v463, %v465
  %v467 = vrot.slane %v239, 1
  %v468 = vrot.slane %v240, 1
  %v469 = vsel %vm426, %v467, %v468
  %v470 = vrot.slane %v241, 1
  %v471 = vsel %vm426, %v468, %v470
  %v472 = vrot.slane %v242, 1
  %v473 = vrot.slane %v243, 1
  %v474 = vsel %vm426, %v472, %v473
  %v475 = vrot.slane %v244, 1
  %v476 = vsel %vm426, %v473, %v475
  %v477 = vrot.slane %v245, 1
  %v478 = vrot.slane %v246, 1
  %v479 = vsel %vm426, %v477, %v478
  %v480 = vrot.slane %v247, 1
  %v481 = vsel %vm426, %v478, %v480
  %v482 = vrot.slane %v248, 1
  %v483 = vrot.slane %v249, 1
  %v484 = vsel %vm426, %v482, %v483
  %v485 = vrot.slane %v250, 1
  %v486 = vsel %vm426, %v483, %v485
  %v487 = vrot.slane %v251, 1
  %v488 = vrot.slane %v252, 1
  %v489 = vsel %vm426, %v487, %v488
  %v490 = vrot.slane %v253, 1
  %v491 = vsel %vm426, %v488, %v490
  %v492 = vrot.slane %v254, 1
  %v493 = vrot.slane %v255, 1
  %v494 = vsel %vm426, %v492, %v493
  %v495 = vrot.slane %v256, 1
  %v496 = vsel %vm426, %v493, %v495
  %v497 = vrot.slane %v257, 1
  %v498 = vrot.slane %v258, 1
  %v499 = vsel %vm426, %v497, %v498
  %v500 = vrot.slane %v259, 1
  %v501 = vsel %vm426, %v498, %v500
  %v502 = vrot.slane %v260, 1
  %v503 = vrot.slane %v261, 1
  %v504 = vsel %vm426, %v502, %v503
  %v505 = vrot.slane %v262, 1
  %v506 = vsel %vm426, %v503, %v505
  %v507 = vrot.slane %v269, 1
  %v508 = vrot.slane %v270, 1
  %v509 = vsel %vm426, %v507, %v508
  %v510 = vrot.slane %v271, 1
  %v511 = vsel %vm426, %v508, %v510
  %v512 = vrot.slane %v272, 1
  %v513 = vrot.slane %v273, 1
  %v514 = vsel %vm426, %v512, %v513
  %v515 = vrot.slane %v274, 1
  %v516 = vsel %vm426, %v513, %v515
  %v517 = vrot.slane %v275, 1
  %v518 = vrot.slane %v276, 1
  %v519 = vsel %vm426, %v517, %v518
  %v520 = vrot.slane %v277, 1
  %v521 = vsel %vm426, %v518, %v520
  %v522 = vrot.slane %v278, 1
  %v523 = vrot.slane %v279, 1
  %v524 = vsel %vm426, %v522, %v523
  %v525 = vrot.slane %v280, 1
  %v526 = vsel %vm426, %v523, %v525
  %v527 = vrot.slane %v281, 1
  %v528 = vrot.slane %v282, 1
  %v529 = vsel %vm426, %v527, %v528
  %v530 = vrot.slane %v283, 1
  %v531 = vsel %vm426, %v528, %v530
  %v532 = vrot.slane %v284, 1
  %v533 = vrot.slane %v285, 1
  %v534 = vsel %vm426, %v532, %v533
  %v535 = vrot.slane %v286, 1
  %v536 = vsel %vm426, %v533, %v535
  %v537 = vrot.slane %v287, 1
  %v538 = vrot.slane %v288, 1
  %v539 = vsel %vm426, %v537, %v538
  %v540 = vrot.slane %v289, 1
  %v541 = vsel %vm426, %v538, %v540
  %v542 = vrot.slane %v290, 1
  %v543 = vrot.slane %v291, 1
  %v544 = vsel %vm426, %v542, %v543
  %v545 = vrot.slane %v292, 1
  %v546 = vsel %vm426, %v543, %v545
  %v547 = vrot.slane %v293, 1
  %v548 = vrot.slane %v294, 1
  %v549 = vsel %vm426, %v547, %v548
  %v550 = vrot.slane %v295, 1
  %v551 = vsel %vm426, %v548, %v550
  %v552 = vrot.slane %v296, 1
  %v553 = vrot.slane %v297, 1
  %v554 = vsel %vm426, %v552, %v553
  %v555 = vrot.slane %v298, 1
  %v556 = vsel %vm426, %v553, %v555
  %v557 = vrot.slane %v299, 1
  %v558 = vrot.slane %v300, 1
  %v559 = vsel %vm426, %v557, %v558
  %v560 = vrot.slane %v301, 1
  %v561 = vsel %vm426, %v558, %v560
  %v562 = vrot.slane %v302, 1
  %v563 = vrot.slane %v303, 1
  %v564 = vsel %vm426, %v562, %v563
  %v565 = vrot.slane %v304, 1
  %v566 = vsel %vm426, %v563, %v565
  %v567 = vrot.slane %v305, 1
  %v568 = vrot.slane %v306, 1
  %v569 = vsel %vm426, %v567, %v568
  %v570 = vrot.slane %v307, 1
  %v571 = vsel %vm426, %v568, %v570
  %v572 = vrot.slane %v308, 1
  %v573 = vrot.slane %v309, 1
  %v574 = vsel %vm426, %v572, %v573
  %v575 = vrot.slane %v310, 1
  %v576 = vsel %vm426, %v573, %v575
  %v577 = vrot.slane %v311, 1
  %v578 = vrot.slane %v312, 1
  %v579 = vsel %vm426, %v577, %v578
  %v580 = vrot.slane %v313, 1
  %v581 = vsel %vm426, %v578, %v580
  %v582 = vrot.slane %v314, 1
  %v583 = vrot.slane %v315, 1
  %v584 = vsel %vm426, %v582, %v583
  %v585 = vrot.slane %v316, 1
  %v586 = vsel %vm426, %v583, %v585
  %587 = vrot.lane.b32.xlu0 %v429, 4
  %v588 = vpop.permute.xlu0 %587
  %589 = vrot.lane.b32.xlu0 %v431, 4
  %v590 = vpop.permute.xlu0 %589
  %591 = vrot.lane.b32.xlu0 %v434, 4
  %v592 = vpop.permute.xlu0 %591
  %593 = vrot.lane.b32.xlu0 %v436, 4
  %v594 = vpop.permute.xlu0 %593
  %595 = vrot.lane.b32.xlu0 %v439, 4
  %v596 = vpop.permute.xlu0 %595
  %597 = vrot.lane.b32.xlu0 %v441, 4
  %v598 = vpop.permute.xlu0 %597
  %599 = vrot.lane.b32.xlu0 %v444, 4
  %v600 = vpop.permute.xlu0 %599
  %601 = vrot.lane.b32.xlu0 %v446, 4
  %v602 = vpop.permute.xlu0 %601
  %603 = vrot.lane.b32.xlu0 %v449, 4
  %v604 = vpop.permute.xlu0 %603
  %605 = vrot.lane.b32.xlu0 %v451, 4
  %v606 = vpop.permute.xlu0 %605
  %607 = vrot.lane.b32.xlu0 %v454, 4
  %v608 = vpop.permute.xlu0 %607
  %609 = vrot.lane.b32.xlu0 %v456, 4
  %v610 = vpop.permute.xlu0 %609
  %611 = vrot.lane.b32.xlu0 %v459, 4
  %v612 = vpop.permute.xlu0 %611
  %613 = vrot.lane.b32.xlu0 %v461, 4
  %v614 = vpop.permute.xlu0 %613
  %615 = vrot.lane.b32.xlu0 %v464, 4
  %v616 = vpop.permute.xlu0 %615
  %617 = vrot.lane.b32.xlu0 %v466, 4
  %v618 = vpop.permute.xlu0 %617
  %619 = vrot.lane.b32.xlu0 %v469, 4
  %v620 = vpop.permute.xlu0 %619
  %621 = vrot.lane.b32.xlu0 %v471, 4
  %v622 = vpop.permute.xlu0 %621
  %623 = vrot.lane.b32.xlu0 %v474, 4
  %v624 = vpop.permute.xlu0 %623
  %625 = vrot.lane.b32.xlu0 %v476, 4
  %v626 = vpop.permute.xlu0 %625
  %627 = vrot.lane.b32.xlu0 %v479, 4
  %v628 = vpop.permute.xlu0 %627
  %629 = vrot.lane.b32.xlu0 %v481, 4
  %v630 = vpop.permute.xlu0 %629
  %631 = vrot.lane.b32.xlu0 %v484, 4
  %v632 = vpop.permute.xlu0 %631
  %633 = vrot.lane.b32.xlu0 %v486, 4
  %v634 = vpop.permute.xlu0 %633
  %635 = vrot.lane.b32.xlu0 %v489, 4
  %v636 = vpop.permute.xlu0 %635
  %637 = vrot.lane.b32.xlu0 %v491, 4
  %v638 = vpop.permute.xlu0 %637
  %639 = vrot.lane.b32.xlu0 %v494, 4
  %v640 = vpop.permute.xlu0 %639
  %641 = vrot.lane.b32.xlu0 %v496, 4
  %v642 = vpop.permute.xlu0 %641
  %643 = vrot.lane.b32.xlu0 %v499, 4
  %v644 = vpop.permute.xlu0 %643
  %645 = vrot.lane.b32.xlu0 %v501, 4
  %v646 = vpop.permute.xlu0 %645
  %647 = vrot.lane.b32.xlu0 %v504, 4
  %v648 = vpop.permute.xlu0 %647
  %649 = vrot.lane.b32.xlu0 %v506, 4
  %v650 = vpop.permute.xlu0 %649
  %651 = vrot.lane.b32.xlu0 %v509, 4
  %v652 = vpop.permute.xlu0 %651
  %653 = vrot.lane.b32.xlu0 %v511, 4
  %v654 = vpop.permute.xlu0 %653
  %655 = vrot.lane.b32.xlu0 %v514, 4
  %v656 = vpop.permute.xlu0 %655
  %657 = vrot.lane.b32.xlu0 %v516, 4
  %v658 = vpop.permute.xlu0 %657
  %659 = vrot.lane.b32.xlu0 %v519, 4
  %v660 = vpop.permute.xlu0 %659
  %661 = vrot.lane.b32.xlu0 %v521, 4
  %v662 = vpop.permute.xlu0 %661
  %663 = vrot.lane.b32.xlu0 %v524, 4
  %v664 = vpop.permute.xlu0 %663
  %665 = vrot.lane.b32.xlu0 %v526, 4
  %v666 = vpop.permute.xlu0 %665
  %667 = vrot.lane.b32.xlu0 %v529, 4
  %v668 = vpop.permute.xlu0 %667
  %669 = vrot.lane.b32.xlu0 %v531, 4
  %v670 = vpop.permute.xlu0 %669
  %671 = vrot.lane.b32.xlu0 %v534, 4
  %v672 = vpop.permute.xlu0 %671
  %673 = vrot.lane.b32.xlu0 %v536, 4
  %v674 = vpop.permute.xlu0 %673
  %675 = vrot.lane.b32.xlu0 %v539, 4
  %v676 = vpop.permute.xlu0 %675
  %677 = vrot.lane.b32.xlu0 %v541, 4
  %v678 = vpop.permute.xlu0 %677
  %679 = vrot.lane.b32.xlu0 %v544, 4
  %v680 = vpop.permute.xlu0 %679
  %681 = vrot.lane.b32.xlu0 %v546, 4
  %v682 = vpop.permute.xlu0 %681
  %683 = vrot.lane.b32.xlu0 %v549, 4
  %v684 = vpop.permute.xlu0 %683
  %685 = vrot.lane.b32.xlu0 %v551, 4
  %v686 = vpop.permute.xlu0 %685
  %687 = vrot.lane.b32.xlu0 %v554, 4
  %v688 = vpop.permute.xlu0 %687
  %689 = vrot.lane.b32.xlu0 %v556, 4
  %v690 = vpop.permute.xlu0 %689
  %691 = vrot.lane.b32.xlu0 %v559, 4
  %v692 = vpop.permute.xlu0 %691
  %693 = vrot.lane.b32.xlu0 %v561, 4
  %v694 = vpop.permute.xlu0 %693
  %695 = vrot.lane.b32.xlu0 %v564, 4
  %v696 = vpop.permute.xlu0 %695
  %697 = vrot.lane.b32.xlu0 %v566, 4
  %v698 = vpop.permute.xlu0 %697
  %699 = vrot.lane.b32.xlu0 %v569, 4
  %v700 = vpop.permute.xlu0 %699
  %701 = vrot.lane.b32.xlu0 %v571, 4
  %v702 = vpop.permute.xlu0 %701
  %703 = vrot.lane.b32.xlu0 %v574, 4
  %v704 = vpop.permute.xlu0 %703
  %705 = vrot.lane.b32.xlu0 %v576, 4
  %v706 = vpop.permute.xlu0 %705
  %707 = vrot.lane.b32.xlu0 %v579, 4
  %v708 = vpop.permute.xlu0 %707
  %709 = vrot.lane.b32.xlu0 %v581, 4
  %v710 = vpop.permute.xlu0 %709
  %711 = vrot.lane.b32.xlu0 %v584, 4
  %v712 = vpop.permute.xlu0 %711
  %713 = vrot.lane.b32.xlu0 %v586, 4
  %v714 = vpop.permute.xlu0 %713
  %vm779 = vcmask 1045504
  %v780 = vrot.slane %v215, 2
  %v781 = vrot.slane %v216, 2
  %v782 = vsel %vm779, %v780, %v781
  %v783 = vrot.slane %v217, 2
  %v784 = vsel %vm779, %v781, %v783
  %v785 = vrot.slane %v218, 2
  %v786 = vrot.slane %v219, 2
  %v787 = vsel %vm779, %v785, %v786
  %v788 = vrot.slane %v220, 2
  %v789 = vsel %vm779, %v786, %v788
  %v790 = vrot.slane %v221, 2
  %v791 = vrot.slane %v222, 2
  %v792 = vsel %vm779, %v790, %v791
  %v793 = vrot.slane %v223, 2
  %v794 = vsel %vm779, %v791, %v793
  %v795 = vrot.slane %v224, 2
  %v796 = vrot.slane %v225, 2
  %v797 = vsel %vm779, %v795, %v796
  %v798 = vrot.slane %v226, 2
  %v799 = vsel %vm779, %v796, %v798
  %v800 = vrot.slane %v227, 2
  %v801 = vrot.slane %v228, 2
  %v802 = vsel %vm779, %v800, %v801
  %v803 = vrot.slane %v229, 2
  %v804 = vsel %vm779, %v801, %v803
  %v805 = vrot.slane %v230, 2
  %v806 = vrot.slane %v231, 2
  %v807 = vsel %vm779, %v805, %v806
  %v808 = vrot.slane %v232, 2
  %v809 = vsel %vm779, %v806, %v808
  %v810 = vrot.slane %v233, 2
  %v811 = vrot.slane %v234, 2
  %v812 = vsel %vm779, %v810, %v811
  %v813 = vrot.slane %v235, 2
  %v814 = vsel %vm779, %v811, %v813
  %v815 = vrot.slane %v236, 2
  %v816 = vrot.slane %v237, 2
  %v817 = vsel %vm779, %v815, %v816
  %v818 = vrot.slane %v238, 2
  %v819 = vsel %vm779, %v816, %v818
  %v820 = vrot.slane %v239, 2
  %v821 = vrot.slane %v240, 2
  %v822 = vsel %vm779, %v820, %v821
  %v823 = vrot.slane %v241, 2
  %v824 = vsel %vm779, %v821, %v823
  %v825 = vrot.slane %v242, 2
  %v826 = vrot.slane %v243, 2
  %v827 = vsel %vm779, %v825, %v826
  %v828 = vrot.slane %v244, 2
  %v829 = vsel %vm779, %v826, %v828
  %v830 = vrot.slane %v245, 2
  %v831 = vrot.slane %v246, 2
  %v832 = vsel %vm779, %v830, %v831
  %v833 = vrot.slane %v247, 2
  %v834 = vsel %vm779, %v831, %v833
  %v835 = vrot.slane %v248, 2
  %v836 = vrot.slane %v249, 2
  %v837 = vsel %vm779, %v835, %v836
  %v838 = vrot.slane %v250, 2
  %v839 = vsel %vm779, %v836, %v838
  %v840 = vrot.slane %v251, 2
  %v841 = vrot.slane %v252, 2
  %v842 = vsel %vm779, %v840, %v841
  %v843 = vrot.slane %v253, 2
  %v844 = vsel %vm779, %v841, %v843
  %v845 = vrot.slane %v254, 2
  %v846 = vrot.slane %v255, 2
  %v847 = vsel %vm779, %v845, %v846
  %v848 = vrot.slane %v256, 2
  %v849 = vsel %vm779, %v846, %v848
  %v850 = vrot.slane %v257, 2
  %v851 = vrot.slane %v258, 2
  %v852 = vsel %vm779, %v850, %v851
  %v853 = vrot.slane %v259, 2
  %v854 = vsel %vm779, %v851, %v853
  %v855 = vrot.slane %v260, 2
  %v856 = vrot.slane %v261, 2
  %v857 = vsel %vm779, %v855, %v856
  %v858 = vrot.slane %v262, 2
  %v859 = vsel %vm779, %v856, %v858
  %v860 = vrot.slane %v269, 2
  %v861 = vrot.slane %v270, 2
  %v862 = vsel %vm779, %v860, %v861
  %v863 = vrot.slane %v271, 2
  %v864 = vsel %vm779, %v861, %v863
  %v865 = vrot.slane %v272, 2
  %v866 = vrot.slane %v273, 2
  %v867 = vsel %vm779, %v865, %v866
  %v868 = vrot.slane %v274, 2
  %v869 = vsel %vm779, %v866, %v868
  %v870 = vrot.slane %v275, 2
  %v871 = vrot.slane %v276, 2
  %v872 = vsel %vm779, %v870, %v871
  %v873 = vrot.slane %v277, 2
  %v874 = vsel %vm779, %v871, %v873
  %v875 = vrot.slane %v278, 2
  %v876 = vrot.slane %v279, 2
  %v877 = vsel %vm779, %v875, %v876
  %v878 = vrot.slane %v280, 2
  %v879 = vsel %vm779, %v876, %v878
  %v880 = vrot.slane %v281, 2
  %v881 = vrot.slane %v282, 2
  %v882 = vsel %vm779, %v880, %v881
  %v883 = vrot.slane %v283, 2
  %v884 = vsel %vm779, %v881, %v883
  %v885 = vrot.slane %v284, 2
  %v886 = vrot.slane %v285, 2
  %v887 = vsel %vm779, %v885, %v886
  %v888 = vrot.slane %v286, 2
  %v889 = vsel %vm779, %v886, %v888
  %v890 = vrot.slane %v287, 2
  %v891 = vrot.slane %v288, 2
  %v892 = vsel %vm779, %v890, %v891
  %v893 = vrot.slane %v289, 2
  %v894 = vsel %vm779, %v891, %v893
  %v895 = vrot.slane %v290, 2
  %v896 = vrot.slane %v291, 2
  %v897 = vsel %vm779, %v895, %v896
  %v898 = vrot.slane %v292, 2
  %v899 = vsel %vm779, %v896, %v898
  %v900 = vrot.slane %v293, 2
  %v901 = vrot.slane %v294, 2
  %v902 = vsel %vm779, %v900, %v901
  %v903 = vrot.slane %v295, 2
  %v904 = vsel %vm779, %v901, %v903
  %v905 = vrot.slane %v296, 2
  %v906 = vrot.slane %v297, 2
  %v907 = vsel %vm779, %v905, %v906
  %v908 = vrot.slane %v298, 2
  %v909 = vsel %vm779, %v906, %v908
  %v910 = vrot.slane %v299, 2
  %v911 = vrot.slane %v300, 2
  %v912 = vsel %vm779, %v910, %v911
  %v913 = vrot.slane %v301, 2
  %v914 = vsel %vm779, %v911, %v913
  %v915 = vrot.slane %v302, 2
  %v916 = vrot.slane %v303, 2
  %v917 = vsel %vm779, %v915, %v916
  %v918 = vrot.slane %v304, 2
  %v919 = vsel %vm779, %v916, %v918
  %v920 = vrot.slane %v305, 2
  %v921 = vrot.slane %v306, 2
  %v922 = vsel %vm779, %v920, %v921
  %v923 = vrot.slane %v307, 2
  %v924 = vsel %vm779, %v921, %v923
  %v925 = vrot.slane %v308, 2
  %v926 = vrot.slane %v309, 2
  %v927 = vsel %vm779, %v925, %v926
  %v928 = vrot.slane %v310, 2
  %v929 = vsel %vm779, %v926, %v928
  %v930 = vrot.slane %v311, 2
  %v931 = vrot.slane %v312, 2
  %v932 = vsel %vm779, %v930, %v931
  %v933 = vrot.slane %v313, 2
  %v934 = vsel %vm779, %v931, %v933
  %v935 = vrot.slane %v314, 2
  %v936 = vrot.slane %v315, 2
  %v937 = vsel %vm779, %v935, %v936
  %v938 = vrot.slane %v316, 2
  %v939 = vsel %vm779, %v936, %v938
  %940 = vrot.lane.b32.xlu0 %v782, 8
  %v941 = vpop.permute.xlu0 %940
  %942 = vrot.lane.b32.xlu0 %v784, 8
  %v943 = vpop.permute.xlu0 %942
  %944 = vrot.lane.b32.xlu0 %v787, 8
  %v945 = vpop.permute.xlu0 %944
  %946 = vrot.lane.b32.xlu0 %v789, 8
  %v947 = vpop.permute.xlu0 %946
  %948 = vrot.lane.b32.xlu0 %v792, 8
  %v949 = vpop.permute.xlu0 %948
  %950 = vrot.lane.b32.xlu0 %v794, 8
  %v951 = vpop.permute.xlu0 %950
  %952 = vrot.lane.b32.xlu0 %v797, 8
  %v953 = vpop.permute.xlu0 %952
  %954 = vrot.lane.b32.xlu0 %v799, 8
  %v955 = vpop.permute.xlu0 %954
  %956 = vrot.lane.b32.xlu0 %v802, 8
  %v957 = vpop.permute.xlu0 %956
  %958 = vrot.lane.b32.xlu0 %v804, 8
  %v959 = vpop.permute.xlu0 %958
  %960 = vrot.lane.b32.xlu0 %v807, 8
  %v961 = vpop.permute.xlu0 %960
  %962 = vrot.lane.b32.xlu0 %v809, 8
  %v963 = vpop.permute.xlu0 %962
  %964 = vrot.lane.b32.xlu0 %v812, 8
  %v965 = vpop.permute.xlu0 %964
  %966 = vrot.lane.b32.xlu0 %v814, 8
  %v967 = vpop.permute.xlu0 %966
  %968 = vrot.lane.b32.xlu0 %v817, 8
  %v969 = vpop.permute.xlu0 %968
  %970 = vrot.lane.b32.xlu0 %v819, 8
  %v971 = vpop.permute.xlu0 %970
  %972 = vrot.lane.b32.xlu0 %v822, 8
  %v973 = vpop.permute.xlu0 %972
  %974 = vrot.lane.b32.xlu0 %v824, 8
  %v975 = vpop.permute.xlu0 %974
  %976 = vrot.lane.b32.xlu0 %v827, 8
  %v977 = vpop.permute.xlu0 %976
  %978 = vrot.lane.b32.xlu0 %v829, 8
  %v979 = vpop.permute.xlu0 %978
  %980 = vrot.lane.b32.xlu0 %v832, 8
  %v981 = vpop.permute.xlu0 %980
  %982 = vrot.lane.b32.xlu0 %v834, 8
  %v983 = vpop.permute.xlu0 %982
  %984 = vrot.lane.b32.xlu0 %v837, 8
  %v985 = vpop.permute.xlu0 %984
  %986 = vrot.lane.b32.xlu0 %v839, 8
  %v987 = vpop.permute.xlu0 %986
  %988 = vrot.lane.b32.xlu0 %v842, 8
  %v989 = vpop.permute.xlu0 %988
  %990 = vrot.lane.b32.xlu0 %v844, 8
  %v991 = vpop.permute.xlu0 %990
  %992 = vrot.lane.b32.xlu0 %v847, 8
  %v993 = vpop.permute.xlu0 %992
  %994 = vrot.lane.b32.xlu0 %v849, 8
  %v995 = vpop.permute.xlu0 %994
  %996 = vrot.lane.b32.xlu0 %v852, 8
  %v997 = vpop.permute.xlu0 %996
  %998 = vrot.lane.b32.xlu0 %v854, 8
  %v999 = vpop.permute.xlu0 %998
  %1000 = vrot.lane.b32.xlu0 %v857, 8
  %v1001 = vpop.permute.xlu0 %1000
  %1002 = vrot.lane.b32.xlu0 %v859, 8
  %v1003 = vpop.permute.xlu0 %1002
  %1004 = vrot.lane.b32.xlu0 %v862, 8
  %v1005 = vpop.permute.xlu0 %1004
  %1006 = vrot.lane.b32.xlu0 %v864, 8
  %v1007 = vpop.permute.xlu0 %1006
  %1008 = vrot.lane.b32.xlu0 %v867, 8
  %v1009 = vpop.permute.xlu0 %1008
  %1010 = vrot.lane.b32.xlu0 %v869, 8
  %v1011 = vpop.permute.xlu0 %1010
  %1012 = vrot.lane.b32.xlu0 %v872, 8
  %v1013 = vpop.permute.xlu0 %1012
  %1014 = vrot.lane.b32.xlu0 %v874, 8
  %v1015 = vpop.permute.xlu0 %1014
  %1016 = vrot.lane.b32.xlu0 %v877, 8
  %v1017 = vpop.permute.xlu0 %1016
  %1018 = vrot.lane.b32.xlu0 %v879, 8
  %v1019 = vpop.permute.xlu0 %1018
  %1020 = vrot.lane.b32.xlu0 %v882, 8
  %v1021 = vpop.permute.xlu0 %1020
  %1022 = vrot.lane.b32.xlu0 %v884, 8
  %v1023 = vpop.permute.xlu0 %1022
  %1024 = vrot.lane.b32.xlu0 %v887, 8
  %v1025 = vpop.permute.xlu0 %1024
  %1026 = vrot.lane.b32.xlu0 %v889, 8
  %v1027 = vpop.permute.xlu0 %1026
  %1028 = vrot.lane.b32.xlu0 %v892, 8
  %v1029 = vpop.permute.xlu0 %1028
  %1030 = vrot.lane.b32.xlu0 %v894, 8
  %v1031 = vpop.permute.xlu0 %1030
  %1032 = vrot.lane.b32.xlu0 %v897, 8
  %v1033 = vpop.permute.xlu0 %1032
  %1034 = vrot.lane.b32.xlu0 %v899, 8
  %v1035 = vpop.permute.xlu0 %1034
  %1036 = vrot.lane.b32.xlu0 %v902, 8
  %v1037 = vpop.permute.xlu0 %1036
  %1038 = vrot.lane.b32.xlu0 %v904, 8
  %v1039 = vpop.permute.xlu0 %1038
  %1040 = vrot.lane.b32.xlu0 %v907, 8
  %v1041 = vpop.permute.xlu0 %1040
  %1042 = vrot.lane.b32.xlu0 %v909, 8
  %v1043 = vpop.permute.xlu0 %1042
  %1044 = vrot.lane.b32.xlu0 %v912, 8
  %v1045 = vpop.permute.xlu0 %1044
  %1046 = vrot.lane.b32.xlu0 %v914, 8
  %v1047 = vpop.permute.xlu0 %1046
  %1048 = vrot.lane.b32.xlu0 %v917, 8
  %v1049 = vpop.permute.xlu0 %1048
  %1050 = vrot.lane.b32.xlu0 %v919, 8
  %v1051 = vpop.permute.xlu0 %1050
  %1052 = vrot.lane.b32.xlu0 %v922, 8
  %v1053 = vpop.permute.xlu0 %1052
  %1054 = vrot.lane.b32.xlu0 %v924, 8
  %v1055 = vpop.permute.xlu0 %1054
  %1056 = vrot.lane.b32.xlu0 %v927, 8
  %v1057 = vpop.permute.xlu0 %1056
  %1058 = vrot.lane.b32.xlu0 %v929, 8
  %v1059 = vpop.permute.xlu0 %1058
  %1060 = vrot.lane.b32.xlu0 %v932, 8
  %v1061 = vpop.permute.xlu0 %1060
  %1062 = vrot.lane.b32.xlu0 %v934, 8
  %v1063 = vpop.permute.xlu0 %1062
  %1064 = vrot.lane.b32.xlu0 %v937, 8
  %v1065 = vpop.permute.xlu0 %1064
  %1066 = vrot.lane.b32.xlu0 %v939, 8
  %v1067 = vpop.permute.xlu0 %1066
  %1136 = vrot.lane.b32.xlu0 %v218, 12
  %v1137 = vpop.permute.xlu0 %1136
  %1138 = vrot.lane.b32.xlu0 %v219, 12
  %v1139 = vpop.permute.xlu0 %1138
  %1140 = vrot.lane.b32.xlu0 %v221, 12
  %v1141 = vpop.permute.xlu0 %1140
  %1142 = vrot.lane.b32.xlu0 %v222, 12
  %v1143 = vpop.permute.xlu0 %1142
  %1144 = vrot.lane.b32.xlu0 %v224, 12
  %v1145 = vpop.permute.xlu0 %1144
  %1146 = vrot.lane.b32.xlu0 %v225, 12
  %v1147 = vpop.permute.xlu0 %1146
  %1148 = vrot.lane.b32.xlu0 %v227, 12
  %v1149 = vpop.permute.xlu0 %1148
  %1150 = vrot.lane.b32.xlu0 %v228, 12
  %v1151 = vpop.permute.xlu0 %1150
  %1152 = vrot.lane.b32.xlu0 %v230, 12
  %v1153 = vpop.permute.xlu0 %1152
  %1154 = vrot.lane.b32.xlu0 %v231, 12
  %v1155 = vpop.permute.xlu0 %1154
  %1156 = vrot.lane.b32.xlu0 %v233, 12
  %v1157 = vpop.permute.xlu0 %1156
  %1158 = vrot.lane.b32.xlu0 %v234, 12
  %v1159 = vpop.permute.xlu0 %1158
  %1160 = vrot.lane.b32.xlu0 %v236, 12
  %v1161 = vpop.permute.xlu0 %1160
  %1162 = vrot.lane.b32.xlu0 %v237, 12
  %v1163 = vpop.permute.xlu0 %1162
  %1164 = vrot.lane.b32.xlu0 %v239, 12
  %v1165 = vpop.permute.xlu0 %1164
  %1166 = vrot.lane.b32.xlu0 %v240, 12
  %v1167 = vpop.permute.xlu0 %1166
  %1168 = vrot.lane.b32.xlu0 %v242, 12
  %v1169 = vpop.permute.xlu0 %1168
  %1170 = vrot.lane.b32.xlu0 %v243, 12
  %v1171 = vpop.permute.xlu0 %1170
  %1172 = vrot.lane.b32.xlu0 %v245, 12
  %v1173 = vpop.permute.xlu0 %1172
  %1174 = vrot.lane.b32.xlu0 %v246, 12
  %v1175 = vpop.permute.xlu0 %1174
  %1176 = vrot.lane.b32.xlu0 %v248, 12
  %v1177 = vpop.permute.xlu0 %1176
  %1178 = vrot.lane.b32.xlu0 %v249, 12
  %v1179 = vpop.permute.xlu0 %1178
  %1180 = vrot.lane.b32.xlu0 %v251, 12
  %v1181 = vpop.permute.xlu0 %1180
  %1182 = vrot.lane.b32.xlu0 %v252, 12
  %v1183 = vpop.permute.xlu0 %1182
  %1184 = vrot.lane.b32.xlu0 %v254, 12
  %v1185 = vpop.permute.xlu0 %1184
  %1186 = vrot.lane.b32.xlu0 %v255, 12
  %v1187 = vpop.permute.xlu0 %1186
  %1188 = vrot.lane.b32.xlu0 %v257, 12
  %v1189 = vpop.permute.xlu0 %1188
  %1190 = vrot.lane.b32.xlu0 %v258, 12
  %v1191 = vpop.permute.xlu0 %1190
  %1192 = vrot.lane.b32.xlu0 %v260, 12
  %v1193 = vpop.permute.xlu0 %1192
  %1194 = vrot.lane.b32.xlu0 %v261, 12
  %v1195 = vpop.permute.xlu0 %1194
  %1196 = vrot.lane.b32.xlu0 %v263, 12
  %v1197 = vpop.permute.xlu0 %1196
  %1198 = vrot.lane.b32.xlu0 %v264, 12
  %v1199 = vpop.permute.xlu0 %1198
  %1200 = vrot.lane.b32.xlu0 %v272, 12
  %v1201 = vpop.permute.xlu0 %1200
  %1202 = vrot.lane.b32.xlu0 %v273, 12
  %v1203 = vpop.permute.xlu0 %1202
  %1204 = vrot.lane.b32.xlu0 %v275, 12
  %v1205 = vpop.permute.xlu0 %1204
  %1206 = vrot.lane.b32.xlu0 %v276, 12
  %v1207 = vpop.permute.xlu0 %1206
  %1208 = vrot.lane.b32.xlu0 %v278, 12
  %v1209 = vpop.permute.xlu0 %1208
  %1210 = vrot.lane.b32.xlu0 %v279, 12
  %v1211 = vpop.permute.xlu0 %1210
  %1212 = vrot.lane.b32.xlu0 %v281, 12
  %v1213 = vpop.permute.xlu0 %1212
  %1214 = vrot.lane.b32.xlu0 %v282, 12
  %v1215 = vpop.permute.xlu0 %1214
  %1216 = vrot.lane.b32.xlu0 %v284, 12
  %v1217 = vpop.permute.xlu0 %1216
  %1218 = vrot.lane.b32.xlu0 %v285, 12
  %v1219 = vpop.permute.xlu0 %1218
  %1220 = vrot.lane.b32.xlu0 %v287, 12
  %v1221 = vpop.permute.xlu0 %1220
  %1222 = vrot.lane.b32.xlu0 %v288, 12
  %v1223 = vpop.permute.xlu0 %1222
  %1224 = vrot.lane.b32.xlu0 %v290, 12
  %v1225 = vpop.permute.xlu0 %1224
  %1226 = vrot.lane.b32.xlu0 %v291, 12
  %v1227 = vpop.permute.xlu0 %1226
  %1228 = vrot.lane.b32.xlu0 %v293, 12
  %v1229 = vpop.permute.xlu0 %1228
  %1230 = vrot.lane.b32.xlu0 %v294, 12
  %v1231 = vpop.permute.xlu0 %1230
  %1232 = vrot.lane.b32.xlu0 %v296, 12
  %v1233 = vpop.permute.xlu0 %1232
  %1234 = vrot.lane.b32.xlu0 %v297, 12
  %v1235 = vpop.permute.xlu0 %1234
  %1236 = vrot.lane.b32.xlu0 %v299, 12
  %v1237 = vpop.permute.xlu0 %1236
  %1238 = vrot.lane.b32.xlu0 %v300, 12
  %v1239 = vpop.permute.xlu0 %1238
  %1240 = vrot.lane.b32.xlu0 %v302, 12
  %v1241 = vpop.permute.xlu0 %1240
  %1242 = vrot.lane.b32.xlu0 %v303, 12
  %v1243 = vpop.permute.xlu0 %1242
  %1244 = vrot.lane.b32.xlu0 %v305, 12
  %v1245 = vpop.permute.xlu0 %1244
  %1246 = vrot.lane.b32.xlu0 %v306, 12
  %v1247 = vpop.permute.xlu0 %1246
  %1248 = vrot.lane.b32.xlu0 %v308, 12
  %v1249 = vpop.permute.xlu0 %1248
  %1250 = vrot.lane.b32.xlu0 %v309, 12
  %v1251 = vpop.permute.xlu0 %1250
  %1252 = vrot.lane.b32.xlu0 %v311, 12
  %v1253 = vpop.permute.xlu0 %1252
  %1254 = vrot.lane.b32.xlu0 %v312, 12
  %v1255 = vpop.permute.xlu0 %1254
  %1256 = vrot.lane.b32.xlu0 %v314, 12
  %v1257 = vpop.permute.xlu0 %1256
  %1258 = vrot.lane.b32.xlu0 %v315, 12
  %v1259 = vpop.permute.xlu0 %1258
  %1260 = vrot.lane.b32.xlu0 %v317, 12
  %v1261 = vpop.permute.xlu0 %1260
  %1262 = vrot.lane.b32.xlu0 %v318, 12
  %v1263 = vpop.permute.xlu0 %1262
  %v1330 = vrot.slane %v263, 1
  %v1331 = vrot.slane %v264, 1
  %v1332 = vsel %vm426, %v1330, %v1331
  %v1333 = vrot.slane %v265, 1
  %v1334 = vsel %vm426, %v1331, %v1333
  %v1335 = vrot.slane %v317, 1
  %v1336 = vrot.slane %v318, 1
  %v1337 = vsel %vm426, %v1335, %v1336
  %v1338 = vrot.slane %v319, 1
  %v1339 = vsel %vm426, %v1336, %v1338
  %1340 = vrot.lane.b32.xlu0 %v434, 16
  %v1341 = vpop.permute.xlu0 %1340
  %1342 = vrot.lane.b32.xlu0 %v436, 16
  %v1343 = vpop.permute.xlu0 %1342
  %1344 = vrot.lane.b32.xlu0 %v439, 16
  %v1345 = vpop.permute.xlu0 %1344
  %1346 = vrot.lane.b32.xlu0 %v441, 16
  %v1347 = vpop.permute.xlu0 %1346
  %1348 = vrot.lane.b32.xlu0 %v444, 16
  %v1349 = vpop.permute.xlu0 %1348
  %1350 = vrot.lane.b32.xlu0 %v446, 16
  %v1351 = vpop.permute.xlu0 %1350
  %1352 = vrot.lane.b32.xlu0 %v449, 16
  %v1353 = vpop.permute.xlu0 %1352
  %1354 = vrot.lane.b32.xlu0 %v451, 16
  %v1355 = vpop.permute.xlu0 %1354
  %1356 = vrot.lane.b32.xlu0 %v454, 16
  %v1357 = vpop.permute.xlu0 %1356
  %1358 = vrot.lane.b32.xlu0 %v456, 16
  %v1359 = vpop.permute.xlu0 %1358
  %1360 = vrot.lane.b32.xlu0 %v459, 16
  %v1361 = vpop.permute.xlu0 %1360
  %1362 = vrot.lane.b32.xlu0 %v461, 16
  %v1363 = vpop.permute.xlu0 %1362
  %1364 = vrot.lane.b32.xlu0 %v464, 16
  %v1365 = vpop.permute.xlu0 %1364
  %1366 = vrot.lane.b32.xlu0 %v466, 16
  %v1367 = vpop.permute.xlu0 %1366
  %1368 = vrot.lane.b32.xlu0 %v469, 16
  %v1369 = vpop.permute.xlu0 %1368
  %1370 = vrot.lane.b32.xlu0 %v471, 16
  %v1371 = vpop.permute.xlu0 %1370
  %1372 = vrot.lane.b32.xlu0 %v474, 16
  %v1373 = vpop.permute.xlu0 %1372
  %1374 = vrot.lane.b32.xlu0 %v476, 16
  %v1375 = vpop.permute.xlu0 %1374
  %1376 = vrot.lane.b32.xlu0 %v479, 16
  %v1377 = vpop.permute.xlu0 %1376
  %1378 = vrot.lane.b32.xlu0 %v481, 16
  %v1379 = vpop.permute.xlu0 %1378
  %1380 = vrot.lane.b32.xlu0 %v484, 16
  %v1381 = vpop.permute.xlu0 %1380
  %1382 = vrot.lane.b32.xlu0 %v486, 16
  %v1383 = vpop.permute.xlu0 %1382
  %1384 = vrot.lane.b32.xlu0 %v489, 16
  %v1385 = vpop.permute.xlu0 %1384
  %1386 = vrot.lane.b32.xlu0 %v491, 16
  %v1387 = vpop.permute.xlu0 %1386
  %1388 = vrot.lane.b32.xlu0 %v494, 16
  %v1389 = vpop.permute.xlu0 %1388
  %1390 = vrot.lane.b32.xlu0 %v496, 16
  %v1391 = vpop.permute.xlu0 %1390
  %1392 = vrot.lane.b32.xlu0 %v499, 16
  %v1393 = vpop.permute.xlu0 %1392
  %1394 = vrot.lane.b32.xlu0 %v501, 16
  %v1395 = vpop.permute.xlu0 %1394
  %1396 = vrot.lane.b32.xlu0 %v504, 16
  %v1397 = vpop.permute.xlu0 %1396
  %1398 = vrot.lane.b32.xlu0 %v506, 16
  %v1399 = vpop.permute.xlu0 %1398
  %1400 = vrot.lane.b32.xlu0 %v1332, 16
  %v1401 = vpop.permute.xlu0 %1400
  %1402 = vrot.lane.b32.xlu0 %v1334, 16
  %v1403 = vpop.permute.xlu0 %1402
  %1404 = vrot.lane.b32.xlu0 %v514, 16
  %v1405 = vpop.permute.xlu0 %1404
  %1406 = vrot.lane.b32.xlu0 %v516, 16
  %v1407 = vpop.permute.xlu0 %1406
  %1408 = vrot.lane.b32.xlu0 %v519, 16
  %v1409 = vpop.permute.xlu0 %1408
  %1410 = vrot.lane.b32.xlu0 %v521, 16
  %v1411 = vpop.permute.xlu0 %1410
  %1412 = vrot.lane.b32.xlu0 %v524, 16
  %v1413 = vpop.permute.xlu0 %1412
  %1414 = vrot.lane.b32.xlu0 %v526, 16
  %v1415 = vpop.permute.xlu0 %1414
  %1416 = vrot.lane.b32.xlu0 %v529, 16
  %v1417 = vpop.permute.xlu0 %1416
  %1418 = vrot.lane.b32.xlu0 %v531, 16
  %v1419 = vpop.permute.xlu0 %1418
  %1420 = vrot.lane.b32.xlu0 %v534, 16
  %v1421 = vpop.permute.xlu0 %1420
  %1422 = vrot.lane.b32.xlu0 %v536, 16
  %v1423 = vpop.permute.xlu0 %1422
  %1424 = vrot.lane.b32.xlu0 %v539, 16
  %v1425 = vpop.permute.xlu0 %1424
  %1426 = vrot.lane.b32.xlu0 %v541, 16
  %v1427 = vpop.permute.xlu0 %1426
  %1428 = vrot.lane.b32.xlu0 %v544, 16
  %v1429 = vpop.permute.xlu0 %1428
  %1430 = vrot.lane.b32.xlu0 %v546, 16
  %v1431 = vpop.permute.xlu0 %1430
  %1432 = vrot.lane.b32.xlu0 %v549, 16
  %v1433 = vpop.permute.xlu0 %1432
  %1434 = vrot.lane.b32.xlu0 %v551, 16
  %v1435 = vpop.permute.xlu0 %1434
  %1436 = vrot.lane.b32.xlu0 %v554, 16
  %v1437 = vpop.permute.xlu0 %1436
  %1438 = vrot.lane.b32.xlu0 %v556, 16
  %v1439 = vpop.permute.xlu0 %1438
  %1440 = vrot.lane.b32.xlu0 %v559, 16
  %v1441 = vpop.permute.xlu0 %1440
  %1442 = vrot.lane.b32.xlu0 %v561, 16
  %v1443 = vpop.permute.xlu0 %1442
  %1444 = vrot.lane.b32.xlu0 %v564, 16
  %v1445 = vpop.permute.xlu0 %1444
  %1446 = vrot.lane.b32.xlu0 %v566, 16
  %v1447 = vpop.permute.xlu0 %1446
  %1448 = vrot.lane.b32.xlu0 %v569, 16
  %v1449 = vpop.permute.xlu0 %1448
  %1450 = vrot.lane.b32.xlu0 %v571, 16
  %v1451 = vpop.permute.xlu0 %1450
  %1452 = vrot.lane.b32.xlu0 %v574, 16
  %v1453 = vpop.permute.xlu0 %1452
  %1454 = vrot.lane.b32.xlu0 %v576, 16
  %v1455 = vpop.permute.xlu0 %1454
  %1456 = vrot.lane.b32.xlu0 %v579, 16
  %v1457 = vpop.permute.xlu0 %1456
  %1458 = vrot.lane.b32.xlu0 %v581, 16
  %v1459 = vpop.permute.xlu0 %1458
  %1460 = vrot.lane.b32.xlu0 %v584, 16
  %v1461 = vpop.permute.xlu0 %1460
  %1462 = vrot.lane.b32.xlu0 %v586, 16
  %v1463 = vpop.permute.xlu0 %1462
  %1464 = vrot.lane.b32.xlu0 %v1337, 16
  %v1465 = vpop.permute.xlu0 %1464
  %1466 = vrot.lane.b32.xlu0 %v1339, 16
  %v1467 = vpop.permute.xlu0 %1466
  %v1532 = vrot.slane %v263, 2
  %v1533 = vrot.slane %v264, 2
  %v1534 = vsel %vm779, %v1532, %v1533
  %v1535 = vrot.slane %v265, 2
  %v1536 = vsel %vm779, %v1533, %v1535
  %v1537 = vrot.slane %v317, 2
  %v1538 = vrot.slane %v318, 2
  %v1539 = vsel %vm779, %v1537, %v1538
  %v1540 = vrot.slane %v319, 2
  %v1541 = vsel %vm779, %v1538, %v1540
  %1542 = vrot.lane.b32.xlu0 %v787, 20
  %v1543 = vpop.permute.xlu0 %1542
  %1544 = vrot.lane.b32.xlu0 %v789, 20
  %v1545 = vpop.permute.xlu0 %1544
  %1546 = vrot.lane.b32.xlu0 %v792, 20
  %v1547 = vpop.permute.xlu0 %1546
  %1548 = vrot.lane.b32.xlu0 %v794, 20
  %v1549 = vpop.permute.xlu0 %1548
  %1550 = vrot.lane.b32.xlu0 %v797, 20
  %v1551 = vpop.permute.xlu0 %1550
  %1552 = vrot.lane.b32.xlu0 %v799, 20
  %v1553 = vpop.permute.xlu0 %1552
  %1554 = vrot.lane.b32.xlu0 %v802, 20
  %v1555 = vpop.permute.xlu0 %1554
  %1556 = vrot.lane.b32.xlu0 %v804, 20
  %v1557 = vpop.permute.xlu0 %1556
  %1558 = vrot.lane.b32.xlu0 %v807, 20
  %v1559 = vpop.permute.xlu0 %1558
  %1560 = vrot.lane.b32.xlu0 %v809, 20
  %v1561 = vpop.permute.xlu0 %1560
  %1562 = vrot.lane.b32.xlu0 %v812, 20
  %v1563 = vpop.permute.xlu0 %1562
  %1564 = vrot.lane.b32.xlu0 %v814, 20
  %v1565 = vpop.permute.xlu0 %1564
  %1566 = vrot.lane.b32.xlu0 %v817, 20
  %v1567 = vpop.permute.xlu0 %1566
  %1568 = vrot.lane.b32.xlu0 %v819, 20
  %v1569 = vpop.permute.xlu0 %1568
  %1570 = vrot.lane.b32.xlu0 %v822, 20
  %v1571 = vpop.permute.xlu0 %1570
  %1572 = vrot.lane.b32.xlu0 %v824, 20
  %v1573 = vpop.permute.xlu0 %1572
  %1574 = vrot.lane.b32.xlu0 %v827, 20
  %v1575 = vpop.permute.xlu0 %1574
  %1576 = vrot.lane.b32.xlu0 %v829, 20
  %v1577 = vpop.permute.xlu0 %1576
  %1578 = vrot.lane.b32.xlu0 %v832, 20
  %v1579 = vpop.permute.xlu0 %1578
  %1580 = vrot.lane.b32.xlu0 %v834, 20
  %v1581 = vpop.permute.xlu0 %1580
  %1582 = vrot.lane.b32.xlu0 %v837, 20
  %v1583 = vpop.permute.xlu0 %1582
  %1584 = vrot.lane.b32.xlu0 %v839, 20
  %v1585 = vpop.permute.xlu0 %1584
  %1586 = vrot.lane.b32.xlu0 %v842, 20
  %v1587 = vpop.permute.xlu0 %1586
  %1588 = vrot.lane.b32.xlu0 %v844, 20
  %v1589 = vpop.permute.xlu0 %1588
  %1590 = vrot.lane.b32.xlu0 %v847, 20
  %v1591 = vpop.permute.xlu0 %1590
  %1592 = vrot.lane.b32.xlu0 %v849, 20
  %v1593 = vpop.permute.xlu0 %1592
  %1594 = vrot.lane.b32.xlu0 %v852, 20
  %v1595 = vpop.permute.xlu0 %1594
  %1596 = vrot.lane.b32.xlu0 %v854, 20
  %v1597 = vpop.permute.xlu0 %1596
  %1598 = vrot.lane.b32.xlu0 %v857, 20
  %v1599 = vpop.permute.xlu0 %1598
  %1600 = vrot.lane.b32.xlu0 %v859, 20
  %v1601 = vpop.permute.xlu0 %1600
  %1602 = vrot.lane.b32.xlu0 %v1534, 20
  %v1603 = vpop.permute.xlu0 %1602
  %1604 = vrot.lane.b32.xlu0 %v1536, 20
  %v1605 = vpop.permute.xlu0 %1604
  %1606 = vrot.lane.b32.xlu0 %v867, 20
  %v1607 = vpop.permute.xlu0 %1606
  %1608 = vrot.lane.b32.xlu0 %v869, 20
  %v1609 = vpop.permute.xlu0 %1608
  %1610 = vrot.lane.b32.xlu0 %v872, 20
  %v1611 = vpop.permute.xlu0 %1610
  %1612 = vrot.lane.b32.xlu0 %v874, 20
  %v1613 = vpop.permute.xlu0 %1612
  %1614 = vrot.lane.b32.xlu0 %v877, 20
  %v1615 = vpop.permute.xlu0 %1614
  %1616 = vrot.lane.b32.xlu0 %v879, 20
  %v1617 = vpop.permute.xlu0 %1616
  %1618 = vrot.lane.b32.xlu0 %v882, 20
  %v1619 = vpop.permute.xlu0 %1618
  %1620 = vrot.lane.b32.xlu0 %v884, 20
  %v1621 = vpop.permute.xlu0 %1620
  %1622 = vrot.lane.b32.xlu0 %v887, 20
  %v1623 = vpop.permute.xlu0 %1622
  %1624 = vrot.lane.b32.xlu0 %v889, 20
  %v1625 = vpop.permute.xlu0 %1624
  %1626 = vrot.lane.b32.xlu0 %v892, 20
  %v1627 = vpop.permute.xlu0 %1626
  %1628 = vrot.lane.b32.xlu0 %v894, 20
  %v1629 = vpop.permute.xlu0 %1628
  %1630 = vrot.lane.b32.xlu0 %v897, 20
  %v1631 = vpop.permute.xlu0 %1630
  %1632 = vrot.lane.b32.xlu0 %v899, 20
  %v1633 = vpop.permute.xlu0 %1632
  %1634 = vrot.lane.b32.xlu0 %v902, 20
  %v1635 = vpop.permute.xlu0 %1634
  %1636 = vrot.lane.b32.xlu0 %v904, 20
  %v1637 = vpop.permute.xlu0 %1636
  %1638 = vrot.lane.b32.xlu0 %v907, 20
  %v1639 = vpop.permute.xlu0 %1638
  %1640 = vrot.lane.b32.xlu0 %v909, 20
  %v1641 = vpop.permute.xlu0 %1640
  %1642 = vrot.lane.b32.xlu0 %v912, 20
  %v1643 = vpop.permute.xlu0 %1642
  %1644 = vrot.lane.b32.xlu0 %v914, 20
  %v1645 = vpop.permute.xlu0 %1644
  %1646 = vrot.lane.b32.xlu0 %v917, 20
  %v1647 = vpop.permute.xlu0 %1646
  %1648 = vrot.lane.b32.xlu0 %v919, 20
  %v1649 = vpop.permute.xlu0 %1648
  %1650 = vrot.lane.b32.xlu0 %v922, 20
  %v1651 = vpop.permute.xlu0 %1650
  %1652 = vrot.lane.b32.xlu0 %v924, 20
  %v1653 = vpop.permute.xlu0 %1652
  %1654 = vrot.lane.b32.xlu0 %v927, 20
  %v1655 = vpop.permute.xlu0 %1654
  %1656 = vrot.lane.b32.xlu0 %v929, 20
  %v1657 = vpop.permute.xlu0 %1656
  %1658 = vrot.lane.b32.xlu0 %v932, 20
  %v1659 = vpop.permute.xlu0 %1658
  %1660 = vrot.lane.b32.xlu0 %v934, 20
  %v1661 = vpop.permute.xlu0 %1660
  %1662 = vrot.lane.b32.xlu0 %v937, 20
  %v1663 = vpop.permute.xlu0 %1662
  %1664 = vrot.lane.b32.xlu0 %v939, 20
  %v1665 = vpop.permute.xlu0 %1664
  %1666 = vrot.lane.b32.xlu0 %v1539, 20
  %v1667 = vpop.permute.xlu0 %1666
  %1668 = vrot.lane.b32.xlu0 %v1541, 20
  %v1669 = vpop.permute.xlu0 %1668
  %1738 = vrot.lane.b32.xlu0 %v221, 24
  %v1739 = vpop.permute.xlu0 %1738
  %1740 = vrot.lane.b32.xlu0 %v222, 24
  %v1741 = vpop.permute.xlu0 %1740
  %1742 = vrot.lane.b32.xlu0 %v224, 24
  %v1743 = vpop.permute.xlu0 %1742
  %1744 = vrot.lane.b32.xlu0 %v225, 24
  %v1745 = vpop.permute.xlu0 %1744
  %1746 = vrot.lane.b32.xlu0 %v227, 24
  %v1747 = vpop.permute.xlu0 %1746
  %1748 = vrot.lane.b32.xlu0 %v228, 24
  %v1749 = vpop.permute.xlu0 %1748
  %1750 = vrot.lane.b32.xlu0 %v230, 24
  %v1751 = vpop.permute.xlu0 %1750
  %1752 = vrot.lane.b32.xlu0 %v231, 24
  %v1753 = vpop.permute.xlu0 %1752
  %1754 = vrot.lane.b32.xlu0 %v233, 24
  %v1755 = vpop.permute.xlu0 %1754
  %1756 = vrot.lane.b32.xlu0 %v234, 24
  %v1757 = vpop.permute.xlu0 %1756
  %1758 = vrot.lane.b32.xlu0 %v236, 24
  %v1759 = vpop.permute.xlu0 %1758
  %1760 = vrot.lane.b32.xlu0 %v237, 24
  %v1761 = vpop.permute.xlu0 %1760
  %1762 = vrot.lane.b32.xlu0 %v239, 24
  %v1763 = vpop.permute.xlu0 %1762
  %1764 = vrot.lane.b32.xlu0 %v240, 24
  %v1765 = vpop.permute.xlu0 %1764
  %1766 = vrot.lane.b32.xlu0 %v242, 24
  %v1767 = vpop.permute.xlu0 %1766
  %1768 = vrot.lane.b32.xlu0 %v243, 24
  %v1769 = vpop.permute.xlu0 %1768
  %1770 = vrot.lane.b32.xlu0 %v245, 24
  %v1771 = vpop.permute.xlu0 %1770
  %1772 = vrot.lane.b32.xlu0 %v246, 24
  %v1773 = vpop.permute.xlu0 %1772
  %1774 = vrot.lane.b32.xlu0 %v248, 24
  %v1775 = vpop.permute.xlu0 %1774
  %1776 = vrot.lane.b32.xlu0 %v249, 24
  %v1777 = vpop.permute.xlu0 %1776
  %1778 = vrot.lane.b32.xlu0 %v251, 24
  %v1779 = vpop.permute.xlu0 %1778
  %1780 = vrot.lane.b32.xlu0 %v252, 24
  %v1781 = vpop.permute.xlu0 %1780
  %1782 = vrot.lane.b32.xlu0 %v254, 24
  %v1783 = vpop.permute.xlu0 %1782
  %1784 = vrot.lane.b32.xlu0 %v255, 24
  %v1785 = vpop.permute.xlu0 %1784
  %1786 = vrot.lane.b32.xlu0 %v257, 24
  %v1787 = vpop.permute.xlu0 %1786
  %1788 = vrot.lane.b32.xlu0 %v258, 24
  %v1789 = vpop.permute.xlu0 %1788
  %1790 = vrot.lane.b32.xlu0 %v260, 24
  %v1791 = vpop.permute.xlu0 %1790
  %1792 = vrot.lane.b32.xlu0 %v261, 24
  %v1793 = vpop.permute.xlu0 %1792
  %1794 = vrot.lane.b32.xlu0 %v263, 24
  %v1795 = vpop.permute.xlu0 %1794
  %1796 = vrot.lane.b32.xlu0 %v264, 24
  %v1797 = vpop.permute.xlu0 %1796
  %1798 = vrot.lane.b32.xlu0 %v266, 24
  %v1799 = vpop.permute.xlu0 %1798
  %1800 = vrot.lane.b32.xlu0 %v267, 24
  %v1801 = vpop.permute.xlu0 %1800
  %1802 = vrot.lane.b32.xlu0 %v275, 24
  %v1803 = vpop.permute.xlu0 %1802
  %1804 = vrot.lane.b32.xlu0 %v276, 24
  %v1805 = vpop.permute.xlu0 %1804
  %1806 = vrot.lane.b32.xlu0 %v278, 24
  %v1807 = vpop.permute.xlu0 %1806
  %1808 = vrot.lane.b32.xlu0 %v279, 24
  %v1809 = vpop.permute.xlu0 %1808
  %1810 = vrot.lane.b32.xlu0 %v281, 24
  %v1811 = vpop.permute.xlu0 %1810
  %1812 = vrot.lane.b32.xlu0 %v282, 24
  %v1813 = vpop.permute.xlu0 %1812
  %1814 = vrot.lane.b32.xlu0 %v284, 24
  %v1815 = vpop.permute.xlu0 %1814
  %1816 = vrot.lane.b32.xlu0 %v285, 24
  %v1817 = vpop.permute.xlu0 %1816
  %1818 = vrot.lane.b32.xlu0 %v287, 24
  %v1819 = vpop.permute.xlu0 %1818
  %1820 = vrot.lane.b32.xlu0 %v288, 24
  %v1821 = vpop.permute.xlu0 %1820
  %1822 = vrot.lane.b32.xlu0 %v290, 24
  %v1823 = vpop.permute.xlu0 %1822
  %1824 = vrot.lane.b32.xlu0 %v291, 24
  %v1825 = vpop.permute.xlu0 %1824
  %1826 = vrot.lane.b32.xlu0 %v293, 24
  %v1827 = vpop.permute.xlu0 %1826
  %1828 = vrot.lane.b32.xlu0 %v294, 24
  %v1829 = vpop.permute.xlu0 %1828
  %1830 = vrot.lane.b32.xlu0 %v296, 24
  %v1831 = vpop.permute.xlu0 %1830
  %1832 = vrot.lane.b32.xlu0 %v297, 24
  %v1833 = vpop.permute.xlu0 %1832
  %1834 = vrot.lane.b32.xlu0 %v299, 24
  %v1835 = vpop.permute.xlu0 %1834
  %1836 = vrot.lane.b32.xlu0 %v300, 24
  %v1837 = vpop.permute.xlu0 %1836
  %1838 = vrot.lane.b32.xlu0 %v302, 24
  %v1839 = vpop.permute.xlu0 %1838
  %1840 = vrot.lane.b32.xlu0 %v303, 24
  %v1841 = vpop.permute.xlu0 %1840
  %1842 = vrot.lane.b32.xlu0 %v305, 24
  %v1843 = vpop.permute.xlu0 %1842
  %1844 = vrot.lane.b32.xlu0 %v306, 24
  %v1845 = vpop.permute.xlu0 %1844
  %1846 = vrot.lane.b32.xlu0 %v308, 24
  %v1847 = vpop.permute.xlu0 %1846
  %1848 = vrot.lane.b32.xlu0 %v309, 24
  %v1849 = vpop.permute.xlu0 %1848
  %1850 = vrot.lane.b32.xlu0 %v311, 24
  %v1851 = vpop.permute.xlu0 %1850
  %1852 = vrot.lane.b32.xlu0 %v312, 24
  %v1853 = vpop.permute.xlu0 %1852
  %1854 = vrot.lane.b32.xlu0 %v314, 24
  %v1855 = vpop.permute.xlu0 %1854
  %1856 = vrot.lane.b32.xlu0 %v315, 24
  %v1857 = vpop.permute.xlu0 %1856
  %1858 = vrot.lane.b32.xlu0 %v317, 24
  %v1859 = vpop.permute.xlu0 %1858
  %1860 = vrot.lane.b32.xlu0 %v318, 24
  %v1861 = vpop.permute.xlu0 %1860
  %1862 = vrot.lane.b32.xlu0 %v320, 24
  %v1863 = vpop.permute.xlu0 %1862
  %1864 = vrot.lane.b32.xlu0 %v321, 24
  %v1865 = vpop.permute.xlu0 %1864
  %v1932 = vrot.slane %v266, 1
  %v1933 = vrot.slane %v267, 1
  %v1934 = vsel %vm426, %v1932, %v1933
  %v1935 = vrot.slane %v268, 1
  %v1936 = vsel %vm426, %v1933, %v1935
  %v1937 = vrot.slane %v320, 1
  %v1938 = vrot.slane %v321, 1
  %v1939 = vsel %vm426, %v1937, %v1938
  %v1940 = vrot.slane %v322, 1
  %v1941 = vsel %vm426, %v1938, %v1940
  %1942 = vrot.lane.b32.xlu0 %v439, 28
  %v1943 = vpop.permute.xlu0 %1942
  %1944 = vrot.lane.b32.xlu0 %v441, 28
  %v1945 = vpop.permute.xlu0 %1944
  %1946 = vrot.lane.b32.xlu0 %v444, 28
  %v1947 = vpop.permute.xlu0 %1946
  %1948 = vrot.lane.b32.xlu0 %v446, 28
  %v1949 = vpop.permute.xlu0 %1948
  %1950 = vrot.lane.b32.xlu0 %v449, 28
  %v1951 = vpop.permute.xlu0 %1950
  %1952 = vrot.lane.b32.xlu0 %v451, 28
  %v1953 = vpop.permute.xlu0 %1952
  %1954 = vrot.lane.b32.xlu0 %v454, 28
  %v1955 = vpop.permute.xlu0 %1954
  %1956 = vrot.lane.b32.xlu0 %v456, 28
  %v1957 = vpop.permute.xlu0 %1956
  %1958 = vrot.lane.b32.xlu0 %v459, 28
  %v1959 = vpop.permute.xlu0 %1958
  %1960 = vrot.lane.b32.xlu0 %v461, 28
  %v1961 = vpop.permute.xlu0 %1960
  %1962 = vrot.lane.b32.xlu0 %v464, 28
  %v1963 = vpop.permute.xlu0 %1962
  %1964 = vrot.lane.b32.xlu0 %v466, 28
  %v1965 = vpop.permute.xlu0 %1964
  %1966 = vrot.lane.b32.xlu0 %v469, 28
  %v1967 = vpop.permute.xlu0 %1966
  %1968 = vrot.lane.b32.xlu0 %v471, 28
  %v1969 = vpop.permute.xlu0 %1968
  %1970 = vrot.lane.b32.xlu0 %v474, 28
  %v1971 = vpop.permute.xlu0 %1970
  %1972 = vrot.lane.b32.xlu0 %v476, 28
  %v1973 = vpop.permute.xlu0 %1972
  %1974 = vrot.lane.b32.xlu0 %v479, 28
  %v1975 = vpop.permute.xlu0 %1974
  %1976 = vrot.lane.b32.xlu0 %v481, 28
  %v1977 = vpop.permute.xlu0 %1976
  %1978 = vrot.lane.b32.xlu0 %v484, 28
  %v1979 = vpop.permute.xlu0 %1978
  %1980 = vrot.lane.b32.xlu0 %v486, 28
  %v1981 = vpop.permute.xlu0 %1980
  %1982 = vrot.lane.b32.xlu0 %v489, 28
  %v1983 = vpop.permute.xlu0 %1982
  %1984 = vrot.lane.b32.xlu0 %v491, 28
  %v1985 = vpop.permute.xlu0 %1984
  %1986 = vrot.lane.b32.xlu0 %v494, 28
  %v1987 = vpop.permute.xlu0 %1986
  %1988 = vrot.lane.b32.xlu0 %v496, 28
  %v1989 = vpop.permute.xlu0 %1988
  %1990 = vrot.lane.b32.xlu0 %v499, 28
  %v1991 = vpop.permute.xlu0 %1990
  %1992 = vrot.lane.b32.xlu0 %v501, 28
  %v1993 = vpop.permute.xlu0 %1992
  %1994 = vrot.lane.b32.xlu0 %v504, 28
  %v1995 = vpop.permute.xlu0 %1994
  %1996 = vrot.lane.b32.xlu0 %v506, 28
  %v1997 = vpop.permute.xlu0 %1996
  %1998 = vrot.lane.b32.xlu0 %v1332, 28
  %v1999 = vpop.permute.xlu0 %1998
  %2000 = vrot.lane.b32.xlu0 %v1334, 28
  %v2001 = vpop.permute.xlu0 %2000
  %2002 = vrot.lane.b32.xlu0 %v1934, 28
  %v2003 = vpop.permute.xlu0 %2002
  %2004 = vrot.lane.b32.xlu0 %v1936, 28
  %v2005 = vpop.permute.xlu0 %2004
  %2006 = vrot.lane.b32.xlu0 %v519, 28
  %v2007 = vpop.permute.xlu0 %2006
  %2008 = vrot.lane.b32.xlu0 %v521, 28
  %v2009 = vpop.permute.xlu0 %2008
  %2010 = vrot.lane.b32.xlu0 %v524, 28
  %v2011 = vpop.permute.xlu0 %2010
  %2012 = vrot.lane.b32.xlu0 %v526, 28
  %v2013 = vpop.permute.xlu0 %2012
  %2014 = vrot.lane.b32.xlu0 %v529, 28
  %v2015 = vpop.permute.xlu0 %2014
  %2016 = vrot.lane.b32.xlu0 %v531, 28
  %v2017 = vpop.permute.xlu0 %2016
  %2018 = vrot.lane.b32.xlu0 %v534, 28
  %v2019 = vpop.permute.xlu0 %2018
  %2020 = vrot.lane.b32.xlu0 %v536, 28
  %v2021 = vpop.permute.xlu0 %2020
  %2022 = vrot.lane.b32.xlu0 %v539, 28
  %v2023 = vpop.permute.xlu0 %2022
  %2024 = vrot.lane.b32.xlu0 %v541, 28
  %v2025 = vpop.permute.xlu0 %2024
  %2026 = vrot.lane.b32.xlu0 %v544, 28
  %v2027 = vpop.permute.xlu0 %2026
  %2028 = vrot.lane.b32.xlu0 %v546, 28
  %v2029 = vpop.permute.xlu0 %2028
  %2030 = vrot.lane.b32.xlu0 %v549, 28
  %v2031 = vpop.permute.xlu0 %2030
  %2032 = vrot.lane.b32.xlu0 %v551, 28
  %v2033 = vpop.permute.xlu0 %2032
  %2034 = vrot.lane.b32.xlu0 %v554, 28
  %v2035 = vpop.permute.xlu0 %2034
  %2036 = vrot.lane.b32.xlu0 %v556, 28
  %v2037 = vpop.permute.xlu0 %2036
  %2038 = vrot.lane.b32.xlu0 %v559, 28
  %v2039 = vpop.permute.xlu0 %2038
  %2040 = vrot.lane.b32.xlu0 %v561, 28
  %v2041 = vpop.permute.xlu0 %2040
  %2042 = vrot.lane.b32.xlu0 %v564, 28
  %v2043 = vpop.permute.xlu0 %2042
  %2044 = vrot.lane.b32.xlu0 %v566, 28
  %v2045 = vpop.permute.xlu0 %2044
  %2046 = vrot.lane.b32.xlu0 %v569, 28
  %v2047 = vpop.permute.xlu0 %2046
  %2048 = vrot.lane.b32.xlu0 %v571, 28
  %v2049 = vpop.permute.xlu0 %2048
  %2050 = vrot.lane.b32.xlu0 %v574, 28
  %v2051 = vpop.permute.xlu0 %2050
  %2052 = vrot.lane.b32.xlu0 %v576, 28
  %v2053 = vpop.permute.xlu0 %2052
  %2054 = vrot.lane.b32.xlu0 %v579, 28
  %v2055 = vpop.permute.xlu0 %2054
  %2056 = vrot.lane.b32.xlu0 %v581, 28
  %v2057 = vpop.permute.xlu0 %2056
  %2058 = vrot.lane.b32.xlu0 %v584, 28
  %v2059 = vpop.permute.xlu0 %2058
  %2060 = vrot.lane.b32.xlu0 %v586, 28
  %v2061 = vpop.permute.xlu0 %2060
  %2062 = vrot.lane.b32.xlu0 %v1337, 28
  %v2063 = vpop.permute.xlu0 %2062
  %2064 = vrot.lane.b32.xlu0 %v1339, 28
  %v2065 = vpop.permute.xlu0 %2064
  %2066 = vrot.lane.b32.xlu0 %v1939, 28
  %v2067 = vpop.permute.xlu0 %2066
  %2068 = vrot.lane.b32.xlu0 %v1941, 28
  %v2069 = vpop.permute.xlu0 %2068
  %v2134 = vrot.slane %v266, 2
  %v2135 = vrot.slane %v267, 2
  %v2136 = vsel %vm779, %v2134, %v2135
  %v2137 = vrot.slane %v268, 2
  %v2138 = vsel %vm779, %v2135, %v2137
  %v2139 = vrot.slane %v320, 2
  %v2140 = vrot.slane %v321, 2
  %v2141 = vsel %vm779, %v2139, %v2140
  %v2142 = vrot.slane %v322, 2
  %v2143 = vsel %vm779, %v2140, %v2142
  %2144 = vrot.lane.b32.xlu0 %v792, 32
  %v2145 = vpop.permute.xlu0 %2144
  %2146 = vrot.lane.b32.xlu0 %v794, 32
  %v2147 = vpop.permute.xlu0 %2146
  %2148 = vrot.lane.b32.xlu0 %v797, 32
  %v2149 = vpop.permute.xlu0 %2148
  %2150 = vrot.lane.b32.xlu0 %v799, 32
  %v2151 = vpop.permute.xlu0 %2150
  %2152 = vrot.lane.b32.xlu0 %v802, 32
  %v2153 = vpop.permute.xlu0 %2152
  %2154 = vrot.lane.b32.xlu0 %v804, 32
  %v2155 = vpop.permute.xlu0 %2154
  %2156 = vrot.lane.b32.xlu0 %v807, 32
  %v2157 = vpop.permute.xlu0 %2156
  %2158 = vrot.lane.b32.xlu0 %v809, 32
  %v2159 = vpop.permute.xlu0 %2158
  %2160 = vrot.lane.b32.xlu0 %v812, 32
  %v2161 = vpop.permute.xlu0 %2160
  %2162 = vrot.lane.b32.xlu0 %v814, 32
  %v2163 = vpop.permute.xlu0 %2162
  %2164 = vrot.lane.b32.xlu0 %v817, 32
  %v2165 = vpop.permute.xlu0 %2164
  %2166 = vrot.lane.b32.xlu0 %v819, 32
  %v2167 = vpop.permute.xlu0 %2166
  %2168 = vrot.lane.b32.xlu0 %v822, 32
  %v2169 = vpop.permute.xlu0 %2168
  %2170 = vrot.lane.b32.xlu0 %v824, 32
  %v2171 = vpop.permute.xlu0 %2170
  %2172 = vrot.lane.b32.xlu0 %v827, 32
  %v2173 = vpop.permute.xlu0 %2172
  %2174 = vrot.lane.b32.xlu0 %v829, 32
  %v2175 = vpop.permute.xlu0 %2174
  %2176 = vrot.lane.b32.xlu0 %v832, 32
  %v2177 = vpop.permute.xlu0 %2176
  %2178 = vrot.lane.b32.xlu0 %v834, 32
  %v2179 = vpop.permute.xlu0 %2178
  %2180 = vrot.lane.b32.xlu0 %v837, 32
  %v2181 = vpop.permute.xlu0 %2180
  %2182 = vrot.lane.b32.xlu0 %v839, 32
  %v2183 = vpop.permute.xlu0 %2182
  %2184 = vrot.lane.b32.xlu0 %v842, 32
  %v2185 = vpop.permute.xlu0 %2184
  %2186 = vrot.lane.b32.xlu0 %v844, 32
  %v2187 = vpop.permute.xlu0 %2186
  %2188 = vrot.lane.b32.xlu0 %v847, 32
  %v2189 = vpop.permute.xlu0 %2188
  %2190 = vrot.lane.b32.xlu0 %v849, 32
  %v2191 = vpop.permute.xlu0 %2190
  %2192 = vrot.lane.b32.xlu0 %v852, 32
  %v2193 = vpop.permute.xlu0 %2192
  %2194 = vrot.lane.b32.xlu0 %v854, 32
  %v2195 = vpop.permute.xlu0 %2194
  %2196 = vrot.lane.b32.xlu0 %v857, 32
  %v2197 = vpop.permute.xlu0 %2196
  %2198 = vrot.lane.b32.xlu0 %v859, 32
  %v2199 = vpop.permute.xlu0 %2198
  %2200 = vrot.lane.b32.xlu0 %v1534, 32
  %v2201 = vpop.permute.xlu0 %2200
  %2202 = vrot.lane.b32.xlu0 %v1536, 32
  %v2203 = vpop.permute.xlu0 %2202
  %2204 = vrot.lane.b32.xlu0 %v2136, 32
  %v2205 = vpop.permute.xlu0 %2204
  %2206 = vrot.lane.b32.xlu0 %v2138, 32
  %v2207 = vpop.permute.xlu0 %2206
  %2208 = vrot.lane.b32.xlu0 %v872, 32
  %v2209 = vpop.permute.xlu0 %2208
  %2210 = vrot.lane.b32.xlu0 %v874, 32
  %v2211 = vpop.permute.xlu0 %2210
  %2212 = vrot.lane.b32.xlu0 %v877, 32
  %v2213 = vpop.permute.xlu0 %2212
  %2214 = vrot.lane.b32.xlu0 %v879, 32
  %v2215 = vpop.permute.xlu0 %2214
  %2216 = vrot.lane.b32.xlu0 %v882, 32
  %v2217 = vpop.permute.xlu0 %2216
  %2218 = vrot.lane.b32.xlu0 %v884, 32
  %v2219 = vpop.permute.xlu0 %2218
  %2220 = vrot.lane.b32.xlu0 %v887, 32
  %v2221 = vpop.permute.xlu0 %2220
  %2222 = vrot.lane.b32.xlu0 %v889, 32
  %v2223 = vpop.permute.xlu0 %2222
  %2224 = vrot.lane.b32.xlu0 %v892, 32
  %v2225 = vpop.permute.xlu0 %2224
  %2226 = vrot.lane.b32.xlu0 %v894, 32
  %v2227 = vpop.permute.xlu0 %2226
  %2228 = vrot.lane.b32.xlu0 %v897, 32
  %v2229 = vpop.permute.xlu0 %2228
  %2230 = vrot.lane.b32.xlu0 %v899, 32
  %v2231 = vpop.permute.xlu0 %2230
  %2232 = vrot.lane.b32.xlu0 %v902, 32
  %v2233 = vpop.permute.xlu0 %2232
  %2234 = vrot.lane.b32.xlu0 %v904, 32
  %v2235 = vpop.permute.xlu0 %2234
  %2236 = vrot.lane.b32.xlu0 %v907, 32
  %v2237 = vpop.permute.xlu0 %2236
  %2238 = vrot.lane.b32.xlu0 %v909, 32
  %v2239 = vpop.permute.xlu0 %2238
  %2240 = vrot.lane.b32.xlu0 %v912, 32
  %v2241 = vpop.permute.xlu0 %2240
  %2242 = vrot.lane.b32.xlu0 %v914, 32
  %v2243 = vpop.permute.xlu0 %2242
  %2244 = vrot.lane.b32.xlu0 %v917, 32
  %v2245 = vpop.permute.xlu0 %2244
  %2246 = vrot.lane.b32.xlu0 %v919, 32
  %v2247 = vpop.permute.xlu0 %2246
  %2248 = vrot.lane.b32.xlu0 %v922, 32
  %v2249 = vpop.permute.xlu0 %2248
  %2250 = vrot.lane.b32.xlu0 %v924, 32
  %v2251 = vpop.permute.xlu0 %2250
  %2252 = vrot.lane.b32.xlu0 %v927, 32
  %v2253 = vpop.permute.xlu0 %2252
  %2254 = vrot.lane.b32.xlu0 %v929, 32
  %v2255 = vpop.permute.xlu0 %2254
  %2256 = vrot.lane.b32.xlu0 %v932, 32
  %v2257 = vpop.permute.xlu0 %2256
  %2258 = vrot.lane.b32.xlu0 %v934, 32
  %v2259 = vpop.permute.xlu0 %2258
  %2260 = vrot.lane.b32.xlu0 %v937, 32
  %v2261 = vpop.permute.xlu0 %2260
  %2262 = vrot.lane.b32.xlu0 %v939, 32
  %v2263 = vpop.permute.xlu0 %2262
  %2264 = vrot.lane.b32.xlu0 %v1539, 32
  %v2265 = vpop.permute.xlu0 %2264
  %2266 = vrot.lane.b32.xlu0 %v1541, 32
  %v2267 = vpop.permute.xlu0 %2266
  %2268 = vrot.lane.b32.xlu0 %v2141, 32
  %v2269 = vpop.permute.xlu0 %2268
  %2270 = vrot.lane.b32.xlu0 %v2143, 32
  %v2271 = vpop.permute.xlu0 %2270
  %vm2336 = vcmask 31744
  %v2337 = vsel %vm2336, %v215, %v588
  %v2338 = vsel %vm2336, %v216, %v590
  %v2339 = vsel %vm2336, %v218, %v592
  %v2340 = vsel %vm2336, %v219, %v594
  %v2341 = vsel %vm2336, %v221, %v596
  %v2342 = vsel %vm2336, %v222, %v598
  %v2343 = vsel %vm2336, %v224, %v600
  %v2344 = vsel %vm2336, %v225, %v602
  %v2345 = vsel %vm2336, %v227, %v604
  %v2346 = vsel %vm2336, %v228, %v606
  %v2347 = vsel %vm2336, %v230, %v608
  %v2348 = vsel %vm2336, %v231, %v610
  %v2349 = vsel %vm2336, %v233, %v612
  %v2350 = vsel %vm2336, %v234, %v614
  %v2351 = vsel %vm2336, %v236, %v616
  %v2352 = vsel %vm2336, %v237, %v618
  %v2353 = vsel %vm2336, %v239, %v620
  %v2354 = vsel %vm2336, %v240, %v622
  %v2355 = vsel %vm2336, %v242, %v624
  %v2356 = vsel %vm2336, %v243, %v626
  %v2357 = vsel %vm2336, %v245, %v628
  %v2358 = vsel %vm2336, %v246, %v630
  %v2359 = vsel %vm2336, %v248, %v632
  %v2360 = vsel %vm2336, %v249, %v634
  %v2361 = vsel %vm2336, %v251, %v636
  %v2362 = vsel %vm2336, %v252, %v638
  %v2363 = vsel %vm2336, %v254, %v640
  %v2364 = vsel %vm2336, %v255, %v642
  %v2365 = vsel %vm2336, %v257, %v644
  %v2366 = vsel %vm2336, %v258, %v646
  %v2367 = vsel %vm2336, %v260, %v648
  %v2368 = vsel %vm2336, %v261, %v650
  %v2369 = vsel %vm2336, %v269, %v652
  %v2370 = vsel %vm2336, %v270, %v654
  %v2371 = vsel %vm2336, %v272, %v656
  %v2372 = vsel %vm2336, %v273, %v658
  %v2373 = vsel %vm2336, %v275, %v660
  %v2374 = vsel %vm2336, %v276, %v662
  %v2375 = vsel %vm2336, %v278, %v664
  %v2376 = vsel %vm2336, %v279, %v666
  %v2377 = vsel %vm2336, %v281, %v668
  %v2378 = vsel %vm2336, %v282, %v670
  %v2379 = vsel %vm2336, %v284, %v672
  %v2380 = vsel %vm2336, %v285, %v674
  %v2381 = vsel %vm2336, %v287, %v676
  %v2382 = vsel %vm2336, %v288, %v678
  %v2383 = vsel %vm2336, %v290, %v680
  %v2384 = vsel %vm2336, %v291, %v682
  %v2385 = vsel %vm2336, %v293, %v684
  %v2386 = vsel %vm2336, %v294, %v686
  %v2387 = vsel %vm2336, %v296, %v688
  %v2388 = vsel %vm2336, %v297, %v690
  %v2389 = vsel %vm2336, %v299, %v692
  %v2390 = vsel %vm2336, %v300, %v694
  %v2391 = vsel %vm2336, %v302, %v696
  %v2392 = vsel %vm2336, %v303, %v698
  %v2393 = vsel %vm2336, %v305, %v700
  %v2394 = vsel %vm2336, %v306, %v702
  %v2395 = vsel %vm2336, %v308, %v704
  %v2396 = vsel %vm2336, %v309, %v706
  %v2397 = vsel %vm2336, %v311, %v708
  %v2398 = vsel %vm2336, %v312, %v710
  %v2399 = vsel %vm2336, %v314, %v712
  %v2400 = vsel %vm2336, %v315, %v714
  %v2401 = vsel %vm127, %v2337, %v941
  %v2402 = vsel %vm127, %v2338, %v943
  %v2403 = vsel %vm127, %v2339, %v945
  %v2404 = vsel %vm127, %v2340, %v947
  %v2405 = vsel %vm127, %v2341, %v949
  %v2406 = vsel %vm127, %v2342, %v951
  %v2407 = vsel %vm127, %v2343, %v953
  %v2408 = vsel %vm127, %v2344, %v955
  %v2409 = vsel %vm127, %v2345, %v957
  %v2410 = vsel %vm127, %v2346, %v959
  %v2411 = vsel %vm127, %v2347, %v961
  %v2412 = vsel %vm127, %v2348, %v963
  %v2413 = vsel %vm127, %v2349, %v965
  %v2414 = vsel %vm127, %v2350, %v967
  %v2415 = vsel %vm127, %v2351, %v969
  %v2416 = vsel %vm127, %v2352, %v971
  %v2417 = vsel %vm127, %v2353, %v973
  %v2418 = vsel %vm127, %v2354, %v975
  %v2419 = vsel %vm127, %v2355, %v977
  %v2420 = vsel %vm127, %v2356, %v979
  %v2421 = vsel %vm127, %v2357, %v981
  %v2422 = vsel %vm127, %v2358, %v983
  %v2423 = vsel %vm127, %v2359, %v985
  %v2424 = vsel %vm127, %v2360, %v987
  %v2425 = vsel %vm127, %v2361, %v989
  %v2426 = vsel %vm127, %v2362, %v991
  %v2427 = vsel %vm127, %v2363, %v993
  %v2428 = vsel %vm127, %v2364, %v995
  %v2429 = vsel %vm127, %v2365, %v997
  %v2430 = vsel %vm127, %v2366, %v999
  %v2431 = vsel %vm127, %v2367, %v1001
  %v2432 = vsel %vm127, %v2368, %v1003
  %v2433 = vsel %vm127, %v2369, %v1005
  %v2434 = vsel %vm127, %v2370, %v1007
  %v2435 = vsel %vm127, %v2371, %v1009
  %v2436 = vsel %vm127, %v2372, %v1011
  %v2437 = vsel %vm127, %v2373, %v1013
  %v2438 = vsel %vm127, %v2374, %v1015
  %v2439 = vsel %vm127, %v2375, %v1017
  %v2440 = vsel %vm127, %v2376, %v1019
  %v2441 = vsel %vm127, %v2377, %v1021
  %v2442 = vsel %vm127, %v2378, %v1023
  %v2443 = vsel %vm127, %v2379, %v1025
  %v2444 = vsel %vm127, %v2380, %v1027
  %v2445 = vsel %vm127, %v2381, %v1029
  %v2446 = vsel %vm127, %v2382, %v1031
  %v2447 = vsel %vm127, %v2383, %v1033
  %v2448 = vsel %vm127, %v2384, %v1035
  %v2449 = vsel %vm127, %v2385, %v1037
  %v2450 = vsel %vm127, %v2386, %v1039
  %v2451 = vsel %vm127, %v2387, %v1041
  %v2452 = vsel %vm127, %v2388, %v1043
  %v2453 = vsel %vm127, %v2389, %v1045
  %v2454 = vsel %vm127, %v2390, %v1047
  %v2455 = vsel %vm127, %v2391, %v1049
  %v2456 = vsel %vm127, %v2392, %v1051
  %v2457 = vsel %vm127, %v2393, %v1053
  %v2458 = vsel %vm127, %v2394, %v1055
  %v2459 = vsel %vm127, %v2395, %v1057
  %v2460 = vsel %vm127, %v2396, %v1059
  %v2461 = vsel %vm127, %v2397, %v1061
  %v2462 = vsel %vm127, %v2398, %v1063
  %v2463 = vsel %vm127, %v2399, %v1065
  %v2464 = vsel %vm127, %v2400, %v1067
  %vm2465 = vcmask 97280
  %v2466 = vsel %vm2465, %v2401, %v1137
  %v2467 = vsel %vm2465, %v2402, %v1139
  %v2468 = vsel %vm2465, %v2403, %v1141
  %v2469 = vsel %vm2465, %v2404, %v1143
  %v2470 = vsel %vm2465, %v2405, %v1145
  %v2471 = vsel %vm2465, %v2406, %v1147
  %v2472 = vsel %vm2465, %v2407, %v1149
  %v2473 = vsel %vm2465, %v2408, %v1151
  %v2474 = vsel %vm2465, %v2409, %v1153
  %v2475 = vsel %vm2465, %v2410, %v1155
  %v2476 = vsel %vm2465, %v2411, %v1157
  %v2477 = vsel %vm2465, %v2412, %v1159
  %v2478 = vsel %vm2465, %v2413, %v1161
  %v2479 = vsel %vm2465, %v2414, %v1163
  %v2480 = vsel %vm2465, %v2415, %v1165
  %v2481 = vsel %vm2465, %v2416, %v1167
  %v2482 = vsel %vm2465, %v2417, %v1169
  %v2483 = vsel %vm2465, %v2418, %v1171
  %v2484 = vsel %vm2465, %v2419, %v1173
  %v2485 = vsel %vm2465, %v2420, %v1175
  %v2486 = vsel %vm2465, %v2421, %v1177
  %v2487 = vsel %vm2465, %v2422, %v1179
  %v2488 = vsel %vm2465, %v2423, %v1181
  %v2489 = vsel %vm2465, %v2424, %v1183
  %v2490 = vsel %vm2465, %v2425, %v1185
  %v2491 = vsel %vm2465, %v2426, %v1187
  %v2492 = vsel %vm2465, %v2427, %v1189
  %v2493 = vsel %vm2465, %v2428, %v1191
  %v2494 = vsel %vm2465, %v2429, %v1193
  %v2495 = vsel %vm2465, %v2430, %v1195
  %v2496 = vsel %vm2465, %v2431, %v1197
  %v2497 = vsel %vm2465, %v2432, %v1199
  %v2498 = vsel %vm2465, %v2433, %v1201
  %v2499 = vsel %vm2465, %v2434, %v1203
  %v2500 = vsel %vm2465, %v2435, %v1205
  %v2501 = vsel %vm2465, %v2436, %v1207
  %v2502 = vsel %vm2465, %v2437, %v1209
  %v2503 = vsel %vm2465, %v2438, %v1211
  %v2504 = vsel %vm2465, %v2439, %v1213
  %v2505 = vsel %vm2465, %v2440, %v1215
  %v2506 = vsel %vm2465, %v2441, %v1217
  %v2507 = vsel %vm2465, %v2442, %v1219
  %v2508 = vsel %vm2465, %v2443, %v1221
  %v2509 = vsel %vm2465, %v2444, %v1223
  %v2510 = vsel %vm2465, %v2445, %v1225
  %v2511 = vsel %vm2465, %v2446, %v1227
  %v2512 = vsel %vm2465, %v2447, %v1229
  %v2513 = vsel %vm2465, %v2448, %v1231
  %v2514 = vsel %vm2465, %v2449, %v1233
  %v2515 = vsel %vm2465, %v2450, %v1235
  %v2516 = vsel %vm2465, %v2451, %v1237
  %v2517 = vsel %vm2465, %v2452, %v1239
  %v2518 = vsel %vm2465, %v2453, %v1241
  %v2519 = vsel %vm2465, %v2454, %v1243
  %v2520 = vsel %vm2465, %v2455, %v1245
  %v2521 = vsel %vm2465, %v2456, %v1247
  %v2522 = vsel %vm2465, %v2457, %v1249
  %v2523 = vsel %vm2465, %v2458, %v1251
  %v2524 = vsel %vm2465, %v2459, %v1253
  %v2525 = vsel %vm2465, %v2460, %v1255
  %v2526 = vsel %vm2465, %v2461, %v1257
  %v2527 = vsel %vm2465, %v2462, %v1259
  %v2528 = vsel %vm2465, %v2463, %v1261
  %v2529 = vsel %vm2465, %v2464, %v1263
  %v2530 = vsel %vm39, %v2466, %v1341
  %v2531 = vsel %vm39, %v2467, %v1343
  %v2532 = vsel %vm39, %v2468, %v1345
  %v2533 = vsel %vm39, %v2469, %v1347
  %v2534 = vsel %vm39, %v2470, %v1349
  %v2535 = vsel %vm39, %v2471, %v1351
  %v2536 = vsel %vm39, %v2472, %v1353
  %v2537 = vsel %vm39, %v2473, %v1355
  %v2538 = vsel %vm39, %v2474, %v1357
  %v2539 = vsel %vm39, %v2475, %v1359
  %v2540 = vsel %vm39, %v2476, %v1361
  %v2541 = vsel %vm39, %v2477, %v1363
  %v2542 = vsel %vm39, %v2478, %v1365
  %v2543 = vsel %vm39, %v2479, %v1367
  %v2544 = vsel %vm39, %v2480, %v1369
  %v2545 = vsel %vm39, %v2481, %v1371
  %v2546 = vsel %vm39, %v2482, %v1373
  %v2547 = vsel %vm39, %v2483, %v1375
  %v2548 = vsel %vm39, %v2484, %v1377
  %v2549 = vsel %vm39, %v2485, %v1379
  %v2550 = vsel %vm39, %v2486, %v1381
  %v2551 = vsel %vm39, %v2487, %v1383
  %v2552 = vsel %vm39, %v2488, %v1385
  %v2553 = vsel %vm39, %v2489, %v1387
  %v2554 = vsel %vm39, %v2490, %v1389
  %v2555 = vsel %vm39, %v2491, %v1391
  %v2556 = vsel %vm39, %v2492, %v1393
  %v2557 = vsel %vm39, %v2493, %v1395
  %v2558 = vsel %vm39, %v2494, %v1397
  %v2559 = vsel %vm39, %v2495, %v1399
  %v2560 = vsel %vm39, %v2496, %v1401
  %v2561 = vsel %vm39, %v2497, %v1403
  %v2562 = vsel %vm39, %v2498, %v1405
  %v2563 = vsel %vm39, %v2499, %v1407
  %v2564 = vsel %vm39, %v2500, %v1409
  %v2565 = vsel %vm39, %v2501, %v1411
  %v2566 = vsel %vm39, %v2502, %v1413
  %v2567 = vsel %vm39, %v2503, %v1415
  %v2568 = vsel %vm39, %v2504, %v1417
  %v2569 = vsel %vm39, %v2505, %v1419
  %v2570 = vsel %vm39, %v2506, %v1421
  %v2571 = vsel %vm39, %v2507, %v1423
  %v2572 = vsel %vm39, %v2508, %v1425
  %v2573 = vsel %vm39, %v2509, %v1427
  %v2574 = vsel %vm39, %v2510, %v1429
  %v2575 = vsel %vm39, %v2511, %v1431
  %v2576 = vsel %vm39, %v2512, %v1433
  %v2577 = vsel %vm39, %v2513, %v1435
  %v2578 = vsel %vm39, %v2514, %v1437
  %v2579 = vsel %vm39, %v2515, %v1439
  %v2580 = vsel %vm39, %v2516, %v1441
  %v2581 = vsel %vm39, %v2517, %v1443
  %v2582 = vsel %vm39, %v2518, %v1445
  %v2583 = vsel %vm39, %v2519, %v1447
  %v2584 = vsel %vm39, %v2520, %v1449
  %v2585 = vsel %vm39, %v2521, %v1451
  %v2586 = vsel %vm39, %v2522, %v1453
  %v2587 = vsel %vm39, %v2523, %v1455
  %v2588 = vsel %vm39, %v2524, %v1457
  %v2589 = vsel %vm39, %v2525, %v1459
  %v2590 = vsel %vm39, %v2526, %v1461
  %v2591 = vsel %vm39, %v2527, %v1463
  %v2592 = vsel %vm39, %v2528, %v1465
  %v2593 = vsel %vm39, %v2529, %v1467
  %vm2594 = vcmask 162816
  %v2595 = vsel %vm2594, %v2530, %v1543
  %v2596 = vsel %vm2594, %v2531, %v1545
  %v2597 = vsel %vm2594, %v2532, %v1547
  %v2598 = vsel %vm2594, %v2533, %v1549
  %v2599 = vsel %vm2594, %v2534, %v1551
  %v2600 = vsel %vm2594, %v2535, %v1553
  %v2601 = vsel %vm2594, %v2536, %v1555
  %v2602 = vsel %vm2594, %v2537, %v1557
  %v2603 = vsel %vm2594, %v2538, %v1559
  %v2604 = vsel %vm2594, %v2539, %v1561
  %v2605 = vsel %vm2594, %v2540, %v1563
  %v2606 = vsel %vm2594, %v2541, %v1565
  %v2607 = vsel %vm2594, %v2542, %v1567
  %v2608 = vsel %vm2594, %v2543, %v1569
  %v2609 = vsel %vm2594, %v2544, %v1571
  %v2610 = vsel %vm2594, %v2545, %v1573
  %v2611 = vsel %vm2594, %v2546, %v1575
  %v2612 = vsel %vm2594, %v2547, %v1577
  %v2613 = vsel %vm2594, %v2548, %v1579
  %v2614 = vsel %vm2594, %v2549, %v1581
  %v2615 = vsel %vm2594, %v2550, %v1583
  %v2616 = vsel %vm2594, %v2551, %v1585
  %v2617 = vsel %vm2594, %v2552, %v1587
  %v2618 = vsel %vm2594, %v2553, %v1589
  %v2619 = vsel %vm2594, %v2554, %v1591
  %v2620 = vsel %vm2594, %v2555, %v1593
  %v2621 = vsel %vm2594, %v2556, %v1595
  %v2622 = vsel %vm2594, %v2557, %v1597
  %v2623 = vsel %vm2594, %v2558, %v1599
  %v2624 = vsel %vm2594, %v2559, %v1601
  %v2625 = vsel %vm2594, %v2560, %v1603
  %v2626 = vsel %vm2594, %v2561, %v1605
  %v2627 = vsel %vm2594, %v2562, %v1607
  %v2628 = vsel %vm2594, %v2563, %v1609
  %v2629 = vsel %vm2594, %v2564, %v1611
  %v2630 = vsel %vm2594, %v2565, %v1613
  %v2631 = vsel %vm2594, %v2566, %v1615
  %v2632 = vsel %vm2594, %v2567, %v1617
  %v2633 = vsel %vm2594, %v2568, %v1619
  %v2634 = vsel %vm2594, %v2569, %v1621
  %v2635 = vsel %vm2594, %v2570, %v1623
  %v2636 = vsel %vm2594, %v2571, %v1625
  %v2637 = vsel %vm2594, %v2572, %v1627
  %v2638 = vsel %vm2594, %v2573, %v1629
  %v2639 = vsel %vm2594, %v2574, %v1631
  %v2640 = vsel %vm2594, %v2575, %v1633
  %v2641 = vsel %vm2594, %v2576, %v1635
  %v2642 = vsel %vm2594, %v2577, %v1637
  %v2643 = vsel %vm2594, %v2578, %v1639
  %v2644 = vsel %vm2594, %v2579, %v1641
  %v2645 = vsel %vm2594, %v2580, %v1643
  %v2646 = vsel %vm2594, %v2581, %v1645
  %v2647 = vsel %vm2594, %v2582, %v1647
  %v2648 = vsel %vm2594, %v2583, %v1649
  %v2649 = vsel %vm2594, %v2584, %v1651
  %v2650 = vsel %vm2594, %v2585, %v1653
  %v2651 = vsel %vm2594, %v2586, %v1655
  %v2652 = vsel %vm2594, %v2587, %v1657
  %v2653 = vsel %vm2594, %v2588, %v1659
  %v2654 = vsel %vm2594, %v2589, %v1661
  %v2655 = vsel %vm2594, %v2590, %v1663
  %v2656 = vsel %vm2594, %v2591, %v1665
  %v2657 = vsel %vm2594, %v2592, %v1667
  %v2658 = vsel %vm2594, %v2593, %v1669
  %vm2659 = vcmask 195584
  %v2660 = vsel %vm2659, %v2595, %v1739
  %v2661 = vsel %vm2659, %v2596, %v1741
  %v2662 = vsel %vm2659, %v2597, %v1743
  %v2663 = vsel %vm2659, %v2598, %v1745
  %v2664 = vsel %vm2659, %v2599, %v1747
  %v2665 = vsel %vm2659, %v2600, %v1749
  %v2666 = vsel %vm2659, %v2601, %v1751
  %v2667 = vsel %vm2659, %v2602, %v1753
  %v2668 = vsel %vm2659, %v2603, %v1755
  %v2669 = vsel %vm2659, %v2604, %v1757
  %v2670 = vsel %vm2659, %v2605, %v1759
  %v2671 = vsel %vm2659, %v2606, %v1761
  %v2672 = vsel %vm2659, %v2607, %v1763
  %v2673 = vsel %vm2659, %v2608, %v1765
  %v2674 = vsel %vm2659, %v2609, %v1767
  %v2675 = vsel %vm2659, %v2610, %v1769
  %v2676 = vsel %vm2659, %v2611, %v1771
  %v2677 = vsel %vm2659, %v2612, %v1773
  %v2678 = vsel %vm2659, %v2613, %v1775
  %v2679 = vsel %vm2659, %v2614, %v1777
  %v2680 = vsel %vm2659, %v2615, %v1779
  %v2681 = vsel %vm2659, %v2616, %v1781
  %v2682 = vsel %vm2659, %v2617, %v1783
  %v2683 = vsel %vm2659, %v2618, %v1785
  %v2684 = vsel %vm2659, %v2619, %v1787
  %v2685 = vsel %vm2659, %v2620, %v1789
  %v2686 = vsel %vm2659, %v2621, %v1791
  %v2687 = vsel %vm2659, %v2622, %v1793
  %v2688 = vsel %vm2659, %v2623, %v1795
  %v2689 = vsel %vm2659, %v2624, %v1797
  %v2690 = vsel %vm2659, %v2625, %v1799
  %v2691 = vsel %vm2659, %v2626, %v1801
  %v2692 = vsel %vm2659, %v2627, %v1803
  %v2693 = vsel %vm2659, %v2628, %v1805
  %v2694 = vsel %vm2659, %v2629, %v1807
  %v2695 = vsel %vm2659, %v2630, %v1809
  %v2696 = vsel %vm2659, %v2631, %v1811
  %v2697 = vsel %vm2659, %v2632, %v1813
  %v2698 = vsel %vm2659, %v2633, %v1815
  %v2699 = vsel %vm2659, %v2634, %v1817
  %v2700 = vsel %vm2659, %v2635, %v1819
  %v2701 = vsel %vm2659, %v2636, %v1821
  %v2702 = vsel %vm2659, %v2637, %v1823
  %v2703 = vsel %vm2659, %v2638, %v1825
  %v2704 = vsel %vm2659, %v2639, %v1827
  %v2705 = vsel %vm2659, %v2640, %v1829
  %v2706 = vsel %vm2659, %v2641, %v1831
  %v2707 = vsel %vm2659, %v2642, %v1833
  %v2708 = vsel %vm2659, %v2643, %v1835
  %v2709 = vsel %vm2659, %v2644, %v1837
  %v2710 = vsel %vm2659, %v2645, %v1839
  %v2711 = vsel %vm2659, %v2646, %v1841
  %v2712 = vsel %vm2659, %v2647, %v1843
  %v2713 = vsel %vm2659, %v2648, %v1845
  %v2714 = vsel %vm2659, %v2649, %v1847
  %v2715 = vsel %vm2659, %v2650, %v1849
  %v2716 = vsel %vm2659, %v2651, %v1851
  %v2717 = vsel %vm2659, %v2652, %v1853
  %v2718 = vsel %vm2659, %v2653, %v1855
  %v2719 = vsel %vm2659, %v2654, %v1857
  %v2720 = vsel %vm2659, %v2655, %v1859
  %v2721 = vsel %vm2659, %v2656, %v1861
  %v2722 = vsel %vm2659, %v2657, %v1863
  %v2723 = vsel %vm2659, %v2658, %v1865
  %vm2724 = vcmask 228352
  %v2725 = vsel %vm2724, %v2660, %v1943
  %v2726 = vsel %vm2724, %v2661, %v1945
  %v2727 = vsel %vm2724, %v2662, %v1947
  %v2728 = vsel %vm2724, %v2663, %v1949
  %v2729 = vsel %vm2724, %v2664, %v1951
  %v2730 = vsel %vm2724, %v2665, %v1953
  %v2731 = vsel %vm2724, %v2666, %v1955
  %v2732 = vsel %vm2724, %v2667, %v1957
  %v2733 = vsel %vm2724, %v2668, %v1959
  %v2734 = vsel %vm2724, %v2669, %v1961
  %v2735 = vsel %vm2724, %v2670, %v1963
  %v2736 = vsel %vm2724, %v2671, %v1965
  %v2737 = vsel %vm2724, %v2672, %v1967
  %v2738 = vsel %vm2724, %v2673, %v1969
  %v2739 = vsel %vm2724, %v2674, %v1971
  %v2740 = vsel %vm2724, %v2675, %v1973
  %v2741 = vsel %vm2724, %v2676, %v1975
  %v2742 = vsel %vm2724, %v2677, %v1977
  %v2743 = vsel %vm2724, %v2678, %v1979
  %v2744 = vsel %vm2724, %v2679, %v1981
  %v2745 = vsel %vm2724, %v2680, %v1983
  %v2746 = vsel %vm2724, %v2681, %v1985
  %v2747 = vsel %vm2724, %v2682, %v1987
  %v2748 = vsel %vm2724, %v2683, %v1989
  %v2749 = vsel %vm2724, %v2684, %v1991
  %v2750 = vsel %vm2724, %v2685, %v1993
  %v2751 = vsel %vm2724, %v2686, %v1995
  %v2752 = vsel %vm2724, %v2687, %v1997
  %v2753 = vsel %vm2724, %v2688, %v1999
  %v2754 = vsel %vm2724, %v2689, %v2001
  %v2755 = vsel %vm2724, %v2690, %v2003
  %v2756 = vsel %vm2724, %v2691, %v2005
  %v2757 = vsel %vm2724, %v2692, %v2007
  %v2758 = vsel %vm2724, %v2693, %v2009
  %v2759 = vsel %vm2724, %v2694, %v2011
  %v2760 = vsel %vm2724, %v2695, %v2013
  %v2761 = vsel %vm2724, %v2696, %v2015
  %v2762 = vsel %vm2724, %v2697, %v2017
  %v2763 = vsel %vm2724, %v2698, %v2019
  %v2764 = vsel %vm2724, %v2699, %v2021
  %v2765 = vsel %vm2724, %v2700, %v2023
  %v2766 = vsel %vm2724, %v2701, %v2025
  %v2767 = vsel %vm2724, %v2702, %v2027
  %v2768 = vsel %vm2724, %v2703, %v2029
  %v2769 = vsel %vm2724, %v2704, %v2031
  %v2770 = vsel %vm2724, %v2705, %v2033
  %v2771 = vsel %vm2724, %v2706, %v2035
  %v2772 = vsel %vm2724, %v2707, %v2037
  %v2773 = vsel %vm2724, %v2708, %v2039
  %v2774 = vsel %vm2724, %v2709, %v2041
  %v2775 = vsel %vm2724, %v2710, %v2043
  %v2776 = vsel %vm2724, %v2711, %v2045
  %v2777 = vsel %vm2724, %v2712, %v2047
  %v2778 = vsel %vm2724, %v2713, %v2049
  %v2779 = vsel %vm2724, %v2714, %v2051
  %v2780 = vsel %vm2724, %v2715, %v2053
  %v2781 = vsel %vm2724, %v2716, %v2055
  %v2782 = vsel %vm2724, %v2717, %v2057
  %v2783 = vsel %vm2724, %v2718, %v2059
  %v2784 = vsel %vm2724, %v2719, %v2061
  %v2785 = vsel %vm2724, %v2720, %v2063
  %v2786 = vsel %vm2724, %v2721, %v2065
  %v2787 = vsel %vm2724, %v2722, %v2067
  %v2788 = vsel %vm2724, %v2723, %v2069
  %vm2789 = vcmask 261120
  %v2790 = vsel %vm2789, %v2725, %v2145
  %v2791 = vsel %vm2789, %v2726, %v2147
  %v2792 = vsel %vm2789, %v2727, %v2149
  %v2793 = vsel %vm2789, %v2728, %v2151
  %v2794 = vsel %vm2789, %v2729, %v2153
  %v2795 = vsel %vm2789, %v2730, %v2155
  %v2796 = vsel %vm2789, %v2731, %v2157
  %v2797 = vsel %vm2789, %v2732, %v2159
  %v2798 = vsel %vm2789, %v2733, %v2161
  %v2799 = vsel %vm2789, %v2734, %v2163
  %v2800 = vsel %vm2789, %v2735, %v2165
  %v2801 = vsel %vm2789, %v2736, %v2167
  %v2802 = vsel %vm2789, %v2737, %v2169
  %v2803 = vsel %vm2789, %v2738, %v2171
  %v2804 = vsel %vm2789, %v2739, %v2173
  %v2805 = vsel %vm2789, %v2740, %v2175
  %v2806 = vsel %vm2789, %v2741, %v2177
  %v2807 = vsel %vm2789, %v2742, %v2179
  %v2808 = vsel %vm2789, %v2743, %v2181
  %v2809 = vsel %vm2789, %v2744, %v2183
  %v2810 = vsel %vm2789, %v2745, %v2185
  %v2811 = vsel %vm2789, %v2746, %v2187
  %v2812 = vsel %vm2789, %v2747, %v2189
  %v2813 = vsel %vm2789, %v2748, %v2191
  %v2814 = vsel %vm2789, %v2749, %v2193
  %v2815 = vsel %vm2789, %v2750, %v2195
  %v2816 = vsel %vm2789, %v2751, %v2197
  %v2817 = vsel %vm2789, %v2752, %v2199
  %v2818 = vsel %vm2789, %v2753, %v2201
  %v2819 = vsel %vm2789, %v2754, %v2203
  %v2820 = vsel %vm2789, %v2755, %v2205
  %v2821 = vsel %vm2789, %v2756, %v2207
  %v2822 = vsel %vm2789, %v2757, %v2209
  %v2823 = vsel %vm2789, %v2758, %v2211
  %v2824 = vsel %vm2789, %v2759, %v2213
  %v2825 = vsel %vm2789, %v2760, %v2215
  %v2826 = vsel %vm2789, %v2761, %v2217
  %v2827 = vsel %vm2789, %v2762, %v2219
  %v2828 = vsel %vm2789, %v2763, %v2221
  %v2829 = vsel %vm2789, %v2764, %v2223
  %v2830 = vsel %vm2789, %v2765, %v2225
  %v2831 = vsel %vm2789, %v2766, %v2227
  %v2832 = vsel %vm2789, %v2767, %v2229
  %v2833 = vsel %vm2789, %v2768, %v2231
  %v2834 = vsel %vm2789, %v2769, %v2233
  %v2835 = vsel %vm2789, %v2770, %v2235
  %v2836 = vsel %vm2789, %v2771, %v2237
  %v2837 = vsel %vm2789, %v2772, %v2239
  %v2838 = vsel %vm2789, %v2773, %v2241
  %v2839 = vsel %vm2789, %v2774, %v2243
  %v2840 = vsel %vm2789, %v2775, %v2245
  %v2841 = vsel %vm2789, %v2776, %v2247
  %v2842 = vsel %vm2789, %v2777, %v2249
  %v2843 = vsel %vm2789, %v2778, %v2251
  %v2844 = vsel %vm2789, %v2779, %v2253
  %v2845 = vsel %vm2789, %v2780, %v2255
  %v2846 = vsel %vm2789, %v2781, %v2257
  %v2847 = vsel %vm2789, %v2782, %v2259
  %v2848 = vsel %vm2789, %v2783, %v2261
  %v2849 = vsel %vm2789, %v2784, %v2263
  %v2850 = vsel %vm2789, %v2785, %v2265
  %v2851 = vsel %vm2789, %v2786, %v2267
  %v2852 = vsel %vm2789, %v2787, %v2269
  %v2853 = vsel %vm2789, %v2788, %v2271
  %v2854 = vpack.c.bf16 %v2791, %v2790
  %v2855 = vpack.c.bf16 %v2793, %v2792
  %v2856 = vpack.c.bf16 %v2795, %v2794
  %v2857 = vpack.c.bf16 %v2797, %v2796
  %v2858 = vpack.c.bf16 %v2799, %v2798
  %v2859 = vpack.c.bf16 %v2801, %v2800
  %v2860 = vpack.c.bf16 %v2803, %v2802
  %v2861 = vpack.c.bf16 %v2805, %v2804
  %v2862 = vpack.c.bf16 %v2807, %v2806
  %v2863 = vpack.c.bf16 %v2809, %v2808
  %v2864 = vpack.c.bf16 %v2811, %v2810
  %v2865 = vpack.c.bf16 %v2813, %v2812
  %v2866 = vpack.c.bf16 %v2815, %v2814
  %v2867 = vpack.c.bf16 %v2817, %v2816
  %v2868 = vpack.c.bf16 %v2819, %v2818
  %v2869 = vpack.c.bf16 %v2821, %v2820
  %v2870 = vpack.c.bf16 %v2823, %v2822
  %v2871 = vpack.c.bf16 %v2825, %v2824
  %v2872 = vpack.c.bf16 %v2827, %v2826
  %v2873 = vpack.c.bf16 %v2829, %v2828
  %v2874 = vpack.c.bf16 %v2831, %v2830
  %v2875 = vpack.c.bf16 %v2833, %v2832
  %v2876 = vpack.c.bf16 %v2835, %v2834
  %v2877 = vpack.c.bf16 %v2837, %v2836
  %v2878 = vpack.c.bf16 %v2839, %v2838
  %v2879 = vpack.c.bf16 %v2841, %v2840
  %v2880 = vpack.c.bf16 %v2843, %v2842
  %v2881 = vpack.c.bf16 %v2845, %v2844
  %v2882 = vpack.c.bf16 %v2847, %v2846
  %v2883 = vpack.c.bf16 %v2849, %v2848
  %v2884 = vpack.c.bf16 %v2851, %v2850
  %v2885 = vpack.c.bf16 %v2853, %v2852
  %v2891 = vunpack.c.l.b16 %v323
  %v2892 = vunpack.c.l.b16 %v324
  %v2893 = vunpack.c.l.b16 %v325
  %v2894 = vunpack.c.l.b16 %v326
  %v2895 = vunpack.c.l.b16 %v327
  %v2896 = vpack.c.b16 %v2892, %v2891
  %v2897 = vpack.c.b16 %v2894, %v2893
  %v2898 = vpack.c.b16 %v2895, %v2895
  %vm2901 = vcmask 293888
  %v2903 = vsel %vm2901, %v2854, 0
  %v2906 = vsel %vm2901, %v2855, 0
  %v2909 = vsel %vm2901, %v2856, 0
  %v2912 = vsel %vm2901, %v2857, 0
  %v2915 = vsel %vm2901, %v2858, 0
  %v2918 = vsel %vm2901, %v2859, 0
  %v2921 = vsel %vm2901, %v2860, 0
  %v2924 = vsel %vm2901, %v2861, 0
  %v2927 = vsel %vm2901, %v2862, 0
  %v2930 = vsel %vm2901, %v2863, 0
  %v2933 = vsel %vm2901, %v2864, 0
  %v2936 = vsel %vm2901, %v2865, 0
  %v2939 = vsel %vm2901, %v2866, 0
  %v2942 = vsel %vm2901, %v2867, 0
  %v2945 = vsel %vm2901, %v2868, 0
  %v2948 = vsel %vm2901, %v2869, 0
  %v2951 = vsel %vm2901, %v2870, 0
  %v2954 = vsel %vm2901, %v2871, 0
  %v2957 = vsel %vm2901, %v2872, 0
  %v2960 = vsel %vm2901, %v2873, 0
  %v2963 = vsel %vm2901, %v2874, 0
  %v2966 = vsel %vm2901, %v2875, 0
  %v2969 = vsel %vm2901, %v2876, 0
  %v2972 = vsel %vm2901, %v2877, 0
  %v2975 = vsel %vm2901, %v2878, 0
  %v2978 = vsel %vm2901, %v2879, 0
  %v2981 = vsel %vm2901, %v2880, 0
  %v2984 = vsel %vm2901, %v2881, 0
  %v2987 = vsel %vm2901, %v2882, 0
  %v2990 = vsel %vm2901, %v2883, 0
  %v2993 = vsel %vm2901, %v2884, 0
  %v2996 = vsel %vm2901, %v2885, 0
  %vm2998 = vcmask 1041408
  %v3000 = vsel %vm2998, %v2898, 0
  %3002 = vmatprep.subr.bf16.mxu0 0
  %3003 = vmatpush1.bf16.msra.mxu0 %v2896
  %3004 = vmatprep.subr.bf16.mxu0 0
  %3005 = vmatpush1.bf16.msra.mxu0 %v2897
  %3006 = vmatprep.subr.bf16.mxu0 0
  %3007 = vmatpush1.bf16.msra.mxu0 %v3000
  %3008 = vmatprep.subr.bf16.mxu0 0
  %3009 = vmatpush1.bf16.msra.mxu0 0
  %3010 = vmatprep.subr.bf16.mxu0 0
  %3011 = vmatpush1.bf16.msra.mxu0 0
  %3012 = vmatprep.subr.bf16.mxu0 0
  %3013 = vmatpush1.bf16.msra.mxu0 0
  %3014 = vmatprep.subr.bf16.mxu0 0
  %3015 = vmatpush1.bf16.msra.mxu0 0
  %3016 = vmatprep.subr.bf16.mxu0 0
  %3017 = vmatpush1.bf16.msra.mxu0 0
  %3018 = vmatprep.subr.bf16.mxu0 0
  %3019 = vmatpush1.bf16.msra.mxu0 0
  %3020 = vmatprep.subr.bf16.mxu0 0
  %3021 = vmatpush1.bf16.msra.mxu0 0
  %3022 = vmatprep.subr.bf16.mxu0 0
  %3023 = vmatpush1.bf16.msra.mxu0 0
  %3024 = vmatprep.subr.bf16.mxu0 0
  %3025 = vmatpush1.bf16.msra.mxu0 0
  %3026 = vmatprep.subr.bf16.mxu0 0
  %3027 = vmatpush1.bf16.msra.mxu0 0
  %3028 = vmatprep.subr.bf16.mxu0 0
  %3029 = vmatpush1.bf16.msra.mxu0 0
  %3030 = vmatprep.subr.bf16.mxu0 0
  %3031 = vmatpush1.bf16.msra.mxu0 0
  %3032 = vmatprep.subr.bf16.mxu0 0
  %3033 = vmatpush1.bf16.msra.mxu0 0
  %3034 = vmatprep.mubr.bf16.mxu0 0
  %3035 = vmatmul.mubr.bf16.gmra.mrb[0].mxu0 %v2903
  %v3036 = vpop.f32.mrb[0].mxu0
  %v3037 = vadd.f32 0.0, %v3036
  %v3038 = vpop.f32.mrb[0].mxu0
  %v3039 = vpop.f32.mrb[0].mxu0
  %v3040 = vadd.f32 0.0, %v3039
  %v3041 = vpop.f32.mrb[0].mxu0
  %3042 = vmatprep.mubr.bf16.mxu0 0
  %3043 = vmatmul.mubr.bf16.gmra.mrb[0].mxu0 %v2906
  %v3044 = vpop.f32.mrb[0].mxu0
  %v3045 = vadd.f32 0.0, %v3044
  %v3046 = vpop.f32.mrb[0].mxu0
  %v3047 = vpop.f32.mrb[0].mxu0
  %v3048 = vadd.f32 0.0, %v3047
  %v3049 = vpop.f32.mrb[0].mxu0
  %3050 = vmatprep.mubr.bf16.mxu0 0
  %3051 = vmatmul.mubr.bf16.gmra.mrb[0].mxu0 %v2909
  %v3052 = vpop.f32.mrb[0].mxu0
  %v3053 = vadd.f32 0.0, %v3052
  %v3054 = vpop.f32.mrb[0].mxu0
  %v3055 = vpop.f32.mrb[0].mxu0
  %v3056 = vadd.f32 0.0, %v3055
  %v3057 = vpop.f32.mrb[0].mxu0
  %3058 = vmatprep.mubr.bf16.mxu0 0
  %3059 = vmatmul.mubr.bf16.gmra.mrb[0].mxu0 %v2912
  %v3060 = vpop.f32.mrb[0].mxu0
  %v3061 = vadd.f32 0.0, %v3060
  %v3062 = vpop.f32.mrb[0].mxu0
  %v3063 = vpop.f32.mrb[0].mxu0
  %v3064 = vadd.f32 0.0, %v3063
  %v3065 = vpop.f32.mrb[0].mxu0
  %3066 = vmatprep.mubr.bf16.mxu0 0
  %3067 = vmatmul.mubr.bf16.gmra.mrb[0].mxu0 %v2915
  %v3068 = vpop.f32.mrb[0].mxu0
  %v3069 = vadd.f32 0.0, %v3068
  %v3070 = vpop.f32.mrb[0].mxu0
  %v3071 = vpop.f32.mrb[0].mxu0
  %v3072 = vadd.f32 0.0, %v3071
  %v3073 = vpop.f32.mrb[0].mxu0
  %3074 = vmatprep.mubr.bf16.mxu0 0
  %3075 = vmatmul.mubr.bf16.gmra.mrb[0].mxu0 %v2918
  %v3076 = vpop.f32.mrb[0].mxu0
  %v3077 = vadd.f32 0.0, %v3076
  %v3078 = vpop.f32.mrb[0].mxu0
  %v3079 = vpop.f32.mrb[0].mxu0
  %v3080 = vadd.f32 0.0, %v3079
  %v3081 = vpop.f32.mrb[0].mxu0
  %3082 = vmatprep.mubr.bf16.mxu0 0
  %3083 = vmatmul.mubr.bf16.gmra.mrb[0].mxu0 %v2921
  %v3084 = vpop.f32.mrb[0].mxu0
  %v3085 = vadd.f32 0.0, %v3084
  %v3086 = vpop.f32.mrb[0].mxu0
  %v3087 = vpop.f32.mrb[0].mxu0
  %v3088 = vadd.f32 0.0, %v3087
  %v3089 = vpop.f32.mrb[0].mxu0
  %3090 = vmatprep.mubr.bf16.mxu0 0
  %3091 = vmatmul.mubr.bf16.gmra.mrb[0].mxu0 %v2924
  %v3092 = vpop.f32.mrb[0].mxu0
  %v3093 = vadd.f32 0.0, %v3092
  %v3094 = vpop.f32.mrb[0].mxu0
  %v3095 = vpop.f32.mrb[0].mxu0
  %v3096 = vadd.f32 0.0, %v3095
  %v3097 = vpop.f32.mrb[0].mxu0
  %3098 = vmatprep.mubr.bf16.mxu0 0
  %3099 = vmatmul.mubr.bf16.gmra.mrb[0].mxu0 %v2927
  %v3100 = vpop.f32.mrb[0].mxu0
  %v3101 = vadd.f32 0.0, %v3100
  %v3102 = vpop.f32.mrb[0].mxu0
  %v3103 = vpop.f32.mrb[0].mxu0
  %v3104 = vadd.f32 0.0, %v3103
  %v3105 = vpop.f32.mrb[0].mxu0
  %3106 = vmatprep.mubr.bf16.mxu0 0
  %3107 = vmatmul.mubr.bf16.gmra.mrb[0].mxu0 %v2930
  %v3108 = vpop.f32.mrb[0].mxu0
  %v3109 = vadd.f32 0.0, %v3108
  %v3110 = vpop.f32.mrb[0].mxu0
  %v3111 = vpop.f32.mrb[0].mxu0
  %v3112 = vadd.f32 0.0, %v3111
  %v3113 = vpop.f32.mrb[0].mxu0
  %3114 = vmatprep.mubr.bf16.mxu0 0
  %3115 = vmatmul.mubr.bf16.gmra.mrb[0].mxu0 %v2933
  %v3116 = vpop.f32.mrb[0].mxu0
  %v3117 = vadd.f32 0.0, %v3116
  %v3118 = vpop.f32.mrb[0].mxu0
  %v3119 = vpop.f32.mrb[0].mxu0
  %v3120 = vadd.f32 0.0, %v3119
  %v3121 = vpop.f32.mrb[0].mxu0
  %3122 = vmatprep.mubr.bf16.mxu0 0
  %3123 = vmatmul.mubr.bf16.gmra.mrb[0].mxu0 %v2936
  %v3124 = vpop.f32.mrb[0].mxu0
  %v3125 = vadd.f32 0.0, %v3124
  %v3126 = vpop.f32.mrb[0].mxu0
  %v3127 = vpop.f32.mrb[0].mxu0
  %v3128 = vadd.f32 0.0, %v3127
  %v3129 = vpop.f32.mrb[0].mxu0
  %3130 = vmatprep.mubr.bf16.mxu0 0
  %3131 = vmatmul.mubr.bf16.gmra.mrb[0].mxu0 %v2939
  %v3132 = vpop.f32.mrb[0].mxu0
  %v3133 = vadd.f32 0.0, %v3132
  %v3134 = vpop.f32.mrb[0].mxu0
  %v3135 = vpop.f32.mrb[0].mxu0
  %v3136 = vadd.f32 0.0, %v3135
  %v3137 = vpop.f32.mrb[0].mxu0
  %3138 = vmatprep.mubr.bf16.mxu0 0
  %3139 = vmatmul.mubr.bf16.gmra.mrb[0].mxu0 %v2942
  %v3140 = vpop.f32.mrb[0].mxu0
  %v3141 = vadd.f32 0.0, %v3140
  %v3142 = vpop.f32.mrb[0].mxu0
  %v3143 = vpop.f32.mrb[0].mxu0
  %v3144 = vadd.f32 0.0, %v3143
  %v3145 = vpop.f32.mrb[0].mxu0
  %3146 = vmatprep.mubr.bf16.mxu0 0
  %3147 = vmatmul.mubr.bf16.gmra.mrb[0].mxu0 %v2945
  %v3148 = vpop.f32.mrb[0].mxu0
  %v3149 = vadd.f32 0.0, %v3148
  %v3150 = vpop.f32.mrb[0].mxu0
  %v3151 = vpop.f32.mrb[0].mxu0
  %v3152 = vadd.f32 0.0, %v3151
  %v3153 = vpop.f32.mrb[0].mxu0
  %3154 = vmatprep.mubr.bf16.mxu0 0
  %3155 = vmatmul.mubr.bf16.gmra.mrb[0].mxu0 %v2948
  %v3156 = vpop.f32.mrb[0].mxu0
  %v3157 = vadd.f32 0.0, %v3156
  %v3158 = vpop.f32.mrb[0].mxu0
  %v3159 = vpop.f32.mrb[0].mxu0
  %v3160 = vadd.f32 0.0, %v3159
  %v3161 = vpop.f32.mrb[0].mxu0
  %3162 = vmatprep.mubr.bf16.mxu0 0
  %3163 = vmatmul.mubr.bf16.gmra.mrb[0].mxu0 %v2951
  %v3164 = vpop.f32.mrb[0].mxu0
  %v3165 = vadd.f32 0.0, %v3164
  %v3166 = vpop.f32.mrb[0].mxu0
  %v3167 = vpop.f32.mrb[0].mxu0
  %v3168 = vadd.f32 0.0, %v3167
  %v3169 = vpop.f32.mrb[0].mxu0
  %3170 = vmatprep.mubr.bf16.mxu0 0
  %3171 = vmatmul.mubr.bf16.gmra.mrb[0].mxu0 %v2954
  %v3172 = vpop.f32.mrb[0].mxu0
  %v3173 = vadd.f32 0.0, %v3172
  %v3174 = vpop.f32.mrb[0].mxu0
  %v3175 = vpop.f32.mrb[0].mxu0
  %v3176 = vadd.f32 0.0, %v3175
  %v3177 = vpop.f32.mrb[0].mxu0
  %3178 = vmatprep.mubr.bf16.mxu0 0
  %3179 = vmatmul.mubr.bf16.gmra.mrb[0].mxu0 %v2957
  %v3180 = vpop.f32.mrb[0].mxu0
  %v3181 = vadd.f32 0.0, %v3180
  %v3182 = vpop.f32.mrb[0].mxu0
  %v3183 = vpop.f32.mrb[0].mxu0
  %v3184 = vadd.f32 0.0, %v3183
  %v3185 = vpop.f32.mrb[0].mxu0
  %3186 = vmatprep.mubr.bf16.mxu0 0
  %3187 = vmatmul.mubr.bf16.gmra.mrb[0].mxu0 %v2960
  %v3188 = vpop.f32.mrb[0].mxu0
  %v3189 = vadd.f32 0.0, %v3188
  %v3190 = vpop.f32.mrb[0].mxu0
  %v3191 = vpop.f32.mrb[0].mxu0
  %v3192 = vadd.f32 0.0, %v3191
  %v3193 = vpop.f32.mrb[0].mxu0
  %3194 = vmatprep.mubr.bf16.mxu0 0
  %3195 = vmatmul.mubr.bf16.gmra.mrb[0].mxu0 %v2963
  %v3196 = vpop.f32.mrb[0].mxu0
  %v3197 = vadd.f32 0.0, %v3196
  %v3198 = vpop.f32.mrb[0].mxu0
  %v3199 = vpop.f32.mrb[0].mxu0
  %v3200 = vadd.f32 0.0, %v3199
  %v3201 = vpop.f32.mrb[0].mxu0
  %3202 = vmatprep.mubr.bf16.mxu0 0
  %3203 = vmatmul.mubr.bf16.gmra.mrb[0].mxu0 %v2966
  %v3204 = vpop.f32.mrb[0].mxu0
  %v3205 = vadd.f32 0.0, %v3204
  %v3206 = vpop.f32.mrb[0].mxu0
  %v3207 = vpop.f32.mrb[0].mxu0
  %v3208 = vadd.f32 0.0, %v3207
  %v3209 = vpop.f32.mrb[0].mxu0
  %3210 = vmatprep.mubr.bf16.mxu0 0
  %3211 = vmatmul.mubr.bf16.gmra.mrb[0].mxu0 %v2969
  %v3212 = vpop.f32.mrb[0].mxu0
  %v3213 = vadd.f32 0.0, %v3212
  %v3214 = vpop.f32.mrb[0].mxu0
  %v3215 = vpop.f32.mrb[0].mxu0
  %v3216 = vadd.f32 0.0, %v3215
  %v3217 = vpop.f32.mrb[0].mxu0
  %3218 = vmatprep.mubr.bf16.mxu0 0
  %3219 = vmatmul.mubr.bf16.gmra.mrb[0].mxu0 %v2972
  %v3220 = vpop.f32.mrb[0].mxu0
  %v3221 = vadd.f32 0.0, %v3220
  %v3222 = vpop.f32.mrb[0].mxu0
  %v3223 = vpop.f32.mrb[0].mxu0
  %v3224 = vadd.f32 0.0, %v3223
  %v3225 = vpop.f32.mrb[0].mxu0
  %3226 = vmatprep.mubr.bf16.mxu0 0
  %3227 = vmatmul.mubr.bf16.gmra.mrb[0].mxu0 %v2975
  %v3228 = vpop.f32.mrb[0].mxu0
  %v3229 = vadd.f32 0.0, %v3228
  %v3230 = vpop.f32.mrb[0].mxu0
  %v3231 = vpop.f32.mrb[0].mxu0
  %v3232 = vadd.f32 0.0, %v3231
  %v3233 = vpop.f32.mrb[0].mxu0
  %3234 = vmatprep.mubr.bf16.mxu0 0
  %3235 = vmatmul.mubr.bf16.gmra.mrb[0].mxu0 %v2978
  %v3236 = vpop.f32.mrb[0].mxu0
  %v3237 = vadd.f32 0.0, %v3236
  %v3238 = vpop.f32.mrb[0].mxu0
  %v3239 = vpop.f32.mrb[0].mxu0
  %v3240 = vadd.f32 0.0, %v3239
  %v3241 = vpop.f32.mrb[0].mxu0
  %3242 = vmatprep.mubr.bf16.mxu0 0
  %3243 = vmatmul.mubr.bf16.gmra.mrb[0].mxu0 %v2981
  %v3244 = vpop.f32.mrb[0].mxu0
  %v3245 = vadd.f32 0.0, %v3244
  %v3246 = vpop.f32.mrb[0].mxu0
  %v3247 = vpop.f32.mrb[0].mxu0
  %v3248 = vadd.f32 0.0, %v3247
  %v3249 = vpop.f32.mrb[0].mxu0
  %3250 = vmatprep.mubr.bf16.mxu0 0
  %3251 = vmatmul.mubr.bf16.gmra.mrb[0].mxu0 %v2984
  %v3252 = vpop.f32.mrb[0].mxu0
  %v3253 = vadd.f32 0.0, %v3252
  %v3254 = vpop.f32.mrb[0].mxu0
  %v3255 = vpop.f32.mrb[0].mxu0
  %v3256 = vadd.f32 0.0, %v3255
  %v3257 = vpop.f32.mrb[0].mxu0
  %3258 = vmatprep.mubr.bf16.mxu0 0
  %3259 = vmatmul.mubr.bf16.gmra.mrb[0].mxu0 %v2987
  %v3260 = vpop.f32.mrb[0].mxu0
  %v3261 = vadd.f32 0.0, %v3260
  %v3262 = vpop.f32.mrb[0].mxu0
  %v3263 = vpop.f32.mrb[0].mxu0
  %v3264 = vadd.f32 0.0, %v3263
  %v3265 = vpop.f32.mrb[0].mxu0
  %3266 = vmatprep.mubr.bf16.mxu0 0
  %3267 = vmatmul.mubr.bf16.gmra.mrb[0].mxu0 %v2990
  %v3268 = vpop.f32.mrb[0].mxu0
  %v3269 = vadd.f32 0.0, %v3268
  %v3270 = vpop.f32.mrb[0].mxu0
  %v3271 = vpop.f32.mrb[0].mxu0
  %v3272 = vadd.f32 0.0, %v3271
  %v3273 = vpop.f32.mrb[0].mxu0
  %3274 = vmatprep.mubr.bf16.mxu0 0
  %3275 = vmatmul.mubr.bf16.gmra.mrb[0].mxu0 %v2993
  %v3276 = vpop.f32.mrb[0].mxu0
  %v3277 = vadd.f32 0.0, %v3276
  %v3278 = vpop.f32.mrb[0].mxu0
  %v3279 = vpop.f32.mrb[0].mxu0
  %v3280 = vadd.f32 0.0, %v3279
  %v3281 = vpop.f32.mrb[0].mxu0
  %3282 = vmatprep.mubr.bf16.mxu0 0
  %3283 = vmatmul.mubr.bf16.gmra.mrb[0].mxu0 %v2996
  %v3284 = vpop.f32.mrb[0].mxu0
  %v3285 = vadd.f32 0.0, %v3284
  %v3286 = vpop.f32.mrb[0].mxu0
  %v3287 = vpop.f32.mrb[0].mxu0
  %v3288 = vadd.f32 0.0, %v3287
  %v3289 = vpop.f32.mrb[0].mxu0
  %3290 = vdwg.mxu0
  %v3291 = vadd.f32 %v3037, %v3040
  %v3292 = vadd.f32 %v3291, %v3045
  %v3293 = vadd.f32 %v3292, %v3048
  %v3294 = vadd.f32 %v3293, %v3053
  %v3295 = vadd.f32 %v3294, %v3056
  %v3296 = vadd.f32 %v3295, %v3061
  %v3297 = vadd.f32 %v3296, %v3064
  %v3298 = vadd.f32 %v3297, %v3069
  %v3299 = vadd.f32 %v3298, %v3072
  %v3300 = vadd.f32 %v3299, %v3077
  %v3301 = vadd.f32 %v3300, %v3080
  %v3302 = vadd.f32 %v3301, %v3085
  %v3303 = vadd.f32 %v3302, %v3088
  %v3304 = vadd.f32 %v3303, %v3093
  %v3305 = vadd.f32 %v3304, %v3096
  %v3306 = vadd.f32 %v3305, %v3101
  %v3307 = vadd.f32 %v3306, %v3104
  %v3308 = vadd.f32 %v3307, %v3109
  %v3309 = vadd.f32 %v3308, %v3112
  %v3310 = vadd.f32 %v3309, %v3117
  %v3311 = vadd.f32 %v3310, %v3120
  %v3312 = vadd.f32 %v3311, %v3125
  %v3313 = vadd.f32 %v3312, %v3128
  %v3314 = vadd.f32 %v3313, %v3133
  %v3315 = vadd.f32 %v3314, %v3136
  %v3316 = vadd.f32 %v3315, %v3141
  %v3317 = vadd.f32 %v3316, %v3144
  %v3318 = vadd.f32 %v3317, %v3149
  %v3319 = vadd.f32 %v3318, %v3152
  %v3320 = vadd.f32 %v3319, %v3157
  %v3321 = vadd.f32 %v3320, %v3160
  %v3322 = vadd.f32 %v3321, %v3165
  %v3323 = vadd.f32 %v3322, %v3168
  %v3324 = vadd.f32 %v3323, %v3173
  %v3325 = vadd.f32 %v3324, %v3176
  %v3326 = vadd.f32 %v3325, %v3181
  %v3327 = vadd.f32 %v3326, %v3184
  %v3328 = vadd.f32 %v3327, %v3189
  %v3329 = vadd.f32 %v3328, %v3192
  %v3330 = vadd.f32 %v3329, %v3197
  %v3331 = vadd.f32 %v3330, %v3200
  %v3332 = vadd.f32 %v3331, %v3205
  %v3333 = vadd.f32 %v3332, %v3208
  %v3334 = vadd.f32 %v3333, %v3213
  %v3335 = vadd.f32 %v3334, %v3216
  %v3336 = vadd.f32 %v3335, %v3221
  %v3337 = vadd.f32 %v3336, %v3224
  %v3338 = vadd.f32 %v3337, %v3229
  %v3339 = vadd.f32 %v3338, %v3232
  %v3340 = vadd.f32 %v3339, %v3237
  %v3341 = vadd.f32 %v3340, %v3240
  %v3342 = vadd.f32 %v3341, %v3245
  %v3343 = vadd.f32 %v3342, %v3248
  %v3344 = vadd.f32 %v3343, %v3253
  %v3345 = vadd.f32 %v3344, %v3256
  %v3346 = vadd.f32 %v3345, %v3261
  %v3347 = vadd.f32 %v3346, %v3264
  %v3348 = vadd.f32 %v3347, %v3269
  %v3349 = vadd.f32 %v3348, %v3272
  %v3350 = vadd.f32 %v3349, %v3277
  %v3351 = vadd.f32 %v3350, %v3280
  %v3352 = vadd.f32 %v3351, %v3285
  %v3353 = vadd.f32 %v3352, %v3288
  %v3354 = vrot.slane %v3353, 4
  %v3355 = vadd.f32 %v3353, %v3354
  %v3356 = vrot.slane %v3355, 2
  %v3357 = vadd.f32 %v3355, %v3356
  %v3358 = vrot.slane %v3357, 1
  %v3359 = vadd.f32 %v3357, %v3358
  %v3360 = vmul.f32 %v3359, 0.001953125
  %v3361 = vsub.f32 %v3037, %v3360
  %v3362 = vsub.f32 %v3040, %v3360
  %v3363 = vsub.f32 %v3045, %v3360
  %v3364 = vsub.f32 %v3048, %v3360
  %v3365 = vsub.f32 %v3053, %v3360
  %v3366 = vsub.f32 %v3056, %v3360
  %v3367 = vsub.f32 %v3061, %v3360
  %v3368 = vsub.f32 %v3064, %v3360
  %v3369 = vsub.f32 %v3069, %v3360
  %v3370 = vsub.f32 %v3072, %v3360
  %v3371 = vsub.f32 %v3077, %v3360
  %v3372 = vsub.f32 %v3080, %v3360
  %v3373 = vsub.f32 %v3085, %v3360
  %v3374 = vsub.f32 %v3088, %v3360
  %v3375 = vsub.f32 %v3093, %v3360
  %v3376 = vsub.f32 %v3096, %v3360
  %v3377 = vsub.f32 %v3101, %v3360
  %v3378 = vsub.f32 %v3104, %v3360
  %v3379 = vsub.f32 %v3109, %v3360
  %v3380 = vsub.f32 %v3112, %v3360
  %v3381 = vsub.f32 %v3117, %v3360
  %v3382 = vsub.f32 %v3120, %v3360
  %v3383 = vsub.f32 %v3125, %v3360
  %v3384 = vsub.f32 %v3128, %v3360
  %v3385 = vsub.f32 %v3133, %v3360
  %v3386 = vsub.f32 %v3136, %v3360
  %v3387 = vsub.f32 %v3141, %v3360
  %v3388 = vsub.f32 %v3144, %v3360
  %v3389 = vsub.f32 %v3149, %v3360
  %v3390 = vsub.f32 %v3152, %v3360
  %v3391 = vsub.f32 %v3157, %v3360
  %v3392 = vsub.f32 %v3160, %v3360
  %v3393 = vsub.f32 %v3165, %v3360
  %v3394 = vsub.f32 %v3168, %v3360
  %v3395 = vsub.f32 %v3173, %v3360
  %v3396 = vsub.f32 %v3176, %v3360
  %v3397 = vsub.f32 %v3181, %v3360
  %v3398 = vsub.f32 %v3184, %v3360
  %v3399 = vsub.f32 %v3189, %v3360
  %v3400 = vsub.f32 %v3192, %v3360
  %v3401 = vsub.f32 %v3197, %v3360
  %v3402 = vsub.f32 %v3200, %v3360
  %v3403 = vsub.f32 %v3205, %v3360
  %v3404 = vsub.f32 %v3208, %v3360
  %v3405 = vsub.f32 %v3213, %v3360
  %v3406 = vsub.f32 %v3216, %v3360
  %v3407 = vsub.f32 %v3221, %v3360
  %v3408 = vsub.f32 %v3224, %v3360
  %v3409 = vsub.f32 %v3229, %v3360
  %v3410 = vsub.f32 %v3232, %v3360
  %v3411 = vsub.f32 %v3237, %v3360
  %v3412 = vsub.f32 %v3240, %v3360
  %v3413 = vsub.f32 %v3245, %v3360
  %v3414 = vsub.f32 %v3248, %v3360
  %v3415 = vsub.f32 %v3253, %v3360
  %v3416 = vsub.f32 %v3256, %v3360
  %v3417 = vsub.f32 %v3261, %v3360
  %v3418 = vsub.f32 %v3264, %v3360
  %v3419 = vsub.f32 %v3269, %v3360
  %v3420 = vsub.f32 %v3272, %v3360
  %v3421 = vsub.f32 %v3277, %v3360
  %v3422 = vsub.f32 %v3280, %v3360
  %v3423 = vsub.f32 %v3285, %v3360
  %v3424 = vsub.f32 %v3288, %v3360
  %v3425 = vmul.f32 %v3361, %v3361
  %v3426 = vmul.f32 %v3362, %v3362
  %v3427 = vmul.f32 %v3363, %v3363
  %v3428 = vmul.f32 %v3364, %v3364
  %v3429 = vmul.f32 %v3365, %v3365
  %v3430 = vmul.f32 %v3366, %v3366
  %v3431 = vmul.f32 %v3367, %v3367
  %v3432 = vmul.f32 %v3368, %v3368
  %v3433 = vmul.f32 %v3369, %v3369
  %v3434 = vmul.f32 %v3370, %v3370
  %v3435 = vmul.f32 %v3371, %v3371
  %v3436 = vmul.f32 %v3372, %v3372
  %v3437 = vmul.f32 %v3373, %v3373
  %v3438 = vmul.f32 %v3374, %v3374
  %v3439 = vmul.f32 %v3375, %v3375
  %v3440 = vmul.f32 %v3376, %v3376
  %v3441 = vmul.f32 %v3377, %v3377
  %v3442 = vmul.f32 %v3378, %v3378
  %v3443 = vmul.f32 %v3379, %v3379
  %v3444 = vmul.f32 %v3380, %v3380
  %v3445 = vmul.f32 %v3381, %v3381
  %v3446 = vmul.f32 %v3382, %v3382
  %v3447 = vmul.f32 %v3383, %v3383
  %v3448 = vmul.f32 %v3384, %v3384
  %v3449 = vmul.f32 %v3385, %v3385
  %v3450 = vmul.f32 %v3386, %v3386
  %v3451 = vmul.f32 %v3387, %v3387
  %v3452 = vmul.f32 %v3388, %v3388
  %v3453 = vmul.f32 %v3389, %v3389
  %v3454 = vmul.f32 %v3390, %v3390
  %v3455 = vmul.f32 %v3391, %v3391
  %v3456 = vmul.f32 %v3392, %v3392
  %v3457 = vmul.f32 %v3393, %v3393
  %v3458 = vmul.f32 %v3394, %v3394
  %v3459 = vmul.f32 %v3395, %v3395
  %v3460 = vmul.f32 %v3396, %v3396
  %v3461 = vmul.f32 %v3397, %v3397
  %v3462 = vmul.f32 %v3398, %v3398
  %v3463 = vmul.f32 %v3399, %v3399
  %v3464 = vmul.f32 %v3400, %v3400
  %v3465 = vmul.f32 %v3401, %v3401
  %v3466 = vmul.f32 %v3402, %v3402
  %v3467 = vmul.f32 %v3403, %v3403
  %v3468 = vmul.f32 %v3404, %v3404
  %v3469 = vmul.f32 %v3405, %v3405
  %v3470 = vmul.f32 %v3406, %v3406
  %v3471 = vmul.f32 %v3407, %v3407
  %v3472 = vmul.f32 %v3408, %v3408
  %v3473 = vmul.f32 %v3409, %v3409
  %v3474 = vmul.f32 %v3410, %v3410
  %v3475 = vmul.f32 %v3411, %v3411
  %v3476 = vmul.f32 %v3412, %v3412
  %v3477 = vmul.f32 %v3413, %v3413
  %v3478 = vmul.f32 %v3414, %v3414
  %v3479 = vmul.f32 %v3415, %v3415
  %v3480 = vmul.f32 %v3416, %v3416
  %v3481 = vmul.f32 %v3417, %v3417
  %v3482 = vmul.f32 %v3418, %v3418
  %v3483 = vmul.f32 %v3419, %v3419
  %v3484 = vmul.f32 %v3420, %v3420
  %v3485 = vmul.f32 %v3421, %v3421
  %v3486 = vmul.f32 %v3422, %v3422
  %v3487 = vmul.f32 %v3423, %v3423
  %v3488 = vmul.f32 %v3424, %v3424
  %v3489 = vadd.f32 %v3425, %v3426
  %v3490 = vadd.f32 %v3489, %v3427
  %v3491 = vadd.f32 %v3490, %v3428
  %v3492 = vadd.f32 %v3491, %v3429
  %v3493 = vadd.f32 %v3492, %v3430
  %v3494 = vadd.f32 %v3493, %v3431
  %v3495 = vadd.f32 %v3494, %v3432
  %v3496 = vadd.f32 %v3495, %v3433
  %v3497 = vadd.f32 %v3496, %v3434
  %v3498 = vadd.f32 %v3497, %v3435
  %v3499 = vadd.f32 %v3498, %v3436
  %v3500 = vadd.f32 %v3499, %v3437
  %v3501 = vadd.f32 %v3500, %v3438
  %v3502 = vadd.f32 %v3501, %v3439
  %v3503 = vadd.f32 %v3502, %v3440
  %v3504 = vadd.f32 %v3503, %v3441
  %v3505 = vadd.f32 %v3504, %v3442
  %v3506 = vadd.f32 %v3505, %v3443
  %v3507 = vadd.f32 %v3506, %v3444
  %v3508 = vadd.f32 %v3507, %v3445
  %v3509 = vadd.f32 %v3508, %v3446
  %v3510 = vadd.f32 %v3509, %v3447
  %v3511 = vadd.f32 %v3510, %v3448
  %v3512 = vadd.f32 %v3511, %v3449
  %v3513 = vadd.f32 %v3512, %v3450
  %v3514 = vadd.f32 %v3513, %v3451
  %v3515 = vadd.f32 %v3514, %v3452
  %v3516 = vadd.f32 %v3515, %v3453
  %v3517 = vadd.f32 %v3516, %v3454
  %v3518 = vadd.f32 %v3517, %v3455
  %v3519 = vadd.f32 %v3518, %v3456
  %v3520 = vadd.f32 %v3519, %v3457
  %v3521 = vadd.f32 %v3520, %v3458
  %v3522 = vadd.f32 %v3521, %v3459
  %v3523 = vadd.f32 %v3522, %v3460
  %v3524 = vadd.f32 %v3523, %v3461
  %v3525 = vadd.f32 %v3524, %v3462
  %v3526 = vadd.f32 %v3525, %v3463
  %v3527 = vadd.f32 %v3526, %v3464
  %v3528 = vadd.f32 %v3527, %v3465
  %v3529 = vadd.f32 %v3528, %v3466
  %v3530 = vadd.f32 %v3529, %v3467
  %v3531 = vadd.f32 %v3530, %v3468
  %v3532 = vadd.f32 %v3531, %v3469
  %v3533 = vadd.f32 %v3532, %v3470
  %v3534 = vadd.f32 %v3533, %v3471
  %v3535 = vadd.f32 %v3534, %v3472
  %v3536 = vadd.f32 %v3535, %v3473
  %v3537 = vadd.f32 %v3536, %v3474
  %v3538 = vadd.f32 %v3537, %v3475
  %v3539 = vadd.f32 %v3538, %v3476
  %v3540 = vadd.f32 %v3539, %v3477
  %v3541 = vadd.f32 %v3540, %v3478
  %v3542 = vadd.f32 %v3541, %v3479
  %v3543 = vadd.f32 %v3542, %v3480
  %v3544 = vadd.f32 %v3543, %v3481
  %v3545 = vadd.f32 %v3544, %v3482
  %v3546 = vadd.f32 %v3545, %v3483
  %v3547 = vadd.f32 %v3546, %v3484
  %v3548 = vadd.f32 %v3547, %v3485
  %v3549 = vadd.f32 %v3548, %v3486
  %v3550 = vadd.f32 %v3549, %v3487
  %v3551 = vadd.f32 %v3550, %v3488
  %v3552 = vrot.slane %v3551, 4
  %v3553 = vadd.f32 %v3551, %v3552
  %v3554 = vrot.slane %v3553, 2
  %v3555 = vadd.f32 %v3553, %v3554
  %v3556 = vrot.slane %v3555, 1
  %v3557 = vadd.f32 %v3555, %v3556
  %v3558 = vmul.f32 %v3557, 0.001953125
  %v3559 = vadd.f32 %v3558, 1e-05
  %v3560 = vrsqrt.pop %v3559
  %v3561 = vmul.f32 %v328, %v3560
  %v3563 = vlaneseq
  %v3564 = vshrl.u32 %v3563, 7
  %v3565 = vsub.s32 0, %v3564
  %v3566 = vrot.slane %v3561, %v3565
  %v3568 = vmul.f32 %v3361, %v3566
  %v3569 = vmul.f32 %v3362, %v3566
  %v3570 = vmul.f32 %v3363, %v3566
  %v3571 = vmul.f32 %v3364, %v3566
  %v3572 = vmul.f32 %v3365, %v3566
  %v3573 = vmul.f32 %v3366, %v3566
  %v3574 = vmul.f32 %v3367, %v3566
  %v3575 = vmul.f32 %v3368, %v3566
  %v3576 = vmul.f32 %v3369, %v3566
  %v3577 = vmul.f32 %v3370, %v3566
  %v3578 = vmul.f32 %v3371, %v3566
  %v3579 = vmul.f32 %v3372, %v3566
  %v3580 = vmul.f32 %v3373, %v3566
  %v3581 = vmul.f32 %v3374, %v3566
  %v3582 = vmul.f32 %v3375, %v3566
  %v3583 = vmul.f32 %v3376, %v3566
  %v3584 = vmul.f32 %v3377, %v3566
  %v3585 = vmul.f32 %v3378, %v3566
  %v3586 = vmul.f32 %v3379, %v3566
  %v3587 = vmul.f32 %v3380, %v3566
  %v3588 = vmul.f32 %v3381, %v3566
  %v3589 = vmul.f32 %v3382, %v3566
  %v3590 = vmul.f32 %v3383, %v3566
  %v3591 = vmul.f32 %v3384, %v3566
  %v3592 = vmul.f32 %v3385, %v3566
  %v3593 = vmul.f32 %v3386, %v3566
  %v3594 = vmul.f32 %v3387, %v3566
  %v3595 = vmul.f32 %v3388, %v3566
  %v3596 = vmul.f32 %v3389, %v3566
  %v3597 = vmul.f32 %v3390, %v3566
  %v3598 = vmul.f32 %v3391, %v3566
  %v3599 = vmul.f32 %v3392, %v3566
  %v3600 = vmul.f32 %v3393, %v3566
  %v3601 = vmul.f32 %v3394, %v3566
  %v3602 = vmul.f32 %v3395, %v3566
  %v3603 = vmul.f32 %v3396, %v3566
  %v3604 = vmul.f32 %v3397, %v3566
  %v3605 = vmul.f32 %v3398, %v3566
  %v3606 = vmul.f32 %v3399, %v3566
  %v3607 = vmul.f32 %v3400, %v3566
  %v3608 = vmul.f32 %v3401, %v3566
  %v3609 = vmul.f32 %v3402, %v3566
  %v3610 = vmul.f32 %v3403, %v3566
  %v3611 = vmul.f32 %v3404, %v3566
  %v3612 = vmul.f32 %v3405, %v3566
  %v3613 = vmul.f32 %v3406, %v3566
  %v3614 = vmul.f32 %v3407, %v3566
  %v3615 = vmul.f32 %v3408, %v3566
  %v3616 = vmul.f32 %v3409, %v3566
  %v3617 = vmul.f32 %v3410, %v3566
  %v3618 = vmul.f32 %v3411, %v3566
  %v3619 = vmul.f32 %v3412, %v3566
  %v3620 = vmul.f32 %v3413, %v3566
  %v3621 = vmul.f32 %v3414, %v3566
  %v3622 = vmul.f32 %v3415, %v3566
  %v3623 = vmul.f32 %v3416, %v3566
  %v3624 = vmul.f32 %v3417, %v3566
  %v3625 = vmul.f32 %v3418, %v3566
  %v3626 = vmul.f32 %v3419, %v3566
  %v3627 = vmul.f32 %v3420, %v3566
  %v3628 = vmul.f32 %v3421, %v3566
  %v3629 = vmul.f32 %v3422, %v3566
  %v3630 = vmul.f32 %v3423, %v3566
  %v3631 = vmul.f32 %v3424, %v3566
  %v3633 = vlaneseq
  %v3634 = vshrl.u32 %v3633, 7
  %v3635 = vsub.s32 0, %v3634
  %v3636 = vrot.slane %v329, %v3635
  %v3638 = vadd.f32 %v3568, %v3636
  %v3639 = vadd.f32 %v3569, %v3636
  %v3640 = vadd.f32 %v3570, %v3636
  %v3641 = vadd.f32 %v3571, %v3636
  %v3642 = vadd.f32 %v3572, %v3636
  %v3643 = vadd.f32 %v3573, %v3636
  %v3644 = vadd.f32 %v3574, %v3636
  %v3645 = vadd.f32 %v3575, %v3636
  %v3646 = vadd.f32 %v3576, %v3636
  %v3647 = vadd.f32 %v3577, %v3636
  %v3648 = vadd.f32 %v3578, %v3636
  %v3649 = vadd.f32 %v3579, %v3636
  %v3650 = vadd.f32 %v3580, %v3636
  %v3651 = vadd.f32 %v3581, %v3636
  %v3652 = vadd.f32 %v3582, %v3636
  %v3653 = vadd.f32 %v3583, %v3636
  %v3654 = vadd.f32 %v3584, %v3636
  %v3655 = vadd.f32 %v3585, %v3636
  %v3656 = vadd.f32 %v3586, %v3636
  %v3657 = vadd.f32 %v3587, %v3636
  %v3658 = vadd.f32 %v3588, %v3636
  %v3659 = vadd.f32 %v3589, %v3636
  %v3660 = vadd.f32 %v3590, %v3636
  %v3661 = vadd.f32 %v3591, %v3636
  %v3662 = vadd.f32 %v3592, %v3636
  %v3663 = vadd.f32 %v3593, %v3636
  %v3664 = vadd.f32 %v3594, %v3636
  %v3665 = vadd.f32 %v3595, %v3636
  %v3666 = vadd.f32 %v3596, %v3636
  %v3667 = vadd.f32 %v3597, %v3636
  %v3668 = vadd.f32 %v3598, %v3636
  %v3669 = vadd.f32 %v3599, %v3636
  %v3670 = vadd.f32 %v3600, %v3636
  %v3671 = vadd.f32 %v3601, %v3636
  %v3672 = vadd.f32 %v3602, %v3636
  %v3673 = vadd.f32 %v3603, %v3636
  %v3674 = vadd.f32 %v3604, %v3636
  %v3675 = vadd.f32 %v3605, %v3636
  %v3676 = vadd.f32 %v3606, %v3636
  %v3677 = vadd.f32 %v3607, %v3636
  %v3678 = vadd.f32 %v3608, %v3636
  %v3679 = vadd.f32 %v3609, %v3636
  %v3680 = vadd.f32 %v3610, %v3636
  %v3681 = vadd.f32 %v3611, %v3636
  %v3682 = vadd.f32 %v3612, %v3636
  %v3683 = vadd.f32 %v3613, %v3636
  %v3684 = vadd.f32 %v3614, %v3636
  %v3685 = vadd.f32 %v3615, %v3636
  %v3686 = vadd.f32 %v3616, %v3636
  %v3687 = vadd.f32 %v3617, %v3636
  %v3688 = vadd.f32 %v3618, %v3636
  %v3689 = vadd.f32 %v3619, %v3636
  %v3690 = vadd.f32 %v3620, %v3636
  %v3691 = vadd.f32 %v3621, %v3636
  %v3692 = vadd.f32 %v3622, %v3636
  %v3693 = vadd.f32 %v3623, %v3636
  %v3694 = vadd.f32 %v3624, %v3636
  %v3695 = vadd.f32 %v3625, %v3636
  %v3696 = vadd.f32 %v3626, %v3636
  %v3697 = vadd.f32 %v3627, %v3636
  %v3698 = vadd.f32 %v3628, %v3636
  %v3699 = vadd.f32 %v3629, %v3636
  %v3700 = vadd.f32 %v3630, %v3636
  %v3701 = vadd.f32 %v3631, %v3636
  %v3702 = vmax.f32 %v3638, 0.0
  %v3703 = vmax.f32 %v3639, 0.0
  %v3704 = vmax.f32 %v3640, 0.0
  %v3705 = vmax.f32 %v3641, 0.0
  %v3706 = vmax.f32 %v3642, 0.0
  %v3707 = vmax.f32 %v3643, 0.0
  %v3708 = vmax.f32 %v3644, 0.0
  %v3709 = vmax.f32 %v3645, 0.0
  %v3710 = vmax.f32 %v3646, 0.0
  %v3711 = vmax.f32 %v3647, 0.0
  %v3712 = vmax.f32 %v3648, 0.0
  %v3713 = vmax.f32 %v3649, 0.0
  %v3714 = vmax.f32 %v3650, 0.0
  %v3715 = vmax.f32 %v3651, 0.0
  %v3716 = vmax.f32 %v3652, 0.0
  %v3717 = vmax.f32 %v3653, 0.0
  %v3718 = vmax.f32 %v3654, 0.0
  %v3719 = vmax.f32 %v3655, 0.0
  %v3720 = vmax.f32 %v3656, 0.0
  %v3721 = vmax.f32 %v3657, 0.0
  %v3722 = vmax.f32 %v3658, 0.0
  %v3723 = vmax.f32 %v3659, 0.0
  %v3724 = vmax.f32 %v3660, 0.0
  %v3725 = vmax.f32 %v3661, 0.0
  %v3726 = vmax.f32 %v3662, 0.0
  %v3727 = vmax.f32 %v3663, 0.0
  %v3728 = vmax.f32 %v3664, 0.0
  %v3729 = vmax.f32 %v3665, 0.0
  %v3730 = vmax.f32 %v3666, 0.0
  %v3731 = vmax.f32 %v3667, 0.0
  %v3732 = vmax.f32 %v3668, 0.0
  %v3733 = vmax.f32 %v3669, 0.0
  %v3734 = vmax.f32 %v3670, 0.0
  %v3735 = vmax.f32 %v3671, 0.0
  %v3736 = vmax.f32 %v3672, 0.0
  %v3737 = vmax.f32 %v3673, 0.0
  %v3738 = vmax.f32 %v3674, 0.0
  %v3739 = vmax.f32 %v3675, 0.0
  %v3740 = vmax.f32 %v3676, 0.0
  %v3741 = vmax.f32 %v3677, 0.0
  %v3742 = vmax.f32 %v3678, 0.0
  %v3743 = vmax.f32 %v3679, 0.0
  %v3744 = vmax.f32 %v3680, 0.0
  %v3745 = vmax.f32 %v3681, 0.0
  %v3746 = vmax.f32 %v3682, 0.0
  %v3747 = vmax.f32 %v3683, 0.0
  %v3748 = vmax.f32 %v3684, 0.0
  %v3749 = vmax.f32 %v3685, 0.0
  %v3750 = vmax.f32 %v3686, 0.0
  %v3751 = vmax.f32 %v3687, 0.0
  %v3752 = vmax.f32 %v3688, 0.0
  %v3753 = vmax.f32 %v3689, 0.0
  %v3754 = vmax.f32 %v3690, 0.0
  %v3755 = vmax.f32 %v3691, 0.0
  %v3756 = vmax.f32 %v3692, 0.0
  %v3757 = vmax.f32 %v3693, 0.0
  %v3758 = vmax.f32 %v3694, 0.0
  %v3759 = vmax.f32 %v3695, 0.0
  %v3760 = vmax.f32 %v3696, 0.0
  %v3761 = vmax.f32 %v3697, 0.0
  %v3762 = vmax.f32 %v3698, 0.0
  %v3763 = vmax.f32 %v3699, 0.0
  %v3764 = vmax.f32 %v3700, 0.0
  %v3765 = vmax.f32 %v3701, 0.0
  %s3766 = scalar_lea.vmem [#allocation2], 24
  %3767 = vst.msk [vmem:[%s3766 + $0x1] sm:$0xff] %vm127, %v3702
  %3768 = vst.msk [vmem:[%s3766 + $0x9] sm:$0xff] %vm127, %v3703
  %3769 = vst.msk [vmem:[%s3766 + $0x19] sm:$0xff] %vm127, %v3704
  %3770 = vst.msk [vmem:[%s3766 + $0x21] sm:$0xff] %vm127, %v3705
  %3771 = vst.msk [vmem:[%s3766 + $0x31] sm:$0xff] %vm127, %v3706
  %3772 = vst.msk [vmem:[%s3766 + $0x39] sm:$0xff] %vm127, %v3707
  %3773 = vst.msk [vmem:[%s3766 + $0x49] sm:$0xff] %vm127, %v3708
  %3774 = vst.msk [vmem:[%s3766 + $0x51] sm:$0xff] %vm127, %v3709
  %3775 = vst.msk [vmem:[%s3766 + $0x61] sm:$0xff] %vm127, %v3710
  %3776 = vst.msk [vmem:[%s3766 + $0x69] sm:$0xff] %vm127, %v3711
  %3777 = vst.msk [vmem:[%s3766 + $0x79] sm:$0xff] %vm127, %v3712
  %3778 = vst.msk [vmem:[%s3766 + $0x81] sm:$0xff] %vm127, %v3713
  %3779 = vst.msk [vmem:[%s3766 + $0x91] sm:$0xff] %vm127, %v3714
  %3780 = vst.msk [vmem:[%s3766 + $0x99] sm:$0xff] %vm127, %v3715
  %3781 = vst.msk [vmem:[%s3766 + $0xa9] sm:$0xff] %vm127, %v3716
  %3782 = vst.msk [vmem:[%s3766 + $0xb1] sm:$0xff] %vm127, %v3717
  %3783 = vst.msk [vmem:[%s3766 + $0xc1] sm:$0xff] %vm127, %v3718
  %3784 = vst.msk [vmem:[%s3766 + $0xc9] sm:$0xff] %vm127, %v3719
  %3785 = vst.msk [vmem:[%s3766 + $0xd9] sm:$0xff] %vm127, %v3720
  %3786 = vst.msk [vmem:[%s3766 + $0xe1] sm:$0xff] %vm127, %v3721
  %3787 = vst.msk [vmem:[%s3766 + $0xf1] sm:$0xff] %vm127, %v3722
  %3788 = vst.msk [vmem:[%s3766 + $0xf9] sm:$0xff] %vm127, %v3723
  %3789 = vst.msk [vmem:[%s3766 + $0x109] sm:$0xff] %vm127, %v3724
  %3790 = vst.msk [vmem:[%s3766 + $0x111] sm:$0xff] %vm127, %v3725
  %3791 = vst.msk [vmem:[%s3766 + $0x121] sm:$0xff] %vm127, %v3726
  %3792 = vst.msk [vmem:[%s3766 + $0x129] sm:$0xff] %vm127, %v3727
  %3793 = vst.msk [vmem:[%s3766 + $0x139] sm:$0xff] %vm127, %v3728
  %3794 = vst.msk [vmem:[%s3766 + $0x141] sm:$0xff] %vm127, %v3729
  %3795 = vst.msk [vmem:[%s3766 + $0x151] sm:$0xff] %vm127, %v3730
  %3796 = vst.msk [vmem:[%s3766 + $0x159] sm:$0xff] %vm127, %v3731
  %3797 = vst.msk [vmem:[%s3766 + $0x169] sm:$0xff] %vm127, %v3732
  %3798 = vst.msk [vmem:[%s3766 + $0x171] sm:$0xff] %vm127, %v3733
  %3799 = vst.msk [vmem:[%s3766 + $0x1b1] sm:$0xff] %vm127, %v3734
  %3800 = vst.msk [vmem:[%s3766 + $0x1b9] sm:$0xff] %vm127, %v3735
  %3801 = vst.msk [vmem:[%s3766 + $0x1c9] sm:$0xff] %vm127, %v3736
  %3802 = vst.msk [vmem:[%s3766 + $0x1d1] sm:$0xff] %vm127, %v3737
  %3803 = vst.msk [vmem:[%s3766 + $0x1e1] sm:$0xff] %vm127, %v3738
  %3804 = vst.msk [vmem:[%s3766 + $0x1e9] sm:$0xff] %vm127, %v3739
  %3805 = vst.msk [vmem:[%s3766 + $0x1f9] sm:$0xff] %vm127, %v3740
  %3806 = vst.msk [vmem:[%s3766 + $0x201] sm:$0xff] %vm127, %v3741
  %3807 = vst.msk [vmem:[%s3766 + $0x211] sm:$0xff] %vm127, %v3742
  %3808 = vst.msk [vmem:[%s3766 + $0x219] sm:$0xff] %vm127, %v3743
  %3809 = vst.msk [vmem:[%s3766 + $0x229] sm:$0xff] %vm127, %v3744
  %3810 = vst.msk [vmem:[%s3766 + $0x231] sm:$0xff] %vm127, %v3745
  %3811 = vst.msk [vmem:[%s3766 + $0x241] sm:$0xff] %vm127, %v3746
  %3812 = vst.msk [vmem:[%s3766 + $0x249] sm:$0xff] %vm127, %v3747
  %3813 = vst.msk [vmem:[%s3766 + $0x259] sm:$0xff] %vm127, %v3748
  %3814 = vst.msk [vmem:[%s3766 + $0x261] sm:$0xff] %vm127, %v3749
  %3815 = vst.msk [vmem:[%s3766 + $0x271] sm:$0xff] %vm127, %v3750
  %3816 = vst.msk [vmem:[%s3766 + $0x279] sm:$0xff] %vm127, %v3751
  %3817 = vst.msk [vmem:[%s3766 + $0x289] sm:$0xff] %vm127, %v3752
  %3818 = vst.msk [vmem:[%s3766 + $0x291] sm:$0xff] %vm127, %v3753
  %3819 = vst.msk [vmem:[%s3766 + $0x2a1] sm:$0xff] %vm127, %v3754
  %3820 = vst.msk [vmem:[%s3766 + $0x2a9] sm:$0xff] %vm127, %v3755
  %3821 = vst.msk [vmem:[%s3766 + $0x2b9] sm:$0xff] %vm127, %v3756
  %3822 = vst.msk [vmem:[%s3766 + $0x2c1] sm:$0xff] %vm127, %v3757
  %3823 = vst.msk [vmem:[%s3766 + $0x2d1] sm:$0xff] %vm127, %v3758
  %3824 = vst.msk [vmem:[%s3766 + $0x2d9] sm:$0xff] %vm127, %v3759
  %3825 = vst.msk [vmem:[%s3766 + $0x2e9] sm:$0xff] %vm127, %v3760
  %3826 = vst.msk [vmem:[%s3766 + $0x2f1] sm:$0xff] %vm127, %v3761
  %3827 = vst.msk [vmem:[%s3766 + $0x301] sm:$0xff] %vm127, %v3762
  %3828 = vst.msk [vmem:[%s3766 + $0x309] sm:$0xff] %vm127, %v3763
  %3829 = vst.msk [vmem:[%s3766 + $0x319] sm:$0xff] %vm127, %v3764
  %3830 = vst.msk [vmem:[%s3766 + $0x321] sm:$0xff] %vm127, %v3765
  %v3831 = vld [vmem:[%s1] sm:$0xff]
  %v3832 = vld [vmem:[%s1 + $0x8] sm:$0xff]
  %v3833 = vld [vmem:[%s1 + $0x10] sm:$0xff]
  %v3834 = vld [vmem:[%s1 + $0x18] sm:$0xff]
  %v3835 = vld [vmem:[%s1 + $0x20] sm:$0xff]
  %v3836 = vld [vmem:[%s1 + $0x28] sm:$0xff]
  %v3837 = vld [vmem:[%s1 + $0x30] sm:$0xff]
  %v3838 = vld [vmem:[%s1 + $0x38] sm:$0xff]
  %v3839 = vld [vmem:[%s1 + $0x40] sm:$0xff]
  %v3840 = vld [vmem:[%s1 + $0x48] sm:$0xff]
  %v3841 = vld [vmem:[%s1 + $0x50] sm:$0xff]
  %v3842 = vld [vmem:[%s1 + $0x58] sm:$0xff]
  %v3843 = vld [vmem:[%s1 + $0x60] sm:$0xff]
  %v3844 = vld [vmem:[%s1 + $0x68] sm:$0xff]
  %v3845 = vld [vmem:[%s1 + $0x70] sm:$0xff]
  %v3846 = vld [vmem:[%s1 + $0x78] sm:$0xff]
  %v3847 = vld [vmem:[%s1 + $0x80] sm:$0xff]
  %v3848 = vld [vmem:[%s1 + $0x88] sm:$0xff]
  %v3849 = vld [vmem:[%s1 + $0x90] sm:$0xff]
  %v3850 = vld [vmem:[%s1 + $0x98] sm:$0xff]
  %v3851 = vld [vmem:[%s1 + $0xa0] sm:$0xff]
  %v3852 = vld [vmem:[%s1 + $0xa8] sm:$0xff]
  %v3853 = vld [vmem:[%s1 + $0xb0] sm:$0xff]
  %v3854 = vld [vmem:[%s1 + $0xb8] sm:$0xff]
  %v3855 = vld [vmem:[%s1 + $0xc0] sm:$0xff]
  %v3856 = vld [vmem:[%s1 + $0xc8] sm:$0xff]
  %v3857 = vld [vmem:[%s1 + $0xd0] sm:$0xff]
  %v3858 = vld [vmem:[%s1 + $0xd8] sm:$0xff]
  %v3859 = vld [vmem:[%s1 + $0xe0] sm:$0xff]
  %v3860 = vld [vmem:[%s1 + $0xe8] sm:$0xff]
  %v3861 = vld [vmem:[%s1 + $0xf0] sm:$0xff]
  %v3862 = vld [vmem:[%s1 + $0xf8] sm:$0xff]
  %v3863 = vld [vmem:[%s1 + $0x100] sm:$0xff]
  %v3864 = vld [vmem:[%s1 + $0x108] sm:$0xff]
  %v3865 = vld [vmem:[%s1 + $0x110] sm:$0xff]
  %v3866 = vld [vmem:[%s1 + $0x118] sm:$0xff]
  %v3867 = vld [vmem:[%s1 + $0x120] sm:$0xff]
  %v3868 = vld [vmem:[%s1 + $0x128] sm:$0xff]
  %v3869 = vld [vmem:[%s1 + $0x130] sm:$0xff]
  %v3870 = vld [vmem:[%s1 + $0x138] sm:$0xff]
  %v3871 = vld [vmem:[%s1 + $0x140] sm:$0xff]
  %v3872 = vld [vmem:[%s1 + $0x148] sm:$0xff]
  %v3873 = vld [vmem:[%s1 + $0x150] sm:$0xff]
  %v3874 = vld [vmem:[%s1 + $0x158] sm:$0xff]
  %v3875 = vld [vmem:[%s1 + $0x160] sm:$0xff]
  %v3876 = vld [vmem:[%s1 + $0x168] sm:$0xff]
  %v3877 = vld [vmem:[%s1 + $0x170] sm:$0xff]
  %v3878 = vld [vmem:[%s1 + $0x178] sm:$0xff]
  %v3879 = vld [vmem:[%s1 + $0x180] sm:$0xff]
  %v3880 = vld [vmem:[%s1 + $0x188] sm:$0xff]
  %v3881 = vld [vmem:[%s1 + $0x190] sm:$0xff]
  %v3882 = vld [vmem:[%s1 + $0x198] sm:$0xff]
  %v3883 = vld [vmem:[%s1 + $0x1a0] sm:$0xff]
  %v3884 = vld [vmem:[%s1 + $0x1a8] sm:$0xff]
  %v3885 = vld [vmem:[%s1 + $0x1b0] sm:$0xff]
  %v3886 = vld [vmem:[%s1 + $0x1b8] sm:$0xff]
  %v3887 = vld [vmem:[%s1 + $0x1c0] sm:$0xff]
  %v3888 = vld [vmem:[%s1 + $0x1c8] sm:$0xff]
  %v3889 = vld [vmem:[%s1 + $0x1d0] sm:$0xff]
  %v3890 = vld [vmem:[%s1 + $0x1d8] sm:$0xff]
  %v3891 = vld [vmem:[%s1 + $0x1e0] sm:$0xff]
  %v3892 = vld [vmem:[%s1 + $0x1e8] sm:$0xff]
  %v3893 = vld [vmem:[%s1 + $0x1f0] sm:$0xff]
  %v3894 = vld [vmem:[%s1 + $0x1f8] sm:$0xff]
  %3959 = vrot.lane.b32.xlu0 %v3831, 8
  %v3960 = vpop.permute.xlu0 %3959
  %3961 = vrot.lane.b32.xlu0 %v3832, 8
  %v3962 = vpop.permute.xlu0 %3961
  %3963 = vrot.lane.b32.xlu0 %v3833, 8
  %v3964 = vpop.permute.xlu0 %3963
  %3965 = vrot.lane.b32.xlu0 %v3834, 8
  %v3966 = vpop.permute.xlu0 %3965
  %3967 = vrot.lane.b32.xlu0 %v3835, 8
  %v3968 = vpop.permute.xlu0 %3967
  %3969 = vrot.lane.b32.xlu0 %v3836, 8
  %v3970 = vpop.permute.xlu0 %3969
  %3971 = vrot.lane.b32.xlu0 %v3837, 8
  %v3972 = vpop.permute.xlu0 %3971
  %3973 = vrot.lane.b32.xlu0 %v3838, 8
  %v3974 = vpop.permute.xlu0 %3973
  %3975 = vrot.lane.b32.xlu0 %v3839, 8
  %v3976 = vpop.permute.xlu0 %3975
  %3977 = vrot.lane.b32.xlu0 %v3840, 8
  %v3978 = vpop.permute.xlu0 %3977
  %3979 = vrot.lane.b32.xlu0 %v3841, 8
  %v3980 = vpop.permute.xlu0 %3979
  %3981 = vrot.lane.b32.xlu0 %v3842, 8
  %v3982 = vpop.permute.xlu0 %3981
  %3983 = vrot.lane.b32.xlu0 %v3843, 8
  %v3984 = vpop.permute.xlu0 %3983
  %3985 = vrot.lane.b32.xlu0 %v3844, 8
  %v3986 = vpop.permute.xlu0 %3985
  %3987 = vrot.lane.b32.xlu0 %v3845, 8
  %v3988 = vpop.permute.xlu0 %3987
  %3989 = vrot.lane.b32.xlu0 %v3846, 8
  %v3990 = vpop.permute.xlu0 %3989
  %3991 = vrot.lane.b32.xlu0 %v3847, 8
  %v3992 = vpop.permute.xlu0 %3991
  %3993 = vrot.lane.b32.xlu0 %v3848, 8
  %v3994 = vpop.permute.xlu0 %3993
  %3995 = vrot.lane.b32.xlu0 %v3849, 8
  %v3996 = vpop.permute.xlu0 %3995
  %3997 = vrot.lane.b32.xlu0 %v3850, 8
  %v3998 = vpop.permute.xlu0 %3997
  %3999 = vrot.lane.b32.xlu0 %v3851, 8
  %v4000 = vpop.permute.xlu0 %3999
  %4001 = vrot.lane.b32.xlu0 %v3852, 8
  %v4002 = vpop.permute.xlu0 %4001
  %4003 = vrot.lane.b32.xlu0 %v3853, 8
  %v4004 = vpop.permute.xlu0 %4003
  %4005 = vrot.lane.b32.xlu0 %v3854, 8
  %v4006 = vpop.permute.xlu0 %4005
  %4007 = vrot.lane.b32.xlu0 %v3855, 8
  %v4008 = vpop.permute.xlu0 %4007
  %4009 = vrot.lane.b32.xlu0 %v3856, 8
  %v4010 = vpop.permute.xlu0 %4009
  %4011 = vrot.lane.b32.xlu0 %v3857, 8
  %v4012 = vpop.permute.xlu0 %4011
  %4013 = vrot.lane.b32.xlu0 %v3858, 8
  %v4014 = vpop.permute.xlu0 %4013
  %4015 = vrot.lane.b32.xlu0 %v3859, 8
  %v4016 = vpop.permute.xlu0 %4015
  %4017 = vrot.lane.b32.xlu0 %v3860, 8
  %v4018 = vpop.permute.xlu0 %4017
  %4019 = vrot.lane.b32.xlu0 %v3861, 8
  %v4020 = vpop.permute.xlu0 %4019
  %4021 = vrot.lane.b32.xlu0 %v3862, 8
  %v4022 = vpop.permute.xlu0 %4021
  %4023 = vrot.lane.b32.xlu0 %v3863, 8
  %v4024 = vpop.permute.xlu0 %4023
  %4025 = vrot.lane.b32.xlu0 %v3864, 8
  %v4026 = vpop.permute.xlu0 %4025
  %4027 = vrot.lane.b32.xlu0 %v3865, 8
  %v4028 = vpop.permute.xlu0 %4027
  %4029 = vrot.lane.b32.xlu0 %v3866, 8
  %v4030 = vpop.permute.xlu0 %4029
  %4031 = vrot.lane.b32.xlu0 %v3867, 8
  %v4032 = vpop.permute.xlu0 %4031
  %4033 = vrot.lane.b32.xlu0 %v3868, 8
  %v4034 = vpop.permute.xlu0 %4033
  %4035 = vrot.lane.b32.xlu0 %v3869, 8
  %v4036 = vpop.permute.xlu0 %4035
  %4037 = vrot.lane.b32.xlu0 %v3870, 8
  %v4038 = vpop.permute.xlu0 %4037
  %4039 = vrot.lane.b32.xlu0 %v3871, 8
  %v4040 = vpop.permute.xlu0 %4039
  %4041 = vrot.lane.b32.xlu0 %v3872, 8
  %v4042 = vpop.permute.xlu0 %4041
  %4043 = vrot.lane.b32.xlu0 %v3873, 8
  %v4044 = vpop.permute.xlu0 %4043
  %4045 = vrot.lane.b32.xlu0 %v3874, 8
  %v4046 = vpop.permute.xlu0 %4045
  %4047 = vrot.lane.b32.xlu0 %v3875, 8
  %v4048 = vpop.permute.xlu0 %4047
  %4049 = vrot.lane.b32.xlu0 %v3876, 8
  %v4050 = vpop.permute.xlu0 %4049
  %4051 = vrot.lane.b32.xlu0 %v3877, 8
  %v4052 = vpop.permute.xlu0 %4051
  %4053 = vrot.lane.b32.xlu0 %v3878, 8
  %v4054 = vpop.permute.xlu0 %4053
  %4055 = vrot.lane.b32.xlu0 %v3879, 8
  %v4056 = vpop.permute.xlu0 %4055
  %4057 = vrot.lane.b32.xlu0 %v3880, 8
  %v4058 = vpop.permute.xlu0 %4057
  %4059 = vrot.lane.b32.xlu0 %v3881, 8
  %v4060 = vpop.permute.xlu0 %4059
  %4061 = vrot.lane.b32.xlu0 %v3882, 8
  %v4062 = vpop.permute.xlu0 %4061
  %4063 = vrot.lane.b32.xlu0 %v3883, 8
  %v4064 = vpop.permute.xlu0 %4063
  %4065 = vrot.lane.b32.xlu0 %v3884, 8
  %v4066 = vpop.permute.xlu0 %4065
  %4067 = vrot.lane.b32.xlu0 %v3885, 8
  %v4068 = vpop.permute.xlu0 %4067
  %4069 = vrot.lane.b32.xlu0 %v3886, 8
  %v4070 = vpop.permute.xlu0 %4069
  %4071 = vrot.lane.b32.xlu0 %v3887, 8
  %v4072 = vpop.permute.xlu0 %4071
  %4073 = vrot.lane.b32.xlu0 %v3888, 8
  %v4074 = vpop.permute.xlu0 %4073
  %4075 = vrot.lane.b32.xlu0 %v3889, 8
  %v4076 = vpop.permute.xlu0 %4075
  %4077 = vrot.lane.b32.xlu0 %v3890, 8
  %v4078 = vpop.permute.xlu0 %4077
  %4079 = vrot.lane.b32.xlu0 %v3891, 8
  %v4080 = vpop.permute.xlu0 %4079
  %4081 = vrot.lane.b32.xlu0 %v3892, 8
  %v4082 = vpop.permute.xlu0 %4081
  %4083 = vrot.lane.b32.xlu0 %v3893, 8
  %v4084 = vpop.permute.xlu0 %4083
  %4085 = vrot.lane.b32.xlu0 %v3894, 8
  %v4086 = vpop.permute.xlu0 %4085
  %vm4151 = vcmask 130112
  %4152 = vst.msk [vmem:[%s3766 + $0x1] sm:$0xff] %vm4151, %v3960
  %4153 = vst.msk [vmem:[%s3766 + $0x9] sm:$0xff] %vm4151, %v3962
  %4154 = vst.msk [vmem:[%s3766 + $0x19] sm:$0xff] %vm4151, %v3964
  %4155 = vst.msk [vmem:[%s3766 + $0x21] sm:$0xff] %vm4151, %v3966
  %4156 = vst.msk [vmem:[%s3766 + $0x31] sm:$0xff] %vm4151, %v3968
  %4157 = vst.msk [vmem:[%s3766 + $0x39] sm:$0xff] %vm4151, %v3970
  %4158 = vst.msk [vmem:[%s3766 + $0x49] sm:$0xff] %vm4151, %v3972
  %4159 = vst.msk [vmem:[%s3766 + $0x51] sm:$0xff] %vm4151, %v3974
  %4160 = vst.msk [vmem:[%s3766 + $0x61] sm:$0xff] %vm4151, %v3976
  %4161 = vst.msk [vmem:[%s3766 + $0x69] sm:$0xff] %vm4151, %v3978
  %4162 = vst.msk [vmem:[%s3766 + $0x79] sm:$0xff] %vm4151, %v3980
  %4163 = vst.msk [vmem:[%s3766 + $0x81] sm:$0xff] %vm4151, %v3982
  %4164 = vst.msk [vmem:[%s3766 + $0x91] sm:$0xff] %vm4151, %v3984
  %4165 = vst.msk [vmem:[%s3766 + $0x99] sm:$0xff] %vm4151, %v3986
  %4166 = vst.msk [vmem:[%s3766 + $0xa9] sm:$0xff] %vm4151, %v3988
  %4167 = vst.msk [vmem:[%s3766 + $0xb1] sm:$0xff] %vm4151, %v3990
  %4168 = vst.msk [vmem:[%s3766 + $0xc1] sm:$0xff] %vm4151, %v3992
  %4169 = vst.msk [vmem:[%s3766 + $0xc9] sm:$0xff] %vm4151, %v3994
  %4170 = vst.msk [vmem:[%s3766 + $0xd9] sm:$0xff] %vm4151, %v3996
  %4171 = vst.msk [vmem:[%s3766 + $0xe1] sm:$0xff] %vm4151, %v3998
  %4172 = vst.msk [vmem:[%s3766 + $0xf1] sm:$0xff] %vm4151, %v4000
  %4173 = vst.msk [vmem:[%s3766 + $0xf9] sm:$0xff] %vm4151, %v4002
  %4174 = vst.msk [vmem:[%s3766 + $0x109] sm:$0xff] %vm4151, %v4004
  %4175 = vst.msk [vmem:[%s3766 + $0x111] sm:$0xff] %vm4151, %v4006
  %4176 = vst.msk [vmem:[%s3766 + $0x121] sm:$0xff] %vm4151, %v4008
  %4177 = vst.msk [vmem:[%s3766 + $0x129] sm:$0xff] %vm4151, %v4010
  %4178 = vst.msk [vmem:[%s3766 + $0x139] sm:$0xff] %vm4151, %v4012
  %4179 = vst.msk [vmem:[%s3766 + $0x141] sm:$0xff] %vm4151, %v4014
  %4180 = vst.msk [vmem:[%s3766 + $0x151] sm:$0xff] %vm4151, %v4016
  %4181 = vst.msk [vmem:[%s3766 + $0x159] sm:$0xff] %vm4151, %v4018
  %4182 = vst.msk [vmem:[%s3766 + $0x169] sm:$0xff] %vm4151, %v4020
  %4183 = vst.msk [vmem:[%s3766 + $0x171] sm:$0xff] %vm4151, %v4022
  %4184 = vst.msk [vmem:[%s3766 + $0x1b1] sm:$0xff] %vm4151, %v4024
  %4185 = vst.msk [vmem:[%s3766 + $0x1b9] sm:$0xff] %vm4151, %v4026
  %4186 = vst.msk [vmem:[%s3766 + $0x1c9] sm:$0xff] %vm4151, %v4028
  %4187 = vst.msk [vmem:[%s3766 + $0x1d1] sm:$0xff] %vm4151, %v4030
  %4188 = vst.msk [vmem:[%s3766 + $0x1e1] sm:$0xff] %vm4151, %v4032
  %4189 = vst.msk [vmem:[%s3766 + $0x1e9] sm:$0xff] %vm4151, %v4034
  %4190 = vst.msk [vmem:[%s3766 + $0x1f9] sm:$0xff] %vm4151, %v4036
  %4191 = vst.msk [vmem:[%s3766 + $0x201] sm:$0xff] %vm4151, %v4038
  %4192 = vst.msk [vmem:[%s3766 + $0x211] sm:$0xff] %vm4151, %v4040
  %4193 = vst.msk [vmem:[%s3766 + $0x219] sm:$0xff] %vm4151, %v4042
  %4194 = vst.msk [vmem:[%s3766 + $0x229] sm:$0xff] %vm4151, %v4044
  %4195 = vst.msk [vmem:[%s3766 + $0x231] sm:$0xff] %vm4151, %v4046
  %4196 = vst.msk [vmem:[%s3766 + $0x241] sm:$0xff] %vm4151, %v4048
  %4197 = vst.msk [vmem:[%s3766 + $0x249] sm:$0xff] %vm4151, %v4050
  %4198 = vst.msk [vmem:[%s3766 + $0x259] sm:$0xff] %vm4151, %v4052
  %4199 = vst.msk [vmem:[%s3766 + $0x261] sm:$0xff] %vm4151, %v4054
  %4200 = vst.msk [vmem:[%s3766 + $0x271] sm:$0xff] %vm4151, %v4056
  %4201 = vst.msk [vmem:[%s3766 + $0x279] sm:$0xff] %vm4151, %v4058
  %4202 = vst.msk [vmem:[%s3766 + $0x289] sm:$0xff] %vm4151, %v4060
  %4203 = vst.msk [vmem:[%s3766 + $0x291] sm:$0xff] %vm4151, %v4062
  %4204 = vst.msk [vmem:[%s3766 + $0x2a1] sm:$0xff] %vm4151, %v4064
  %4205 = vst.msk [vmem:[%s3766 + $0x2a9] sm:$0xff] %vm4151, %v4066
  %4206 = vst.msk [vmem:[%s3766 + $0x2b9] sm:$0xff] %vm4151, %v4068
  %4207 = vst.msk [vmem:[%s3766 + $0x2c1] sm:$0xff] %vm4151, %v4070
  %4208 = vst.msk [vmem:[%s3766 + $0x2d1] sm:$0xff] %vm4151, %v4072
  %4209 = vst.msk [vmem:[%s3766 + $0x2d9] sm:$0xff] %vm4151, %v4074
  %4210 = vst.msk [vmem:[%s3766 + $0x2e9] sm:$0xff] %vm4151, %v4076
  %4211 = vst.msk [vmem:[%s3766 + $0x2f1] sm:$0xff] %vm4151, %v4078
  %4212 = vst.msk [vmem:[%s3766 + $0x301] sm:$0xff] %vm4151, %v4080
  %4213 = vst.msk [vmem:[%s3766 + $0x309] sm:$0xff] %vm4151, %v4082
  %4214 = vst.msk [vmem:[%s3766 + $0x319] sm:$0xff] %vm4151, %v4084
  %4215 = vst.msk [vmem:[%s3766 + $0x321] sm:$0xff] %vm4151, %v4086
  %v4216 = vld [vmem:[#allocation2] sm:$0xff]
  %v4217 = vld [vmem:[#allocation2 + $0x8] sm:$0xff]
  %v4218 = vld [vmem:[#allocation2 + $0x10] sm:$0x3]
  %v4219 = vld [vmem:[#allocation2 + $0x18] sm:$0xff]
  %v4220 = vld [vmem:[#allocation2 + $0x20] sm:$0xff]
  %v4221 = vld [vmem:[#allocation2 + $0x28] sm:$0x3]
  %v4222 = vld [vmem:[#allocation2 + $0x30] sm:$0xff]
  %v4223 = vld [vmem:[#allocation2 + $0x38] sm:$0xff]
  %v4224 = vld [vmem:[#allocation2 + $0x40] sm:$0x3]
  %v4225 = vld [vmem:[#allocation2 + $0x48] sm:$0xff]
  %v4226 = vld [vmem:[#allocation2 + $0x50] sm:$0xff]
  %v4227 = vld [vmem:[#allocation2 + $0x58] sm:$0x3]
  %v4228 = vld [vmem:[#allocation2 + $0x60] sm:$0xff]
  %v4229 = vld [vmem:[#allocation2 + $0x68] sm:$0xff]
  %v4230 = vld [vmem:[#allocation2 + $0x70] sm:$0x3]
  %v4231 = vld [vmem:[#allocation2 + $0x78] sm:$0xff]
  %v4232 = vld [vmem:[#allocation2 + $0x80] sm:$0xff]
  %v4233 = vld [vmem:[#allocation2 + $0x88] sm:$0x3]
  %v4234 = vld [vmem:[#allocation2 + $0x90] sm:$0xff]
  %v4235 = vld [vmem:[#allocation2 + $0x98] sm:$0xff]
  %v4236 = vld [vmem:[#allocation2 + $0xa0] sm:$0x3]
  %v4237 = vld [vmem:[#allocation2 + $0xa8] sm:$0xff]
  %v4238 = vld [vmem:[#allocation2 + $0xb0] sm:$0xff]
  %v4239 = vld [vmem:[#allocation2 + $0xb8] sm:$0x3]
  %v4240 = vld [vmem:[#allocation2 + $0xc0] sm:$0xff]
  %v4241 = vld [vmem:[#allocation2 + $0xc8] sm:$0xff]
  %v4242 = vld [vmem:[#allocation2 + $0xd0] sm:$0x3]
  %v4243 = vld [vmem:[#allocation2 + $0xd8] sm:$0xff]
  %v4244 = vld [vmem:[#allocation2 + $0xe0] sm:$0xff]
  %v4245 = vld [vmem:[#allocation2 + $0xe8] sm:$0x3]
  %v4246 = vld [vmem:[#allocation2 + $0xf0] sm:$0xff]
  %v4247 = vld [vmem:[#allocation2 + $0xf8] sm:$0xff]
  %v4248 = vld [vmem:[#allocation2 + $0x100] sm:$0x3]
  %v4249 = vld [vmem:[#allocation2 + $0x108] sm:$0xff]
  %v4250 = vld [vmem:[#allocation2 + $0x110] sm:$0xff]
  %v4251 = vld [vmem:[#allocation2 + $0x118] sm:$0x3]
  %v4252 = vld [vmem:[#allocation2 + $0x120] sm:$0xff]
  %v4253 = vld [vmem:[#allocation2 + $0x128] sm:$0xff]
  %v4254 = vld [vmem:[#allocation2 + $0x130] sm:$0x3]
  %v4255 = vld [vmem:[#allocation2 + $0x138] sm:$0xff]
  %v4256 = vld [vmem:[#allocation2 + $0x140] sm:$0xff]
  %v4257 = vld [vmem:[#allocation2 + $0x148] sm:$0x3]
  %v4258 = vld [vmem:[#allocation2 + $0x150] sm:$0xff]
  %v4259 = vld [vmem:[#allocation2 + $0x158] sm:$0xff]
  %v4260 = vld [vmem:[#allocation2 + $0x160] sm:$0x3]
  %v4261 = vld [vmem:[#allocation2 + $0x168] sm:$0xff]
  %v4262 = vld [vmem:[#allocation2 + $0x170] sm:$0xff]
  %v4263 = vld [vmem:[#allocation2 + $0x178] sm:$0x3]
  %v4264 = vld [vmem:[#allocation2 + $0x180] sm:$0xff]
  %v4265 = vld [vmem:[#allocation2 + $0x188] sm:$0xff]
  %v4266 = vld [vmem:[#allocation2 + $0x190] sm:$0x3]
  %v4267 = vld [vmem:[#allocation2 + $0x198] sm:$0xff]
  %v4268 = vld [vmem:[#allocation2 + $0x1a0] sm:$0xff]
  %v4269 = vld [vmem:[#allocation2 + $0x1a8] sm:$0x3]
  %v4270 = vld [vmem:[#allocation2 + $0x1b0] sm:$0xff]
  %v4271 = vld [vmem:[#allocation2 + $0x1b8] sm:$0xff]
  %v4272 = vld [vmem:[#allocation2 + $0x1c0] sm:$0x3]
  %v4273 = vld [vmem:[#allocation2 + $0x1c8] sm:$0xff]
  %v4274 = vld [vmem:[#allocation2 + $0x1d0] sm:$0xff]
  %v4275 = vld [vmem:[#allocation2 + $0x1d8] sm:$0x3]
  %v4276 = vld [vmem:[#allocation2 + $0x1e0] sm:$0xff]
  %v4277 = vld [vmem:[#allocation2 + $0x1e8] sm:$0xff]
  %v4278 = vld [vmem:[#allocation2 + $0x1f0] sm:$0x3]
  %v4279 = vld [vmem:[#allocation2 + $0x1f8] sm:$0xff]
  %v4280 = vld [vmem:[#allocation2 + $0x200] sm:$0xff]
  %v4281 = vld [vmem:[#allocation2 + $0x208] sm:$0x3]
  %v4282 = vld [vmem:[#allocation2 + $0x210] sm:$0xff]
  %v4283 = vld [vmem:[#allocation2 + $0x218] sm:$0xff]
  %v4284 = vld [vmem:[#allocation2 + $0x220] sm:$0x3]
  %v4285 = vld [vmem:[#allocation2 + $0x228] sm:$0xff]
  %v4286 = vld [vmem:[#allocation2 + $0x230] sm:$0xff]
  %v4287 = vld [vmem:[#allocation2 + $0x238] sm:$0x3]
  %v4288 = vld [vmem:[#allocation2 + $0x240] sm:$0xff]
  %v4289 = vld [vmem:[#allocation2 + $0x248] sm:$0xff]
  %v4290 = vld [vmem:[#allocation2 + $0x250] sm:$0x3]
  %v4291 = vld [vmem:[#allocation2 + $0x258] sm:$0xff]
  %v4292 = vld [vmem:[#allocation2 + $0x260] sm:$0xff]
  %v4293 = vld [vmem:[#allocation2 + $0x268] sm:$0x3]
  %v4294 = vld [vmem:[#allocation2 + $0x270] sm:$0xff]
  %v4295 = vld [vmem:[#allocation2 + $0x278] sm:$0xff]
  %v4296 = vld [vmem:[#allocation2 + $0x280] sm:$0x3]
  %v4297 = vld [vmem:[#allocation2 + $0x288] sm:$0xff]
  %v4298 = vld [vmem:[#allocation2 + $0x290] sm:$0xff]
  %v4299 = vld [vmem:[#allocation2 + $0x298] sm:$0x3]
  %v4300 = vld [vmem:[#allocation2 + $0x2a0] sm:$0xff]
  %v4301 = vld [vmem:[#allocation2 + $0x2a8] sm:$0xff]
  %v4302 = vld [vmem:[#allocation2 + $0x2b0] sm:$0x3]
  %v4303 = vld [vmem:[#allocation2 + $0x2b8] sm:$0xff]
  %v4304 = vld [vmem:[#allocation2 + $0x2c0] sm:$0xff]
  %v4305 = vld [vmem:[#allocation2 + $0x2c8] sm:$0x3]
  %v4306 = vld [vmem:[#allocation2 + $0x2d0] sm:$0xff]
  %v4307 = vld [vmem:[#allocation2 + $0x2d8] sm:$0xff]
  %v4308 = vld [vmem:[#allocation2 + $0x2e0] sm:$0x3]
  %v4309 = vld [vmem:[#allocation2 + $0x2e8] sm:$0xff]
  %v4310 = vld [vmem:[#allocation2 + $0x2f0] sm:$0xff]
  %v4311 = vld [vmem:[#allocation2 + $0x2f8] sm:$0x3]
  %v4312 = vld [vmem:[#allocation2 + $0x300] sm:$0xff]
  %v4313 = vld [vmem:[#allocation2 + $0x308] sm:$0xff]
  %v4314 = vld [vmem:[#allocation2 + $0x310] sm:$0x3]
  %v4315 = vld [vmem:[#allocation2 + $0x318] sm:$0xff]
  %v4316 = vld [vmem:[#allocation2 + $0x320] sm:$0xff]
  %v4317 = vld [vmem:[#allocation2 + $0x328] sm:$0x3]
  %v4318 = vld [vmem:[#allocation2 + $0x330] sm:$0xff]
  %v4319 = vld [vmem:[#allocation2 + $0x338] sm:$0xff]
  %v4320 = vld [vmem:[#allocation2 + $0x340] sm:$0x3]
  %v4321 = vld [vmem:[#allocation2 + $0x348] sm:$0xff]
  %v4322 = vld [vmem:[#allocation2 + $0x350] sm:$0xff]
  %v4323 = vld [vmem:[#allocation2 + $0x358] sm:$0x3]
  %v4324 = vld [vmem:[%s5] sm:$0xf]
  %v4325 = vld [vmem:[%s5 + $0x4] sm:$0xf]
  %v4326 = vld [vmem:[%s5 + $0x8] sm:$0xf]
  %v4327 = vld [vmem:[%s5 + $0xc] sm:$0xf]
  %v4328 = vld [vmem:[%s5 + $0x10] sm:$0xf]
  %v4329 = vld [vmem:[%s5 + $0x14] sm:$0xf]
  %v4330 = vld [vmem:[%s5 + $0x18] sm:$0xf]
  %v4331 = vld [vmem:[%s5 + $0x1c] sm:$0xf]
  %v4332 = vld [vmem:[%s5 + $0x20] sm:$0xf]
  %v4333 = vld [vmem:[%s5 + $0x24] sm:$0xf]
  %v4334 = vld [vmem:[%s5 + $0x28] sm:$0xf]
  %v4335 = vld [vmem:[%s5 + $0x2c] sm:$0xf]
  %v4336 = vld [vmem:[%s5 + $0x30] sm:$0xf]
  %v4337 = vld [vmem:[%s5 + $0x34] sm:$0xf]
  %v4338 = vld [vmem:[%s5 + $0x38] sm:$0xf]
  %v4339 = vld [vmem:[%s5 + $0x3c] sm:$0xf]
  %v4340 = vld [vmem:[%s5 + $0x40] sm:$0xf]
  %v4341 = vld [vmem:[%s5 + $0x44] sm:$0xf]
  %v4342 = vld [vmem:[%s6] sm:$0x1]
  %v4343 = vld [vmem:[%s7] sm:$0x1]
  %v4440 = vrot.slane %v4216, 1
  %v4441 = vrot.slane %v4217, 1
  %v4442 = vsel %vm426, %v4440, %v4441
  %v4443 = vrot.slane %v4218, 1
  %v4444 = vsel %vm426, %v4441, %v4443
  %v4445 = vrot.slane %v4219, 1
  %v4446 = vrot.slane %v4220, 1
  %v4447 = vsel %vm426, %v4445, %v4446
  %v4448 = vrot.slane %v4221, 1
  %v4449 = vsel %vm426, %v4446, %v4448
  %v4450 = vrot.slane %v4222, 1
  %v4451 = vrot.slane %v4223, 1
  %v4452 = vsel %vm426, %v4450, %v4451
  %v4453 = vrot.slane %v4224, 1
  %v4454 = vsel %vm426, %v4451, %v4453
  %v4455 = vrot.slane %v4225, 1
  %v4456 = vrot.slane %v4226, 1
  %v4457 = vsel %vm426, %v4455, %v4456
  %v4458 = vrot.slane %v4227, 1
  %v4459 = vsel %vm426, %v4456, %v4458
  %v4460 = vrot.slane %v4228, 1
  %v4461 = vrot.slane %v4229, 1
  %v4462 = vsel %vm426, %v4460, %v4461
  %v4463 = vrot.slane %v4230, 1
  %v4464 = vsel %vm426, %v4461, %v4463
  %v4465 = vrot.slane %v4231, 1
  %v4466 = vrot.slane %v4232, 1
  %v4467 = vsel %vm426, %v4465, %v4466
  %v4468 = vrot.slane %v4233, 1
  %v4469 = vsel %vm426, %v4466, %v4468
  %v4470 = vrot.slane %v4234, 1
  %v4471 = vrot.slane %v4235, 1
  %v4472 = vsel %vm426, %v4470, %v4471
  %v4473 = vrot.slane %v4236, 1
  %v4474 = vsel %vm426, %v4471, %v4473
  %v4475 = vrot.slane %v4237, 1
  %v4476 = vrot.slane %v4238, 1
  %v4477 = vsel %vm426, %v4475, %v4476
  %v4478 = vrot.slane %v4239, 1
  %v4479 = vsel %vm426, %v4476, %v4478
  %v4480 = vrot.slane %v4240, 1
  %v4481 = vrot.slane %v4241, 1
  %v4482 = vsel %vm426, %v4480, %v4481
  %v4483 = vrot.slane %v4242, 1
  %v4484 = vsel %vm426, %v4481, %v4483
  %v4485 = vrot.slane %v4243, 1
  %v4486 = vrot.slane %v4244, 1
  %v4487 = vsel %vm426, %v4485, %v4486
  %v4488 = vrot.slane %v4245, 1
  %v4489 = vsel %vm426, %v4486, %v4488
  %v4490 = vrot.slane %v4246, 1
  %v4491 = vrot.slane %v4247, 1
  %v4492 = vsel %vm426, %v4490, %v4491
  %v4493 = vrot.slane %v4248, 1
  %v4494 = vsel %vm426, %v4491, %v4493
  %v4495 = vrot.slane %v4249, 1
  %v4496 = vrot.slane %v4250, 1
  %v4497 = vsel %vm426, %v4495, %v4496
  %v4498 = vrot.slane %v4251, 1
  %v4499 = vsel %vm426, %v4496, %v4498
  %v4500 = vrot.slane %v4252, 1
  %v4501 = vrot.slane %v4253, 1
  %v4502 = vsel %vm426, %v4500, %v4501
  %v4503 = vrot.slane %v4254, 1
  %v4504 = vsel %vm426, %v4501, %v4503
  %v4505 = vrot.slane %v4255, 1
  %v4506 = vrot.slane %v4256, 1
  %v4507 = vsel %vm426, %v4505, %v4506
  %v4508 = vrot.slane %v4257, 1
  %v4509 = vsel %vm426, %v4506, %v4508
  %v4510 = vrot.slane %v4258, 1
  %v4511 = vrot.slane %v4259, 1
  %v4512 = vsel %vm426, %v4510, %v4511
  %v4513 = vrot.slane %v4260, 1
  %v4514 = vsel %vm426, %v4511, %v4513
  %v4515 = vrot.slane %v4261, 1
  %v4516 = vrot.slane %v4262, 1
  %v4517 = vsel %vm426, %v4515, %v4516
  %v4518 = vrot.slane %v4263, 1
  %v4519 = vsel %vm426, %v4516, %v4518
  %v4520 = vrot.slane %v4270, 1
  %v4521 = vrot.slane %v4271, 1
  %v4522 = vsel %vm426, %v4520, %v4521
  %v4523 = vrot.slane %v4272, 1
  %v4524 = vsel %vm426, %v4521, %v4523
  %v4525 = vrot.slane %v4273, 1
  %v4526 = vrot.slane %v4274, 1
  %v4527 = vsel %vm426, %v4525, %v4526
  %v4528 = vrot.slane %v4275, 1
  %v4529 = vsel %vm426, %v4526, %v4528
  %v4530 = vrot.slane %v4276, 1
  %v4531 = vrot.slane %v4277, 1
  %v4532 = vsel %vm426, %v4530, %v4531
  %v4533 = vrot.slane %v4278, 1
  %v4534 = vsel %vm426, %v4531, %v4533
  %v4535 = vrot.slane %v4279, 1
  %v4536 = vrot.slane %v4280, 1
  %v4537 = vsel %vm426, %v4535, %v4536
  %v4538 = vrot.slane %v4281, 1
  %v4539 = vsel %vm426, %v4536, %v4538
  %v4540 = vrot.slane %v4282, 1
  %v4541 = vrot.slane %v4283, 1
  %v4542 = vsel %vm426, %v4540, %v4541
  %v4543 = vrot.slane %v4284, 1
  %v4544 = vsel %vm426, %v4541, %v4543
  %v4545 = vrot.slane %v4285, 1
  %v4546 = vrot.slane %v4286, 1
  %v4547 = vsel %vm426, %v4545, %v4546
  %v4548 = vrot.slane %v4287, 1
  %v4549 = vsel %vm426, %v4546, %v4548
  %v4550 = vrot.slane %v4288, 1
  %v4551 = vrot.slane %v4289, 1
  %v4552 = vsel %vm426, %v4550, %v4551
  %v4553 = vrot.slane %v4290, 1
  %v4554 = vsel %vm426, %v4551, %v4553
  %v4555 = vrot.slane %v4291, 1
  %v4556 = vrot.slane %v4292, 1
  %v4557 = vsel %vm426, %v4555, %v4556
  %v4558 = vrot.slane %v4293, 1
  %v4559 = vsel %vm426, %v4556, %v4558
  %v4560 = vrot.slane %v4294, 1
  %v4561 = vrot.slane %v4295, 1
  %v4562 = vsel %vm426, %v4560, %v4561
  %v4563 = vrot.slane %v4296, 1
  %v4564 = vsel %vm426, %v4561, %v4563
  %v4565 = vrot.slane %v4297, 1
  %v4566 = vrot.slane %v4298, 1
  %v4567 = vsel %vm426, %v4565, %v4566
  %v4568 = vrot.slane %v4299, 1
  %v4569 = vsel %vm426, %v4566, %v4568
  %v4570 = vrot.slane %v4300, 1
  %v4571 = vrot.slane %v4301, 1
  %v4572 = vsel %vm426, %v4570, %v4571
  %v4573 = vrot.slane %v4302, 1
  %v4574 = vsel %vm426, %v4571, %v4573
  %v4575 = vrot.slane %v4303, 1
  %v4576 = vrot.slane %v4304, 1
  %v4577 = vsel %vm426, %v4575, %v4576
  %v4578 = vrot.slane %v4305, 1
  %v4579 = vsel %vm426, %v4576, %v4578
  %v4580 = vrot.slane %v4306, 1
  %v4581 = vrot.slane %v4307, 1
  %v4582 = vsel %vm426, %v4580, %v4581
  %v4583 = vrot.slane %v4308, 1
  %v4584 = vsel %vm426, %v4581, %v4583
  %v4585 = vrot.slane %v4309, 1
  %v4586 = vrot.slane %v4310, 1
  %v4587 = vsel %vm426, %v4585, %v4586
  %v4588 = vrot.slane %v4311, 1
  %v4589 = vsel %vm426, %v4586, %v4588
  %v4590 = vrot.slane %v4312, 1
  %v4591 = vrot.slane %v4313, 1
  %v4592 = vsel %vm426, %v4590, %v4591
  %v4593 = vrot.slane %v4314, 1
  %v4594 = vsel %vm426, %v4591, %v4593
  %v4595 = vrot.slane %v4315, 1
  %v4596 = vrot.slane %v4316, 1
  %v4597 = vsel %vm426, %v4595, %v4596
  %v4598 = vrot.slane %v4317, 1
  %v4599 = vsel %vm426, %v4596, %v4598
  %4600 = vrot.lane.b32.xlu0 %v4442, 16
  %v4601 = vpop.permute.xlu0 %4600
  %4602 = vrot.lane.b32.xlu0 %v4444, 16
  %v4603 = vpop.permute.xlu0 %4602
  %4604 = vrot.lane.b32.xlu0 %v4447, 16
  %v4605 = vpop.permute.xlu0 %4604
  %4606 = vrot.lane.b32.xlu0 %v4449, 16
  %v4607 = vpop.permute.xlu0 %4606
  %4608 = vrot.lane.b32.xlu0 %v4452, 16
  %v4609 = vpop.permute.xlu0 %4608
  %4610 = vrot.lane.b32.xlu0 %v4454, 16
  %v4611 = vpop.permute.xlu0 %4610
  %4612 = vrot.lane.b32.xlu0 %v4457, 16
  %v4613 = vpop.permute.xlu0 %4612
  %4614 = vrot.lane.b32.xlu0 %v4459, 16
  %v4615 = vpop.permute.xlu0 %4614
  %4616 = vrot.lane.b32.xlu0 %v4462, 16
  %v4617 = vpop.permute.xlu0 %4616
  %4618 = vrot.lane.b32.xlu0 %v4464, 16
  %v4619 = vpop.permute.xlu0 %4618
  %4620 = vrot.lane.b32.xlu0 %v4467, 16
  %v4621 = vpop.permute.xlu0 %4620
  %4622 = vrot.lane.b32.xlu0 %v4469, 16
  %v4623 = vpop.permute.xlu0 %4622
  %4624 = vrot.lane.b32.xlu0 %v4472, 16
  %v4625 = vpop.permute.xlu0 %4624
  %4626 = vrot.lane.b32.xlu0 %v4474, 16
  %v4627 = vpop.permute.xlu0 %4626
  %4628 = vrot.lane.b32.xlu0 %v4477, 16
  %v4629 = vpop.permute.xlu0 %4628
  %4630 = vrot.lane.b32.xlu0 %v4479, 16
  %v4631 = vpop.permute.xlu0 %4630
  %4632 = vrot.lane.b32.xlu0 %v4482, 16
  %v4633 = vpop.permute.xlu0 %4632
  %4634 = vrot.lane.b32.xlu0 %v4484, 16
  %v4635 = vpop.permute.xlu0 %4634
  %4636 = vrot.lane.b32.xlu0 %v4487, 16
  %v4637 = vpop.permute.xlu0 %4636
  %4638 = vrot.lane.b32.xlu0 %v4489, 16
  %v4639 = vpop.permute.xlu0 %4638
  %4640 = vrot.lane.b32.xlu0 %v4492, 16
  %v4641 = vpop.permute.xlu0 %4640
  %4642 = vrot.lane.b32.xlu0 %v4494, 16
  %v4643 = vpop.permute.xlu0 %4642
  %4644 = vrot.lane.b32.xlu0 %v4497, 16
  %v4645 = vpop.permute.xlu0 %4644
  %4646 = vrot.lane.b32.xlu0 %v4499, 16
  %v4647 = vpop.permute.xlu0 %4646
  %4648 = vrot.lane.b32.xlu0 %v4502, 16
  %v4649 = vpop.permute.xlu0 %4648
  %4650 = vrot.lane.b32.xlu0 %v4504, 16
  %v4651 = vpop.permute.xlu0 %4650
  %4652 = vrot.lane.b32.xlu0 %v4507, 16
  %v4653 = vpop.permute.xlu0 %4652
  %4654 = vrot.lane.b32.xlu0 %v4509, 16
  %v4655 = vpop.permute.xlu0 %4654
  %4656 = vrot.lane.b32.xlu0 %v4512, 16
  %v4657 = vpop.permute.xlu0 %4656
  %4658 = vrot.lane.b32.xlu0 %v4514, 16
  %v4659 = vpop.permute.xlu0 %4658
  %4660 = vrot.lane.b32.xlu0 %v4517, 16
  %v4661 = vpop.permute.xlu0 %4660
  %4662 = vrot.lane.b32.xlu0 %v4519, 16
  %v4663 = vpop.permute.xlu0 %4662
  %4664 = vrot.lane.b32.xlu0 %v4522, 16
  %v4665 = vpop.permute.xlu0 %4664
  %4666 = vrot.lane.b32.xlu0 %v4524, 16
  %v4667 = vpop.permute.xlu0 %4666
  %4668 = vrot.lane.b32.xlu0 %v4527, 16
  %v4669 = vpop.permute.xlu0 %4668
  %4670 = vrot.lane.b32.xlu0 %v4529, 16
  %v4671 = vpop.permute.xlu0 %4670
  %4672 = vrot.lane.b32.xlu0 %v4532, 16
  %v4673 = vpop.permute.xlu0 %4672
  %4674 = vrot.lane.b32.xlu0 %v4534, 16
  %v4675 = vpop.permute.xlu0 %4674
  %4676 = vrot.lane.b32.xlu0 %v4537, 16
  %v4677 = vpop.permute.xlu0 %4676
  %4678 = vrot.lane.b32.xlu0 %v4539, 16
  %v4679 = vpop.permute.xlu0 %4678
  %4680 = vrot.lane.b32.xlu0 %v4542, 16
  %v4681 = vpop.permute.xlu0 %4680
  %4682 = vrot.lane.b32.xlu0 %v4544, 16
  %v4683 = vpop.permute.xlu0 %4682
  %4684 = vrot.lane.b32.xlu0 %v4547, 16
  %v4685 = vpop.permute.xlu0 %4684
  %4686 = vrot.lane.b32.xlu0 %v4549, 16
  %v4687 = vpop.permute.xlu0 %4686
  %4688 = vrot.lane.b32.xlu0 %v4552, 16
  %v4689 = vpop.permute.xlu0 %4688
  %4690 = vrot.lane.b32.xlu0 %v4554, 16
  %v4691 = vpop.permute.xlu0 %4690
  %4692 = vrot.lane.b32.xlu0 %v4557, 16
  %v4693 = vpop.permute.xlu0 %4692
  %4694 = vrot.lane.b32.xlu0 %v4559, 16
  %v4695 = vpop.permute.xlu0 %4694
  %4696 = vrot.lane.b32.xlu0 %v4562, 16
  %v4697 = vpop.permute.xlu0 %4696
  %4698 = vrot.lane.b32.xlu0 %v4564, 16
  %v4699 = vpop.permute.xlu0 %4698
  %4700 = vrot.lane.b32.xlu0 %v4567, 16
  %v4701 = vpop.permute.xlu0 %4700
  %4702 = vrot.lane.b32.xlu0 %v4569, 16
  %v4703 = vpop.permute.xlu0 %4702
  %4704 = vrot.lane.b32.xlu0 %v4572, 16
  %v4705 = vpop.permute.xlu0 %4704
  %4706 = vrot.lane.b32.xlu0 %v4574, 16
  %v4707 = vpop.permute.xlu0 %4706
  %4708 = vrot.lane.b32.xlu0 %v4577, 16
  %v4709 = vpop.permute.xlu0 %4708
  %4710 = vrot.lane.b32.xlu0 %v4579, 16
  %v4711 = vpop.permute.xlu0 %4710
  %4712 = vrot.lane.b32.xlu0 %v4582, 16
  %v4713 = vpop.permute.xlu0 %4712
  %4714 = vrot.lane.b32.xlu0 %v4584, 16
  %v4715 = vpop.permute.xlu0 %4714
  %4716 = vrot.lane.b32.xlu0 %v4587, 16
  %v4717 = vpop.permute.xlu0 %4716
  %4718 = vrot.lane.b32.xlu0 %v4589, 16
  %v4719 = vpop.permute.xlu0 %4718
  %4720 = vrot.lane.b32.xlu0 %v4592, 16
  %v4721 = vpop.permute.xlu0 %4720
  %4722 = vrot.lane.b32.xlu0 %v4594, 16
  %v4723 = vpop.permute.xlu0 %4722
  %4724 = vrot.lane.b32.xlu0 %v4597, 16
  %v4725 = vpop.permute.xlu0 %4724
  %4726 = vrot.lane.b32.xlu0 %v4599, 16
  %v4727 = vpop.permute.xlu0 %4726
  %v4792 = vrot.slane %v4216, 2
  %v4793 = vrot.slane %v4217, 2
  %v4794 = vsel %vm779, %v4792, %v4793
  %v4795 = vrot.slane %v4218, 2
  %v4796 = vsel %vm779, %v4793, %v4795
  %v4797 = vrot.slane %v4219, 2
  %v4798 = vrot.slane %v4220, 2
  %v4799 = vsel %vm779, %v4797, %v4798
  %v4800 = vrot.slane %v4221, 2
  %v4801 = vsel %vm779, %v4798, %v4800
  %v4802 = vrot.slane %v4222, 2
  %v4803 = vrot.slane %v4223, 2
  %v4804 = vsel %vm779, %v4802, %v4803
  %v4805 = vrot.slane %v4224, 2
  %v4806 = vsel %vm779, %v4803, %v4805
  %v4807 = vrot.slane %v4225, 2
  %v4808 = vrot.slane %v4226, 2
  %v4809 = vsel %vm779, %v4807, %v4808
  %v4810 = vrot.slane %v4227, 2
  %v4811 = vsel %vm779, %v4808, %v4810
  %v4812 = vrot.slane %v4228, 2
  %v4813 = vrot.slane %v4229, 2
  %v4814 = vsel %vm779, %v4812, %v4813
  %v4815 = vrot.slane %v4230, 2
  %v4816 = vsel %vm779, %v4813, %v4815
  %v4817 = vrot.slane %v4231, 2
  %v4818 = vrot.slane %v4232, 2
  %v4819 = vsel %vm779, %v4817, %v4818
  %v4820 = vrot.slane %v4233, 2
  %v4821 = vsel %vm779, %v4818, %v4820
  %v4822 = vrot.slane %v4234, 2
  %v4823 = vrot.slane %v4235, 2
  %v4824 = vsel %vm779, %v4822, %v4823
  %v4825 = vrot.slane %v4236, 2
  %v4826 = vsel %vm779, %v4823, %v4825
  %v4827 = vrot.slane %v4237, 2
  %v4828 = vrot.slane %v4238, 2
  %v4829 = vsel %vm779, %v4827, %v4828
  %v4830 = vrot.slane %v4239, 2
  %v4831 = vsel %vm779, %v4828, %v4830
  %v4832 = vrot.slane %v4240, 2
  %v4833 = vrot.slane %v4241, 2
  %v4834 = vsel %vm779, %v4832, %v4833
  %v4835 = vrot.slane %v4242, 2
  %v4836 = vsel %vm779, %v4833, %v4835
  %v4837 = vrot.slane %v4243, 2
  %v4838 = vrot.slane %v4244, 2
  %v4839 = vsel %vm779, %v4837, %v4838
  %v4840 = vrot.slane %v4245, 2
  %v4841 = vsel %vm779, %v4838, %v4840
  %v4842 = vrot.slane %v4246, 2
  %v4843 = vrot.slane %v4247, 2
  %v4844 = vsel %vm779, %v4842, %v4843
  %v4845 = vrot.slane %v4248, 2
  %v4846 = vsel %vm779, %v4843, %v4845
  %v4847 = vrot.slane %v4249, 2
  %v4848 = vrot.slane %v4250, 2
  %v4849 = vsel %vm779, %v4847, %v4848
  %v4850 = vrot.slane %v4251, 2
  %v4851 = vsel %vm779, %v4848, %v4850
  %v4852 = vrot.slane %v4252, 2
  %v4853 = vrot.slane %v4253, 2
  %v4854 = vsel %vm779, %v4852, %v4853
  %v4855 = vrot.slane %v4254, 2
  %v4856 = vsel %vm779, %v4853, %v4855
  %v4857 = vrot.slane %v4255, 2
  %v4858 = vrot.slane %v4256, 2
  %v4859 = vsel %vm779, %v4857, %v4858
  %v4860 = vrot.slane %v4257, 2
  %v4861 = vsel %vm779, %v4858, %v4860
  %v4862 = vrot.slane %v4258, 2
  %v4863 = vrot.slane %v4259, 2
  %v4864 = vsel %vm779, %v4862, %v4863
  %v4865 = vrot.slane %v4260, 2
  %v4866 = vsel %vm779, %v4863, %v4865
  %v4867 = vrot.slane %v4261, 2
  %v4868 = vrot.slane %v4262, 2
  %v4869 = vsel %vm779, %v4867, %v4868
  %v4870 = vrot.slane %v4263, 2
  %v4871 = vsel %vm779, %v4868, %v4870
  %v4872 = vrot.slane %v4270, 2
  %v4873 = vrot.slane %v4271, 2
  %v4874 = vsel %vm779, %v4872, %v4873
  %v4875 = vrot.slane %v4272, 2
  %v4876 = vsel %vm779, %v4873, %v4875
  %v4877 = vrot.slane %v4273, 2
  %v4878 = vrot.slane %v4274, 2
  %v4879 = vsel %vm779, %v4877, %v4878
  %v4880 = vrot.slane %v4275, 2
  %v4881 = vsel %vm779, %v4878, %v4880
  %v4882 = vrot.slane %v4276, 2
  %v4883 = vrot.slane %v4277, 2
  %v4884 = vsel %vm779, %v4882, %v4883
  %v4885 = vrot.slane %v4278, 2
  %v4886 = vsel %vm779, %v4883, %v4885
  %v4887 = vrot.slane %v4279, 2
  %v4888 = vrot.slane %v4280, 2
  %v4889 = vsel %vm779, %v4887, %v4888
  %v4890 = vrot.slane %v4281, 2
  %v4891 = vsel %vm779, %v4888, %v4890
  %v4892 = vrot.slane %v4282, 2
  %v4893 = vrot.slane %v4283, 2
  %v4894 = vsel %vm779, %v4892, %v4893
  %v4895 = vrot.slane %v4284, 2
  %v4896 = vsel %vm779, %v4893, %v4895
  %v4897 = vrot.slane %v4285, 2
  %v4898 = vrot.slane %v4286, 2
  %v4899 = vsel %vm779, %v4897, %v4898
  %v4900 = vrot.slane %v4287, 2
  %v4901 = vsel %vm779, %v4898, %v4900
  %v4902 = vrot.slane %v4288, 2
  %v4903 = vrot.slane %v4289, 2
  %v4904 = vsel %vm779, %v4902, %v4903
  %v4905 = vrot.slane %v4290, 2
  %v4906 = vsel %vm779, %v4903, %v4905
  %v4907 = vrot.slane %v4291, 2
  %v4908 = vrot.slane %v4292, 2
  %v4909 = vsel %vm779, %v4907, %v4908
  %v4910 = vrot.slane %v4293, 2
  %v4911 = vsel %vm779, %v4908, %v4910
  %v4912 = vrot.slane %v4294, 2
  %v4913 = vrot.slane %v4295, 2
  %v4914 = vsel %vm779, %v4912, %v4913
  %v4915 = vrot.slane %v4296, 2
  %v4916 = vsel %vm779, %v4913, %v4915
  %v4917 = vrot.slane %v4297, 2
  %v4918 = vrot.slane %v4298, 2
  %v4919 = vsel %vm779, %v4917, %v4918
  %v4920 = vrot.slane %v4299, 2
  %v4921 = vsel %vm779, %v4918, %v4920
  %v4922 = vrot.slane %v4300, 2
  %v4923 = vrot.slane %v4301, 2
  %v4924 = vsel %vm779, %v4922, %v4923
  %v4925 = vrot.slane %v4302, 2
  %v4926 = vsel %vm779, %v4923, %v4925
  %v4927 = vrot.slane %v4303, 2
  %v4928 = vrot.slane %v4304, 2
  %v4929 = vsel %vm779, %v4927, %v4928
  %v4930 = vrot.slane %v4305, 2
  %v4931 = vsel %vm779, %v4928, %v4930
  %v4932 = vrot.slane %v4306, 2
  %v4933 = vrot.slane %v4307, 2
  %v4934 = vsel %vm779, %v4932, %v4933
  %v4935 = vrot.slane %v4308, 2
  %v4936 = vsel %vm779, %v4933, %v4935
  %v4937 = vrot.slane %v4309, 2
  %v4938 = vrot.slane %v4310, 2
  %v4939 = vsel %vm779, %v4937, %v4938
  %v4940 = vrot.slane %v4311, 2
  %v4941 = vsel %vm779, %v4938, %v4940
  %v4942 = vrot.slane %v4312, 2
  %v4943 = vrot.slane %v4313, 2
  %v4944 = vsel %vm779, %v4942, %v4943
  %v4945 = vrot.slane %v4314, 2
  %v4946 = vsel %vm779, %v4943, %v4945
  %v4947 = vrot.slane %v4315, 2
  %v4948 = vrot.slane %v4316, 2
  %v4949 = vsel %vm779, %v4947, %v4948
  %v4950 = vrot.slane %v4317, 2
  %v4951 = vsel %vm779, %v4948, %v4950
  %4952 = vrot.lane.b32.xlu0 %v4794, 32
  %v4953 = vpop.permute.xlu0 %4952
  %4954 = vrot.lane.b32.xlu0 %v4796, 32
  %v4955 = vpop.permute.xlu0 %4954
  %4956 = vrot.lane.b32.xlu0 %v4799, 32
  %v4957 = vpop.permute.xlu0 %4956
  %4958 = vrot.lane.b32.xlu0 %v4801, 32
  %v4959 = vpop.permute.xlu0 %4958
  %4960 = vrot.lane.b32.xlu0 %v4804, 32
  %v4961 = vpop.permute.xlu0 %4960
  %4962 = vrot.lane.b32.xlu0 %v4806, 32
  %v4963 = vpop.permute.xlu0 %4962
  %4964 = vrot.lane.b32.xlu0 %v4809, 32
  %v4965 = vpop.permute.xlu0 %4964
  %4966 = vrot.lane.b32.xlu0 %v4811, 32
  %v4967 = vpop.permute.xlu0 %4966
  %4968 = vrot.lane.b32.xlu0 %v4814, 32
  %v4969 = vpop.permute.xlu0 %4968
  %4970 = vrot.lane.b32.xlu0 %v4816, 32
  %v4971 = vpop.permute.xlu0 %4970
  %4972 = vrot.lane.b32.xlu0 %v4819, 32
  %v4973 = vpop.permute.xlu0 %4972
  %4974 = vrot.lane.b32.xlu0 %v4821, 32
  %v4975 = vpop.permute.xlu0 %4974
  %4976 = vrot.lane.b32.xlu0 %v4824, 32
  %v4977 = vpop.permute.xlu0 %4976
  %4978 = vrot.lane.b32.xlu0 %v4826, 32
  %v4979 = vpop.permute.xlu0 %4978
  %4980 = vrot.lane.b32.xlu0 %v4829, 32
  %v4981 = vpop.permute.xlu0 %4980
  %4982 = vrot.lane.b32.xlu0 %v4831, 32
  %v4983 = vpop.permute.xlu0 %4982
  %4984 = vrot.lane.b32.xlu0 %v4834, 32
  %v4985 = vpop.permute.xlu0 %4984
  %4986 = vrot.lane.b32.xlu0 %v4836, 32
  %v4987 = vpop.permute.xlu0 %4986
  %4988 = vrot.lane.b32.xlu0 %v4839, 32
  %v4989 = vpop.permute.xlu0 %4988
  %4990 = vrot.lane.b32.xlu0 %v4841, 32
  %v4991 = vpop.permute.xlu0 %4990
  %4992 = vrot.lane.b32.xlu0 %v4844, 32
  %v4993 = vpop.permute.xlu0 %4992
  %4994 = vrot.lane.b32.xlu0 %v4846, 32
  %v4995 = vpop.permute.xlu0 %4994
  %4996 = vrot.lane.b32.xlu0 %v4849, 32
  %v4997 = vpop.permute.xlu0 %4996
  %4998 = vrot.lane.b32.xlu0 %v4851, 32
  %v4999 = vpop.permute.xlu0 %4998
  %5000 = vrot.lane.b32.xlu0 %v4854, 32
  %v5001 = vpop.permute.xlu0 %5000
  %5002 = vrot.lane.b32.xlu0 %v4856, 32
  %v5003 = vpop.permute.xlu0 %5002
  %5004 = vrot.lane.b32.xlu0 %v4859, 32
  %v5005 = vpop.permute.xlu0 %5004
  %5006 = vrot.lane.b32.xlu0 %v4861, 32
  %v5007 = vpop.permute.xlu0 %5006
  %5008 = vrot.lane.b32.xlu0 %v4864, 32
  %v5009 = vpop.permute.xlu0 %5008
  %5010 = vrot.lane.b32.xlu0 %v4866, 32
  %v5011 = vpop.permute.xlu0 %5010
  %5012 = vrot.lane.b32.xlu0 %v4869, 32
  %v5013 = vpop.permute.xlu0 %5012
  %5014 = vrot.lane.b32.xlu0 %v4871, 32
  %v5015 = vpop.permute.xlu0 %5014
  %5016 = vrot.lane.b32.xlu0 %v4874, 32
  %v5017 = vpop.permute.xlu0 %5016
  %5018 = vrot.lane.b32.xlu0 %v4876, 32
  %v5019 = vpop.permute.xlu0 %5018
  %5020 = vrot.lane.b32.xlu0 %v4879, 32
  %v5021 = vpop.permute.xlu0 %5020
  %5022 = vrot.lane.b32.xlu0 %v4881, 32
  %v5023 = vpop.permute.xlu0 %5022
  %5024 = vrot.lane.b32.xlu0 %v4884, 32
  %v5025 = vpop.permute.xlu0 %5024
  %5026 = vrot.lane.b32.xlu0 %v4886, 32
  %v5027 = vpop.permute.xlu0 %5026
  %5028 = vrot.lane.b32.xlu0 %v4889, 32
  %v5029 = vpop.permute.xlu0 %5028
  %5030 = vrot.lane.b32.xlu0 %v4891, 32
  %v5031 = vpop.permute.xlu0 %5030
  %5032 = vrot.lane.b32.xlu0 %v4894, 32
  %v5033 = vpop.permute.xlu0 %5032
  %5034 = vrot.lane.b32.xlu0 %v4896, 32
  %v5035 = vpop.permute.xlu0 %5034
  %5036 = vrot.lane.b32.xlu0 %v4899, 32
  %v5037 = vpop.permute.xlu0 %5036
  %5038 = vrot.lane.b32.xlu0 %v4901, 32
  %v5039 = vpop.permute.xlu0 %5038
  %5040 = vrot.lane.b32.xlu0 %v4904, 32
  %v5041 = vpop.permute.xlu0 %5040
  %5042 = vrot.lane.b32.xlu0 %v4906, 32
  %v5043 = vpop.permute.xlu0 %5042
  %5044 = vrot.lane.b32.xlu0 %v4909, 32
  %v5045 = vpop.permute.xlu0 %5044
  %5046 = vrot.lane.b32.xlu0 %v4911, 32
  %v5047 = vpop.permute.xlu0 %5046
  %5048 = vrot.lane.b32.xlu0 %v4914, 32
  %v5049 = vpop.permute.xlu0 %5048
  %5050 = vrot.lane.b32.xlu0 %v4916, 32
  %v5051 = vpop.permute.xlu0 %5050
  %5052 = vrot.lane.b32.xlu0 %v4919, 32
  %v5053 = vpop.permute.xlu0 %5052
  %5054 = vrot.lane.b32.xlu0 %v4921, 32
  %v5055 = vpop.permute.xlu0 %5054
  %5056 = vrot.lane.b32.xlu0 %v4924, 32
  %v5057 = vpop.permute.xlu0 %5056
  %5058 = vrot.lane.b32.xlu0 %v4926, 32
  %v5059 = vpop.permute.xlu0 %5058
  %5060 = vrot.lane.b32.xlu0 %v4929, 32
  %v5061 = vpop.permute.xlu0 %5060
  %5062 = vrot.lane.b32.xlu0 %v4931, 32
  %v5063 = vpop.permute.xlu0 %5062
  %5064 = vrot.lane.b32.xlu0 %v4934, 32
  %v5065 = vpop.permute.xlu0 %5064
  %5066 = vrot.lane.b32.xlu0 %v4936, 32
  %v5067 = vpop.permute.xlu0 %5066
  %5068 = vrot.lane.b32.xlu0 %v4939, 32
  %v5069 = vpop.permute.xlu0 %5068
  %5070 = vrot.lane.b32.xlu0 %v4941, 32
  %v5071 = vpop.permute.xlu0 %5070
  %5072 = vrot.lane.b32.xlu0 %v4944, 32
  %v5073 = vpop.permute.xlu0 %5072
  %5074 = vrot.lane.b32.xlu0 %v4946, 32
  %v5075 = vpop.permute.xlu0 %5074
  %5076 = vrot.lane.b32.xlu0 %v4949, 32
  %v5077 = vpop.permute.xlu0 %5076
  %5078 = vrot.lane.b32.xlu0 %v4951, 32
  %v5079 = vpop.permute.xlu0 %5078
  %5148 = vrot.lane.b32.xlu0 %v4219, 48
  %v5149 = vpop.permute.xlu0 %5148
  %5150 = vrot.lane.b32.xlu0 %v4220, 48
  %v5151 = vpop.permute.xlu0 %5150
  %5152 = vrot.lane.b32.xlu0 %v4222, 48
  %v5153 = vpop.permute.xlu0 %5152
  %5154 = vrot.lane.b32.xlu0 %v4223, 48
  %v5155 = vpop.permute.xlu0 %5154
  %5156 = vrot.lane.b32.xlu0 %v4225, 48
  %v5157 = vpop.permute.xlu0 %5156
  %5158 = vrot.lane.b32.xlu0 %v4226, 48
  %v5159 = vpop.permute.xlu0 %5158
  %5160 = vrot.lane.b32.xlu0 %v4228, 48
  %v5161 = vpop.permute.xlu0 %5160
  %5162 = vrot.lane.b32.xlu0 %v4229, 48
  %v5163 = vpop.permute.xlu0 %5162
  %5164 = vrot.lane.b32.xlu0 %v4231, 48
  %v5165 = vpop.permute.xlu0 %5164
  %5166 = vrot.lane.b32.xlu0 %v4232, 48
  %v5167 = vpop.permute.xlu0 %5166
  %5168 = vrot.lane.b32.xlu0 %v4234, 48
  %v5169 = vpop.permute.xlu0 %5168
  %5170 = vrot.lane.b32.xlu0 %v4235, 48
  %v5171 = vpop.permute.xlu0 %5170
  %5172 = vrot.lane.b32.xlu0 %v4237, 48
  %v5173 = vpop.permute.xlu0 %5172
  %5174 = vrot.lane.b32.xlu0 %v4238, 48
  %v5175 = vpop.permute.xlu0 %5174
  %5176 = vrot.lane.b32.xlu0 %v4240, 48
  %v5177 = vpop.permute.xlu0 %5176
  %5178 = vrot.lane.b32.xlu0 %v4241, 48
  %v5179 = vpop.permute.xlu0 %5178
  %5180 = vrot.lane.b32.xlu0 %v4243, 48
  %v5181 = vpop.permute.xlu0 %5180
  %5182 = vrot.lane.b32.xlu0 %v4244, 48
  %v5183 = vpop.permute.xlu0 %5182
  %5184 = vrot.lane.b32.xlu0 %v4246, 48
  %v5185 = vpop.permute.xlu0 %5184
  %5186 = vrot.lane.b32.xlu0 %v4247, 48
  %v5187 = vpop.permute.xlu0 %5186
  %5188 = vrot.lane.b32.xlu0 %v4249, 48
  %v5189 = vpop.permute.xlu0 %5188
  %5190 = vrot.lane.b32.xlu0 %v4250, 48
  %v5191 = vpop.permute.xlu0 %5190
  %5192 = vrot.lane.b32.xlu0 %v4252, 48
  %v5193 = vpop.permute.xlu0 %5192
  %5194 = vrot.lane.b32.xlu0 %v4253, 48
  %v5195 = vpop.permute.xlu0 %5194
  %5196 = vrot.lane.b32.xlu0 %v4255, 48
  %v5197 = vpop.permute.xlu0 %5196
  %5198 = vrot.lane.b32.xlu0 %v4256, 48
  %v5199 = vpop.permute.xlu0 %5198
  %5200 = vrot.lane.b32.xlu0 %v4258, 48
  %v5201 = vpop.permute.xlu0 %5200
  %5202 = vrot.lane.b32.xlu0 %v4259, 48
  %v5203 = vpop.permute.xlu0 %5202
  %5204 = vrot.lane.b32.xlu0 %v4261, 48
  %v5205 = vpop.permute.xlu0 %5204
  %5206 = vrot.lane.b32.xlu0 %v4262, 48
  %v5207 = vpop.permute.xlu0 %5206
  %5208 = vrot.lane.b32.xlu0 %v4264, 48
  %v5209 = vpop.permute.xlu0 %5208
  %5210 = vrot.lane.b32.xlu0 %v4265, 48
  %v5211 = vpop.permute.xlu0 %5210
  %5212 = vrot.lane.b32.xlu0 %v4273, 48
  %v5213 = vpop.permute.xlu0 %5212
  %5214 = vrot.lane.b32.xlu0 %v4274, 48
  %v5215 = vpop.permute.xlu0 %5214
  %5216 = vrot.lane.b32.xlu0 %v4276, 48
  %v5217 = vpop.permute.xlu0 %5216
  %5218 = vrot.lane.b32.xlu0 %v4277, 48
  %v5219 = vpop.permute.xlu0 %5218
  %5220 = vrot.lane.b32.xlu0 %v4279, 48
  %v5221 = vpop.permute.xlu0 %5220
  %5222 = vrot.lane.b32.xlu0 %v4280, 48
  %v5223 = vpop.permute.xlu0 %5222
  %5224 = vrot.lane.b32.xlu0 %v4282, 48
  %v5225 = vpop.permute.xlu0 %5224
  %5226 = vrot.lane.b32.xlu0 %v4283, 48
  %v5227 = vpop.permute.xlu0 %5226
  %5228 = vrot.lane.b32.xlu0 %v4285, 48
  %v5229 = vpop.permute.xlu0 %5228
  %5230 = vrot.lane.b32.xlu0 %v4286, 48
  %v5231 = vpop.permute.xlu0 %5230
  %5232 = vrot.lane.b32.xlu0 %v4288, 48
  %v5233 = vpop.permute.xlu0 %5232
  %5234 = vrot.lane.b32.xlu0 %v4289, 48
  %v5235 = vpop.permute.xlu0 %5234
  %5236 = vrot.lane.b32.xlu0 %v4291, 48
  %v5237 = vpop.permute.xlu0 %5236
  %5238 = vrot.lane.b32.xlu0 %v4292, 48
  %v5239 = vpop.permute.xlu0 %5238
  %5240 = vrot.lane.b32.xlu0 %v4294, 48
  %v5241 = vpop.permute.xlu0 %5240
  %5242 = vrot.lane.b32.xlu0 %v4295, 48
  %v5243 = vpop.permute.xlu0 %5242
  %5244 = vrot.lane.b32.xlu0 %v4297, 48
  %v5245 = vpop.permute.xlu0 %5244
  %5246 = vrot.lane.b32.xlu0 %v4298, 48
  %v5247 = vpop.permute.xlu0 %5246
  %5248 = vrot.lane.b32.xlu0 %v4300, 48
  %v5249 = vpop.permute.xlu0 %5248
  %5250 = vrot.lane.b32.xlu0 %v4301, 48
  %v5251 = vpop.permute.xlu0 %5250
  %5252 = vrot.lane.b32.xlu0 %v4303, 48
  %v5253 = vpop.permute.xlu0 %5252
  %5254 = vrot.lane.b32.xlu0 %v4304, 48
  %v5255 = vpop.permute.xlu0 %5254
  %5256 = vrot.lane.b32.xlu0 %v4306, 48
  %v5257 = vpop.permute.xlu0 %5256
  %5258 = vrot.lane.b32.xlu0 %v4307, 48
  %v5259 = vpop.permute.xlu0 %5258
  %5260 = vrot.lane.b32.xlu0 %v4309, 48
  %v5261 = vpop.permute.xlu0 %5260
  %5262 = vrot.lane.b32.xlu0 %v4310, 48
  %v5263 = vpop.permute.xlu0 %5262
  %5264 = vrot.lane.b32.xlu0 %v4312, 48
  %v5265 = vpop.permute.xlu0 %5264
  %5266 = vrot.lane.b32.xlu0 %v4313, 48
  %v5267 = vpop.permute.xlu0 %5266
  %5268 = vrot.lane.b32.xlu0 %v4315, 48
  %v5269 = vpop.permute.xlu0 %5268
  %5270 = vrot.lane.b32.xlu0 %v4316, 48
  %v5271 = vpop.permute.xlu0 %5270
  %5272 = vrot.lane.b32.xlu0 %v4318, 48
  %v5273 = vpop.permute.xlu0 %5272
  %5274 = vrot.lane.b32.xlu0 %v4319, 48
  %v5275 = vpop.permute.xlu0 %5274
  %v5342 = vrot.slane %v4264, 1
  %v5343 = vrot.slane %v4265, 1
  %v5344 = vsel %vm426, %v5342, %v5343
  %v5345 = vrot.slane %v4266, 1
  %v5346 = vsel %vm426, %v5343, %v5345
  %v5347 = vrot.slane %v4318, 1
  %v5348 = vrot.slane %v4319, 1
  %v5349 = vsel %vm426, %v5347, %v5348
  %v5350 = vrot.slane %v4320, 1
  %v5351 = vsel %vm426, %v5348, %v5350
  %5352 = vrot.lane.b32.xlu0 %v4447, 64
  %v5353 = vpop.permute.xlu0 %5352
  %5354 = vrot.lane.b32.xlu0 %v4449, 64
  %v5355 = vpop.permute.xlu0 %5354
  %5356 = vrot.lane.b32.xlu0 %v4452, 64
  %v5357 = vpop.permute.xlu0 %5356
  %5358 = vrot.lane.b32.xlu0 %v4454, 64
  %v5359 = vpop.permute.xlu0 %5358
  %5360 = vrot.lane.b32.xlu0 %v4457, 64
  %v5361 = vpop.permute.xlu0 %5360
  %5362 = vrot.lane.b32.xlu0 %v4459, 64
  %v5363 = vpop.permute.xlu0 %5362
  %5364 = vrot.lane.b32.xlu0 %v4462, 64
  %v5365 = vpop.permute.xlu0 %5364
  %5366 = vrot.lane.b32.xlu0 %v4464, 64
  %v5367 = vpop.permute.xlu0 %5366
  %5368 = vrot.lane.b32.xlu0 %v4467, 64
  %v5369 = vpop.permute.xlu0 %5368
  %5370 = vrot.lane.b32.xlu0 %v4469, 64
  %v5371 = vpop.permute.xlu0 %5370
  %5372 = vrot.lane.b32.xlu0 %v4472, 64
  %v5373 = vpop.permute.xlu0 %5372
  %5374 = vrot.lane.b32.xlu0 %v4474, 64
  %v5375 = vpop.permute.xlu0 %5374
  %5376 = vrot.lane.b32.xlu0 %v4477, 64
  %v5377 = vpop.permute.xlu0 %5376
  %5378 = vrot.lane.b32.xlu0 %v4479, 64
  %v5379 = vpop.permute.xlu0 %5378
  %5380 = vrot.lane.b32.xlu0 %v4482, 64
  %v5381 = vpop.permute.xlu0 %5380
  %5382 = vrot.lane.b32.xlu0 %v4484, 64
  %v5383 = vpop.permute.xlu0 %5382
  %5384 = vrot.lane.b32.xlu0 %v4487, 64
  %v5385 = vpop.permute.xlu0 %5384
  %5386 = vrot.lane.b32.xlu0 %v4489, 64
  %v5387 = vpop.permute.xlu0 %5386
  %5388 = vrot.lane.b32.xlu0 %v4492, 64
  %v5389 = vpop.permute.xlu0 %5388
  %5390 = vrot.lane.b32.xlu0 %v4494, 64
  %v5391 = vpop.permute.xlu0 %5390
  %5392 = vrot.lane.b32.xlu0 %v4497, 64
  %v5393 = vpop.permute.xlu0 %5392
  %5394 = vrot.lane.b32.xlu0 %v4499, 64
  %v5395 = vpop.permute.xlu0 %5394
  %5396 = vrot.lane.b32.xlu0 %v4502, 64
  %v5397 = vpop.permute.xlu0 %5396
  %5398 = vrot.lane.b32.xlu0 %v4504, 64
  %v5399 = vpop.permute.xlu0 %5398
  %5400 = vrot.lane.b32.xlu0 %v4507, 64
  %v5401 = vpop.permute.xlu0 %5400
  %5402 = vrot.lane.b32.xlu0 %v4509, 64
  %v5403 = vpop.permute.xlu0 %5402
  %5404 = vrot.lane.b32.xlu0 %v4512, 64
  %v5405 = vpop.permute.xlu0 %5404
  %5406 = vrot.lane.b32.xlu0 %v4514, 64
  %v5407 = vpop.permute.xlu0 %5406
  %5408 = vrot.lane.b32.xlu0 %v4517, 64
  %v5409 = vpop.permute.xlu0 %5408
  %5410 = vrot.lane.b32.xlu0 %v4519, 64
  %v5411 = vpop.permute.xlu0 %5410
  %5412 = vrot.lane.b32.xlu0 %v5344, 64
  %v5413 = vpop.permute.xlu0 %5412
  %5414 = vrot.lane.b32.xlu0 %v5346, 64
  %v5415 = vpop.permute.xlu0 %5414
  %5416 = vrot.lane.b32.xlu0 %v4527, 64
  %v5417 = vpop.permute.xlu0 %5416
  %5418 = vrot.lane.b32.xlu0 %v4529, 64
  %v5419 = vpop.permute.xlu0 %5418
  %5420 = vrot.lane.b32.xlu0 %v4532, 64
  %v5421 = vpop.permute.xlu0 %5420
  %5422 = vrot.lane.b32.xlu0 %v4534, 64
  %v5423 = vpop.permute.xlu0 %5422
  %5424 = vrot.lane.b32.xlu0 %v4537, 64
  %v5425 = vpop.permute.xlu0 %5424
  %5426 = vrot.lane.b32.xlu0 %v4539, 64
  %v5427 = vpop.permute.xlu0 %5426
  %5428 = vrot.lane.b32.xlu0 %v4542, 64
  %v5429 = vpop.permute.xlu0 %5428
  %5430 = vrot.lane.b32.xlu0 %v4544, 64
  %v5431 = vpop.permute.xlu0 %5430
  %5432 = vrot.lane.b32.xlu0 %v4547, 64
  %v5433 = vpop.permute.xlu0 %5432
  %5434 = vrot.lane.b32.xlu0 %v4549, 64
  %v5435 = vpop.permute.xlu0 %5434
  %5436 = vrot.lane.b32.xlu0 %v4552, 64
  %v5437 = vpop.permute.xlu0 %5436
  %5438 = vrot.lane.b32.xlu0 %v4554, 64
  %v5439 = vpop.permute.xlu0 %5438
  %5440 = vrot.lane.b32.xlu0 %v4557, 64
  %v5441 = vpop.permute.xlu0 %5440
  %5442 = vrot.lane.b32.xlu0 %v4559, 64
  %v5443 = vpop.permute.xlu0 %5442
  %5444 = vrot.lane.b32.xlu0 %v4562, 64
  %v5445 = vpop.permute.xlu0 %5444
  %5446 = vrot.lane.b32.xlu0 %v4564, 64
  %v5447 = vpop.permute.xlu0 %5446
  %5448 = vrot.lane.b32.xlu0 %v4567, 64
  %v5449 = vpop.permute.xlu0 %5448
  %5450 = vrot.lane.b32.xlu0 %v4569, 64
  %v5451 = vpop.permute.xlu0 %5450
  %5452 = vrot.lane.b32.xlu0 %v4572, 64
  %v5453 = vpop.permute.xlu0 %5452
  %5454 = vrot.lane.b32.xlu0 %v4574, 64
  %v5455 = vpop.permute.xlu0 %5454
  %5456 = vrot.lane.b32.xlu0 %v4577, 64
  %v5457 = vpop.permute.xlu0 %5456
  %5458 = vrot.lane.b32.xlu0 %v4579, 64
  %v5459 = vpop.permute.xlu0 %5458
  %5460 = vrot.lane.b32.xlu0 %v4582, 64
  %v5461 = vpop.permute.xlu0 %5460
  %5462 = vrot.lane.b32.xlu0 %v4584, 64
  %v5463 = vpop.permute.xlu0 %5462
  %5464 = vrot.lane.b32.xlu0 %v4587, 64
  %v5465 = vpop.permute.xlu0 %5464
  %5466 = vrot.lane.b32.xlu0 %v4589, 64
  %v5467 = vpop.permute.xlu0 %5466
  %5468 = vrot.lane.b32.xlu0 %v4592, 64
  %v5469 = vpop.permute.xlu0 %5468
  %5470 = vrot.lane.b32.xlu0 %v4594, 64
  %v5471 = vpop.permute.xlu0 %5470
  %5472 = vrot.lane.b32.xlu0 %v4597, 64
  %v5473 = vpop.permute.xlu0 %5472
  %5474 = vrot.lane.b32.xlu0 %v4599, 64
  %v5475 = vpop.permute.xlu0 %5474
  %5476 = vrot.lane.b32.xlu0 %v5349, 64
  %v5477 = vpop.permute.xlu0 %5476
  %5478 = vrot.lane.b32.xlu0 %v5351, 64
  %v5479 = vpop.permute.xlu0 %5478
  %v5544 = vrot.slane %v4264, 2
  %v5545 = vrot.slane %v4265, 2
  %v5546 = vsel %vm779, %v5544, %v5545
  %v5547 = vrot.slane %v4266, 2
  %v5548 = vsel %vm779, %v5545, %v5547
  %v5549 = vrot.slane %v4318, 2
  %v5550 = vrot.slane %v4319, 2
  %v5551 = vsel %vm779, %v5549, %v5550
  %v5552 = vrot.slane %v4320, 2
  %v5553 = vsel %vm779, %v5550, %v5552
  %5554 = vrot.lane.b32.xlu0 %v4799, 80
  %v5555 = vpop.permute.xlu0 %5554
  %5556 = vrot.lane.b32.xlu0 %v4801, 80
  %v5557 = vpop.permute.xlu0 %5556
  %5558 = vrot.lane.b32.xlu0 %v4804, 80
  %v5559 = vpop.permute.xlu0 %5558
  %5560 = vrot.lane.b32.xlu0 %v4806, 80
  %v5561 = vpop.permute.xlu0 %5560
  %5562 = vrot.lane.b32.xlu0 %v4809, 80
  %v5563 = vpop.permute.xlu0 %5562
  %5564 = vrot.lane.b32.xlu0 %v4811, 80
  %v5565 = vpop.permute.xlu0 %5564
  %5566 = vrot.lane.b32.xlu0 %v4814, 80
  %v5567 = vpop.permute.xlu0 %5566
  %5568 = vrot.lane.b32.xlu0 %v4816, 80
  %v5569 = vpop.permute.xlu0 %5568
  %5570 = vrot.lane.b32.xlu0 %v4819, 80
  %v5571 = vpop.permute.xlu0 %5570
  %5572 = vrot.lane.b32.xlu0 %v4821, 80
  %v5573 = vpop.permute.xlu0 %5572
  %5574 = vrot.lane.b32.xlu0 %v4824, 80
  %v5575 = vpop.permute.xlu0 %5574
  %5576 = vrot.lane.b32.xlu0 %v4826, 80
  %v5577 = vpop.permute.xlu0 %5576
  %5578 = vrot.lane.b32.xlu0 %v4829, 80
  %v5579 = vpop.permute.xlu0 %5578
  %5580 = vrot.lane.b32.xlu0 %v4831, 80
  %v5581 = vpop.permute.xlu0 %5580
  %5582 = vrot.lane.b32.xlu0 %v4834, 80
  %v5583 = vpop.permute.xlu0 %5582
  %5584 = vrot.lane.b32.xlu0 %v4836, 80
  %v5585 = vpop.permute.xlu0 %5584
  %5586 = vrot.lane.b32.xlu0 %v4839, 80
  %v5587 = vpop.permute.xlu0 %5586
  %5588 = vrot.lane.b32.xlu0 %v4841, 80
  %v5589 = vpop.permute.xlu0 %5588
  %5590 = vrot.lane.b32.xlu0 %v4844, 80
  %v5591 = vpop.permute.xlu0 %5590
  %5592 = vrot.lane.b32.xlu0 %v4846, 80
  %v5593 = vpop.permute.xlu0 %5592
  %5594 = vrot.lane.b32.xlu0 %v4849, 80
  %v5595 = vpop.permute.xlu0 %5594
  %5596 = vrot.lane.b32.xlu0 %v4851, 80
  %v5597 = vpop.permute.xlu0 %5596
  %5598 = vrot.lane.b32.xlu0 %v4854, 80
  %v5599 = vpop.permute.xlu0 %5598
  %5600 = vrot.lane.b32.xlu0 %v4856, 80
  %v5601 = vpop.permute.xlu0 %5600
  %5602 = vrot.lane.b32.xlu0 %v4859, 80
  %v5603 = vpop.permute.xlu0 %5602
  %5604 = vrot.lane.b32.xlu0 %v4861, 80
  %v5605 = vpop.permute.xlu0 %5604
  %5606 = vrot.lane.b32.xlu0 %v4864, 80
  %v5607 = vpop.permute.xlu0 %5606
  %5608 = vrot.lane.b32.xlu0 %v4866, 80
  %v5609 = vpop.permute.xlu0 %5608
  %5610 = vrot.lane.b32.xlu0 %v4869, 80
  %v5611 = vpop.permute.xlu0 %5610
  %5612 = vrot.lane.b32.xlu0 %v4871, 80
  %v5613 = vpop.permute.xlu0 %5612
  %5614 = vrot.lane.b32.xlu0 %v5546, 80
  %v5615 = vpop.permute.xlu0 %5614
  %5616 = vrot.lane.b32.xlu0 %v5548, 80
  %v5617 = vpop.permute.xlu0 %5616
  %5618 = vrot.lane.b32.xlu0 %v4879, 80
  %v5619 = vpop.permute.xlu0 %5618
  %5620 = vrot.lane.b32.xlu0 %v4881, 80
  %v5621 = vpop.permute.xlu0 %5620
  %5622 = vrot.lane.b32.xlu0 %v4884, 80
  %v5623 = vpop.permute.xlu0 %5622
  %5624 = vrot.lane.b32.xlu0 %v4886, 80
  %v5625 = vpop.permute.xlu0 %5624
  %5626 = vrot.lane.b32.xlu0 %v4889, 80
  %v5627 = vpop.permute.xlu0 %5626
  %5628 = vrot.lane.b32.xlu0 %v4891, 80
  %v5629 = vpop.permute.xlu0 %5628
  %5630 = vrot.lane.b32.xlu0 %v4894, 80
  %v5631 = vpop.permute.xlu0 %5630
  %5632 = vrot.lane.b32.xlu0 %v4896, 80
  %v5633 = vpop.permute.xlu0 %5632
  %5634 = vrot.lane.b32.xlu0 %v4899, 80
  %v5635 = vpop.permute.xlu0 %5634
  %5636 = vrot.lane.b32.xlu0 %v4901, 80
  %v5637 = vpop.permute.xlu0 %5636
  %5638 = vrot.lane.b32.xlu0 %v4904, 80
  %v5639 = vpop.permute.xlu0 %5638
  %5640 = vrot.lane.b32.xlu0 %v4906, 80
  %v5641 = vpop.permute.xlu0 %5640
  %5642 = vrot.lane.b32.xlu0 %v4909, 80
  %v5643 = vpop.permute.xlu0 %5642
  %5644 = vrot.lane.b32.xlu0 %v4911, 80
  %v5645 = vpop.permute.xlu0 %5644
  %5646 = vrot.lane.b32.xlu0 %v4914, 80
  %v5647 = vpop.permute.xlu0 %5646
  %5648 = vrot.lane.b32.xlu0 %v4916, 80
  %v5649 = vpop.permute.xlu0 %5648
  %5650 = vrot.lane.b32.xlu0 %v4919, 80
  %v5651 = vpop.permute.xlu0 %5650
  %5652 = vrot.lane.b32.xlu0 %v4921, 80
  %v5653 = vpop.permute.xlu0 %5652
  %5654 = vrot.lane.b32.xlu0 %v4924, 80
  %v5655 = vpop.permute.xlu0 %5654
  %5656 = vrot.lane.b32.xlu0 %v4926, 80
  %v5657 = vpop.permute.xlu0 %5656
  %5658 = vrot.lane.b32.xlu0 %v4929, 80
  %v5659 = vpop.permute.xlu0 %5658
  %5660 = vrot.lane.b32.xlu0 %v4931, 80
  %v5661 = vpop.permute.xlu0 %5660
  %5662 = vrot.lane.b32.xlu0 %v4934, 80
  %v5663 = vpop.permute.xlu0 %5662
  %5664 = vrot.lane.b32.xlu0 %v4936, 80
  %v5665 = vpop.permute.xlu0 %5664
  %5666 = vrot.lane.b32.xlu0 %v4939, 80
  %v5667 = vpop.permute.xlu0 %5666
  %5668 = vrot.lane.b32.xlu0 %v4941, 80
  %v5669 = vpop.permute.xlu0 %5668
  %5670 = vrot.lane.b32.xlu0 %v4944, 80
  %v5671 = vpop.permute.xlu0 %5670
  %5672 = vrot.lane.b32.xlu0 %v4946, 80
  %v5673 = vpop.permute.xlu0 %5672
  %5674 = vrot.lane.b32.xlu0 %v4949, 80
  %v5675 = vpop.permute.xlu0 %5674
  %5676 = vrot.lane.b32.xlu0 %v4951, 80
  %v5677 = vpop.permute.xlu0 %5676
  %5678 = vrot.lane.b32.xlu0 %v5551, 80
  %v5679 = vpop.permute.xlu0 %5678
  %5680 = vrot.lane.b32.xlu0 %v5553, 80
  %v5681 = vpop.permute.xlu0 %5680
  %5750 = vrot.lane.b32.xlu0 %v4222, 96
  %v5751 = vpop.permute.xlu0 %5750
  %5752 = vrot.lane.b32.xlu0 %v4223, 96
  %v5753 = vpop.permute.xlu0 %5752
  %5754 = vrot.lane.b32.xlu0 %v4225, 96
  %v5755 = vpop.permute.xlu0 %5754
  %5756 = vrot.lane.b32.xlu0 %v4226, 96
  %v5757 = vpop.permute.xlu0 %5756
  %5758 = vrot.lane.b32.xlu0 %v4228, 96
  %v5759 = vpop.permute.xlu0 %5758
  %5760 = vrot.lane.b32.xlu0 %v4229, 96
  %v5761 = vpop.permute.xlu0 %5760
  %5762 = vrot.lane.b32.xlu0 %v4231, 96
  %v5763 = vpop.permute.xlu0 %5762
  %5764 = vrot.lane.b32.xlu0 %v4232, 96
  %v5765 = vpop.permute.xlu0 %5764
  %5766 = vrot.lane.b32.xlu0 %v4234, 96
  %v5767 = vpop.permute.xlu0 %5766
  %5768 = vrot.lane.b32.xlu0 %v4235, 96
  %v5769 = vpop.permute.xlu0 %5768
  %5770 = vrot.lane.b32.xlu0 %v4237, 96
  %v5771 = vpop.permute.xlu0 %5770
  %5772 = vrot.lane.b32.xlu0 %v4238, 96
  %v5773 = vpop.permute.xlu0 %5772
  %5774 = vrot.lane.b32.xlu0 %v4240, 96
  %v5775 = vpop.permute.xlu0 %5774
  %5776 = vrot.lane.b32.xlu0 %v4241, 96
  %v5777 = vpop.permute.xlu0 %5776
  %5778 = vrot.lane.b32.xlu0 %v4243, 96
  %v5779 = vpop.permute.xlu0 %5778
  %5780 = vrot.lane.b32.xlu0 %v4244, 96
  %v5781 = vpop.permute.xlu0 %5780
  %5782 = vrot.lane.b32.xlu0 %v4246, 96
  %v5783 = vpop.permute.xlu0 %5782
  %5784 = vrot.lane.b32.xlu0 %v4247, 96
  %v5785 = vpop.permute.xlu0 %5784
  %5786 = vrot.lane.b32.xlu0 %v4249, 96
  %v5787 = vpop.permute.xlu0 %5786
  %5788 = vrot.lane.b32.xlu0 %v4250, 96
  %v5789 = vpop.permute.xlu0 %5788
  %5790 = vrot.lane.b32.xlu0 %v4252, 96
  %v5791 = vpop.permute.xlu0 %5790
  %5792 = vrot.lane.b32.xlu0 %v4253, 96
  %v5793 = vpop.permute.xlu0 %5792
  %5794 = vrot.lane.b32.xlu0 %v4255, 96
  %v5795 = vpop.permute.xlu0 %5794
  %5796 = vrot.lane.b32.xlu0 %v4256, 96
  %v5797 = vpop.permute.xlu0 %5796
  %5798 = vrot.lane.b32.xlu0 %v4258, 96
  %v5799 = vpop.permute.xlu0 %5798
  %5800 = vrot.lane.b32.xlu0 %v4259, 96
  %v5801 = vpop.permute.xlu0 %5800
  %5802 = vrot.lane.b32.xlu0 %v4261, 96
  %v5803 = vpop.permute.xlu0 %5802
  %5804 = vrot.lane.b32.xlu0 %v4262, 96
  %v5805 = vpop.permute.xlu0 %5804
  %5806 = vrot.lane.b32.xlu0 %v4264, 96
  %v5807 = vpop.permute.xlu0 %5806
  %5808 = vrot.lane.b32.xlu0 %v4265, 96
  %v5809 = vpop.permute.xlu0 %5808
  %5810 = vrot.lane.b32.xlu0 %v4267, 96
  %v5811 = vpop.permute.xlu0 %5810
  %5812 = vrot.lane.b32.xlu0 %v4268, 96
  %v5813 = vpop.permute.xlu0 %5812
  %5814 = vrot.lane.b32.xlu0 %v4276, 96
  %v5815 = vpop.permute.xlu0 %5814
  %5816 = vrot.lane.b32.xlu0 %v4277, 96
  %v5817 = vpop.permute.xlu0 %5816
  %5818 = vrot.lane.b32.xlu0 %v4279, 96
  %v5819 = vpop.permute.xlu0 %5818
  %5820 = vrot.lane.b32.xlu0 %v4280, 96
  %v5821 = vpop.permute.xlu0 %5820
  %5822 = vrot.lane.b32.xlu0 %v4282, 96
  %v5823 = vpop.permute.xlu0 %5822
  %5824 = vrot.lane.b32.xlu0 %v4283, 96
  %v5825 = vpop.permute.xlu0 %5824
  %5826 = vrot.lane.b32.xlu0 %v4285, 96
  %v5827 = vpop.permute.xlu0 %5826
  %5828 = vrot.lane.b32.xlu0 %v4286, 96
  %v5829 = vpop.permute.xlu0 %5828
  %5830 = vrot.lane.b32.xlu0 %v4288, 96
  %v5831 = vpop.permute.xlu0 %5830
  %5832 = vrot.lane.b32.xlu0 %v4289, 96
  %v5833 = vpop.permute.xlu0 %5832
  %5834 = vrot.lane.b32.xlu0 %v4291, 96
  %v5835 = vpop.permute.xlu0 %5834
  %5836 = vrot.lane.b32.xlu0 %v4292, 96
  %v5837 = vpop.permute.xlu0 %5836
  %5838 = vrot.lane.b32.xlu0 %v4294, 96
  %v5839 = vpop.permute.xlu0 %5838
  %5840 = vrot.lane.b32.xlu0 %v4295, 96
  %v5841 = vpop.permute.xlu0 %5840
  %5842 = vrot.lane.b32.xlu0 %v4297, 96
  %v5843 = vpop.permute.xlu0 %5842
  %5844 = vrot.lane.b32.xlu0 %v4298, 96
  %v5845 = vpop.permute.xlu0 %5844
  %5846 = vrot.lane.b32.xlu0 %v4300, 96
  %v5847 = vpop.permute.xlu0 %5846
  %5848 = vrot.lane.b32.xlu0 %v4301, 96
  %v5849 = vpop.permute.xlu0 %5848
  %5850 = vrot.lane.b32.xlu0 %v4303, 96
  %v5851 = vpop.permute.xlu0 %5850
  %5852 = vrot.lane.b32.xlu0 %v4304, 96
  %v5853 = vpop.permute.xlu0 %5852
  %5854 = vrot.lane.b32.xlu0 %v4306, 96
  %v5855 = vpop.permute.xlu0 %5854
  %5856 = vrot.lane.b32.xlu0 %v4307, 96
  %v5857 = vpop.permute.xlu0 %5856
  %5858 = vrot.lane.b32.xlu0 %v4309, 96
  %v5859 = vpop.permute.xlu0 %5858
  %5860 = vrot.lane.b32.xlu0 %v4310, 96
  %v5861 = vpop.permute.xlu0 %5860
  %5862 = vrot.lane.b32.xlu0 %v4312, 96
  %v5863 = vpop.permute.xlu0 %5862
  %5864 = vrot.lane.b32.xlu0 %v4313, 96
  %v5865 = vpop.permute.xlu0 %5864
  %5866 = vrot.lane.b32.xlu0 %v4315, 96
  %v5867 = vpop.permute.xlu0 %5866
  %5868 = vrot.lane.b32.xlu0 %v4316, 96
  %v5869 = vpop.permute.xlu0 %5868
  %5870 = vrot.lane.b32.xlu0 %v4318, 96
  %v5871 = vpop.permute.xlu0 %5870
  %5872 = vrot.lane.b32.xlu0 %v4319, 96
  %v5873 = vpop.permute.xlu0 %5872
  %5874 = vrot.lane.b32.xlu0 %v4321, 96
  %v5875 = vpop.permute.xlu0 %5874
  %5876 = vrot.lane.b32.xlu0 %v4322, 96
  %v5877 = vpop.permute.xlu0 %5876
  %v5944 = vrot.slane %v4267, 1
  %v5945 = vrot.slane %v4268, 1
  %v5946 = vsel %vm426, %v5944, %v5945
  %v5947 = vrot.slane %v4269, 1
  %v5948 = vsel %vm426, %v5945, %v5947
  %v5949 = vrot.slane %v4321, 1
  %v5950 = vrot.slane %v4322, 1
  %v5951 = vsel %vm426, %v5949, %v5950
  %v5952 = vrot.slane %v4323, 1
  %v5953 = vsel %vm426, %v5950, %v5952
  %5954 = vrot.lane.b32.xlu0 %v4452, 112
  %v5955 = vpop.permute.xlu0 %5954
  %5956 = vrot.lane.b32.xlu0 %v4454, 112
  %v5957 = vpop.permute.xlu0 %5956
  %5958 = vrot.lane.b32.xlu0 %v4457, 112
  %v5959 = vpop.permute.xlu0 %5958
  %5960 = vrot.lane.b32.xlu0 %v4459, 112
  %v5961 = vpop.permute.xlu0 %5960
  %5962 = vrot.lane.b32.xlu0 %v4462, 112
  %v5963 = vpop.permute.xlu0 %5962
  %5964 = vrot.lane.b32.xlu0 %v4464, 112
  %v5965 = vpop.permute.xlu0 %5964
  %5966 = vrot.lane.b32.xlu0 %v4467, 112
  %v5967 = vpop.permute.xlu0 %5966
  %5968 = vrot.lane.b32.xlu0 %v4469, 112
  %v5969 = vpop.permute.xlu0 %5968
  %5970 = vrot.lane.b32.xlu0 %v4472, 112
  %v5971 = vpop.permute.xlu0 %5970
  %5972 = vrot.lane.b32.xlu0 %v4474, 112
  %v5973 = vpop.permute.xlu0 %5972
  %5974 = vrot.lane.b32.xlu0 %v4477, 112
  %v5975 = vpop.permute.xlu0 %5974
  %5976 = vrot.lane.b32.xlu0 %v4479, 112
  %v5977 = vpop.permute.xlu0 %5976
  %5978 = vrot.lane.b32.xlu0 %v4482, 112
  %v5979 = vpop.permute.xlu0 %5978
  %5980 = vrot.lane.b32.xlu0 %v4484, 112
  %v5981 = vpop.permute.xlu0 %5980
  %5982 = vrot.lane.b32.xlu0 %v4487, 112
  %v5983 = vpop.permute.xlu0 %5982
  %5984 = vrot.lane.b32.xlu0 %v4489, 112
  %v5985 = vpop.permute.xlu0 %5984
  %5986 = vrot.lane.b32.xlu0 %v4492, 112
  %v5987 = vpop.permute.xlu0 %5986
  %5988 = vrot.lane.b32.xlu0 %v4494, 112
  %v5989 = vpop.permute.xlu0 %5988
  %5990 = vrot.lane.b32.xlu0 %v4497, 112
  %v5991 = vpop.permute.xlu0 %5990
  %5992 = vrot.lane.b32.xlu0 %v4499, 112
  %v5993 = vpop.permute.xlu0 %5992
  %5994 = vrot.lane.b32.xlu0 %v4502, 112
  %v5995 = vpop.permute.xlu0 %5994
  %5996 = vrot.lane.b32.xlu0 %v4504, 112
  %v5997 = vpop.permute.xlu0 %5996
  %5998 = vrot.lane.b32.xlu0 %v4507, 112
  %v5999 = vpop.permute.xlu0 %5998
  %6000 = vrot.lane.b32.xlu0 %v4509, 112
  %v6001 = vpop.permute.xlu0 %6000
  %6002 = vrot.lane.b32.xlu0 %v4512, 112
  %v6003 = vpop.permute.xlu0 %6002
  %6004 = vrot.lane.b32.xlu0 %v4514, 112
  %v6005 = vpop.permute.xlu0 %6004
  %6006 = vrot.lane.b32.xlu0 %v4517, 112
  %v6007 = vpop.permute.xlu0 %6006
  %6008 = vrot.lane.b32.xlu0 %v4519, 112
  %v6009 = vpop.permute.xlu0 %6008
  %6010 = vrot.lane.b32.xlu0 %v5344, 112
  %v6011 = vpop.permute.xlu0 %6010
  %6012 = vrot.lane.b32.xlu0 %v5346, 112
  %v6013 = vpop.permute.xlu0 %6012
  %6014 = vrot.lane.b32.xlu0 %v5946, 112
  %v6015 = vpop.permute.xlu0 %6014
  %6016 = vrot.lane.b32.xlu0 %v5948, 112
  %v6017 = vpop.permute.xlu0 %6016
  %6018 = vrot.lane.b32.xlu0 %v4532, 112
  %v6019 = vpop.permute.xlu0 %6018
  %6020 = vrot.lane.b32.xlu0 %v4534, 112
  %v6021 = vpop.permute.xlu0 %6020
  %6022 = vrot.lane.b32.xlu0 %v4537, 112
  %v6023 = vpop.permute.xlu0 %6022
  %6024 = vrot.lane.b32.xlu0 %v4539, 112
  %v6025 = vpop.permute.xlu0 %6024
  %6026 = vrot.lane.b32.xlu0 %v4542, 112
  %v6027 = vpop.permute.xlu0 %6026
  %6028 = vrot.lane.b32.xlu0 %v4544, 112
  %v6029 = vpop.permute.xlu0 %6028
  %6030 = vrot.lane.b32.xlu0 %v4547, 112
  %v6031 = vpop.permute.xlu0 %6030
  %6032 = vrot.lane.b32.xlu0 %v4549, 112
  %v6033 = vpop.permute.xlu0 %6032
  %6034 = vrot.lane.b32.xlu0 %v4552, 112
  %v6035 = vpop.permute.xlu0 %6034
  %6036 = vrot.lane.b32.xlu0 %v4554, 112
  %v6037 = vpop.permute.xlu0 %6036
  %6038 = vrot.lane.b32.xlu0 %v4557, 112
  %v6039 = vpop.permute.xlu0 %6038
  %6040 = vrot.lane.b32.xlu0 %v4559, 112
  %v6041 = vpop.permute.xlu0 %6040
  %6042 = vrot.lane.b32.xlu0 %v4562, 112
  %v6043 = vpop.permute.xlu0 %6042
  %6044 = vrot.lane.b32.xlu0 %v4564, 112
  %v6045 = vpop.permute.xlu0 %6044
  %6046 = vrot.lane.b32.xlu0 %v4567, 112
  %v6047 = vpop.permute.xlu0 %6046
  %6048 = vrot.lane.b32.xlu0 %v4569, 112
  %v6049 = vpop.permute.xlu0 %6048
  %6050 = vrot.lane.b32.xlu0 %v4572, 112
  %v6051 = vpop.permute.xlu0 %6050
  %6052 = vrot.lane.b32.xlu0 %v4574, 112
  %v6053 = vpop.permute.xlu0 %6052
  %6054 = vrot.lane.b32.xlu0 %v4577, 112
  %v6055 = vpop.permute.xlu0 %6054
  %6056 = vrot.lane.b32.xlu0 %v4579, 112
  %v6057 = vpop.permute.xlu0 %6056
  %6058 = vrot.lane.b32.xlu0 %v4582, 112
  %v6059 = vpop.permute.xlu0 %6058
  %6060 = vrot.lane.b32.xlu0 %v4584, 112
  %v6061 = vpop.permute.xlu0 %6060
  %6062 = vrot.lane.b32.xlu0 %v4587, 112
  %v6063 = vpop.permute.xlu0 %6062
  %6064 = vrot.lane.b32.xlu0 %v4589, 112
  %v6065 = vpop.permute.xlu0 %6064
  %6066 = vrot.lane.b32.xlu0 %v4592, 112
  %v6067 = vpop.permute.xlu0 %6066
  %6068 = vrot.lane.b32.xlu0 %v4594, 112
  %v6069 = vpop.permute.xlu0 %6068
  %6070 = vrot.lane.b32.xlu0 %v4597, 112
  %v6071 = vpop.permute.xlu0 %6070
  %6072 = vrot.lane.b32.xlu0 %v4599, 112
  %v6073 = vpop.permute.xlu0 %6072
  %6074 = vrot.lane.b32.xlu0 %v5349, 112
  %v6075 = vpop.permute.xlu0 %6074
  %6076 = vrot.lane.b32.xlu0 %v5351, 112
  %v6077 = vpop.permute.xlu0 %6076
  %6078 = vrot.lane.b32.xlu0 %v5951, 112
  %v6079 = vpop.permute.xlu0 %6078
  %6080 = vrot.lane.b32.xlu0 %v5953, 112
  %v6081 = vpop.permute.xlu0 %6080
  %v6146 = vrot.slane %v4267, 2
  %v6147 = vrot.slane %v4268, 2
  %v6148 = vsel %vm779, %v6146, %v6147
  %v6149 = vrot.slane %v4269, 2
  %v6150 = vsel %vm779, %v6147, %v6149
  %v6151 = vrot.slane %v4321, 2
  %v6152 = vrot.slane %v4322, 2
  %v6153 = vsel %vm779, %v6151, %v6152
  %v6154 = vrot.slane %v4323, 2
  %v6155 = vsel %vm779, %v6152, %v6154
  %v6220 = vsel %vm39, %v4216, %v4601
  %v6221 = vsel %vm39, %v4217, %v4603
  %v6222 = vsel %vm39, %v4219, %v4605
  %v6223 = vsel %vm39, %v4220, %v4607
  %v6224 = vsel %vm39, %v4222, %v4609
  %v6225 = vsel %vm39, %v4223, %v4611
  %v6226 = vsel %vm39, %v4225, %v4613
  %v6227 = vsel %vm39, %v4226, %v4615
  %v6228 = vsel %vm39, %v4228, %v4617
  %v6229 = vsel %vm39, %v4229, %v4619
  %v6230 = vsel %vm39, %v4231, %v4621
  %v6231 = vsel %vm39, %v4232, %v4623
  %v6232 = vsel %vm39, %v4234, %v4625
  %v6233 = vsel %vm39, %v4235, %v4627
  %v6234 = vsel %vm39, %v4237, %v4629
  %v6235 = vsel %vm39, %v4238, %v4631
  %v6236 = vsel %vm39, %v4240, %v4633
  %v6237 = vsel %vm39, %v4241, %v4635
  %v6238 = vsel %vm39, %v4243, %v4637
  %v6239 = vsel %vm39, %v4244, %v4639
  %v6240 = vsel %vm39, %v4246, %v4641
  %v6241 = vsel %vm39, %v4247, %v4643
  %v6242 = vsel %vm39, %v4249, %v4645
  %v6243 = vsel %vm39, %v4250, %v4647
  %v6244 = vsel %vm39, %v4252, %v4649
  %v6245 = vsel %vm39, %v4253, %v4651
  %v6246 = vsel %vm39, %v4255, %v4653
  %v6247 = vsel %vm39, %v4256, %v4655
  %v6248 = vsel %vm39, %v4258, %v4657
  %v6249 = vsel %vm39, %v4259, %v4659
  %v6250 = vsel %vm39, %v4261, %v4661
  %v6251 = vsel %vm39, %v4262, %v4663
  %v6252 = vsel %vm39, %v4270, %v4665
  %v6253 = vsel %vm39, %v4271, %v4667
  %v6254 = vsel %vm39, %v4273, %v4669
  %v6255 = vsel %vm39, %v4274, %v4671
  %v6256 = vsel %vm39, %v4276, %v4673
  %v6257 = vsel %vm39, %v4277, %v4675
  %v6258 = vsel %vm39, %v4279, %v4677
  %v6259 = vsel %vm39, %v4280, %v4679
  %v6260 = vsel %vm39, %v4282, %v4681
  %v6261 = vsel %vm39, %v4283, %v4683
  %v6262 = vsel %vm39, %v4285, %v4685
  %v6263 = vsel %vm39, %v4286, %v4687
  %v6264 = vsel %vm39, %v4288, %v4689
  %v6265 = vsel %vm39, %v4289, %v4691
  %v6266 = vsel %vm39, %v4291, %v4693
  %v6267 = vsel %vm39, %v4292, %v4695
  %v6268 = vsel %vm39, %v4294, %v4697
  %v6269 = vsel %vm39, %v4295, %v4699
  %v6270 = vsel %vm39, %v4297, %v4701
  %v6271 = vsel %vm39, %v4298, %v4703
  %v6272 = vsel %vm39, %v4300, %v4705
  %v6273 = vsel %vm39, %v4301, %v4707
  %v6274 = vsel %vm39, %v4303, %v4709
  %v6275 = vsel %vm39, %v4304, %v4711
  %v6276 = vsel %vm39, %v4306, %v4713
  %v6277 = vsel %vm39, %v4307, %v4715
  %v6278 = vsel %vm39, %v4309, %v4717
  %v6279 = vsel %vm39, %v4310, %v4719
  %v6280 = vsel %vm39, %v4312, %v4721
  %v6281 = vsel %vm39, %v4313, %v4723
  %v6282 = vsel %vm39, %v4315, %v4725
  %v6283 = vsel %vm39, %v4316, %v4727
  %v6284 = vsel %vm2789, %v6220, %v4953
  %v6285 = vsel %vm2789, %v6221, %v4955
  %v6286 = vsel %vm2789, %v6222, %v4957
  %v6287 = vsel %vm2789, %v6223, %v4959
  %v6288 = vsel %vm2789, %v6224, %v4961
  %v6289 = vsel %vm2789, %v6225, %v4963
  %v6290 = vsel %vm2789, %v6226, %v4965
  %v6291 = vsel %vm2789, %v6227, %v4967
  %v6292 = vsel %vm2789, %v6228, %v4969
  %v6293 = vsel %vm2789, %v6229, %v4971
  %v6294 = vsel %vm2789, %v6230, %v4973
  %v6295 = vsel %vm2789, %v6231, %v4975
  %v6296 = vsel %vm2789, %v6232, %v4977
  %v6297 = vsel %vm2789, %v6233, %v4979
  %v6298 = vsel %vm2789, %v6234, %v4981
  %v6299 = vsel %vm2789, %v6235, %v4983
  %v6300 = vsel %vm2789, %v6236, %v4985
  %v6301 = vsel %vm2789, %v6237, %v4987
  %v6302 = vsel %vm2789, %v6238, %v4989
  %v6303 = vsel %vm2789, %v6239, %v4991
  %v6304 = vsel %vm2789, %v6240, %v4993
  %v6305 = vsel %vm2789, %v6241, %v4995
  %v6306 = vsel %vm2789, %v6242, %v4997
  %v6307 = vsel %vm2789, %v6243, %v4999
  %v6308 = vsel %vm2789, %v6244, %v5001
  %v6309 = vsel %vm2789, %v6245, %v5003
  %v6310 = vsel %vm2789, %v6246, %v5005
  %v6311 = vsel %vm2789, %v6247, %v5007
  %v6312 = vsel %vm2789, %v6248, %v5009
  %v6313 = vsel %vm2789, %v6249, %v5011
  %v6314 = vsel %vm2789, %v6250, %v5013
  %v6315 = vsel %vm2789, %v6251, %v5015
  %v6316 = vsel %vm2789, %v6252, %v5017
  %v6317 = vsel %vm2789, %v6253, %v5019
  %v6318 = vsel %vm2789, %v6254, %v5021
  %v6319 = vsel %vm2789, %v6255, %v5023
  %v6320 = vsel %vm2789, %v6256, %v5025
  %v6321 = vsel %vm2789, %v6257, %v5027
  %v6322 = vsel %vm2789, %v6258, %v5029
  %v6323 = vsel %vm2789, %v6259, %v5031
  %v6324 = vsel %vm2789, %v6260, %v5033
  %v6325 = vsel %vm2789, %v6261, %v5035
  %v6326 = vsel %vm2789, %v6262, %v5037
  %v6327 = vsel %vm2789, %v6263, %v5039
  %v6328 = vsel %vm2789, %v6264, %v5041
  %v6329 = vsel %vm2789, %v6265, %v5043
  %v6330 = vsel %vm2789, %v6266, %v5045
  %v6331 = vsel %vm2789, %v6267, %v5047
  %v6332 = vsel %vm2789, %v6268, %v5049
  %v6333 = vsel %vm2789, %v6269, %v5051
  %v6334 = vsel %vm2789, %v6270, %v5053
  %v6335 = vsel %vm2789, %v6271, %v5055
  %v6336 = vsel %vm2789, %v6272, %v5057
  %v6337 = vsel %vm2789, %v6273, %v5059
  %v6338 = vsel %vm2789, %v6274, %v5061
  %v6339 = vsel %vm2789, %v6275, %v5063
  %v6340 = vsel %vm2789, %v6276, %v5065
  %v6341 = vsel %vm2789, %v6277, %v5067
  %v6342 = vsel %vm2789, %v6278, %v5069
  %v6343 = vsel %vm2789, %v6279, %v5071
  %v6344 = vsel %vm2789, %v6280, %v5073
  %v6345 = vsel %vm2789, %v6281, %v5075
  %v6346 = vsel %vm2789, %v6282, %v5077
  %v6347 = vsel %vm2789, %v6283, %v5079
  %vm6348 = vcmask 392192
  %v6349 = vsel %vm6348, %v6284, %v5149
  %v6350 = vsel %vm6348, %v6285, %v5151
  %v6351 = vsel %vm6348, %v6286, %v5153
  %v6352 = vsel %vm6348, %v6287, %v5155
  %v6353 = vsel %vm6348, %v6288, %v5157
  %v6354 = vsel %vm6348, %v6289, %v5159
  %v6355 = vsel %vm6348, %v6290, %v5161
  %v6356 = vsel %vm6348, %v6291, %v5163
  %v6357 = vsel %vm6348, %v6292, %v5165
  %v6358 = vsel %vm6348, %v6293, %v5167
  %v6359 = vsel %vm6348, %v6294, %v5169
  %v6360 = vsel %vm6348, %v6295, %v5171
  %v6361 = vsel %vm6348, %v6296, %v5173
  %v6362 = vsel %vm6348, %v6297, %v5175
  %v6363 = vsel %vm6348, %v6298, %v5177
  %v6364 = vsel %vm6348, %v6299, %v5179
  %v6365 = vsel %vm6348, %v6300, %v5181
  %v6366 = vsel %vm6348, %v6301, %v5183
  %v6367 = vsel %vm6348, %v6302, %v5185
  %v6368 = vsel %vm6348, %v6303, %v5187
  %v6369 = vsel %vm6348, %v6304, %v5189
  %v6370 = vsel %vm6348, %v6305, %v5191
  %v6371 = vsel %vm6348, %v6306, %v5193
  %v6372 = vsel %vm6348, %v6307, %v5195
  %v6373 = vsel %vm6348, %v6308, %v5197
  %v6374 = vsel %vm6348, %v6309, %v5199
  %v6375 = vsel %vm6348, %v6310, %v5201
  %v6376 = vsel %vm6348, %v6311, %v5203
  %v6377 = vsel %vm6348, %v6312, %v5205
  %v6378 = vsel %vm6348, %v6313, %v5207
  %v6379 = vsel %vm6348, %v6314, %v5209
  %v6380 = vsel %vm6348, %v6315, %v5211
  %v6381 = vsel %vm6348, %v6316, %v5213
  %v6382 = vsel %vm6348, %v6317, %v5215
  %v6383 = vsel %vm6348, %v6318, %v5217
  %v6384 = vsel %vm6348, %v6319, %v5219
  %v6385 = vsel %vm6348, %v6320, %v5221
  %v6386 = vsel %vm6348, %v6321, %v5223
  %v6387 = vsel %vm6348, %v6322, %v5225
  %v6388 = vsel %vm6348, %v6323, %v5227
  %v6389 = vsel %vm6348, %v6324, %v5229
  %v6390 = vsel %vm6348, %v6325, %v5231
  %v6391 = vsel %vm6348, %v6326, %v5233
  %v6392 = vsel %vm6348, %v6327, %v5235
  %v6393 = vsel %vm6348, %v6328, %v5237
  %v6394 = vsel %vm6348, %v6329, %v5239
  %v6395 = vsel %vm6348, %v6330, %v5241
  %v6396 = vsel %vm6348, %v6331, %v5243
  %v6397 = vsel %vm6348, %v6332, %v5245
  %v6398 = vsel %vm6348, %v6333, %v5247
  %v6399 = vsel %vm6348, %v6334, %v5249
  %v6400 = vsel %vm6348, %v6335, %v5251
  %v6401 = vsel %vm6348, %v6336, %v5253
  %v6402 = vsel %vm6348, %v6337, %v5255
  %v6403 = vsel %vm6348, %v6338, %v5257
  %v6404 = vsel %vm6348, %v6339, %v5259
  %v6405 = vsel %vm6348, %v6340, %v5261
  %v6406 = vsel %vm6348, %v6341, %v5263
  %v6407 = vsel %vm6348, %v6342, %v5265
  %v6408 = vsel %vm6348, %v6343, %v5267
  %v6409 = vsel %vm6348, %v6344, %v5269
  %v6410 = vsel %vm6348, %v6345, %v5271
  %v6411 = vsel %vm6348, %v6346, %v5273
  %v6412 = vsel %vm6348, %v6347, %v5275
  %vm6413 = vcmask 523264
  %v6414 = vsel %vm6413, %v6349, %v5353
  %v6415 = vsel %vm6413, %v6350, %v5355
  %v6416 = vsel %vm6413, %v6351, %v5357
  %v6417 = vsel %vm6413, %v6352, %v5359
  %v6418 = vsel %vm6413, %v6353, %v5361
  %v6419 = vsel %vm6413, %v6354, %v5363
  %v6420 = vsel %vm6413, %v6355, %v5365
  %v6421 = vsel %vm6413, %v6356, %v5367
  %v6422 = vsel %vm6413, %v6357, %v5369
  %v6423 = vsel %vm6413, %v6358, %v5371
  %v6424 = vsel %vm6413, %v6359, %v5373
  %v6425 = vsel %vm6413, %v6360, %v5375
  %v6426 = vsel %vm6413, %v6361, %v5377
  %v6427 = vsel %vm6413, %v6362, %v5379
  %v6428 = vsel %vm6413, %v6363, %v5381
  %v6429 = vsel %vm6413, %v6364, %v5383
  %v6430 = vsel %vm6413, %v6365, %v5385
  %v6431 = vsel %vm6413, %v6366, %v5387
  %v6432 = vsel %vm6413, %v6367, %v5389
  %v6433 = vsel %vm6413, %v6368, %v5391
  %v6434 = vsel %vm6413, %v6369, %v5393
  %v6435 = vsel %vm6413, %v6370, %v5395
  %v6436 = vsel %vm6413, %v6371, %v5397
  %v6437 = vsel %vm6413, %v6372, %v5399
  %v6438 = vsel %vm6413, %v6373, %v5401
  %v6439 = vsel %vm6413, %v6374, %v5403
  %v6440 = vsel %vm6413, %v6375, %v5405
  %v6441 = vsel %vm6413, %v6376, %v5407
  %v6442 = vsel %vm6413, %v6377, %v5409
  %v6443 = vsel %vm6413, %v6378, %v5411
  %v6444 = vsel %vm6413, %v6379, %v5413
  %v6445 = vsel %vm6413, %v6380, %v5415
  %v6446 = vsel %vm6413, %v6381, %v5417
  %v6447 = vsel %vm6413, %v6382, %v5419
  %v6448 = vsel %vm6413, %v6383, %v5421
  %v6449 = vsel %vm6413, %v6384, %v5423
  %v6450 = vsel %vm6413, %v6385, %v5425
  %v6451 = vsel %vm6413, %v6386, %v5427
  %v6452 = vsel %vm6413, %v6387, %v5429
  %v6453 = vsel %vm6413, %v6388, %v5431
  %v6454 = vsel %vm6413, %v6389, %v5433
  %v6455 = vsel %vm6413, %v6390, %v5435
  %v6456 = vsel %vm6413, %v6391, %v5437
  %v6457 = vsel %vm6413, %v6392, %v5439
  %v6458 = vsel %vm6413, %v6393, %v5441
  %v6459 = vsel %vm6413, %v6394, %v5443
  %v6460 = vsel %vm6413, %v6395, %v5445
  %v6461 = vsel %vm6413, %v6396, %v5447
  %v6462 = vsel %vm6413, %v6397, %v5449
  %v6463 = vsel %vm6413, %v6398, %v5451
  %v6464 = vsel %vm6413, %v6399, %v5453
  %v6465 = vsel %vm6413, %v6400, %v5455
  %v6466 = vsel %vm6413, %v6401, %v5457
  %v6467 = vsel %vm6413, %v6402, %v5459
  %v6468 = vsel %vm6413, %v6403, %v5461
  %v6469 = vsel %vm6413, %v6404, %v5463
  %v6470 = vsel %vm6413, %v6405, %v5465
  %v6471 = vsel %vm6413, %v6406, %v5467
  %v6472 = vsel %vm6413, %v6407, %v5469
  %v6473 = vsel %vm6413, %v6408, %v5471
  %v6474 = vsel %vm6413, %v6409, %v5473
  %v6475 = vsel %vm6413, %v6410, %v5475
  %v6476 = vsel %vm6413, %v6411, %v5477
  %v6477 = vsel %vm6413, %v6412, %v5479
  %vm6478 = vcmask 654336
  %v6479 = vsel %vm6478, %v6414, %v5555
  %v6480 = vsel %vm6478, %v6415, %v5557
  %v6481 = vsel %vm6478, %v6416, %v5559
  %v6482 = vsel %vm6478, %v6417, %v5561
  %v6483 = vsel %vm6478, %v6418, %v5563
  %v6484 = vsel %vm6478, %v6419, %v5565
  %v6485 = vsel %vm6478, %v6420, %v5567
  %v6486 = vsel %vm6478, %v6421, %v5569
  %v6487 = vsel %vm6478, %v6422, %v5571
  %v6488 = vsel %vm6478, %v6423, %v5573
  %v6489 = vsel %vm6478, %v6424, %v5575
  %v6490 = vsel %vm6478, %v6425, %v5577
  %v6491 = vsel %vm6478, %v6426, %v5579
  %v6492 = vsel %vm6478, %v6427, %v5581
  %v6493 = vsel %vm6478, %v6428, %v5583
  %v6494 = vsel %vm6478, %v6429, %v5585
  %v6495 = vsel %vm6478, %v6430, %v5587
  %v6496 = vsel %vm6478, %v6431, %v5589
  %v6497 = vsel %vm6478, %v6432, %v5591
  %v6498 = vsel %vm6478, %v6433, %v5593
  %v6499 = vsel %vm6478, %v6434, %v5595
  %v6500 = vsel %vm6478, %v6435, %v5597
  %v6501 = vsel %vm6478, %v6436, %v5599
  %v6502 = vsel %vm6478, %v6437, %v5601
  %v6503 = vsel %vm6478, %v6438, %v5603
  %v6504 = vsel %vm6478, %v6439, %v5605
  %v6505 = vsel %vm6478, %v6440, %v5607
  %v6506 = vsel %vm6478, %v6441, %v5609
  %v6507 = vsel %vm6478, %v6442, %v5611
  %v6508 = vsel %vm6478, %v6443, %v5613
  %v6509 = vsel %vm6478, %v6444, %v5615
  %v6510 = vsel %vm6478, %v6445, %v5617
  %v6511 = vsel %vm6478, %v6446, %v5619
  %v6512 = vsel %vm6478, %v6447, %v5621
  %v6513 = vsel %vm6478, %v6448, %v5623
  %v6514 = vsel %vm6478, %v6449, %v5625
  %v6515 = vsel %vm6478, %v6450, %v5627
  %v6516 = vsel %vm6478, %v6451, %v5629
  %v6517 = vsel %vm6478, %v6452, %v5631
  %v6518 = vsel %vm6478, %v6453, %v5633
  %v6519 = vsel %vm6478, %v6454, %v5635
  %v6520 = vsel %vm6478, %v6455, %v5637
  %v6521 = vsel %vm6478, %v6456, %v5639
  %v6522 = vsel %vm6478, %v6457, %v5641
  %v6523 = vsel %vm6478, %v6458, %v5643
  %v6524 = vsel %vm6478, %v6459, %v5645
  %v6525 = vsel %vm6478, %v6460, %v5647
  %v6526 = vsel %vm6478, %v6461, %v5649
  %v6527 = vsel %vm6478, %v6462, %v5651
  %v6528 = vsel %vm6478, %v6463, %v5653
  %v6529 = vsel %vm6478, %v6464, %v5655
  %v6530 = vsel %vm6478, %v6465, %v5657
  %v6531 = vsel %vm6478, %v6466, %v5659
  %v6532 = vsel %vm6478, %v6467, %v5661
  %v6533 = vsel %vm6478, %v6468, %v5663
  %v6534 = vsel %vm6478, %v6469, %v5665
  %v6535 = vsel %vm6478, %v6470, %v5667
  %v6536 = vsel %vm6478, %v6471, %v5669
  %v6537 = vsel %vm6478, %v6472, %v5671
  %v6538 = vsel %vm6478, %v6473, %v5673
  %v6539 = vsel %vm6478, %v6474, %v5675
  %v6540 = vsel %vm6478, %v6475, %v5677
  %v6541 = vsel %vm6478, %v6476, %v5679
  %v6542 = vsel %vm6478, %v6477, %v5681
  %vm6543 = vcmask 785408
  %v6544 = vsel %vm6543, %v6479, %v5751
  %v6545 = vsel %vm6543, %v6480, %v5753
  %v6546 = vsel %vm6543, %v6481, %v5755
  %v6547 = vsel %vm6543, %v6482, %v5757
  %v6548 = vsel %vm6543, %v6483, %v5759
  %v6549 = vsel %vm6543, %v6484, %v5761
  %v6550 = vsel %vm6543, %v6485, %v5763
  %v6551 = vsel %vm6543, %v6486, %v5765
  %v6552 = vsel %vm6543, %v6487, %v5767
  %v6553 = vsel %vm6543, %v6488, %v5769
  %v6554 = vsel %vm6543, %v6489, %v5771
  %v6555 = vsel %vm6543, %v6490, %v5773
  %v6556 = vsel %vm6543, %v6491, %v5775
  %v6557 = vsel %vm6543, %v6492, %v5777
  %v6558 = vsel %vm6543, %v6493, %v5779
  %v6559 = vsel %vm6543, %v6494, %v5781
  %v6560 = vsel %vm6543, %v6495, %v5783
  %v6561 = vsel %vm6543, %v6496, %v5785
  %v6562 = vsel %vm6543, %v6497, %v5787
  %v6563 = vsel %vm6543, %v6498, %v5789
  %v6564 = vsel %vm6543, %v6499, %v5791
  %v6565 = vsel %vm6543, %v6500, %v5793
  %v6566 = vsel %vm6543, %v6501, %v5795
  %v6567 = vsel %vm6543, %v6502, %v5797
  %v6568 = vsel %vm6543, %v6503, %v5799
  %v6569 = vsel %vm6543, %v6504, %v5801
  %v6570 = vsel %vm6543, %v6505, %v5803
  %v6571 = vsel %vm6543, %v6506, %v5805
  %v6572 = vsel %vm6543, %v6507, %v5807
  %v6573 = vsel %vm6543, %v6508, %v5809
  %v6574 = vsel %vm6543, %v6509, %v5811
  %v6575 = vsel %vm6543, %v6510, %v5813
  %v6576 = vsel %vm6543, %v6511, %v5815
  %v6577 = vsel %vm6543, %v6512, %v5817
  %v6578 = vsel %vm6543, %v6513, %v5819
  %v6579 = vsel %vm6543, %v6514, %v5821
  %v6580 = vsel %vm6543, %v6515, %v5823
  %v6581 = vsel %vm6543, %v6516, %v5825
  %v6582 = vsel %vm6543, %v6517, %v5827
  %v6583 = vsel %vm6543, %v6518, %v5829
  %v6584 = vsel %vm6543, %v6519, %v5831
  %v6585 = vsel %vm6543, %v6520, %v5833
  %v6586 = vsel %vm6543, %v6521, %v5835
  %v6587 = vsel %vm6543, %v6522, %v5837
  %v6588 = vsel %vm6543, %v6523, %v5839
  %v6589 = vsel %vm6543, %v6524, %v5841
  %v6590 = vsel %vm6543, %v6525, %v5843
  %v6591 = vsel %vm6543, %v6526, %v5845
  %v6592 = vsel %vm6543, %v6527, %v5847
  %v6593 = vsel %vm6543, %v6528, %v5849
  %v6594 = vsel %vm6543, %v6529, %v5851
  %v6595 = vsel %vm6543, %v6530, %v5853
  %v6596 = vsel %vm6543, %v6531, %v5855
  %v6597 = vsel %vm6543, %v6532, %v5857
  %v6598 = vsel %vm6543, %v6533, %v5859
  %v6599 = vsel %vm6543, %v6534, %v5861
  %v6600 = vsel %vm6543, %v6535, %v5863
  %v6601 = vsel %vm6543, %v6536, %v5865
  %v6602 = vsel %vm6543, %v6537, %v5867
  %v6603 = vsel %vm6543, %v6538, %v5869
  %v6604 = vsel %vm6543, %v6539, %v5871
  %v6605 = vsel %vm6543, %v6540, %v5873
  %v6606 = vsel %vm6543, %v6541, %v5875
  %v6607 = vsel %vm6543, %v6542, %v5877
  %vm6608 = vcmask 916480
  %v6609 = vsel %vm6608, %v6544, %v5955
  %v6610 = vsel %vm6608, %v6545, %v5957
  %v6611 = vsel %vm6608, %v6546, %v5959
  %v6612 = vsel %vm6608, %v6547, %v5961
  %v6613 = vsel %vm6608, %v6548, %v5963
  %v6614 = vsel %vm6608, %v6549, %v5965
  %v6615 = vsel %vm6608, %v6550, %v5967
  %v6616 = vsel %vm6608, %v6551, %v5969
  %v6617 = vsel %vm6608, %v6552, %v5971
  %v6618 = vsel %vm6608, %v6553, %v5973
  %v6619 = vsel %vm6608, %v6554, %v5975
  %v6620 = vsel %vm6608, %v6555, %v5977
  %v6621 = vsel %vm6608, %v6556, %v5979
  %v6622 = vsel %vm6608, %v6557, %v5981
  %v6623 = vsel %vm6608, %v6558, %v5983
  %v6624 = vsel %vm6608, %v6559, %v5985
  %v6625 = vsel %vm6608, %v6560, %v5987
  %v6626 = vsel %vm6608, %v6561, %v5989
  %v6627 = vsel %vm6608, %v6562, %v5991
  %v6628 = vsel %vm6608, %v6563, %v5993
  %v6629 = vsel %vm6608, %v6564, %v5995
  %v6630 = vsel %vm6608, %v6565, %v5997
  %v6631 = vsel %vm6608, %v6566, %v5999
  %v6632 = vsel %vm6608, %v6567, %v6001
  %v6633 = vsel %vm6608, %v6568, %v6003
  %v6634 = vsel %vm6608, %v6569, %v6005
  %v6635 = vsel %vm6608, %v6570, %v6007
  %v6636 = vsel %vm6608, %v6571, %v6009
  %v6637 = vsel %vm6608, %v6572, %v6011
  %v6638 = vsel %vm6608, %v6573, %v6013
  %v6639 = vsel %vm6608, %v6574, %v6015
  %v6640 = vsel %vm6608, %v6575, %v6017
  %v6641 = vsel %vm6608, %v6576, %v6019
  %v6642 = vsel %vm6608, %v6577, %v6021
  %v6643 = vsel %vm6608, %v6578, %v6023
  %v6644 = vsel %vm6608, %v6579, %v6025
  %v6645 = vsel %vm6608, %v6580, %v6027
  %v6646 = vsel %vm6608, %v6581, %v6029
  %v6647 = vsel %vm6608, %v6582, %v6031
  %v6648 = vsel %vm6608, %v6583, %v6033
  %v6649 = vsel %vm6608, %v6584, %v6035
  %v6650 = vsel %vm6608, %v6585, %v6037
  %v6651 = vsel %vm6608, %v6586, %v6039
  %v6652 = vsel %vm6608, %v6587, %v6041
  %v6653 = vsel %vm6608, %v6588, %v6043
  %v6654 = vsel %vm6608, %v6589, %v6045
  %v6655 = vsel %vm6608, %v6590, %v6047
  %v6656 = vsel %vm6608, %v6591, %v6049
  %v6657 = vsel %vm6608, %v6592, %v6051
  %v6658 = vsel %vm6608, %v6593, %v6053
  %v6659 = vsel %vm6608, %v6594, %v6055
  %v6660 = vsel %vm6608, %v6595, %v6057
  %v6661 = vsel %vm6608, %v6596, %v6059
  %v6662 = vsel %vm6608, %v6597, %v6061
  %v6663 = vsel %vm6608, %v6598, %v6063
  %v6664 = vsel %vm6608, %v6599, %v6065
  %v6665 = vsel %vm6608, %v6600, %v6067
  %v6666 = vsel %vm6608, %v6601, %v6069
  %v6667 = vsel %vm6608, %v6602, %v6071
  %v6668 = vsel %vm6608, %v6603, %v6073
  %v6669 = vsel %vm6608, %v6604, %v6075
  %v6670 = vsel %vm6608, %v6605, %v6077
  %v6671 = vsel %vm6608, %v6606, %v6079
  %v6672 = vsel %vm6608, %v6607, %v6081
  %v6673 = vpack.c.bf16 %v6610, %v6609
  %v6674 = vpack.c.bf16 %v4806, %v4804
  %v6675 = vpack.c.bf16 %v6612, %v6611
  %v6676 = vpack.c.bf16 %v4811, %v4809
  %v6677 = vpack.c.bf16 %v6614, %v6613
  %v6678 = vpack.c.bf16 %v4816, %v4814
  %v6679 = vpack.c.bf16 %v6616, %v6615
  %v6680 = vpack.c.bf16 %v4821, %v4819
  %v6681 = vpack.c.bf16 %v6618, %v6617
  %v6682 = vpack.c.bf16 %v4826, %v4824
  %v6683 = vpack.c.bf16 %v6620, %v6619
  %v6684 = vpack.c.bf16 %v4831, %v4829
  %v6685 = vpack.c.bf16 %v6622, %v6621
  %v6686 = vpack.c.bf16 %v4836, %v4834
  %v6687 = vpack.c.bf16 %v6624, %v6623
  %v6688 = vpack.c.bf16 %v4841, %v4839
  %v6689 = vpack.c.bf16 %v6626, %v6625
  %v6690 = vpack.c.bf16 %v4846, %v4844
  %v6691 = vpack.c.bf16 %v6628, %v6627
  %v6692 = vpack.c.bf16 %v4851, %v4849
  %v6693 = vpack.c.bf16 %v6630, %v6629
  %v6694 = vpack.c.bf16 %v4856, %v4854
  %v6695 = vpack.c.bf16 %v6632, %v6631
  %v6696 = vpack.c.bf16 %v4861, %v4859
  %v6697 = vpack.c.bf16 %v6634, %v6633
  %v6698 = vpack.c.bf16 %v4866, %v4864
  %v6699 = vpack.c.bf16 %v6636, %v6635
  %v6700 = vpack.c.bf16 %v4871, %v4869
  %v6701 = vpack.c.bf16 %v6638, %v6637
  %v6702 = vpack.c.bf16 %v5548, %v5546
  %v6703 = vpack.c.bf16 %v6640, %v6639
  %v6704 = vpack.c.bf16 %v6150, %v6148
  %v6705 = vpack.c.bf16 %v6642, %v6641
  %v6706 = vpack.c.bf16 %v4886, %v4884
  %v6707 = vpack.c.bf16 %v6644, %v6643
  %v6708 = vpack.c.bf16 %v4891, %v4889
  %v6709 = vpack.c.bf16 %v6646, %v6645
  %v6710 = vpack.c.bf16 %v4896, %v4894
  %v6711 = vpack.c.bf16 %v6648, %v6647
  %v6712 = vpack.c.bf16 %v4901, %v4899
  %v6713 = vpack.c.bf16 %v6650, %v6649
  %v6714 = vpack.c.bf16 %v4906, %v4904
  %v6715 = vpack.c.bf16 %v6652, %v6651
  %v6716 = vpack.c.bf16 %v4911, %v4909
  %v6717 = vpack.c.bf16 %v6654, %v6653
  %v6718 = vpack.c.bf16 %v4916, %v4914
  %v6719 = vpack.c.bf16 %v6656, %v6655
  %v6720 = vpack.c.bf16 %v4921, %v4919
  %v6721 = vpack.c.bf16 %v6658, %v6657
  %v6722 = vpack.c.bf16 %v4926, %v4924
  %v6723 = vpack.c.bf16 %v6660, %v6659
  %v6724 = vpack.c.bf16 %v4931, %v4929
  %v6725 = vpack.c.bf16 %v6662, %v6661
  %v6726 = vpack.c.bf16 %v4936, %v4934
  %v6727 = vpack.c.bf16 %v6664, %v6663
  %v6728 = vpack.c.bf16 %v4941, %v4939
  %v6729 = vpack.c.bf16 %v6666, %v6665
  %v6730 = vpack.c.bf16 %v4946, %v4944
  %v6731 = vpack.c.bf16 %v6668, %v6667
  %v6732 = vpack.c.bf16 %v4951, %v4949
  %v6733 = vpack.c.bf16 %v6670, %v6669
  %v6734 = vpack.c.bf16 %v5553, %v5551
  %v6735 = vpack.c.bf16 %v6672, %v6671
  %v6736 = vpack.c.bf16 %v6155, %v6153
  %v6755 = vunpack.c.l.b16 %v4324
  %v6756 = vunpack.c.l.b16 %v4325
  %v6757 = vunpack.c.l.b16 %v4326
  %v6758 = vunpack.c.l.b16 %v4327
  %v6759 = vunpack.c.l.b16 %v4328
  %v6760 = vunpack.c.l.b16 %v4329
  %v6761 = vunpack.c.l.b16 %v4330
  %v6762 = vunpack.c.l.b16 %v4331
  %v6763 = vunpack.c.l.b16 %v4332
  %v6764 = vunpack.c.l.b16 %v4333
  %v6765 = vunpack.c.l.b16 %v4334
  %v6766 = vunpack.c.l.b16 %v4335
  %v6767 = vunpack.c.l.b16 %v4336
  %v6768 = vunpack.c.l.b16 %v4337
  %v6769 = vunpack.c.l.b16 %v4338
  %v6770 = vunpack.c.l.b16 %v4339
  %v6771 = vunpack.c.l.b16 %v4340
  %v6772 = vunpack.c.l.b16 %v4341
  %v6773 = vpack.c.b16 %v6756, %v6755
  %v6774 = vpack.c.b16 %v6758, %v6757
  %v6775 = vpack.c.b16 %v6760, %v6759
  %v6776 = vpack.c.b16 %v6762, %v6761
  %v6777 = vpack.c.b16 %v6764, %v6763
  %v6778 = vpack.c.b16 %v6766, %v6765
  %v6779 = vpack.c.b16 %v6768, %v6767
  %v6780 = vpack.c.b16 %v6770, %v6769
  %v6781 = vpack.c.b16 %v6772, %v6771
  %v6792 = vsel %vm39, %v6674, 0
  %v6795 = vsel %vm39, %v6676, 0
  %v6798 = vsel %vm39, %v6678, 0
  %v6801 = vsel %vm39, %v6680, 0
  %v6804 = vsel %vm39, %v6682, 0
  %v6807 = vsel %vm39, %v6684, 0
  %v6810 = vsel %vm39, %v6686, 0
  %v6813 = vsel %vm39, %v6688, 0
  %v6816 = vsel %vm39, %v6690, 0
  %v6819 = vsel %vm39, %v6692, 0
  %v6822 = vsel %vm39, %v6694, 0
  %v6825 = vsel %vm39, %v6696, 0
  %v6828 = vsel %vm39, %v6698, 0
  %v6831 = vsel %vm39, %v6700, 0
  %v6834 = vsel %vm39, %v6702, 0
  %v6837 = vsel %vm39, %v6704, 0
  %v6840 = vsel %vm39, %v6706, 0
  %v6843 = vsel %vm39, %v6708, 0
  %v6846 = vsel %vm39, %v6710, 0
  %v6849 = vsel %vm39, %v6712, 0
  %v6852 = vsel %vm39, %v6714, 0
  %v6855 = vsel %vm39, %v6716, 0
  %v6858 = vsel %vm39, %v6718, 0
  %v6861 = vsel %vm39, %v6720, 0
  %v6864 = vsel %vm39, %v6722, 0
  %v6867 = vsel %vm39, %v6724, 0
  %v6870 = vsel %vm39, %v6726, 0
  %v6873 = vsel %vm39, %v6728, 0
  %v6876 = vsel %vm39, %v6730, 0
  %v6879 = vsel %vm39, %v6732, 0
  %v6882 = vsel %vm39, %v6734, 0
  %v6885 = vsel %vm39, %v6736, 0
  %6887 = vmatprep.subr.bf16.mxu0 0
  %6888 = vmatpush1.bf16.msra.mxu0 %v6773
  %6889 = vmatprep.subr.bf16.mxu0 0
  %6890 = vmatpush1.bf16.msra.mxu0 %v6774
  %6891 = vmatprep.subr.bf16.mxu0 0
  %6892 = vmatpush1.bf16.msra.mxu0 %v6775
  %6893 = vmatprep.subr.bf16.mxu0 0
  %6894 = vmatpush1.bf16.msra.mxu0 %v6776
  %6895 = vmatprep.subr.bf16.mxu0 0
  %6896 = vmatpush1.bf16.msra.mxu0 %v6777
  %6897 = vmatprep.subr.bf16.mxu0 0
  %6898 = vmatpush1.bf16.msra.mxu0 %v6778
  %6899 = vmatprep.subr.bf16.mxu0 0
  %6900 = vmatpush1.bf16.msra.mxu0 %v6779
  %6901 = vmatprep.subr.bf16.mxu0 0
  %6902 = vmatpush1.bf16.msra.mxu0 %v6780
  %6903 = vmatprep.subr.bf16.mxu0 0
  %6904 = vmatpush1.bf16.msra.mxu0 %v6781
  %6905 = vmatprep.subr.bf16.mxu0 0
  %6906 = vmatpush1.bf16.msra.mxu0 0
  %6907 = vmatprep.subr.bf16.mxu0 0
  %6908 = vmatpush1.bf16.msra.mxu0 0
  %6909 = vmatprep.subr.bf16.mxu0 0
  %6910 = vmatpush1.bf16.msra.mxu0 0
  %6911 = vmatprep.subr.bf16.mxu0 0
  %6912 = vmatpush1.bf16.msra.mxu0 0
  %6913 = vmatprep.subr.bf16.mxu0 0
  %6914 = vmatpush1.bf16.msra.mxu0 0
  %6915 = vmatprep.subr.bf16.mxu0 0
  %6916 = vmatpush1.bf16.msra.mxu0 0
  %6917 = vmatprep.subr.bf16.mxu0 0
  %6918 = vmatpush1.bf16.msra.mxu0 0
  %6919 = vmatprep.mubr.bf16.mxu0 %v6792
  %6920 = vmatmul.mubr.bf16.gmra.mrb[0].mxu0 %v6673
  %v6921 = vpop.f32.mrb[0].mxu0
  %v6922 = vadd.f32 0.0, %v6921
  %v6923 = vpop.f32.mrb[0].mxu0
  %v6924 = vpop.f32.mrb[0].mxu0
  %v6925 = vadd.f32 0.0, %v6924
  %v6926 = vpop.f32.mrb[0].mxu0
  %6927 = vmatprep.mubr.bf16.mxu0 %v6795
  %6928 = vmatmul.mubr.bf16.gmra.mrb[0].mxu0 %v6675
  %v6929 = vpop.f32.mrb[0].mxu0
  %v6930 = vadd.f32 0.0, %v6929
  %v6931 = vpop.f32.mrb[0].mxu0
  %v6932 = vpop.f32.mrb[0].mxu0
  %v6933 = vadd.f32 0.0, %v6932
  %v6934 = vpop.f32.mrb[0].mxu0
  %6935 = vmatprep.mubr.bf16.mxu0 %v6798
  %6936 = vmatmul.mubr.bf16.gmra.mrb[0].mxu0 %v6677
  %v6937 = vpop.f32.mrb[0].mxu0
  %v6938 = vadd.f32 0.0, %v6937
  %v6939 = vpop.f32.mrb[0].mxu0
  %v6940 = vpop.f32.mrb[0].mxu0
  %v6941 = vadd.f32 0.0, %v6940
  %v6942 = vpop.f32.mrb[0].mxu0
  %6943 = vmatprep.mubr.bf16.mxu0 %v6801
  %6944 = vmatmul.mubr.bf16.gmra.mrb[0].mxu0 %v6679
  %v6945 = vpop.f32.mrb[0].mxu0
  %v6946 = vadd.f32 0.0, %v6945
  %v6947 = vpop.f32.mrb[0].mxu0
  %v6948 = vpop.f32.mrb[0].mxu0
  %v6949 = vadd.f32 0.0, %v6948
  %v6950 = vpop.f32.mrb[0].mxu0
  %6951 = vmatprep.mubr.bf16.mxu0 %v6804
  %6952 = vmatmul.mubr.bf16.gmra.mrb[0].mxu0 %v6681
  %v6953 = vpop.f32.mrb[0].mxu0
  %v6954 = vadd.f32 0.0, %v6953
  %v6955 = vpop.f32.mrb[0].mxu0
  %v6956 = vpop.f32.mrb[0].mxu0
  %v6957 = vadd.f32 0.0, %v6956
  %v6958 = vpop.f32.mrb[0].mxu0
  %6959 = vmatprep.mubr.bf16.mxu0 %v6807
  %6960 = vmatmul.mubr.bf16.gmra.mrb[0].mxu0 %v6683
  %v6961 = vpop.f32.mrb[0].mxu0
  %v6962 = vadd.f32 0.0, %v6961
  %v6963 = vpop.f32.mrb[0].mxu0
  %v6964 = vpop.f32.mrb[0].mxu0
  %v6965 = vadd.f32 0.0, %v6964
  %v6966 = vpop.f32.mrb[0].mxu0
  %6967 = vmatprep.mubr.bf16.mxu0 %v6810
  %6968 = vmatmul.mubr.bf16.gmra.mrb[0].mxu0 %v6685
  %v6969 = vpop.f32.mrb[0].mxu0
  %v6970 = vadd.f32 0.0, %v6969
  %v6971 = vpop.f32.mrb[0].mxu0
  %v6972 = vpop.f32.mrb[0].mxu0
  %v6973 = vadd.f32 0.0, %v6972
  %v6974 = vpop.f32.mrb[0].mxu0
  %6975 = vmatprep.mubr.bf16.mxu0 %v6813
  %6976 = vmatmul.mubr.bf16.gmra.mrb[0].mxu0 %v6687
  %v6977 = vpop.f32.mrb[0].mxu0
  %v6978 = vadd.f32 0.0, %v6977
  %v6979 = vpop.f32.mrb[0].mxu0
  %v6980 = vpop.f32.mrb[0].mxu0
  %v6981 = vadd.f32 0.0, %v6980
  %v6982 = vpop.f32.mrb[0].mxu0
  %6983 = vmatprep.mubr.bf16.mxu0 %v6816
  %6984 = vmatmul.mubr.bf16.gmra.mrb[0].mxu0 %v6689
  %v6985 = vpop.f32.mrb[0].mxu0
  %v6986 = vadd.f32 0.0, %v6985
  %v6987 = vpop.f32.mrb[0].mxu0
  %v6988 = vpop.f32.mrb[0].mxu0
  %v6989 = vadd.f32 0.0, %v6988
  %v6990 = vpop.f32.mrb[0].mxu0
  %6991 = vmatprep.mubr.bf16.mxu0 %v6819
  %6992 = vmatmul.mubr.bf16.gmra.mrb[0].mxu0 %v6691
  %v6993 = vpop.f32.mrb[0].mxu0
  %v6994 = vadd.f32 0.0, %v6993
  %v6995 = vpop.f32.mrb[0].mxu0
  %v6996 = vpop.f32.mrb[0].mxu0
  %v6997 = vadd.f32 0.0, %v6996
  %v6998 = vpop.f32.mrb[0].mxu0
  %6999 = vmatprep.mubr.bf16.mxu0 %v6822
  %7000 = vmatmul.mubr.bf16.gmra.mrb[0].mxu0 %v6693
  %v7001 = vpop.f32.mrb[0].mxu0
  %v7002 = vadd.f32 0.0, %v7001
  %v7003 = vpop.f32.mrb[0].mxu0
  %v7004 = vpop.f32.mrb[0].mxu0
  %v7005 = vadd.f32 0.0, %v7004
  %v7006 = vpop.f32.mrb[0].mxu0
  %7007 = vmatprep.mubr.bf16.mxu0 %v6825
  %7008 = vmatmul.mubr.bf16.gmra.mrb[0].mxu0 %v6695
  %v7009 = vpop.f32.mrb[0].mxu0
  %v7010 = vadd.f32 0.0, %v7009
  %v7011 = vpop.f32.mrb[0].mxu0
  %v7012 = vpop.f32.mrb[0].mxu0
  %v7013 = vadd.f32 0.0, %v7012
  %v7014 = vpop.f32.mrb[0].mxu0
  %7015 = vmatprep.mubr.bf16.mxu0 %v6828
  %7016 = vmatmul.mubr.bf16.gmra.mrb[0].mxu0 %v6697
  %v7017 = vpop.f32.mrb[0].mxu0
  %v7018 = vadd.f32 0.0, %v7017
  %v7019 = vpop.f32.mrb[0].mxu0
  %v7020 = vpop.f32.mrb[0].mxu0
  %v7021 = vadd.f32 0.0, %v7020
  %v7022 = vpop.f32.mrb[0].mxu0
  %7023 = vmatprep.mubr.bf16.mxu0 %v6831
  %7024 = vmatmul.mubr.bf16.gmra.mrb[0].mxu0 %v6699
  %v7025 = vpop.f32.mrb[0].mxu0
  %v7026 = vadd.f32 0.0, %v7025
  %v7027 = vpop.f32.mrb[0].mxu0
  %v7028 = vpop.f32.mrb[0].mxu0
  %v7029 = vadd.f32 0.0, %v7028
  %v7030 = vpop.f32.mrb[0].mxu0
  %7031 = vmatprep.mubr.bf16.mxu0 %v6834
  %7032 = vmatmul.mubr.bf16.gmra.mrb[0].mxu0 %v6701
  %v7033 = vpop.f32.mrb[0].mxu0
  %v7034 = vadd.f32 0.0, %v7033
  %v7035 = vpop.f32.mrb[0].mxu0
  %v7036 = vpop.f32.mrb[0].mxu0
  %v7037 = vadd.f32 0.0, %v7036
  %v7038 = vpop.f32.mrb[0].mxu0
  %7039 = vmatprep.mubr.bf16.mxu0 %v6837
  %7040 = vmatmul.mubr.bf16.gmra.mrb[0].mxu0 %v6703
  %v7041 = vpop.f32.mrb[0].mxu0
  %v7042 = vadd.f32 0.0, %v7041
  %v7043 = vpop.f32.mrb[0].mxu0
  %v7044 = vpop.f32.mrb[0].mxu0
  %v7045 = vadd.f32 0.0, %v7044
  %v7046 = vpop.f32.mrb[0].mxu0
  %7047 = vmatprep.mubr.bf16.mxu0 %v6840
  %7048 = vmatmul.mubr.bf16.gmra.mrb[0].mxu0 %v6705
  %v7049 = vpop.f32.mrb[0].mxu0
  %v7050 = vadd.f32 0.0, %v7049
  %v7051 = vpop.f32.mrb[0].mxu0
  %v7052 = vpop.f32.mrb[0].mxu0
  %v7053 = vadd.f32 0.0, %v7052
  %v7054 = vpop.f32.mrb[0].mxu0
  %7055 = vmatprep.mubr.bf16.mxu0 %v6843
  %7056 = vmatmul.mubr.bf16.gmra.mrb[0].mxu0 %v6707
  %v7057 = vpop.f32.mrb[0].mxu0
  %v7058 = vadd.f32 0.0, %v7057
  %v7059 = vpop.f32.mrb[0].mxu0
  %v7060 = vpop.f32.mrb[0].mxu0
  %v7061 = vadd.f32 0.0, %v7060
  %v7062 = vpop.f32.mrb[0].mxu0
  %7063 = vmatprep.mubr.bf16.mxu0 %v6846
  %7064 = vmatmul.mubr.bf16.gmra.mrb[0].mxu0 %v6709
  %v7065 = vpop.f32.mrb[0].mxu0
  %v7066 = vadd.f32 0.0, %v7065
  %v7067 = vpop.f32.mrb[0].mxu0
  %v7068 = vpop.f32.mrb[0].mxu0
  %v7069 = vadd.f32 0.0, %v7068
  %v7070 = vpop.f32.mrb[0].mxu0
  %7071 = vmatprep.mubr.bf16.mxu0 %v6849
  %7072 = vmatmul.mubr.bf16.gmra.mrb[0].mxu0 %v6711
  %v7073 = vpop.f32.mrb[0].mxu0
  %v7074 = vadd.f32 0.0, %v7073
  %v7075 = vpop.f32.mrb[0].mxu0
  %v7076 = vpop.f32.mrb[0].mxu0
  %v7077 = vadd.f32 0.0, %v7076
  %v7078 = vpop.f32.mrb[0].mxu0
  %7079 = vmatprep.mubr.bf16.mxu0 %v6852
  %7080 = vmatmul.mubr.bf16.gmra.mrb[0].mxu0 %v6713
  %v7081 = vpop.f32.mrb[0].mxu0
  %v7082 = vadd.f32 0.0, %v7081
  %v7083 = vpop.f32.mrb[0].mxu0
  %v7084 = vpop.f32.mrb[0].mxu0
  %v7085 = vadd.f32 0.0, %v7084
  %v7086 = vpop.f32.mrb[0].mxu0
  %7087 = vmatprep.mubr.bf16.mxu0 %v6855
  %7088 = vmatmul.mubr.bf16.gmra.mrb[0].mxu0 %v6715
  %v7089 = vpop.f32.mrb[0].mxu0
  %v7090 = vadd.f32 0.0, %v7089
  %v7091 = vpop.f32.mrb[0].mxu0
  %v7092 = vpop.f32.mrb[0].mxu0
  %v7093 = vadd.f32 0.0, %v7092
  %v7094 = vpop.f32.mrb[0].mxu0
  %7095 = vmatprep.mubr.bf16.mxu0 %v6858
  %7096 = vmatmul.mubr.bf16.gmra.mrb[0].mxu0 %v6717
  %v7097 = vpop.f32.mrb[0].mxu0
  %v7098 = vadd.f32 0.0, %v7097
  %v7099 = vpop.f32.mrb[0].mxu0
  %v7100 = vpop.f32.mrb[0].mxu0
  %v7101 = vadd.f32 0.0, %v7100
  %v7102 = vpop.f32.mrb[0].mxu0
  %7103 = vmatprep.mubr.bf16.mxu0 %v6861
  %7104 = vmatmul.mubr.bf16.gmra.mrb[0].mxu0 %v6719
  %v7105 = vpop.f32.mrb[0].mxu0
  %v7106 = vadd.f32 0.0, %v7105
  %v7107 = vpop.f32.mrb[0].mxu0
  %v7108 = vpop.f32.mrb[0].mxu0
  %v7109 = vadd.f32 0.0, %v7108
  %v7110 = vpop.f32.mrb[0].mxu0
  %7111 = vmatprep.mubr.bf16.mxu0 %v6864
  %7112 = vmatmul.mubr.bf16.gmra.mrb[0].mxu0 %v6721
  %v7113 = vpop.f32.mrb[0].mxu0
  %v7114 = vadd.f32 0.0, %v7113
  %v7115 = vpop.f32.mrb[0].mxu0
  %v7116 = vpop.f32.mrb[0].mxu0
  %v7117 = vadd.f32 0.0, %v7116
  %v7118 = vpop.f32.mrb[0].mxu0
  %7119 = vmatprep.mubr.bf16.mxu0 %v6867
  %7120 = vmatmul.mubr.bf16.gmra.mrb[0].mxu0 %v6723
  %v7121 = vpop.f32.mrb[0].mxu0
  %v7122 = vadd.f32 0.0, %v7121
  %v7123 = vpop.f32.mrb[0].mxu0
  %v7124 = vpop.f32.mrb[0].mxu0
  %v7125 = vadd.f32 0.0, %v7124
  %v7126 = vpop.f32.mrb[0].mxu0
  %7127 = vmatprep.mubr.bf16.mxu0 %v6870
  %7128 = vmatmul.mubr.bf16.gmra.mrb[0].mxu0 %v6725
  %v7129 = vpop.f32.mrb[0].mxu0
  %v7130 = vadd.f32 0.0, %v7129
  %v7131 = vpop.f32.mrb[0].mxu0
  %v7132 = vpop.f32.mrb[0].mxu0
  %v7133 = vadd.f32 0.0, %v7132
  %v7134 = vpop.f32.mrb[0].mxu0
  %7135 = vmatprep.mubr.bf16.mxu0 %v6873
  %7136 = vmatmul.mubr.bf16.gmra.mrb[0].mxu0 %v6727
  %v7137 = vpop.f32.mrb[0].mxu0
  %v7138 = vadd.f32 0.0, %v7137
  %v7139 = vpop.f32.mrb[0].mxu0
  %v7140 = vpop.f32.mrb[0].mxu0
  %v7141 = vadd.f32 0.0, %v7140
  %v7142 = vpop.f32.mrb[0].mxu0
  %7143 = vmatprep.mubr.bf16.mxu0 %v6876
  %7144 = vmatmul.mubr.bf16.gmra.mrb[0].mxu0 %v6729
  %v7145 = vpop.f32.mrb[0].mxu0
  %v7146 = vadd.f32 0.0, %v7145
  %v7147 = vpop.f32.mrb[0].mxu0
  %v7148 = vpop.f32.mrb[0].mxu0
  %v7149 = vadd.f32 0.0, %v7148
  %v7150 = vpop.f32.mrb[0].mxu0
  %7151 = vmatprep.mubr.bf16.mxu0 %v6879
  %7152 = vmatmul.mubr.bf16.gmra.mrb[0].mxu0 %v6731
  %v7153 = vpop.f32.mrb[0].mxu0
  %v7154 = vadd.f32 0.0, %v7153
  %v7155 = vpop.f32.mrb[0].mxu0
  %v7156 = vpop.f32.mrb[0].mxu0
  %v7157 = vadd.f32 0.0, %v7156
  %v7158 = vpop.f32.mrb[0].mxu0
  %7159 = vmatprep.mubr.bf16.mxu0 %v6882
  %7160 = vmatmul.mubr.bf16.gmra.mrb[0].mxu0 %v6733
  %v7161 = vpop.f32.mrb[0].mxu0
  %v7162 = vadd.f32 0.0, %v7161
  %v7163 = vpop.f32.mrb[0].mxu0
  %v7164 = vpop.f32.mrb[0].mxu0
  %v7165 = vadd.f32 0.0, %v7164
  %v7166 = vpop.f32.mrb[0].mxu0
  %7167 = vmatprep.mubr.bf16.mxu0 %v6885
  %7168 = vmatmul.mubr.bf16.gmra.mrb[0].mxu0 %v6735
  %v7169 = vpop.f32.mrb[0].mxu0
  %v7170 = vadd.f32 0.0, %v7169
  %v7171 = vpop.f32.mrb[0].mxu0
  %v7172 = vpop.f32.mrb[0].mxu0
  %v7173 = vadd.f32 0.0, %v7172
  %v7174 = vpop.f32.mrb[0].mxu0
  %7175 = vdwg.mxu0
  %v7176 = vadd.f32 %v6922, %v6925
  %v7177 = vadd.f32 %v7176, %v6930
  %v7178 = vadd.f32 %v7177, %v6933
  %v7179 = vadd.f32 %v7178, %v6938
  %v7180 = vadd.f32 %v7179, %v6941
  %v7181 = vadd.f32 %v7180, %v6946
  %v7182 = vadd.f32 %v7181, %v6949
  %v7183 = vadd.f32 %v7182, %v6954
  %v7184 = vadd.f32 %v7183, %v6957
  %v7185 = vadd.f32 %v7184, %v6962
  %v7186 = vadd.f32 %v7185, %v6965
  %v7187 = vadd.f32 %v7186, %v6970
  %v7188 = vadd.f32 %v7187, %v6973
  %v7189 = vadd.f32 %v7188, %v6978
  %v7190 = vadd.f32 %v7189, %v6981
  %v7191 = vadd.f32 %v7190, %v6986
  %v7192 = vadd.f32 %v7191, %v6989
  %v7193 = vadd.f32 %v7192, %v6994
  %v7194 = vadd.f32 %v7193, %v6997
  %v7195 = vadd.f32 %v7194, %v7002
  %v7196 = vadd.f32 %v7195, %v7005
  %v7197 = vadd.f32 %v7196, %v7010
  %v7198 = vadd.f32 %v7197, %v7013
  %v7199 = vadd.f32 %v7198, %v7018
  %v7200 = vadd.f32 %v7199, %v7021
  %v7201 = vadd.f32 %v7200, %v7026
  %v7202 = vadd.f32 %v7201, %v7029
  %v7203 = vadd.f32 %v7202, %v7034
  %v7204 = vadd.f32 %v7203, %v7037
  %v7205 = vadd.f32 %v7204, %v7042
  %v7206 = vadd.f32 %v7205, %v7045
  %v7207 = vadd.f32 %v7206, %v7050
  %v7208 = vadd.f32 %v7207, %v7053
  %v7209 = vadd.f32 %v7208, %v7058
  %v7210 = vadd.f32 %v7209, %v7061
  %v7211 = vadd.f32 %v7210, %v7066
  %v7212 = vadd.f32 %v7211, %v7069
  %v7213 = vadd.f32 %v7212, %v7074
  %v7214 = vadd.f32 %v7213, %v7077
  %v7215 = vadd.f32 %v7214, %v7082
  %v7216 = vadd.f32 %v7215, %v7085
  %v7217 = vadd.f32 %v7216, %v7090
  %v7218 = vadd.f32 %v7217, %v7093
  %v7219 = vadd.f32 %v7218, %v7098
  %v7220 = vadd.f32 %v7219, %v7101
  %v7221 = vadd.f32 %v7220, %v7106
  %v7222 = vadd.f32 %v7221, %v7109
  %v7223 = vadd.f32 %v7222, %v7114
  %v7224 = vadd.f32 %v7223, %v7117
  %v7225 = vadd.f32 %v7224, %v7122
  %v7226 = vadd.f32 %v7225, %v7125
  %v7227 = vadd.f32 %v7226, %v7130
  %v7228 = vadd.f32 %v7227, %v7133
  %v7229 = vadd.f32 %v7228, %v7138
  %v7230 = vadd.f32 %v7229, %v7141
  %v7231 = vadd.f32 %v7230, %v7146
  %v7232 = vadd.f32 %v7231, %v7149
  %v7233 = vadd.f32 %v7232, %v7154
  %v7234 = vadd.f32 %v7233, %v7157
  %v7235 = vadd.f32 %v7234, %v7162
  %v7236 = vadd.f32 %v7235, %v7165
  %v7237 = vadd.f32 %v7236, %v7170
  %v7238 = vadd.f32 %v7237, %v7173
  %v7239 = vrot.slane %v7238, 4
  %v7240 = vadd.f32 %v7238, %v7239
  %v7241 = vrot.slane %v7240, 2
  %v7242 = vadd.f32 %v7240, %v7241
  %v7243 = vrot.slane %v7242, 1
  %v7244 = vadd.f32 %v7242, %v7243
  %v7245 = vmul.f32 %v7244, 0.001953125
  %v7246 = vsub.f32 %v6922, %v7245
  %v7247 = vsub.f32 %v6925, %v7245
  %v7248 = vsub.f32 %v6930, %v7245
  %v7249 = vsub.f32 %v6933, %v7245
  %v7250 = vsub.f32 %v6938, %v7245
  %v7251 = vsub.f32 %v6941, %v7245
  %v7252 = vsub.f32 %v6946, %v7245
  %v7253 = vsub.f32 %v6949, %v7245
  %v7254 = vsub.f32 %v6954, %v7245
  %v7255 = vsub.f32 %v6957, %v7245
  %v7256 = vsub.f32 %v6962, %v7245
  %v7257 = vsub.f32 %v6965, %v7245
  %v7258 = vsub.f32 %v6970, %v7245
  %v7259 = vsub.f32 %v6973, %v7245
  %v7260 = vsub.f32 %v6978, %v7245
  %v7261 = vsub.f32 %v6981, %v7245
  %v7262 = vsub.f32 %v6986, %v7245
  %v7263 = vsub.f32 %v6989, %v7245
  %v7264 = vsub.f32 %v6994, %v7245
  %v7265 = vsub.f32 %v6997, %v7245
  %v7266 = vsub.f32 %v7002, %v7245
  %v7267 = vsub.f32 %v7005, %v7245
  %v7268 = vsub.f32 %v7010, %v7245
  %v7269 = vsub.f32 %v7013, %v7245
  %v7270 = vsub.f32 %v7018, %v7245
  %v7271 = vsub.f32 %v7021, %v7245
  %v7272 = vsub.f32 %v7026, %v7245
  %v7273 = vsub.f32 %v7029, %v7245
  %v7274 = vsub.f32 %v7034, %v7245
  %v7275 = vsub.f32 %v7037, %v7245
  %v7276 = vsub.f32 %v7042, %v7245
  %v7277 = vsub.f32 %v7045, %v7245
  %v7278 = vsub.f32 %v7050, %v7245
  %v7279 = vsub.f32 %v7053, %v7245
  %v7280 = vsub.f32 %v7058, %v7245
  %v7281 = vsub.f32 %v7061, %v7245
  %v7282 = vsub.f32 %v7066, %v7245
  %v7283 = vsub.f32 %v7069, %v7245
  %v7284 = vsub.f32 %v7074, %v7245
  %v7285 = vsub.f32 %v7077, %v7245
  %v7286 = vsub.f32 %v7082, %v7245
  %v7287 = vsub.f32 %v7085, %v7245
  %v7288 = vsub.f32 %v7090, %v7245
  %v7289 = vsub.f32 %v7093, %v7245
  %v7290 = vsub.f32 %v7098, %v7245
  %v7291 = vsub.f32 %v7101, %v7245
  %v7292 = vsub.f32 %v7106, %v7245
  %v7293 = vsub.f32 %v7109, %v7245
  %v7294 = vsub.f32 %v7114, %v7245
  %v7295 = vsub.f32 %v7117, %v7245
  %v7296 = vsub.f32 %v7122, %v7245
  %v7297 = vsub.f32 %v7125, %v7245
  %v7298 = vsub.f32 %v7130, %v7245
  %v7299 = vsub.f32 %v7133, %v7245
  %v7300 = vsub.f32 %v7138, %v7245
  %v7301 = vsub.f32 %v7141, %v7245
  %v7302 = vsub.f32 %v7146, %v7245
  %v7303 = vsub.f32 %v7149, %v7245
  %v7304 = vsub.f32 %v7154, %v7245
  %v7305 = vsub.f32 %v7157, %v7245
  %v7306 = vsub.f32 %v7162, %v7245
  %v7307 = vsub.f32 %v7165, %v7245
  %v7308 = vsub.f32 %v7170, %v7245
  %v7309 = vsub.f32 %v7173, %v7245
  %v7310 = vmul.f32 %v7246, %v7246
  %v7311 = vmul.f32 %v7247, %v7247
  %v7312 = vmul.f32 %v7248, %v7248
  %v7313 = vmul.f32 %v7249, %v7249
  %v7314 = vmul.f32 %v7250, %v7250
  %v7315 = vmul.f32 %v7251, %v7251
  %v7316 = vmul.f32 %v7252, %v7252
  %v7317 = vmul.f32 %v7253, %v7253
  %v7318 = vmul.f32 %v7254, %v7254
  %v7319 = vmul.f32 %v7255, %v7255
  %v7320 = vmul.f32 %v7256, %v7256
  %v7321 = vmul.f32 %v7257, %v7257
  %v7322 = vmul.f32 %v7258, %v7258
  %v7323 = vmul.f32 %v7259, %v7259
  %v7324 = vmul.f32 %v7260, %v7260
  %v7325 = vmul.f32 %v7261, %v7261
  %v7326 = vmul.f32 %v7262, %v7262
  %v7327 = vmul.f32 %v7263, %v7263
  %v7328 = vmul.f32 %v7264, %v7264
  %v7329 = vmul.f32 %v7265, %v7265
  %v7330 = vmul.f32 %v7266, %v7266
  %v7331 = vmul.f32 %v7267, %v7267
  %v7332 = vmul.f32 %v7268, %v7268
  %v7333 = vmul.f32 %v7269, %v7269
  %v7334 = vmul.f32 %v7270, %v7270
  %v7335 = vmul.f32 %v7271, %v7271
  %v7336 = vmul.f32 %v7272, %v7272
  %v7337 = vmul.f32 %v7273, %v7273
  %v7338 = vmul.f32 %v7274, %v7274
  %v7339 = vmul.f32 %v7275, %v7275
  %v7340 = vmul.f32 %v7276, %v7276
  %v7341 = vmul.f32 %v7277, %v7277
  %v7342 = vmul.f32 %v7278, %v7278
  %v7343 = vmul.f32 %v7279, %v7279
  %v7344 = vmul.f32 %v7280, %v7280
  %v7345 = vmul.f32 %v7281, %v7281
  %v7346 = vmul.f32 %v7282, %v7282
  %v7347 = vmul.f32 %v7283, %v7283
  %v7348 = vmul.f32 %v7284, %v7284
  %v7349 = vmul.f32 %v7285, %v7285
  %v7350 = vmul.f32 %v7286, %v7286
  %v7351 = vmul.f32 %v7287, %v7287
  %v7352 = vmul.f32 %v7288, %v7288
  %v7353 = vmul.f32 %v7289, %v7289
  %v7354 = vmul.f32 %v7290, %v7290
  %v7355 = vmul.f32 %v7291, %v7291
  %v7356 = vmul.f32 %v7292, %v7292
  %v7357 = vmul.f32 %v7293, %v7293
  %v7358 = vmul.f32 %v7294, %v7294
  %v7359 = vmul.f32 %v7295, %v7295
  %v7360 = vmul.f32 %v7296, %v7296
  %v7361 = vmul.f32 %v7297, %v7297
  %v7362 = vmul.f32 %v7298, %v7298
  %v7363 = vmul.f32 %v7299, %v7299
  %v7364 = vmul.f32 %v7300, %v7300
  %v7365 = vmul.f32 %v7301, %v7301
  %v7366 = vmul.f32 %v7302, %v7302
  %v7367 = vmul.f32 %v7303, %v7303
  %v7368 = vmul.f32 %v7304, %v7304
  %v7369 = vmul.f32 %v7305, %v7305
  %v7370 = vmul.f32 %v7306, %v7306
  %v7371 = vmul.f32 %v7307, %v7307
  %v7372 = vmul.f32 %v7308, %v7308
  %v7373 = vmul.f32 %v7309, %v7309
  %v7374 = vadd.f32 %v7310, %v7311
  %v7375 = vadd.f32 %v7374, %v7312
  %v7376 = vadd.f32 %v7375, %v7313
  %v7377 = vadd.f32 %v7376, %v7314
  %v7378 = vadd.f32 %v7377, %v7315
  %v7379 = vadd.f32 %v7378, %v7316
  %v7380 = vadd.f32 %v7379, %v7317
  %v7381 = vadd.f32 %v7380, %v7318
  %v7382 = vadd.f32 %v7381, %v7319
  %v7383 = vadd.f32 %v7382, %v7320
  %v7384 = vadd.f32 %v7383, %v7321
  %v7385 = vadd.f32 %v7384, %v7322
  %v7386 = vadd.f32 %v7385, %v7323
  %v7387 = vadd.f32 %v7386, %v7324
  %v7388 = vadd.f32 %v7387, %v7325
  %v7389 = vadd.f32 %v7388, %v7326
  %v7390 = vadd.f32 %v7389, %v7327
  %v7391 = vadd.f32 %v7390, %v7328
  %v7392 = vadd.f32 %v7391, %v7329
  %v7393 = vadd.f32 %v7392, %v7330
  %v7394 = vadd.f32 %v7393, %v7331
  %v7395 = vadd.f32 %v7394, %v7332
  %v7396 = vadd.f32 %v7395, %v7333
  %v7397 = vadd.f32 %v7396, %v7334
  %v7398 = vadd.f32 %v7397, %v7335
  %v7399 = vadd.f32 %v7398, %v7336
  %v7400 = vadd.f32 %v7399, %v7337
  %v7401 = vadd.f32 %v7400, %v7338
  %v7402 = vadd.f32 %v7401, %v7339
  %v7403 = vadd.f32 %v7402, %v7340
  %v7404 = vadd.f32 %v7403, %v7341
  %v7405 = vadd.f32 %v7404, %v7342
  %v7406 = vadd.f32 %v7405, %v7343
  %v7407 = vadd.f32 %v7406, %v7344
  %v7408 = vadd.f32 %v7407, %v7345
  %v7409 = vadd.f32 %v7408, %v7346
  %v7410 = vadd.f32 %v7409, %v7347
  %v7411 = vadd.f32 %v7410, %v7348
  %v7412 = vadd.f32 %v7411, %v7349
  %v7413 = vadd.f32 %v7412, %v7350
  %v7414 = vadd.f32 %v7413, %v7351
  %v7415 = vadd.f32 %v7414, %v7352
  %v7416 = vadd.f32 %v7415, %v7353
  %v7417 = vadd.f32 %v7416, %v7354
  %v7418 = vadd.f32 %v7417, %v7355
  %v7419 = vadd.f32 %v7418, %v7356
  %v7420 = vadd.f32 %v7419, %v7357
  %v7421 = vadd.f32 %v7420, %v7358
  %v7422 = vadd.f32 %v7421, %v7359
  %v7423 = vadd.f32 %v7422, %v7360
  %v7424 = vadd.f32 %v7423, %v7361
  %v7425 = vadd.f32 %v7424, %v7362
  %v7426 = vadd.f32 %v7425, %v7363
  %v7427 = vadd.f32 %v7426, %v7364
  %v7428 = vadd.f32 %v7427, %v7365
  %v7429 = vadd.f32 %v7428, %v7366
  %v7430 = vadd.f32 %v7429, %v7367
  %v7431 = vadd.f32 %v7430, %v7368
  %v7432 = vadd.f32 %v7431, %v7369
  %v7433 = vadd.f32 %v7432, %v7370
  %v7434 = vadd.f32 %v7433, %v7371
  %v7435 = vadd.f32 %v7434, %v7372
  %v7436 = vadd.f32 %v7435, %v7373
  %v7437 = vrot.slane %v7436, 4
  %v7438 = vadd.f32 %v7436, %v7437
  %v7439 = vrot.slane %v7438, 2
  %v7440 = vadd.f32 %v7438, %v7439
  %v7441 = vrot.slane %v7440, 1
  %v7442 = vadd.f32 %v7440, %v7441
  %v7443 = vmul.f32 %v7442, 0.001953125
  %v7444 = vadd.f32 %v7443, 1e-05
  %v7445 = vrsqrt.pop %v7444
  %v7446 = vmul.f32 %v4342, %v7445
  %v7448 = vlaneseq
  %v7449 = vshrl.u32 %v7448, 7
  %v7450 = vsub.s32 0, %v7449
  %v7451 = vrot.slane %v7446, %v7450
  %v7453 = vmul.f32 %v7246, %v7451
  %v7454 = vmul.f32 %v7247, %v7451
  %v7455 = vmul.f32 %v7248, %v7451
  %v7456 = vmul.f32 %v7249, %v7451
  %v7457 = vmul.f32 %v7250, %v7451
  %v7458 = vmul.f32 %v7251, %v7451
  %v7459 = vmul.f32 %v7252, %v7451
  %v7460 = vmul.f32 %v7253, %v7451
  %v7461 = vmul.f32 %v7254, %v7451
  %v7462 = vmul.f32 %v7255, %v7451
  %v7463 = vmul.f32 %v7256, %v7451
  %v7464 = vmul.f32 %v7257, %v7451
  %v7465 = vmul.f32 %v7258, %v7451
  %v7466 = vmul.f32 %v7259, %v7451
  %v7467 = vmul.f32 %v7260, %v7451
  %v7468 = vmul.f32 %v7261, %v7451
  %v7469 = vmul.f32 %v7262, %v7451
  %v7470 = vmul.f32 %v7263, %v7451
  %v7471 = vmul.f32 %v7264, %v7451
  %v7472 = vmul.f32 %v7265, %v7451
  %v7473 = vmul.f32 %v7266, %v7451
  %v7474 = vmul.f32 %v7267, %v7451
  %v7475 = vmul.f32 %v7268, %v7451
  %v7476 = vmul.f32 %v7269, %v7451
  %v7477 = vmul.f32 %v7270, %v7451
  %v7478 = vmul.f32 %v7271, %v7451
  %v7479 = vmul.f32 %v7272, %v7451
  %v7480 = vmul.f32 %v7273, %v7451
  %v7481 = vmul.f32 %v7274, %v7451
  %v7482 = vmul.f32 %v7275, %v7451
  %v7483 = vmul.f32 %v7276, %v7451
  %v7484 = vmul.f32 %v7277, %v7451
  %v7485 = vmul.f32 %v7278, %v7451
  %v7486 = vmul.f32 %v7279, %v7451
  %v7487 = vmul.f32 %v7280, %v7451
  %v7488 = vmul.f32 %v7281, %v7451
  %v7489 = vmul.f32 %v7282, %v7451
  %v7490 = vmul.f32 %v7283, %v7451
  %v7491 = vmul.f32 %v7284, %v7451
  %v7492 = vmul.f32 %v7285, %v7451
  %v7493 = vmul.f32 %v7286, %v7451
  %v7494 = vmul.f32 %v7287, %v7451
  %v7495 = vmul.f32 %v7288, %v7451
  %v7496 = vmul.f32 %v7289, %v7451
  %v7497 = vmul.f32 %v7290, %v7451
  %v7498 = vmul.f32 %v7291, %v7451
  %v7499 = vmul.f32 %v7292, %v7451
  %v7500 = vmul.f32 %v7293, %v7451
  %v7501 = vmul.f32 %v7294, %v7451
  %v7502 = vmul.f32 %v7295, %v7451
  %v7503 = vmul.f32 %v7296, %v7451
  %v7504 = vmul.f32 %v7297, %v7451
  %v7505 = vmul.f32 %v7298, %v7451
  %v7506 = vmul.f32 %v7299, %v7451
  %v7507 = vmul.f32 %v7300, %v7451
  %v7508 = vmul.f32 %v7301, %v7451
  %v7509 = vmul.f32 %v7302, %v7451
  %v7510 = vmul.f32 %v7303, %v7451
  %v7511 = vmul.f32 %v7304, %v7451
  %v7512 = vmul.f32 %v7305, %v7451
  %v7513 = vmul.f32 %v7306, %v7451
  %v7514 = vmul.f32 %v7307, %v7451
  %v7515 = vmul.f32 %v7308, %v7451
  %v7516 = vmul.f32 %v7309, %v7451
  %v7518 = vlaneseq
  %v7519 = vshrl.u32 %v7518, 7
  %v7520 = vsub.s32 0, %v7519
  %v7521 = vrot.slane %v4343, %v7520
  %v7523 = vadd.f32 %v7453, %v7521
  %v7524 = vadd.f32 %v7454, %v7521
  %v7525 = vadd.f32 %v7455, %v7521
  %v7526 = vadd.f32 %v7456, %v7521
  %v7527 = vadd.f32 %v7457, %v7521
  %v7528 = vadd.f32 %v7458, %v7521
  %v7529 = vadd.f32 %v7459, %v7521
  %v7530 = vadd.f32 %v7460, %v7521
  %v7531 = vadd.f32 %v7461, %v7521
  %v7532 = vadd.f32 %v7462, %v7521
  %v7533 = vadd.f32 %v7463, %v7521
  %v7534 = vadd.f32 %v7464, %v7521
  %v7535 = vadd.f32 %v7465, %v7521
  %v7536 = vadd.f32 %v7466, %v7521
  %v7537 = vadd.f32 %v7467, %v7521
  %v7538 = vadd.f32 %v7468, %v7521
  %v7539 = vadd.f32 %v7469, %v7521
  %v7540 = vadd.f32 %v7470, %v7521
  %v7541 = vadd.f32 %v7471, %v7521
  %v7542 = vadd.f32 %v7472, %v7521
  %v7543 = vadd.f32 %v7473, %v7521
  %v7544 = vadd.f32 %v7474, %v7521
  %v7545 = vadd.f32 %v7475, %v7521
  %v7546 = vadd.f32 %v7476, %v7521
  %v7547 = vadd.f32 %v7477, %v7521
  %v7548 = vadd.f32 %v7478, %v7521
  %v7549 = vadd.f32 %v7479, %v7521
  %v7550 = vadd.f32 %v7480, %v7521
  %v7551 = vadd.f32 %v7481, %v7521
  %v7552 = vadd.f32 %v7482, %v7521
  %v7553 = vadd.f32 %v7483, %v7521
  %v7554 = vadd.f32 %v7484, %v7521
  %v7555 = vadd.f32 %v7485, %v7521
  %v7556 = vadd.f32 %v7486, %v7521
  %v7557 = vadd.f32 %v7487, %v7521
  %v7558 = vadd.f32 %v7488, %v7521
  %v7559 = vadd.f32 %v7489, %v7521
  %v7560 = vadd.f32 %v7490, %v7521
  %v7561 = vadd.f32 %v7491, %v7521
  %v7562 = vadd.f32 %v7492, %v7521
  %v7563 = vadd.f32 %v7493, %v7521
  %v7564 = vadd.f32 %v7494, %v7521
  %v7565 = vadd.f32 %v7495, %v7521
  %v7566 = vadd.f32 %v7496, %v7521
  %v7567 = vadd.f32 %v7497, %v7521
  %v7568 = vadd.f32 %v7498, %v7521
  %v7569 = vadd.f32 %v7499, %v7521
  %v7570 = vadd.f32 %v7500, %v7521
  %v7571 = vadd.f32 %v7501, %v7521
  %v7572 = vadd.f32 %v7502, %v7521
  %v7573 = vadd.f32 %v7503, %v7521
  %v7574 = vadd.f32 %v7504, %v7521
  %v7575 = vadd.f32 %v7505, %v7521
  %v7576 = vadd.f32 %v7506, %v7521
  %v7577 = vadd.f32 %v7507, %v7521
  %v7578 = vadd.f32 %v7508, %v7521
  %v7579 = vadd.f32 %v7509, %v7521
  %v7580 = vadd.f32 %v7510, %v7521
  %v7581 = vadd.f32 %v7511, %v7521
  %v7582 = vadd.f32 %v7512, %v7521
  %v7583 = vadd.f32 %v7513, %v7521
  %v7584 = vadd.f32 %v7514, %v7521
  %v7585 = vadd.f32 %v7515, %v7521
  %v7586 = vadd.f32 %v7516, %v7521
  %v7587 = vmax.f32 %v7523, 0.0
  %v7588 = vmax.f32 %v7524, 0.0
  %v7589 = vmax.f32 %v7525, 0.0
  %v7590 = vmax.f32 %v7526, 0.0
  %v7591 = vmax.f32 %v7527, 0.0
  %v7592 = vmax.f32 %v7528, 0.0
  %v7593 = vmax.f32 %v7529, 0.0
  %v7594 = vmax.f32 %v7530, 0.0
  %v7595 = vmax.f32 %v7531, 0.0
  %v7596 = vmax.f32 %v7532, 0.0
  %v7597 = vmax.f32 %v7533, 0.0
  %v7598 = vmax.f32 %v7534, 0.0
  %v7599 = vmax.f32 %v7535, 0.0
  %v7600 = vmax.f32 %v7536, 0.0
  %v7601 = vmax.f32 %v7537, 0.0
  %v7602 = vmax.f32 %v7538, 0.0
  %v7603 = vmax.f32 %v7539, 0.0
  %v7604 = vmax.f32 %v7540, 0.0
  %v7605 = vmax.f32 %v7541, 0.0
  %v7606 = vmax.f32 %v7542, 0.0
  %v7607 = vmax.f32 %v7543, 0.0
  %v7608 = vmax.f32 %v7544, 0.0
  %v7609 = vmax.f32 %v7545, 0.0
  %v7610 = vmax.f32 %v7546, 0.0
  %v7611 = vmax.f32 %v7547, 0.0
  %v7612 = vmax.f32 %v7548, 0.0
  %v7613 = vmax.f32 %v7549, 0.0
  %v7614 = vmax.f32 %v7550, 0.0
  %v7615 = vmax.f32 %v7551, 0.0
  %v7616 = vmax.f32 %v7552, 0.0
  %v7617 = vmax.f32 %v7553, 0.0
  %v7618 = vmax.f32 %v7554, 0.0
  %v7619 = vmax.f32 %v7555, 0.0
  %v7620 = vmax.f32 %v7556, 0.0
  %v7621 = vmax.f32 %v7557, 0.0
  %v7622 = vmax.f32 %v7558, 0.0
  %v7623 = vmax.f32 %v7559, 0.0
  %v7624 = vmax.f32 %v7560, 0.0
  %v7625 = vmax.f32 %v7561, 0.0
  %v7626 = vmax.f32 %v7562, 0.0
  %v7627 = vmax.f32 %v7563, 0.0
  %v7628 = vmax.f32 %v7564, 0.0
  %v7629 = vmax.f32 %v7565, 0.0
  %v7630 = vmax.f32 %v7566, 0.0
  %v7631 = vmax.f32 %v7567, 0.0
  %v7632 = vmax.f32 %v7568, 0.0
  %v7633 = vmax.f32 %v7569, 0.0
  %v7634 = vmax.f32 %v7570, 0.0
  %v7635 = vmax.f32 %v7571, 0.0
  %v7636 = vmax.f32 %v7572, 0.0
  %v7637 = vmax.f32 %v7573, 0.0
  %v7638 = vmax.f32 %v7574, 0.0
  %v7639 = vmax.f32 %v7575, 0.0
  %v7640 = vmax.f32 %v7576, 0.0
  %v7641 = vmax.f32 %v7577, 0.0
  %v7642 = vmax.f32 %v7578, 0.0
  %v7643 = vmax.f32 %v7579, 0.0
  %v7644 = vmax.f32 %v7580, 0.0
  %v7645 = vmax.f32 %v7581, 0.0
  %v7646 = vmax.f32 %v7582, 0.0
  %v7647 = vmax.f32 %v7583, 0.0
  %v7648 = vmax.f32 %v7584, 0.0
  %v7649 = vmax.f32 %v7585, 0.0
  %v7650 = vmax.f32 %v7586, 0.0
  %s7651 = scalar_lea.vmem [#allocation3], 24
  %7652 = vst.msk [vmem:[%s7651 + $0x1] sm:$0xff] %vm127, %v7587
  %7653 = vst.msk [vmem:[%s7651 + $0x9] sm:$0xff] %vm127, %v7588
  %7654 = vst.msk [vmem:[%s7651 + $0x19] sm:$0xff] %vm127, %v7589
  %7655 = vst.msk [vmem:[%s7651 + $0x21] sm:$0xff] %vm127, %v7590
  %7656 = vst.msk [vmem:[%s7651 + $0x31] sm:$0xff] %vm127, %v7591
  %7657 = vst.msk [vmem:[%s7651 + $0x39] sm:$0xff] %vm127, %v7592
  %7658 = vst.msk [vmem:[%s7651 + $0x49] sm:$0xff] %vm127, %v7593
  %7659 = vst.msk [vmem:[%s7651 + $0x51] sm:$0xff] %vm127, %v7594
  %7660 = vst.msk [vmem:[%s7651 + $0x61] sm:$0xff] %vm127, %v7595
  %7661 = vst.msk [vmem:[%s7651 + $0x69] sm:$0xff] %vm127, %v7596
  %7662 = vst.msk [vmem:[%s7651 + $0x79] sm:$0xff] %vm127, %v7597
  %7663 = vst.msk [vmem:[%s7651 + $0x81] sm:$0xff] %vm127, %v7598
  %7664 = vst.msk [vmem:[%s7651 + $0x91] sm:$0xff] %vm127, %v7599
  %7665 = vst.msk [vmem:[%s7651 + $0x99] sm:$0xff] %vm127, %v7600
  %7666 = vst.msk [vmem:[%s7651 + $0xa9] sm:$0xff] %vm127, %v7601
  %7667 = vst.msk [vmem:[%s7651 + $0xb1] sm:$0xff] %vm127, %v7602
  %7668 = vst.msk [vmem:[%s7651 + $0xc1] sm:$0xff] %vm127, %v7603
  %7669 = vst.msk [vmem:[%s7651 + $0xc9] sm:$0xff] %vm127, %v7604
  %7670 = vst.msk [vmem:[%s7651 + $0xd9] sm:$0xff] %vm127, %v7605
  %7671 = vst.msk [vmem:[%s7651 + $0xe1] sm:$0xff] %vm127, %v7606
  %7672 = vst.msk [vmem:[%s7651 + $0xf1] sm:$0xff] %vm127, %v7607
  %7673 = vst.msk [vmem:[%s7651 + $0xf9] sm:$0xff] %vm127, %v7608
  %7674 = vst.msk [vmem:[%s7651 + $0x109] sm:$0xff] %vm127, %v7609
  %7675 = vst.msk [vmem:[%s7651 + $0x111] sm:$0xff] %vm127, %v7610
  %7676 = vst.msk [vmem:[%s7651 + $0x121] sm:$0xff] %vm127, %v7611
  %7677 = vst.msk [vmem:[%s7651 + $0x129] sm:$0xff] %vm127, %v7612
  %7678 = vst.msk [vmem:[%s7651 + $0x139] sm:$0xff] %vm127, %v7613
  %7679 = vst.msk [vmem:[%s7651 + $0x141] sm:$0xff] %vm127, %v7614
  %7680 = vst.msk [vmem:[%s7651 + $0x151] sm:$0xff] %vm127, %v7615
  %7681 = vst.msk [vmem:[%s7651 + $0x159] sm:$0xff] %vm127, %v7616
  %7682 = vst.msk [vmem:[%s7651 + $0x169] sm:$0xff] %vm127, %v7617
  %7683 = vst.msk [vmem:[%s7651 + $0x171] sm:$0xff] %vm127, %v7618
  %7684 = vst.msk [vmem:[%s7651 + $0x1b1] sm:$0xff] %vm127, %v7619
  %7685 = vst.msk [vmem:[%s7651 + $0x1b9] sm:$0xff] %vm127, %v7620
  %7686 = vst.msk [vmem:[%s7651 + $0x1c9] sm:$0xff] %vm127, %v7621
  %7687 = vst.msk [vmem:[%s7651 + $0x1d1] sm:$0xff] %vm127, %v7622
  %7688 = vst.msk [vmem:[%s7651 + $0x1e1] sm:$0xff] %vm127, %v7623
  %7689 = vst.msk [vmem:[%s7651 + $0x1e9] sm:$0xff] %vm127, %v7624
  %7690 = vst.msk [vmem:[%s7651 + $0x1f9] sm:$0xff] %vm127, %v7625
  %7691 = vst.msk [vmem:[%s7651 + $0x201] sm:$0xff] %vm127, %v7626
  %7692 = vst.msk [vmem:[%s7651 + $0x211] sm:$0xff] %vm127, %v7627
  %7693 = vst.msk [vmem:[%s7651 + $0x219] sm:$0xff] %vm127, %v7628
  %7694 = vst.msk [vmem:[%s7651 + $0x229] sm:$0xff] %vm127, %v7629
  %7695 = vst.msk [vmem:[%s7651 + $0x231] sm:$0xff] %vm127, %v7630
  %7696 = vst.msk [vmem:[%s7651 + $0x241] sm:$0xff] %vm127, %v7631
  %7697 = vst.msk [vmem:[%s7651 + $0x249] sm:$0xff] %vm127, %v7632
  %7698 = vst.msk [vmem:[%s7651 + $0x259] sm:$0xff] %vm127, %v7633
  %7699 = vst.msk [vmem:[%s7651 + $0x261] sm:$0xff] %vm127, %v7634
  %7700 = vst.msk [vmem:[%s7651 + $0x271] sm:$0xff] %vm127, %v7635
  %7701 = vst.msk [vmem:[%s7651 + $0x279] sm:$0xff] %vm127, %v7636
  %7702 = vst.msk [vmem:[%s7651 + $0x289] sm:$0xff] %vm127, %v7637
  %7703 = vst.msk [vmem:[%s7651 + $0x291] sm:$0xff] %vm127, %v7638
  %7704 = vst.msk [vmem:[%s7651 + $0x2a1] sm:$0xff] %vm127, %v7639
  %7705 = vst.msk [vmem:[%s7651 + $0x2a9] sm:$0xff] %vm127, %v7640
  %7706 = vst.msk [vmem:[%s7651 + $0x2b9] sm:$0xff] %vm127, %v7641
  %7707 = vst.msk [vmem:[%s7651 + $0x2c1] sm:$0xff] %vm127, %v7642
  %7708 = vst.msk [vmem:[%s7651 + $0x2d1] sm:$0xff] %vm127, %v7643
  %7709 = vst.msk [vmem:[%s7651 + $0x2d9] sm:$0xff] %vm127, %v7644
  %7710 = vst.msk [vmem:[%s7651 + $0x2e9] sm:$0xff] %vm127, %v7645
  %7711 = vst.msk [vmem:[%s7651 + $0x2f1] sm:$0xff] %vm127, %v7646
  %7712 = vst.msk [vmem:[%s7651 + $0x301] sm:$0xff] %vm127, %v7647
  %7713 = vst.msk [vmem:[%s7651 + $0x309] sm:$0xff] %vm127, %v7648
  %7714 = vst.msk [vmem:[%s7651 + $0x319] sm:$0xff] %vm127, %v7649
  %7715 = vst.msk [vmem:[%s7651 + $0x321] sm:$0xff] %vm127, %v7650
  %v7716 = vld [vmem:[#allocation3] sm:$0xff]
  %v7717 = vld [vmem:[#allocation3 + $0x8] sm:$0xff]
  %v7718 = vld [vmem:[#allocation3 + $0x10] sm:$0x3]
  %v7719 = vld [vmem:[#allocation3 + $0x18] sm:$0xff]
  %v7720 = vld [vmem:[#allocation3 + $0x20] sm:$0xff]
  %v7721 = vld [vmem:[#allocation3 + $0x28] sm:$0x3]
  %v7722 = vld [vmem:[#allocation3 + $0x30] sm:$0xff]
  %v7723 = vld [vmem:[#allocation3 + $0x38] sm:$0xff]
  %v7724 = vld [vmem:[#allocation3 + $0x40] sm:$0x3]
  %v7725 = vld [vmem:[#allocation3 + $0x48] sm:$0xff]
  %v7726 = vld [vmem:[#allocation3 + $0x50] sm:$0xff]
  %v7727 = vld [vmem:[#allocation3 + $0x58] sm:$0x3]
  %v7728 = vld [vmem:[#allocation3 + $0x60] sm:$0xff]
  %v7729 = vld [vmem:[#allocation3 + $0x68] sm:$0xff]
  %v7730 = vld [vmem:[#allocation3 + $0x70] sm:$0x3]
  %v7731 = vld [vmem:[#allocation3 + $0x78] sm:$0xff]
  %v7732 = vld [vmem:[#allocation3 + $0x80] sm:$0xff]
  %v7733 = vld [vmem:[#allocation3 + $0x88] sm:$0x3]
  %v7734 = vld [vmem:[#allocation3 + $0x90] sm:$0xff]
  %v7735 = vld [vmem:[#allocation3 + $0x98] sm:$0xff]
  %v7736 = vld [vmem:[#allocation3 + $0xa0] sm:$0x3]
  %v7737 = vld [vmem:[#allocation3 + $0xa8] sm:$0xff]
  %v7738 = vld [vmem:[#allocation3 + $0xb0] sm:$0xff]
  %v7739 = vld [vmem:[#allocation3 + $0xb8] sm:$0x3]
  %v7740 = vld [vmem:[#allocation3 + $0xc0] sm:$0xff]
  %v7741 = vld [vmem:[#allocation3 + $0xc8] sm:$0xff]
  %v7742 = vld [vmem:[#allocation3 + $0xd0] sm:$0x3]
  %v7743 = vld [vmem:[#allocation3 + $0xd8] sm:$0xff]
  %v7744 = vld [vmem:[#allocation3 + $0xe0] sm:$0xff]
  %v7745 = vld [vmem:[#allocation3 + $0xe8] sm:$0x3]
  %v7746 = vld [vmem:[#allocation3 + $0xf0] sm:$0xff]
  %v7747 = vld [vmem:[#allocation3 + $0xf8] sm:$0xff]
  %v7748 = vld [vmem:[#allocation3 + $0x100] sm:$0x3]
  %v7749 = vld [vmem:[#allocation3 + $0x108] sm:$0xff]
  %v7750 = vld [vmem:[#allocation3 + $0x110] sm:$0xff]
  %v7751 = vld [vmem:[#allocation3 + $0x118] sm:$0x3]
  %v7752 = vld [vmem:[#allocation3 + $0x120] sm:$0xff]
  %v7753 = vld [vmem:[#allocation3 + $0x128] sm:$0xff]
  %v7754 = vld [vmem:[#allocation3 + $0x130] sm:$0x3]
  %v7755 = vld [vmem:[#allocation3 + $0x138] sm:$0xff]
  %v7756 = vld [vmem:[#allocation3 + $0x140] sm:$0xff]
  %v7757 = vld [vmem:[#allocation3 + $0x148] sm:$0x3]
  %v7758 = vld [vmem:[#allocation3 + $0x150] sm:$0xff]
  %v7759 = vld [vmem:[#allocation3 + $0x158] sm:$0xff]
  %v7760 = vld [vmem:[#allocation3 + $0x160] sm:$0x3]
  %v7761 = vld [vmem:[#allocation3 + $0x168] sm:$0xff]
  %v7762 = vld [vmem:[#allocation3 + $0x170] sm:$0xff]
  %v7763 = vld [vmem:[#allocation3 + $0x178] sm:$0x3]
  %v7764 = vld [vmem:[#allocation3 + $0x180] sm:$0xff]
  %v7765 = vld [vmem:[#allocation3 + $0x188] sm:$0xff]
  %v7766 = vld [vmem:[#allocation3 + $0x190] sm:$0x3]
  %v7767 = vld [vmem:[#allocation3 + $0x198] sm:$0xff]
  %v7768 = vld [vmem:[#allocation3 + $0x1a0] sm:$0xff]
  %v7769 = vld [vmem:[#allocation3 + $0x1a8] sm:$0x3]
  %v7770 = vld [vmem:[#allocation3 + $0x1b0] sm:$0xff]
  %v7771 = vld [vmem:[#allocation3 + $0x1b8] sm:$0xff]
  %v7772 = vld [vmem:[#allocation3 + $0x1c0] sm:$0x3]
  %v7773 = vld [vmem:[#allocation3 + $0x1c8] sm:$0xff]
  %v7774 = vld [vmem:[#allocation3 + $0x1d0] sm:$0xff]
  %v7775 = vld [vmem:[#allocation3 + $0x1d8] sm:$0x3]
  %v7776 = vld [vmem:[#allocation3 + $0x1e0] sm:$0xff]
  %v7777 = vld [vmem:[#allocation3 + $0x1e8] sm:$0xff]
  %v7778 = vld [vmem:[#allocation3 + $0x1f0] sm:$0x3]
  %v7779 = vld [vmem:[#allocation3 + $0x1f8] sm:$0xff]
  %v7780 = vld [vmem:[#allocation3 + $0x200] sm:$0xff]
  %v7781 = vld [vmem:[#allocation3 + $0x208] sm:$0x3]
  %v7782 = vld [vmem:[#allocation3 + $0x210] sm:$0xff]
  %v7783 = vld [vmem:[#allocation3 + $0x218] sm:$0xff]
  %v7784 = vld [vmem:[#allocation3 + $0x220] sm:$0x3]
  %v7785 = vld [vmem:[#allocation3 + $0x228] sm:$0xff]
  %v7786 = vld [vmem:[#allocation3 + $0x230] sm:$0xff]
  %v7787 = vld [vmem:[#allocation3 + $0x238] sm:$0x3]
  %v7788 = vld [vmem:[#allocation3 + $0x240] sm:$0xff]
  %v7789 = vld [vmem:[#allocation3 + $0x248] sm:$0xff]
  %v7790 = vld [vmem:[#allocation3 + $0x250] sm:$0x3]
  %v7791 = vld [vmem:[#allocation3 + $0x258] sm:$0xff]
  %v7792 = vld [vmem:[#allocation3 + $0x260] sm:$0xff]
  %v7793 = vld [vmem:[#allocation3 + $0x268] sm:$0x3]
  %v7794 = vld [vmem:[#allocation3 + $0x270] sm:$0xff]
  %v7795 = vld [vmem:[#allocation3 + $0x278] sm:$0xff]
  %v7796 = vld [vmem:[#allocation3 + $0x280] sm:$0x3]
  %v7797 = vld [vmem:[#allocation3 + $0x288] sm:$0xff]
  %v7798 = vld [vmem:[#allocation3 + $0x290] sm:$0xff]
  %v7799 = vld [vmem:[#allocation3 + $0x298] sm:$0x3]
  %v7800 = vld [vmem:[#allocation3 + $0x2a0] sm:$0xff]
  %v7801 = vld [vmem:[#allocation3 + $0x2a8] sm:$0xff]
  %v7802 = vld [vmem:[#allocation3 + $0x2b0] sm:$0x3]
  %v7803 = vld [vmem:[#allocation3 + $0x2b8] sm:$0xff]
  %v7804 = vld [vmem:[#allocation3 + $0x2c0] sm:$0xff]
  %v7805 = vld [vmem:[#allocation3 + $0x2c8] sm:$0x3]
  %v7806 = vld [vmem:[#allocation3 + $0x2d0] sm:$0xff]
  %v7807 = vld [vmem:[#allocation3 + $0x2d8] sm:$0xff]
  %v7808 = vld [vmem:[#allocation3 + $0x2e0] sm:$0x3]
  %v7809 = vld [vmem:[#allocation3 + $0x2e8] sm:$0xff]
  %v7810 = vld [vmem:[#allocation3 + $0x2f0] sm:$0xff]
  %v7811 = vld [vmem:[#allocation3 + $0x2f8] sm:$0x3]
  %v7812 = vld [vmem:[#allocation3 + $0x300] sm:$0xff]
  %v7813 = vld [vmem:[#allocation3 + $0x308] sm:$0xff]
  %v7814 = vld [vmem:[#allocation3 + $0x310] sm:$0x3]
  %v7815 = vld [vmem:[#allocation3 + $0x318] sm:$0xff]
  %v7816 = vld [vmem:[#allocation3 + $0x320] sm:$0xff]
  %v7817 = vld [vmem:[#allocation3 + $0x328] sm:$0x3]
  %v7818 = vld [vmem:[#allocation3 + $0x330] sm:$0xff]
  %v7819 = vld [vmem:[#allocation3 + $0x338] sm:$0xff]
  %v7820 = vld [vmem:[#allocation3 + $0x340] sm:$0x3]
  %v7821 = vld [vmem:[#allocation3 + $0x348] sm:$0xff]
  %v7822 = vld [vmem:[#allocation3 + $0x350] sm:$0xff]
  %v7823 = vld [vmem:[#allocation3 + $0x358] sm:$0x3]
  %v7824 = vld [vmem:[%s8] sm:$0xf]
  %v7825 = vld [vmem:[%s8 + $0x4] sm:$0xf]
  %v7826 = vld [vmem:[%s8 + $0x8] sm:$0xf]
  %v7827 = vld [vmem:[%s8 + $0xc] sm:$0xf]
  %v7828 = vld [vmem:[%s8 + $0x10] sm:$0xf]
  %v7829 = vld [vmem:[%s8 + $0x14] sm:$0xf]
  %v7830 = vld [vmem:[%s8 + $0x18] sm:$0xf]
  %v7831 = vld [vmem:[%s8 + $0x1c] sm:$0xf]
  %v7832 = vld [vmem:[%s8 + $0x20] sm:$0xf]
  %v7833 = vld [vmem:[%s9] sm:$0x1]
  %v7834 = vld [vmem:[%s10] sm:$0x1]
  %v7931 = vrot.slane %v7716, 1
  %v7932 = vrot.slane %v7717, 1
  %v7933 = vsel %vm426, %v7931, %v7932
  %v7934 = vrot.slane %v7718, 1
  %v7935 = vsel %vm426, %v7932, %v7934
  %v7936 = vrot.slane %v7719, 1
  %v7937 = vrot.slane %v7720, 1
  %v7938 = vsel %vm426, %v7936, %v7937
  %v7939 = vrot.slane %v7721, 1
  %v7940 = vsel %vm426, %v7937, %v7939
  %v7941 = vrot.slane %v7722, 1
  %v7942 = vrot.slane %v7723, 1
  %v7943 = vsel %vm426, %v7941, %v7942
  %v7944 = vrot.slane %v7724, 1
  %v7945 = vsel %vm426, %v7942, %v7944
  %v7946 = vrot.slane %v7725, 1
  %v7947 = vrot.slane %v7726, 1
  %v7948 = vsel %vm426, %v7946, %v7947
  %v7949 = vrot.slane %v7727, 1
  %v7950 = vsel %vm426, %v7947, %v7949
  %v7951 = vrot.slane %v7728, 1
  %v7952 = vrot.slane %v7729, 1
  %v7953 = vsel %vm426, %v7951, %v7952
  %v7954 = vrot.slane %v7730, 1
  %v7955 = vsel %vm426, %v7952, %v7954
  %v7956 = vrot.slane %v7731, 1
  %v7957 = vrot.slane %v7732, 1
  %v7958 = vsel %vm426, %v7956, %v7957
  %v7959 = vrot.slane %v7733, 1
  %v7960 = vsel %vm426, %v7957, %v7959
  %v7961 = vrot.slane %v7734, 1
  %v7962 = vrot.slane %v7735, 1
  %v7963 = vsel %vm426, %v7961, %v7962
  %v7964 = vrot.slane %v7736, 1
  %v7965 = vsel %vm426, %v7962, %v7964
  %v7966 = vrot.slane %v7737, 1
  %v7967 = vrot.slane %v7738, 1
  %v7968 = vsel %vm426, %v7966, %v7967
  %v7969 = vrot.slane %v7739, 1
  %v7970 = vsel %vm426, %v7967, %v7969
  %v7971 = vrot.slane %v7740, 1
  %v7972 = vrot.slane %v7741, 1
  %v7973 = vsel %vm426, %v7971, %v7972
  %v7974 = vrot.slane %v7742, 1
  %v7975 = vsel %vm426, %v7972, %v7974
  %v7976 = vrot.slane %v7743, 1
  %v7977 = vrot.slane %v7744, 1
  %v7978 = vsel %vm426, %v7976, %v7977
  %v7979 = vrot.slane %v7745, 1
  %v7980 = vsel %vm426, %v7977, %v7979
  %v7981 = vrot.slane %v7746, 1
  %v7982 = vrot.slane %v7747, 1
  %v7983 = vsel %vm426, %v7981, %v7982
  %v7984 = vrot.slane %v7748, 1
  %v7985 = vsel %vm426, %v7982, %v7984
  %v7986 = vrot.slane %v7749, 1
  %v7987 = vrot.slane %v7750, 1
  %v7988 = vsel %vm426, %v7986, %v7987
  %v7989 = vrot.slane %v7751, 1
  %v7990 = vsel %vm426, %v7987, %v7989
  %v7991 = vrot.slane %v7752, 1
  %v7992 = vrot.slane %v7753, 1
  %v7993 = vsel %vm426, %v7991, %v7992
  %v7994 = vrot.slane %v7754, 1
  %v7995 = vsel %vm426, %v7992, %v7994
  %v7996 = vrot.slane %v7755, 1
  %v7997 = vrot.slane %v7756, 1
  %v7998 = vsel %vm426, %v7996, %v7997
  %v7999 = vrot.slane %v7757, 1
  %v8000 = vsel %vm426, %v7997, %v7999
  %v8001 = vrot.slane %v7758, 1
  %v8002 = vrot.slane %v7759, 1
  %v8003 = vsel %vm426, %v8001, %v8002
  %v8004 = vrot.slane %v7760, 1
  %v8005 = vsel %vm426, %v8002, %v8004
  %v8006 = vrot.slane %v7761, 1
  %v8007 = vrot.slane %v7762, 1
  %v8008 = vsel %vm426, %v8006, %v8007
  %v8009 = vrot.slane %v7763, 1
  %v8010 = vsel %vm426, %v8007, %v8009
  %v8011 = vrot.slane %v7770, 1
  %v8012 = vrot.slane %v7771, 1
  %v8013 = vsel %vm426, %v8011, %v8012
  %v8014 = vrot.slane %v7772, 1
  %v8015 = vsel %vm426, %v8012, %v8014
  %v8016 = vrot.slane %v7773, 1
  %v8017 = vrot.slane %v7774, 1
  %v8018 = vsel %vm426, %v8016, %v8017
  %v8019 = vrot.slane %v7775, 1
  %v8020 = vsel %vm426, %v8017, %v8019
  %v8021 = vrot.slane %v7776, 1
  %v8022 = vrot.slane %v7777, 1
  %v8023 = vsel %vm426, %v8021, %v8022
  %v8024 = vrot.slane %v7778, 1
  %v8025 = vsel %vm426, %v8022, %v8024
  %v8026 = vrot.slane %v7779, 1
  %v8027 = vrot.slane %v7780, 1
  %v8028 = vsel %vm426, %v8026, %v8027
  %v8029 = vrot.slane %v7781, 1
  %v8030 = vsel %vm426, %v8027, %v8029
  %v8031 = vrot.slane %v7782, 1
  %v8032 = vrot.slane %v7783, 1
  %v8033 = vsel %vm426, %v8031, %v8032
  %v8034 = vrot.slane %v7784, 1
  %v8035 = vsel %vm426, %v8032, %v8034
  %v8036 = vrot.slane %v7785, 1
  %v8037 = vrot.slane %v7786, 1
  %v8038 = vsel %vm426, %v8036, %v8037
  %v8039 = vrot.slane %v7787, 1
  %v8040 = vsel %vm426, %v8037, %v8039
  %v8041 = vrot.slane %v7788, 1
  %v8042 = vrot.slane %v7789, 1
  %v8043 = vsel %vm426, %v8041, %v8042
  %v8044 = vrot.slane %v7790, 1
  %v8045 = vsel %vm426, %v8042, %v8044
  %v8046 = vrot.slane %v7791, 1
  %v8047 = vrot.slane %v7792, 1
  %v8048 = vsel %vm426, %v8046, %v8047
  %v8049 = vrot.slane %v7793, 1
  %v8050 = vsel %vm426, %v8047, %v8049
  %v8051 = vrot.slane %v7794, 1
  %v8052 = vrot.slane %v7795, 1
  %v8053 = vsel %vm426, %v8051, %v8052
  %v8054 = vrot.slane %v7796, 1
  %v8055 = vsel %vm426, %v8052, %v8054
  %v8056 = vrot.slane %v7797, 1
  %v8057 = vrot.slane %v7798, 1
  %v8058 = vsel %vm426, %v8056, %v8057
  %v8059 = vrot.slane %v7799, 1
  %v8060 = vsel %vm426, %v8057, %v8059
  %v8061 = vrot.slane %v7800, 1
  %v8062 = vrot.slane %v7801, 1
  %v8063 = vsel %vm426, %v8061, %v8062
  %v8064 = vrot.slane %v7802, 1
  %v8065 = vsel %vm426, %v8062, %v8064
  %v8066 = vrot.slane %v7803, 1
  %v8067 = vrot.slane %v7804, 1
  %v8068 = vsel %vm426, %v8066, %v8067
  %v8069 = vrot.slane %v7805, 1
  %v8070 = vsel %vm426, %v8067, %v8069
  %v8071 = vrot.slane %v7806, 1
  %v8072 = vrot.slane %v7807, 1
  %v8073 = vsel %vm426, %v8071, %v8072
  %v8074 = vrot.slane %v7808, 1
  %v8075 = vsel %vm426, %v8072, %v8074
  %v8076 = vrot.slane %v7809, 1
  %v8077 = vrot.slane %v7810, 1
  %v8078 = vsel %vm426, %v8076, %v8077
  %v8079 = vrot.slane %v7811, 1
  %v8080 = vsel %vm426, %v8077, %v8079
  %v8081 = vrot.slane %v7812, 1
  %v8082 = vrot.slane %v7813, 1
  %v8083 = vsel %vm426, %v8081, %v8082
  %v8084 = vrot.slane %v7814, 1
  %v8085 = vsel %vm426, %v8082, %v8084
  %v8086 = vrot.slane %v7815, 1
  %v8087 = vrot.slane %v7816, 1
  %v8088 = vsel %vm426, %v8086, %v8087
  %v8089 = vrot.slane %v7817, 1
  %v8090 = vsel %vm426, %v8087, %v8089
  %8091 = vrot.lane.b32.xlu0 %v7933, 8
  %v8092 = vpop.permute.xlu0 %8091
  %8093 = vrot.lane.b32.xlu0 %v7935, 8
  %v8094 = vpop.permute.xlu0 %8093
  %8095 = vrot.lane.b32.xlu0 %v7938, 8
  %v8096 = vpop.permute.xlu0 %8095
  %8097 = vrot.lane.b32.xlu0 %v7940, 8
  %v8098 = vpop.permute.xlu0 %8097
  %8099 = vrot.lane.b32.xlu0 %v7943, 8
  %v8100 = vpop.permute.xlu0 %8099
  %8101 = vrot.lane.b32.xlu0 %v7945, 8
  %v8102 = vpop.permute.xlu0 %8101
  %8103 = vrot.lane.b32.xlu0 %v7948, 8
  %v8104 = vpop.permute.xlu0 %8103
  %8105 = vrot.lane.b32.xlu0 %v7950, 8
  %v8106 = vpop.permute.xlu0 %8105
  %8107 = vrot.lane.b32.xlu0 %v7953, 8
  %v8108 = vpop.permute.xlu0 %8107
  %8109 = vrot.lane.b32.xlu0 %v7955, 8
  %v8110 = vpop.permute.xlu0 %8109
  %8111 = vrot.lane.b32.xlu0 %v7958, 8
  %v8112 = vpop.permute.xlu0 %8111
  %8113 = vrot.lane.b32.xlu0 %v7960, 8
  %v8114 = vpop.permute.xlu0 %8113
  %8115 = vrot.lane.b32.xlu0 %v7963, 8
  %v8116 = vpop.permute.xlu0 %8115
  %8117 = vrot.lane.b32.xlu0 %v7965, 8
  %v8118 = vpop.permute.xlu0 %8117
  %8119 = vrot.lane.b32.xlu0 %v7968, 8
  %v8120 = vpop.permute.xlu0 %8119
  %8121 = vrot.lane.b32.xlu0 %v7970, 8
  %v8122 = vpop.permute.xlu0 %8121
  %8123 = vrot.lane.b32.xlu0 %v7973, 8
  %v8124 = vpop.permute.xlu0 %8123
  %8125 = vrot.lane.b32.xlu0 %v7975, 8
  %v8126 = vpop.permute.xlu0 %8125
  %8127 = vrot.lane.b32.xlu0 %v7978, 8
  %v8128 = vpop.permute.xlu0 %8127
  %8129 = vrot.lane.b32.xlu0 %v7980, 8
  %v8130 = vpop.permute.xlu0 %8129
  %8131 = vrot.lane.b32.xlu0 %v7983, 8
  %v8132 = vpop.permute.xlu0 %8131
  %8133 = vrot.lane.b32.xlu0 %v7985, 8
  %v8134 = vpop.permute.xlu0 %8133
  %8135 = vrot.lane.b32.xlu0 %v7988, 8
  %v8136 = vpop.permute.xlu0 %8135
  %8137 = vrot.lane.b32.xlu0 %v7990, 8
  %v8138 = vpop.permute.xlu0 %8137
  %8139 = vrot.lane.b32.xlu0 %v7993, 8
  %v8140 = vpop.permute.xlu0 %8139
  %8141 = vrot.lane.b32.xlu0 %v7995, 8
  %v8142 = vpop.permute.xlu0 %8141
  %8143 = vrot.lane.b32.xlu0 %v7998, 8
  %v8144 = vpop.permute.xlu0 %8143
  %8145 = vrot.lane.b32.xlu0 %v8000, 8
  %v8146 = vpop.permute.xlu0 %8145
  %8147 = vrot.lane.b32.xlu0 %v8003, 8
  %v8148 = vpop.permute.xlu0 %8147
  %8149 = vrot.lane.b32.xlu0 %v8005, 8
  %v8150 = vpop.permute.xlu0 %8149
  %8151 = vrot.lane.b32.xlu0 %v8008, 8
  %v8152 = vpop.permute.xlu0 %8151
  %8153 = vrot.lane.b32.xlu0 %v8010, 8
  %v8154 = vpop.permute.xlu0 %8153
  %8155 = vrot.lane.b32.xlu0 %v8013, 8
  %v8156 = vpop.permute.xlu0 %8155
  %8157 = vrot.lane.b32.xlu0 %v8015, 8
  %v8158 = vpop.permute.xlu0 %8157
  %8159 = vrot.lane.b32.xlu0 %v8018, 8
  %v8160 = vpop.permute.xlu0 %8159
  %8161 = vrot.lane.b32.xlu0 %v8020, 8
  %v8162 = vpop.permute.xlu0 %8161
  %8163 = vrot.lane.b32.xlu0 %v8023, 8
  %v8164 = vpop.permute.xlu0 %8163
  %8165 = vrot.lane.b32.xlu0 %v8025, 8
  %v8166 = vpop.permute.xlu0 %8165
  %8167 = vrot.lane.b32.xlu0 %v8028, 8
  %v8168 = vpop.permute.xlu0 %8167
  %8169 = vrot.lane.b32.xlu0 %v8030, 8
  %v8170 = vpop.permute.xlu0 %8169
  %8171 = vrot.lane.b32.xlu0 %v8033, 8
  %v8172 = vpop.permute.xlu0 %8171
  %8173 = vrot.lane.b32.xlu0 %v8035, 8
  %v8174 = vpop.permute.xlu0 %8173
  %8175 = vrot.lane.b32.xlu0 %v8038, 8
  %v8176 = vpop.permute.xlu0 %8175
  %8177 = vrot.lane.b32.xlu0 %v8040, 8
  %v8178 = vpop.permute.xlu0 %8177
  %8179 = vrot.lane.b32.xlu0 %v8043, 8
  %v8180 = vpop.permute.xlu0 %8179
  %8181 = vrot.lane.b32.xlu0 %v8045, 8
  %v8182 = vpop.permute.xlu0 %8181
  %8183 = vrot.lane.b32.xlu0 %v8048, 8
  %v8184 = vpop.permute.xlu0 %8183
  %8185 = vrot.lane.b32.xlu0 %v8050, 8
  %v8186 = vpop.permute.xlu0 %8185
  %8187 = vrot.lane.b32.xlu0 %v8053, 8
  %v8188 = vpop.permute.xlu0 %8187
  %8189 = vrot.lane.b32.xlu0 %v8055, 8
  %v8190 = vpop.permute.xlu0 %8189
  %8191 = vrot.lane.b32.xlu0 %v8058, 8
  %v8192 = vpop.permute.xlu0 %8191
  %8193 = vrot.lane.b32.xlu0 %v8060, 8
  %v8194 = vpop.permute.xlu0 %8193
  %8195 = vrot.lane.b32.xlu0 %v8063, 8
  %v8196 = vpop.permute.xlu0 %8195
  %8197 = vrot.lane.b32.xlu0 %v8065, 8
  %v8198 = vpop.permute.xlu0 %8197
  %8199 = vrot.lane.b32.xlu0 %v8068, 8
  %v8200 = vpop.permute.xlu0 %8199
  %8201 = vrot.lane.b32.xlu0 %v8070, 8
  %v8202 = vpop.permute.xlu0 %8201
  %8203 = vrot.lane.b32.xlu0 %v8073, 8
  %v8204 = vpop.permute.xlu0 %8203
  %8205 = vrot.lane.b32.xlu0 %v8075, 8
  %v8206 = vpop.permute.xlu0 %8205
  %8207 = vrot.lane.b32.xlu0 %v8078, 8
  %v8208 = vpop.permute.xlu0 %8207
  %8209 = vrot.lane.b32.xlu0 %v8080, 8
  %v8210 = vpop.permute.xlu0 %8209
  %8211 = vrot.lane.b32.xlu0 %v8083, 8
  %v8212 = vpop.permute.xlu0 %8211
  %8213 = vrot.lane.b32.xlu0 %v8085, 8
  %v8214 = vpop.permute.xlu0 %8213
  %8215 = vrot.lane.b32.xlu0 %v8088, 8
  %v8216 = vpop.permute.xlu0 %8215
  %8217 = vrot.lane.b32.xlu0 %v8090, 8
  %v8218 = vpop.permute.xlu0 %8217
  %v8283 = vrot.slane %v7716, 2
  %v8284 = vrot.slane %v7717, 2
  %v8285 = vsel %vm779, %v8283, %v8284
  %v8286 = vrot.slane %v7718, 2
  %v8287 = vsel %vm779, %v8284, %v8286
  %v8288 = vrot.slane %v7719, 2
  %v8289 = vrot.slane %v7720, 2
  %v8290 = vsel %vm779, %v8288, %v8289
  %v8291 = vrot.slane %v7721, 2
  %v8292 = vsel %vm779, %v8289, %v8291
  %v8293 = vrot.slane %v7722, 2
  %v8294 = vrot.slane %v7723, 2
  %v8295 = vsel %vm779, %v8293, %v8294
  %v8296 = vrot.slane %v7724, 2
  %v8297 = vsel %vm779, %v8294, %v8296
  %v8298 = vrot.slane %v7725, 2
  %v8299 = vrot.slane %v7726, 2
  %v8300 = vsel %vm779, %v8298, %v8299
  %v8301 = vrot.slane %v7727, 2
  %v8302 = vsel %vm779, %v8299, %v8301
  %v8303 = vrot.slane %v7728, 2
  %v8304 = vrot.slane %v7729, 2
  %v8305 = vsel %vm779, %v8303, %v8304
  %v8306 = vrot.slane %v7730, 2
  %v8307 = vsel %vm779, %v8304, %v8306
  %v8308 = vrot.slane %v7731, 2
  %v8309 = vrot.slane %v7732, 2
  %v8310 = vsel %vm779, %v8308, %v8309
  %v8311 = vrot.slane %v7733, 2
  %v8312 = vsel %vm779, %v8309, %v8311
  %v8313 = vrot.slane %v7734, 2
  %v8314 = vrot.slane %v7735, 2
  %v8315 = vsel %vm779, %v8313, %v8314
  %v8316 = vrot.slane %v7736, 2
  %v8317 = vsel %vm779, %v8314, %v8316
  %v8318 = vrot.slane %v7737, 2
  %v8319 = vrot.slane %v7738, 2
  %v8320 = vsel %vm779, %v8318, %v8319
  %v8321 = vrot.slane %v7739, 2
  %v8322 = vsel %vm779, %v8319, %v8321
  %v8323 = vrot.slane %v7740, 2
  %v8324 = vrot.slane %v7741, 2
  %v8325 = vsel %vm779, %v8323, %v8324
  %v8326 = vrot.slane %v7742, 2
  %v8327 = vsel %vm779, %v8324, %v8326
  %v8328 = vrot.slane %v7743, 2
  %v8329 = vrot.slane %v7744, 2
  %v8330 = vsel %vm779, %v8328, %v8329
  %v8331 = vrot.slane %v7745, 2
  %v8332 = vsel %vm779, %v8329, %v8331
  %v8333 = vrot.slane %v7746, 2
  %v8334 = vrot.slane %v7747, 2
  %v8335 = vsel %vm779, %v8333, %v8334
  %v8336 = vrot.slane %v7748, 2
  %v8337 = vsel %vm779, %v8334, %v8336
  %v8338 = vrot.slane %v7749, 2
  %v8339 = vrot.slane %v7750, 2
  %v8340 = vsel %vm779, %v8338, %v8339
  %v8341 = vrot.slane %v7751, 2
  %v8342 = vsel %vm779, %v8339, %v8341
  %v8343 = vrot.slane %v7752, 2
  %v8344 = vrot.slane %v7753, 2
  %v8345 = vsel %vm779, %v8343, %v8344
  %v8346 = vrot.slane %v7754, 2
  %v8347 = vsel %vm779, %v8344, %v8346
  %v8348 = vrot.slane %v7755, 2
  %v8349 = vrot.slane %v7756, 2
  %v8350 = vsel %vm779, %v8348, %v8349
  %v8351 = vrot.slane %v7757, 2
  %v8352 = vsel %vm779, %v8349, %v8351
  %v8353 = vrot.slane %v7758, 2
  %v8354 = vrot.slane %v7759, 2
  %v8355 = vsel %vm779, %v8353, %v8354
  %v8356 = vrot.slane %v7760, 2
  %v8357 = vsel %vm779, %v8354, %v8356
  %v8358 = vrot.slane %v7761, 2
  %v8359 = vrot.slane %v7762, 2
  %v8360 = vsel %vm779, %v8358, %v8359
  %v8361 = vrot.slane %v7763, 2
  %v8362 = vsel %vm779, %v8359, %v8361
  %v8363 = vrot.slane %v7770, 2
  %v8364 = vrot.slane %v7771, 2
  %v8365 = vsel %vm779, %v8363, %v8364
  %v8366 = vrot.slane %v7772, 2
  %v8367 = vsel %vm779, %v8364, %v8366
  %v8368 = vrot.slane %v7773, 2
  %v8369 = vrot.slane %v7774, 2
  %v8370 = vsel %vm779, %v8368, %v8369
  %v8371 = vrot.slane %v7775, 2
  %v8372 = vsel %vm779, %v8369, %v8371
  %v8373 = vrot.slane %v7776, 2
  %v8374 = vrot.slane %v7777, 2
  %v8375 = vsel %vm779, %v8373, %v8374
  %v8376 = vrot.slane %v7778, 2
  %v8377 = vsel %vm779, %v8374, %v8376
  %v8378 = vrot.slane %v7779, 2
  %v8379 = vrot.slane %v7780, 2
  %v8380 = vsel %vm779, %v8378, %v8379
  %v8381 = vrot.slane %v7781, 2
  %v8382 = vsel %vm779, %v8379, %v8381
  %v8383 = vrot.slane %v7782, 2
  %v8384 = vrot.slane %v7783, 2
  %v8385 = vsel %vm779, %v8383, %v8384
  %v8386 = vrot.slane %v7784, 2
  %v8387 = vsel %vm779, %v8384, %v8386
  %v8388 = vrot.slane %v7785, 2
  %v8389 = vrot.slane %v7786, 2
  %v8390 = vsel %vm779, %v8388, %v8389
  %v8391 = vrot.slane %v7787, 2
  %v8392 = vsel %vm779, %v8389, %v8391
  %v8393 = vrot.slane %v7788, 2
  %v8394 = vrot.slane %v7789, 2
  %v8395 = vsel %vm779, %v8393, %v8394
  %v8396 = vrot.slane %v7790, 2
  %v8397 = vsel %vm779, %v8394, %v8396
  %v8398 = vrot.slane %v7791, 2
  %v8399 = vrot.slane %v7792, 2
  %v8400 = vsel %vm779, %v8398, %v8399
  %v8401 = vrot.slane %v7793, 2
  %v8402 = vsel %vm779, %v8399, %v8401
  %v8403 = vrot.slane %v7794, 2
  %v8404 = vrot.slane %v7795, 2
  %v8405 = vsel %vm779, %v8403, %v8404
  %v8406 = vrot.slane %v7796, 2
  %v8407 = vsel %vm779, %v8404, %v8406
  %v8408 = vrot.slane %v7797, 2
  %v8409 = vrot.slane %v7798, 2
  %v8410 = vsel %vm779, %v8408, %v8409
  %v8411 = vrot.slane %v7799, 2
  %v8412 = vsel %vm779, %v8409, %v8411
  %v8413 = vrot.slane %v7800, 2
  %v8414 = vrot.slane %v7801, 2
  %v8415 = vsel %vm779, %v8413, %v8414
  %v8416 = vrot.slane %v7802, 2
  %v8417 = vsel %vm779, %v8414, %v8416
  %v8418 = vrot.slane %v7803, 2
  %v8419 = vrot.slane %v7804, 2
  %v8420 = vsel %vm779, %v8418, %v8419
  %v8421 = vrot.slane %v7805, 2
  %v8422 = vsel %vm779, %v8419, %v8421
  %v8423 = vrot.slane %v7806, 2
  %v8424 = vrot.slane %v7807, 2
  %v8425 = vsel %vm779, %v8423, %v8424
  %v8426 = vrot.slane %v7808, 2
  %v8427 = vsel %vm779, %v8424, %v8426
  %v8428 = vrot.slane %v7809, 2
  %v8429 = vrot.slane %v7810, 2
  %v8430 = vsel %vm779, %v8428, %v8429
  %v8431 = vrot.slane %v7811, 2
  %v8432 = vsel %vm779, %v8429, %v8431
  %v8433 = vrot.slane %v7812, 2
  %v8434 = vrot.slane %v7813, 2
  %v8435 = vsel %vm779, %v8433, %v8434
  %v8436 = vrot.slane %v7814, 2
  %v8437 = vsel %vm779, %v8434, %v8436
  %v8438 = vrot.slane %v7815, 2
  %v8439 = vrot.slane %v7816, 2
  %v8440 = vsel %vm779, %v8438, %v8439
  %v8441 = vrot.slane %v7817, 2
  %v8442 = vsel %vm779, %v8439, %v8441
  %8443 = vrot.lane.b32.xlu0 %v8285, 16
  %v8444 = vpop.permute.xlu0 %8443
  %8445 = vrot.lane.b32.xlu0 %v8287, 16
  %v8446 = vpop.permute.xlu0 %8445
  %8447 = vrot.lane.b32.xlu0 %v8290, 16
  %v8448 = vpop.permute.xlu0 %8447
  %8449 = vrot.lane.b32.xlu0 %v8292, 16
  %v8450 = vpop.permute.xlu0 %8449
  %8451 = vrot.lane.b32.xlu0 %v8295, 16
  %v8452 = vpop.permute.xlu0 %8451
  %8453 = vrot.lane.b32.xlu0 %v8297, 16
  %v8454 = vpop.permute.xlu0 %8453
  %8455 = vrot.lane.b32.xlu0 %v8300, 16
  %v8456 = vpop.permute.xlu0 %8455
  %8457 = vrot.lane.b32.xlu0 %v8302, 16
  %v8458 = vpop.permute.xlu0 %8457
  %8459 = vrot.lane.b32.xlu0 %v8305, 16
  %v8460 = vpop.permute.xlu0 %8459
  %8461 = vrot.lane.b32.xlu0 %v8307, 16
  %v8462 = vpop.permute.xlu0 %8461
  %8463 = vrot.lane.b32.xlu0 %v8310, 16
  %v8464 = vpop.permute.xlu0 %8463
  %8465 = vrot.lane.b32.xlu0 %v8312, 16
  %v8466 = vpop.permute.xlu0 %8465
  %8467 = vrot.lane.b32.xlu0 %v8315, 16
  %v8468 = vpop.permute.xlu0 %8467
  %8469 = vrot.lane.b32.xlu0 %v8317, 16
  %v8470 = vpop.permute.xlu0 %8469
  %8471 = vrot.lane.b32.xlu0 %v8320, 16
  %v8472 = vpop.permute.xlu0 %8471
  %8473 = vrot.lane.b32.xlu0 %v8322, 16
  %v8474 = vpop.permute.xlu0 %8473
  %8475 = vrot.lane.b32.xlu0 %v8325, 16
  %v8476 = vpop.permute.xlu0 %8475
  %8477 = vrot.lane.b32.xlu0 %v8327, 16
  %v8478 = vpop.permute.xlu0 %8477
  %8479 = vrot.lane.b32.xlu0 %v8330, 16
  %v8480 = vpop.permute.xlu0 %8479
  %8481 = vrot.lane.b32.xlu0 %v8332, 16
  %v8482 = vpop.permute.xlu0 %8481
  %8483 = vrot.lane.b32.xlu0 %v8335, 16
  %v8484 = vpop.permute.xlu0 %8483
  %8485 = vrot.lane.b32.xlu0 %v8337, 16
  %v8486 = vpop.permute.xlu0 %8485
  %8487 = vrot.lane.b32.xlu0 %v8340, 16
  %v8488 = vpop.permute.xlu0 %8487
  %8489 = vrot.lane.b32.xlu0 %v8342, 16
  %v8490 = vpop.permute.xlu0 %8489
  %8491 = vrot.lane.b32.xlu0 %v8345, 16
  %v8492 = vpop.permute.xlu0 %8491
  %8493 = vrot.lane.b32.xlu0 %v8347, 16
  %v8494 = vpop.permute.xlu0 %8493
  %8495 = vrot.lane.b32.xlu0 %v8350, 16
  %v8496 = vpop.permute.xlu0 %8495
  %8497 = vrot.lane.b32.xlu0 %v8352, 16
  %v8498 = vpop.permute.xlu0 %8497
  %8499 = vrot.lane.b32.xlu0 %v8355, 16
  %v8500 = vpop.permute.xlu0 %8499
  %8501 = vrot.lane.b32.xlu0 %v8357, 16
  %v8502 = vpop.permute.xlu0 %8501
  %8503 = vrot.lane.b32.xlu0 %v8360, 16
  %v8504 = vpop.permute.xlu0 %8503
  %8505 = vrot.lane.b32.xlu0 %v8362, 16
  %v8506 = vpop.permute.xlu0 %8505
  %8507 = vrot.lane.b32.xlu0 %v8365, 16
  %v8508 = vpop.permute.xlu0 %8507
  %8509 = vrot.lane.b32.xlu0 %v8367, 16
  %v8510 = vpop.permute.xlu0 %8509
  %8511 = vrot.lane.b32.xlu0 %v8370, 16
  %v8512 = vpop.permute.xlu0 %8511
  %8513 = vrot.lane.b32.xlu0 %v8372, 16
  %v8514 = vpop.permute.xlu0 %8513
  %8515 = vrot.lane.b32.xlu0 %v8375, 16
  %v8516 = vpop.permute.xlu0 %8515
  %8517 = vrot.lane.b32.xlu0 %v8377, 16
  %v8518 = vpop.permute.xlu0 %8517
  %8519 = vrot.lane.b32.xlu0 %v8380, 16
  %v8520 = vpop.permute.xlu0 %8519
  %8521 = vrot.lane.b32.xlu0 %v8382, 16
  %v8522 = vpop.permute.xlu0 %8521
  %8523 = vrot.lane.b32.xlu0 %v8385, 16
  %v8524 = vpop.permute.xlu0 %8523
  %8525 = vrot.lane.b32.xlu0 %v8387, 16
  %v8526 = vpop.permute.xlu0 %8525
  %8527 = vrot.lane.b32.xlu0 %v8390, 16
  %v8528 = vpop.permute.xlu0 %8527
  %8529 = vrot.lane.b32.xlu0 %v8392, 16
  %v8530 = vpop.permute.xlu0 %8529
  %8531 = vrot.lane.b32.xlu0 %v8395, 16
  %v8532 = vpop.permute.xlu0 %8531
  %8533 = vrot.lane.b32.xlu0 %v8397, 16
  %v8534 = vpop.permute.xlu0 %8533
  %8535 = vrot.lane.b32.xlu0 %v8400, 16
  %v8536 = vpop.permute.xlu0 %8535
  %8537 = vrot.lane.b32.xlu0 %v8402, 16
  %v8538 = vpop.permute.xlu0 %8537
  %8539 = vrot.lane.b32.xlu0 %v8405, 16
  %v8540 = vpop.permute.xlu0 %8539
  %8541 = vrot.lane.b32.xlu0 %v8407, 16
  %v8542 = vpop.permute.xlu0 %8541
  %8543 = vrot.lane.b32.xlu0 %v8410, 16
  %v8544 = vpop.permute.xlu0 %8543
  %8545 = vrot.lane.b32.xlu0 %v8412, 16
  %v8546 = vpop.permute.xlu0 %8545
  %8547 = vrot.lane.b32.xlu0 %v8415, 16
  %v8548 = vpop.permute.xlu0 %8547
  %8549 = vrot.lane.b32.xlu0 %v8417, 16
  %v8550 = vpop.permute.xlu0 %8549
  %8551 = vrot.lane.b32.xlu0 %v8420, 16
  %v8552 = vpop.permute.xlu0 %8551
  %8553 = vrot.lane.b32.xlu0 %v8422, 16
  %v8554 = vpop.permute.xlu0 %8553
  %8555 = vrot.lane.b32.xlu0 %v8425, 16
  %v8556 = vpop.permute.xlu0 %8555
  %8557 = vrot.lane.b32.xlu0 %v8427, 16
  %v8558 = vpop.permute.xlu0 %8557
  %8559 = vrot.lane.b32.xlu0 %v8430, 16
  %v8560 = vpop.permute.xlu0 %8559
  %8561 = vrot.lane.b32.xlu0 %v8432, 16
  %v8562 = vpop.permute.xlu0 %8561
  %8563 = vrot.lane.b32.xlu0 %v8435, 16
  %v8564 = vpop.permute.xlu0 %8563
  %8565 = vrot.lane.b32.xlu0 %v8437, 16
  %v8566 = vpop.permute.xlu0 %8565
  %8567 = vrot.lane.b32.xlu0 %v8440, 16
  %v8568 = vpop.permute.xlu0 %8567
  %8569 = vrot.lane.b32.xlu0 %v8442, 16
  %v8570 = vpop.permute.xlu0 %8569
  %8639 = vrot.lane.b32.xlu0 %v7719, 24
  %v8640 = vpop.permute.xlu0 %8639
  %8641 = vrot.lane.b32.xlu0 %v7720, 24
  %v8642 = vpop.permute.xlu0 %8641
  %8643 = vrot.lane.b32.xlu0 %v7722, 24
  %v8644 = vpop.permute.xlu0 %8643
  %8645 = vrot.lane.b32.xlu0 %v7723, 24
  %v8646 = vpop.permute.xlu0 %8645
  %8647 = vrot.lane.b32.xlu0 %v7725, 24
  %v8648 = vpop.permute.xlu0 %8647
  %8649 = vrot.lane.b32.xlu0 %v7726, 24
  %v8650 = vpop.permute.xlu0 %8649
  %8651 = vrot.lane.b32.xlu0 %v7728, 24
  %v8652 = vpop.permute.xlu0 %8651
  %8653 = vrot.lane.b32.xlu0 %v7729, 24
  %v8654 = vpop.permute.xlu0 %8653
  %8655 = vrot.lane.b32.xlu0 %v7731, 24
  %v8656 = vpop.permute.xlu0 %8655
  %8657 = vrot.lane.b32.xlu0 %v7732, 24
  %v8658 = vpop.permute.xlu0 %8657
  %8659 = vrot.lane.b32.xlu0 %v7734, 24
  %v8660 = vpop.permute.xlu0 %8659
  %8661 = vrot.lane.b32.xlu0 %v7735, 24
  %v8662 = vpop.permute.xlu0 %8661
  %8663 = vrot.lane.b32.xlu0 %v7737, 24
  %v8664 = vpop.permute.xlu0 %8663
  %8665 = vrot.lane.b32.xlu0 %v7738, 24
  %v8666 = vpop.permute.xlu0 %8665
  %8667 = vrot.lane.b32.xlu0 %v7740, 24
  %v8668 = vpop.permute.xlu0 %8667
  %8669 = vrot.lane.b32.xlu0 %v7741, 24
  %v8670 = vpop.permute.xlu0 %8669
  %8671 = vrot.lane.b32.xlu0 %v7743, 24
  %v8672 = vpop.permute.xlu0 %8671
  %8673 = vrot.lane.b32.xlu0 %v7744, 24
  %v8674 = vpop.permute.xlu0 %8673
  %8675 = vrot.lane.b32.xlu0 %v7746, 24
  %v8676 = vpop.permute.xlu0 %8675
  %8677 = vrot.lane.b32.xlu0 %v7747, 24
  %v8678 = vpop.permute.xlu0 %8677
  %8679 = vrot.lane.b32.xlu0 %v7749, 24
  %v8680 = vpop.permute.xlu0 %8679
  %8681 = vrot.lane.b32.xlu0 %v7750, 24
  %v8682 = vpop.permute.xlu0 %8681
  %8683 = vrot.lane.b32.xlu0 %v7752, 24
  %v8684 = vpop.permute.xlu0 %8683
  %8685 = vrot.lane.b32.xlu0 %v7753, 24
  %v8686 = vpop.permute.xlu0 %8685
  %8687 = vrot.lane.b32.xlu0 %v7755, 24
  %v8688 = vpop.permute.xlu0 %8687
  %8689 = vrot.lane.b32.xlu0 %v7756, 24
  %v8690 = vpop.permute.xlu0 %8689
  %8691 = vrot.lane.b32.xlu0 %v7758, 24
  %v8692 = vpop.permute.xlu0 %8691
  %8693 = vrot.lane.b32.xlu0 %v7759, 24
  %v8694 = vpop.permute.xlu0 %8693
  %8695 = vrot.lane.b32.xlu0 %v7761, 24
  %v8696 = vpop.permute.xlu0 %8695
  %8697 = vrot.lane.b32.xlu0 %v7762, 24
  %v8698 = vpop.permute.xlu0 %8697
  %8699 = vrot.lane.b32.xlu0 %v7764, 24
  %v8700 = vpop.permute.xlu0 %8699
  %8701 = vrot.lane.b32.xlu0 %v7765, 24
  %v8702 = vpop.permute.xlu0 %8701
  %8703 = vrot.lane.b32.xlu0 %v7773, 24
  %v8704 = vpop.permute.xlu0 %8703
  %8705 = vrot.lane.b32.xlu0 %v7774, 24
  %v8706 = vpop.permute.xlu0 %8705
  %8707 = vrot.lane.b32.xlu0 %v7776, 24
  %v8708 = vpop.permute.xlu0 %8707
  %8709 = vrot.lane.b32.xlu0 %v7777, 24
  %v8710 = vpop.permute.xlu0 %8709
  %8711 = vrot.lane.b32.xlu0 %v7779, 24
  %v8712 = vpop.permute.xlu0 %8711
  %8713 = vrot.lane.b32.xlu0 %v7780, 24
  %v8714 = vpop.permute.xlu0 %8713
  %8715 = vrot.lane.b32.xlu0 %v7782, 24
  %v8716 = vpop.permute.xlu0 %8715
  %8717 = vrot.lane.b32.xlu0 %v7783, 24
  %v8718 = vpop.permute.xlu0 %8717
  %8719 = vrot.lane.b32.xlu0 %v7785, 24
  %v8720 = vpop.permute.xlu0 %8719
  %8721 = vrot.lane.b32.xlu0 %v7786, 24
  %v8722 = vpop.permute.xlu0 %8721
  %8723 = vrot.lane.b32.xlu0 %v7788, 24
  %v8724 = vpop.permute.xlu0 %8723
  %8725 = vrot.lane.b32.xlu0 %v7789, 24
  %v8726 = vpop.permute.xlu0 %8725
  %8727 = vrot.lane.b32.xlu0 %v7791, 24
  %v8728 = vpop.permute.xlu0 %8727
  %8729 = vrot.lane.b32.xlu0 %v7792, 24
  %v8730 = vpop.permute.xlu0 %8729
  %8731 = vrot.lane.b32.xlu0 %v7794, 24
  %v8732 = vpop.permute.xlu0 %8731
  %8733 = vrot.lane.b32.xlu0 %v7795, 24
  %v8734 = vpop.permute.xlu0 %8733
  %8735 = vrot.lane.b32.xlu0 %v7797, 24
  %v8736 = vpop.permute.xlu0 %8735
  %8737 = vrot.lane.b32.xlu0 %v7798, 24
  %v8738 = vpop.permute.xlu0 %8737
  %8739 = vrot.lane.b32.xlu0 %v7800, 24
  %v8740 = vpop.permute.xlu0 %8739
  %8741 = vrot.lane.b32.xlu0 %v7801, 24
  %v8742 = vpop.permute.xlu0 %8741
  %8743 = vrot.lane.b32.xlu0 %v7803, 24
  %v8744 = vpop.permute.xlu0 %8743
  %8745 = vrot.lane.b32.xlu0 %v7804, 24
  %v8746 = vpop.permute.xlu0 %8745
  %8747 = vrot.lane.b32.xlu0 %v7806, 24
  %v8748 = vpop.permute.xlu0 %8747
  %8749 = vrot.lane.b32.xlu0 %v7807, 24
  %v8750 = vpop.permute.xlu0 %8749
  %8751 = vrot.lane.b32.xlu0 %v7809, 24
  %v8752 = vpop.permute.xlu0 %8751
  %8753 = vrot.lane.b32.xlu0 %v7810, 24
  %v8754 = vpop.permute.xlu0 %8753
  %8755 = vrot.lane.b32.xlu0 %v7812, 24
  %v8756 = vpop.permute.xlu0 %8755
  %8757 = vrot.lane.b32.xlu0 %v7813, 24
  %v8758 = vpop.permute.xlu0 %8757
  %8759 = vrot.lane.b32.xlu0 %v7815, 24
  %v8760 = vpop.permute.xlu0 %8759
  %8761 = vrot.lane.b32.xlu0 %v7816, 24
  %v8762 = vpop.permute.xlu0 %8761
  %8763 = vrot.lane.b32.xlu0 %v7818, 24
  %v8764 = vpop.permute.xlu0 %8763
  %8765 = vrot.lane.b32.xlu0 %v7819, 24
  %v8766 = vpop.permute.xlu0 %8765
  %v8833 = vrot.slane %v7764, 1
  %v8834 = vrot.slane %v7765, 1
  %v8835 = vsel %vm426, %v8833, %v8834
  %v8836 = vrot.slane %v7766, 1
  %v8837 = vsel %vm426, %v8834, %v8836
  %v8838 = vrot.slane %v7818, 1
  %v8839 = vrot.slane %v7819, 1
  %v8840 = vsel %vm426, %v8838, %v8839
  %v8841 = vrot.slane %v7820, 1
  %v8842 = vsel %vm426, %v8839, %v8841
  %8843 = vrot.lane.b32.xlu0 %v7938, 32
  %v8844 = vpop.permute.xlu0 %8843
  %8845 = vrot.lane.b32.xlu0 %v7940, 32
  %v8846 = vpop.permute.xlu0 %8845
  %8847 = vrot.lane.b32.xlu0 %v7943, 32
  %v8848 = vpop.permute.xlu0 %8847
  %8849 = vrot.lane.b32.xlu0 %v7945, 32
  %v8850 = vpop.permute.xlu0 %8849
  %8851 = vrot.lane.b32.xlu0 %v7948, 32
  %v8852 = vpop.permute.xlu0 %8851
  %8853 = vrot.lane.b32.xlu0 %v7950, 32
  %v8854 = vpop.permute.xlu0 %8853
  %8855 = vrot.lane.b32.xlu0 %v7953, 32
  %v8856 = vpop.permute.xlu0 %8855
  %8857 = vrot.lane.b32.xlu0 %v7955, 32
  %v8858 = vpop.permute.xlu0 %8857
  %8859 = vrot.lane.b32.xlu0 %v7958, 32
  %v8860 = vpop.permute.xlu0 %8859
  %8861 = vrot.lane.b32.xlu0 %v7960, 32
  %v8862 = vpop.permute.xlu0 %8861
  %8863 = vrot.lane.b32.xlu0 %v7963, 32
  %v8864 = vpop.permute.xlu0 %8863
  %8865 = vrot.lane.b32.xlu0 %v7965, 32
  %v8866 = vpop.permute.xlu0 %8865
  %8867 = vrot.lane.b32.xlu0 %v7968, 32
  %v8868 = vpop.permute.xlu0 %8867
  %8869 = vrot.lane.b32.xlu0 %v7970, 32
  %v8870 = vpop.permute.xlu0 %8869
  %8871 = vrot.lane.b32.xlu0 %v7973, 32
  %v8872 = vpop.permute.xlu0 %8871
  %8873 = vrot.lane.b32.xlu0 %v7975, 32
  %v8874 = vpop.permute.xlu0 %8873
  %8875 = vrot.lane.b32.xlu0 %v7978, 32
  %v8876 = vpop.permute.xlu0 %8875
  %8877 = vrot.lane.b32.xlu0 %v7980, 32
  %v8878 = vpop.permute.xlu0 %8877
  %8879 = vrot.lane.b32.xlu0 %v7983, 32
  %v8880 = vpop.permute.xlu0 %8879
  %8881 = vrot.lane.b32.xlu0 %v7985, 32
  %v8882 = vpop.permute.xlu0 %8881
  %8883 = vrot.lane.b32.xlu0 %v7988, 32
  %v8884 = vpop.permute.xlu0 %8883
  %8885 = vrot.lane.b32.xlu0 %v7990, 32
  %v8886 = vpop.permute.xlu0 %8885
  %8887 = vrot.lane.b32.xlu0 %v7993, 32
  %v8888 = vpop.permute.xlu0 %8887
  %8889 = vrot.lane.b32.xlu0 %v7995, 32
  %v8890 = vpop.permute.xlu0 %8889
  %8891 = vrot.lane.b32.xlu0 %v7998, 32
  %v8892 = vpop.permute.xlu0 %8891
  %8893 = vrot.lane.b32.xlu0 %v8000, 32
  %v8894 = vpop.permute.xlu0 %8893
  %8895 = vrot.lane.b32.xlu0 %v8003, 32
  %v8896 = vpop.permute.xlu0 %8895
  %8897 = vrot.lane.b32.xlu0 %v8005, 32
  %v8898 = vpop.permute.xlu0 %8897
  %8899 = vrot.lane.b32.xlu0 %v8008, 32
  %v8900 = vpop.permute.xlu0 %8899
  %8901 = vrot.lane.b32.xlu0 %v8010, 32
  %v8902 = vpop.permute.xlu0 %8901
  %8903 = vrot.lane.b32.xlu0 %v8835, 32
  %v8904 = vpop.permute.xlu0 %8903
  %8905 = vrot.lane.b32.xlu0 %v8837, 32
  %v8906 = vpop.permute.xlu0 %8905
  %8907 = vrot.lane.b32.xlu0 %v8018, 32
  %v8908 = vpop.permute.xlu0 %8907
  %8909 = vrot.lane.b32.xlu0 %v8020, 32
  %v8910 = vpop.permute.xlu0 %8909
  %8911 = vrot.lane.b32.xlu0 %v8023, 32
  %v8912 = vpop.permute.xlu0 %8911
  %8913 = vrot.lane.b32.xlu0 %v8025, 32
  %v8914 = vpop.permute.xlu0 %8913
  %8915 = vrot.lane.b32.xlu0 %v8028, 32
  %v8916 = vpop.permute.xlu0 %8915
  %8917 = vrot.lane.b32.xlu0 %v8030, 32
  %v8918 = vpop.permute.xlu0 %8917
  %8919 = vrot.lane.b32.xlu0 %v8033, 32
  %v8920 = vpop.permute.xlu0 %8919
  %8921 = vrot.lane.b32.xlu0 %v8035, 32
  %v8922 = vpop.permute.xlu0 %8921
  %8923 = vrot.lane.b32.xlu0 %v8038, 32
  %v8924 = vpop.permute.xlu0 %8923
  %8925 = vrot.lane.b32.xlu0 %v8040, 32
  %v8926 = vpop.permute.xlu0 %8925
  %8927 = vrot.lane.b32.xlu0 %v8043, 32
  %v8928 = vpop.permute.xlu0 %8927
  %8929 = vrot.lane.b32.xlu0 %v8045, 32
  %v8930 = vpop.permute.xlu0 %8929
  %8931 = vrot.lane.b32.xlu0 %v8048, 32
  %v8932 = vpop.permute.xlu0 %8931
  %8933 = vrot.lane.b32.xlu0 %v8050, 32
  %v8934 = vpop.permute.xlu0 %8933
  %8935 = vrot.lane.b32.xlu0 %v8053, 32
  %v8936 = vpop.permute.xlu0 %8935
  %8937 = vrot.lane.b32.xlu0 %v8055, 32
  %v8938 = vpop.permute.xlu0 %8937
  %8939 = vrot.lane.b32.xlu0 %v8058, 32
  %v8940 = vpop.permute.xlu0 %8939
  %8941 = vrot.lane.b32.xlu0 %v8060, 32
  %v8942 = vpop.permute.xlu0 %8941
  %8943 = vrot.lane.b32.xlu0 %v8063, 32
  %v8944 = vpop.permute.xlu0 %8943
  %8945 = vrot.lane.b32.xlu0 %v8065, 32
  %v8946 = vpop.permute.xlu0 %8945
  %8947 = vrot.lane.b32.xlu0 %v8068, 32
  %v8948 = vpop.permute.xlu0 %8947
  %8949 = vrot.lane.b32.xlu0 %v8070, 32
  %v8950 = vpop.permute.xlu0 %8949
  %8951 = vrot.lane.b32.xlu0 %v8073, 32
  %v8952 = vpop.permute.xlu0 %8951
  %8953 = vrot.lane.b32.xlu0 %v8075, 32
  %v8954 = vpop.permute.xlu0 %8953
  %8955 = vrot.lane.b32.xlu0 %v8078, 32
  %v8956 = vpop.permute.xlu0 %8955
  %8957 = vrot.lane.b32.xlu0 %v8080, 32
  %v8958 = vpop.permute.xlu0 %8957
  %8959 = vrot.lane.b32.xlu0 %v8083, 32
  %v8960 = vpop.permute.xlu0 %8959
  %8961 = vrot.lane.b32.xlu0 %v8085, 32
  %v8962 = vpop.permute.xlu0 %8961
  %8963 = vrot.lane.b32.xlu0 %v8088, 32
  %v8964 = vpop.permute.xlu0 %8963
  %8965 = vrot.lane.b32.xlu0 %v8090, 32
  %v8966 = vpop.permute.xlu0 %8965
  %8967 = vrot.lane.b32.xlu0 %v8840, 32
  %v8968 = vpop.permute.xlu0 %8967
  %8969 = vrot.lane.b32.xlu0 %v8842, 32
  %v8970 = vpop.permute.xlu0 %8969
  %v9035 = vrot.slane %v7764, 2
  %v9036 = vrot.slane %v7765, 2
  %v9037 = vsel %vm779, %v9035, %v9036
  %v9038 = vrot.slane %v7766, 2
  %v9039 = vsel %vm779, %v9036, %v9038
  %v9040 = vrot.slane %v7818, 2
  %v9041 = vrot.slane %v7819, 2
  %v9042 = vsel %vm779, %v9040, %v9041
  %v9043 = vrot.slane %v7820, 2
  %v9044 = vsel %vm779, %v9041, %v9043
  %9045 = vrot.lane.b32.xlu0 %v8290, 40
  %v9046 = vpop.permute.xlu0 %9045
  %9047 = vrot.lane.b32.xlu0 %v8292, 40
  %v9048 = vpop.permute.xlu0 %9047
  %9049 = vrot.lane.b32.xlu0 %v8295, 40
  %v9050 = vpop.permute.xlu0 %9049
  %9051 = vrot.lane.b32.xlu0 %v8297, 40
  %v9052 = vpop.permute.xlu0 %9051
  %9053 = vrot.lane.b32.xlu0 %v8300, 40
  %v9054 = vpop.permute.xlu0 %9053
  %9055 = vrot.lane.b32.xlu0 %v8302, 40
  %v9056 = vpop.permute.xlu0 %9055
  %9057 = vrot.lane.b32.xlu0 %v8305, 40
  %v9058 = vpop.permute.xlu0 %9057
  %9059 = vrot.lane.b32.xlu0 %v8307, 40
  %v9060 = vpop.permute.xlu0 %9059
  %9061 = vrot.lane.b32.xlu0 %v8310, 40
  %v9062 = vpop.permute.xlu0 %9061
  %9063 = vrot.lane.b32.xlu0 %v8312, 40
  %v9064 = vpop.permute.xlu0 %9063
  %9065 = vrot.lane.b32.xlu0 %v8315, 40
  %v9066 = vpop.permute.xlu0 %9065
  %9067 = vrot.lane.b32.xlu0 %v8317, 40
  %v9068 = vpop.permute.xlu0 %9067
  %9069 = vrot.lane.b32.xlu0 %v8320, 40
  %v9070 = vpop.permute.xlu0 %9069
  %9071 = vrot.lane.b32.xlu0 %v8322, 40
  %v9072 = vpop.permute.xlu0 %9071
  %9073 = vrot.lane.b32.xlu0 %v8325, 40
  %v9074 = vpop.permute.xlu0 %9073
  %9075 = vrot.lane.b32.xlu0 %v8327, 40
  %v9076 = vpop.permute.xlu0 %9075
  %9077 = vrot.lane.b32.xlu0 %v8330, 40
  %v9078 = vpop.permute.xlu0 %9077
  %9079 = vrot.lane.b32.xlu0 %v8332, 40
  %v9080 = vpop.permute.xlu0 %9079
  %9081 = vrot.lane.b32.xlu0 %v8335, 40
  %v9082 = vpop.permute.xlu0 %9081
  %9083 = vrot.lane.b32.xlu0 %v8337, 40
  %v9084 = vpop.permute.xlu0 %9083
  %9085 = vrot.lane.b32.xlu0 %v8340, 40
  %v9086 = vpop.permute.xlu0 %9085
  %9087 = vrot.lane.b32.xlu0 %v8342, 40
  %v9088 = vpop.permute.xlu0 %9087
  %9089 = vrot.lane.b32.xlu0 %v8345, 40
  %v9090 = vpop.permute.xlu0 %9089
  %9091 = vrot.lane.b32.xlu0 %v8347, 40
  %v9092 = vpop.permute.xlu0 %9091
  %9093 = vrot.lane.b32.xlu0 %v8350, 40
  %v9094 = vpop.permute.xlu0 %9093
  %9095 = vrot.lane.b32.xlu0 %v8352, 40
  %v9096 = vpop.permute.xlu0 %9095
  %9097 = vrot.lane.b32.xlu0 %v8355, 40
  %v9098 = vpop.permute.xlu0 %9097
  %9099 = vrot.lane.b32.xlu0 %v8357, 40
  %v9100 = vpop.permute.xlu0 %9099
  %9101 = vrot.lane.b32.xlu0 %v8360, 40
  %v9102 = vpop.permute.xlu0 %9101
  %9103 = vrot.lane.b32.xlu0 %v8362, 40
  %v9104 = vpop.permute.xlu0 %9103
  %9105 = vrot.lane.b32.xlu0 %v9037, 40
  %v9106 = vpop.permute.xlu0 %9105
  %9107 = vrot.lane.b32.xlu0 %v9039, 40
  %v9108 = vpop.permute.xlu0 %9107
  %9109 = vrot.lane.b32.xlu0 %v8370, 40
  %v9110 = vpop.permute.xlu0 %9109
  %9111 = vrot.lane.b32.xlu0 %v8372, 40
  %v9112 = vpop.permute.xlu0 %9111
  %9113 = vrot.lane.b32.xlu0 %v8375, 40
  %v9114 = vpop.permute.xlu0 %9113
  %9115 = vrot.lane.b32.xlu0 %v8377, 40
  %v9116 = vpop.permute.xlu0 %9115
  %9117 = vrot.lane.b32.xlu0 %v8380, 40
  %v9118 = vpop.permute.xlu0 %9117
  %9119 = vrot.lane.b32.xlu0 %v8382, 40
  %v9120 = vpop.permute.xlu0 %9119
  %9121 = vrot.lane.b32.xlu0 %v8385, 40
  %v9122 = vpop.permute.xlu0 %9121
  %9123 = vrot.lane.b32.xlu0 %v8387, 40
  %v9124 = vpop.permute.xlu0 %9123
  %9125 = vrot.lane.b32.xlu0 %v8390, 40
  %v9126 = vpop.permute.xlu0 %9125
  %9127 = vrot.lane.b32.xlu0 %v8392, 40
  %v9128 = vpop.permute.xlu0 %9127
  %9129 = vrot.lane.b32.xlu0 %v8395, 40
  %v9130 = vpop.permute.xlu0 %9129
  %9131 = vrot.lane.b32.xlu0 %v8397, 40
  %v9132 = vpop.permute.xlu0 %9131
  %9133 = vrot.lane.b32.xlu0 %v8400, 40
  %v9134 = vpop.permute.xlu0 %9133
  %9135 = vrot.lane.b32.xlu0 %v8402, 40
  %v9136 = vpop.permute.xlu0 %9135
  %9137 = vrot.lane.b32.xlu0 %v8405, 40
  %v9138 = vpop.permute.xlu0 %9137
  %9139 = vrot.lane.b32.xlu0 %v8407, 40
  %v9140 = vpop.permute.xlu0 %9139
  %9141 = vrot.lane.b32.xlu0 %v8410, 40
  %v9142 = vpop.permute.xlu0 %9141
  %9143 = vrot.lane.b32.xlu0 %v8412, 40
  %v9144 = vpop.permute.xlu0 %9143
  %9145 = vrot.lane.b32.xlu0 %v8415, 40
  %v9146 = vpop.permute.xlu0 %9145
  %9147 = vrot.lane.b32.xlu0 %v8417, 40
  %v9148 = vpop.permute.xlu0 %9147
  %9149 = vrot.lane.b32.xlu0 %v8420, 40
  %v9150 = vpop.permute.xlu0 %9149
  %9151 = vrot.lane.b32.xlu0 %v8422, 40
  %v9152 = vpop.permute.xlu0 %9151
  %9153 = vrot.lane.b32.xlu0 %v8425, 40
  %v9154 = vpop.permute.xlu0 %9153
  %9155 = vrot.lane.b32.xlu0 %v8427, 40
  %v9156 = vpop.permute.xlu0 %9155
  %9157 = vrot.lane.b32.xlu0 %v8430, 40
  %v9158 = vpop.permute.xlu0 %9157
  %9159 = vrot.lane.b32.xlu0 %v8432, 40
  %v9160 = vpop.permute.xlu0 %9159
  %9161 = vrot.lane.b32.xlu0 %v8435, 40
  %v9162 = vpop.permute.xlu0 %9161
  %9163 = vrot.lane.b32.xlu0 %v8437, 40
  %v9164 = vpop.permute.xlu0 %9163
  %9165 = vrot.lane.b32.xlu0 %v8440, 40
  %v9166 = vpop.permute.xlu0 %9165
  %9167 = vrot.lane.b32.xlu0 %v8442, 40
  %v9168 = vpop.permute.xlu0 %9167
  %9169 = vrot.lane.b32.xlu0 %v9042, 40
  %v9170 = vpop.permute.xlu0 %9169
  %9171 = vrot.lane.b32.xlu0 %v9044, 40
  %v9172 = vpop.permute.xlu0 %9171
  %9241 = vrot.lane.b32.xlu0 %v7722, 48
  %v9242 = vpop.permute.xlu0 %9241
  %9243 = vrot.lane.b32.xlu0 %v7723, 48
  %v9244 = vpop.permute.xlu0 %9243
  %9245 = vrot.lane.b32.xlu0 %v7725, 48
  %v9246 = vpop.permute.xlu0 %9245
  %9247 = vrot.lane.b32.xlu0 %v7726, 48
  %v9248 = vpop.permute.xlu0 %9247
  %9249 = vrot.lane.b32.xlu0 %v7728, 48
  %v9250 = vpop.permute.xlu0 %9249
  %9251 = vrot.lane.b32.xlu0 %v7729, 48
  %v9252 = vpop.permute.xlu0 %9251
  %9253 = vrot.lane.b32.xlu0 %v7731, 48
  %v9254 = vpop.permute.xlu0 %9253
  %9255 = vrot.lane.b32.xlu0 %v7732, 48
  %v9256 = vpop.permute.xlu0 %9255
  %9257 = vrot.lane.b32.xlu0 %v7734, 48
  %v9258 = vpop.permute.xlu0 %9257
  %9259 = vrot.lane.b32.xlu0 %v7735, 48
  %v9260 = vpop.permute.xlu0 %9259
  %9261 = vrot.lane.b32.xlu0 %v7737, 48
  %v9262 = vpop.permute.xlu0 %9261
  %9263 = vrot.lane.b32.xlu0 %v7738, 48
  %v9264 = vpop.permute.xlu0 %9263
  %9265 = vrot.lane.b32.xlu0 %v7740, 48
  %v9266 = vpop.permute.xlu0 %9265
  %9267 = vrot.lane.b32.xlu0 %v7741, 48
  %v9268 = vpop.permute.xlu0 %9267
  %9269 = vrot.lane.b32.xlu0 %v7743, 48
  %v9270 = vpop.permute.xlu0 %9269
  %9271 = vrot.lane.b32.xlu0 %v7744, 48
  %v9272 = vpop.permute.xlu0 %9271
  %9273 = vrot.lane.b32.xlu0 %v7746, 48
  %v9274 = vpop.permute.xlu0 %9273
  %9275 = vrot.lane.b32.xlu0 %v7747, 48
  %v9276 = vpop.permute.xlu0 %9275
  %9277 = vrot.lane.b32.xlu0 %v7749, 48
  %v9278 = vpop.permute.xlu0 %9277
  %9279 = vrot.lane.b32.xlu0 %v7750, 48
  %v9280 = vpop.permute.xlu0 %9279
  %9281 = vrot.lane.b32.xlu0 %v7752, 48
  %v9282 = vpop.permute.xlu0 %9281
  %9283 = vrot.lane.b32.xlu0 %v7753, 48
  %v9284 = vpop.permute.xlu0 %9283
  %9285 = vrot.lane.b32.xlu0 %v7755, 48
  %v9286 = vpop.permute.xlu0 %9285
  %9287 = vrot.lane.b32.xlu0 %v7756, 48
  %v9288 = vpop.permute.xlu0 %9287
  %9289 = vrot.lane.b32.xlu0 %v7758, 48
  %v9290 = vpop.permute.xlu0 %9289
  %9291 = vrot.lane.b32.xlu0 %v7759, 48
  %v9292 = vpop.permute.xlu0 %9291
  %9293 = vrot.lane.b32.xlu0 %v7761, 48
  %v9294 = vpop.permute.xlu0 %9293
  %9295 = vrot.lane.b32.xlu0 %v7762, 48
  %v9296 = vpop.permute.xlu0 %9295
  %9297 = vrot.lane.b32.xlu0 %v7764, 48
  %v9298 = vpop.permute.xlu0 %9297
  %9299 = vrot.lane.b32.xlu0 %v7765, 48
  %v9300 = vpop.permute.xlu0 %9299
  %9301 = vrot.lane.b32.xlu0 %v7767, 48
  %v9302 = vpop.permute.xlu0 %9301
  %9303 = vrot.lane.b32.xlu0 %v7768, 48
  %v9304 = vpop.permute.xlu0 %9303
  %9305 = vrot.lane.b32.xlu0 %v7776, 48
  %v9306 = vpop.permute.xlu0 %9305
  %9307 = vrot.lane.b32.xlu0 %v7777, 48
  %v9308 = vpop.permute.xlu0 %9307
  %9309 = vrot.lane.b32.xlu0 %v7779, 48
  %v9310 = vpop.permute.xlu0 %9309
  %9311 = vrot.lane.b32.xlu0 %v7780, 48
  %v9312 = vpop.permute.xlu0 %9311
  %9313 = vrot.lane.b32.xlu0 %v7782, 48
  %v9314 = vpop.permute.xlu0 %9313
  %9315 = vrot.lane.b32.xlu0 %v7783, 48
  %v9316 = vpop.permute.xlu0 %9315
  %9317 = vrot.lane.b32.xlu0 %v7785, 48
  %v9318 = vpop.permute.xlu0 %9317
  %9319 = vrot.lane.b32.xlu0 %v7786, 48
  %v9320 = vpop.permute.xlu0 %9319
  %9321 = vrot.lane.b32.xlu0 %v7788, 48
  %v9322 = vpop.permute.xlu0 %9321
  %9323 = vrot.lane.b32.xlu0 %v7789, 48
  %v9324 = vpop.permute.xlu0 %9323
  %9325 = vrot.lane.b32.xlu0 %v7791, 48
  %v9326 = vpop.permute.xlu0 %9325
  %9327 = vrot.lane.b32.xlu0 %v7792, 48
  %v9328 = vpop.permute.xlu0 %9327
  %9329 = vrot.lane.b32.xlu0 %v7794, 48
  %v9330 = vpop.permute.xlu0 %9329
  %9331 = vrot.lane.b32.xlu0 %v7795, 48
  %v9332 = vpop.permute.xlu0 %9331
  %9333 = vrot.lane.b32.xlu0 %v7797, 48
  %v9334 = vpop.permute.xlu0 %9333
  %9335 = vrot.lane.b32.xlu0 %v7798, 48
  %v9336 = vpop.permute.xlu0 %9335
  %9337 = vrot.lane.b32.xlu0 %v7800, 48
  %v9338 = vpop.permute.xlu0 %9337
  %9339 = vrot.lane.b32.xlu0 %v7801, 48
  %v9340 = vpop.permute.xlu0 %9339
  %9341 = vrot.lane.b32.xlu0 %v7803, 48
  %v9342 = vpop.permute.xlu0 %9341
  %9343 = vrot.lane.b32.xlu0 %v7804, 48
  %v9344 = vpop.permute.xlu0 %9343
  %9345 = vrot.lane.b32.xlu0 %v7806, 48
  %v9346 = vpop.permute.xlu0 %9345
  %9347 = vrot.lane.b32.xlu0 %v7807, 48
  %v9348 = vpop.permute.xlu0 %9347
  %9349 = vrot.lane.b32.xlu0 %v7809, 48
  %v9350 = vpop.permute.xlu0 %9349
  %9351 = vrot.lane.b32.xlu0 %v7810, 48
  %v9352 = vpop.permute.xlu0 %9351
  %9353 = vrot.lane.b32.xlu0 %v7812, 48
  %v9354 = vpop.permute.xlu0 %9353
  %9355 = vrot.lane.b32.xlu0 %v7813, 48
  %v9356 = vpop.permute.xlu0 %9355
  %9357 = vrot.lane.b32.xlu0 %v7815, 48
  %v9358 = vpop.permute.xlu0 %9357
  %9359 = vrot.lane.b32.xlu0 %v7816, 48
  %v9360 = vpop.permute.xlu0 %9359
  %9361 = vrot.lane.b32.xlu0 %v7818, 48
  %v9362 = vpop.permute.xlu0 %9361
  %9363 = vrot.lane.b32.xlu0 %v7819, 48
  %v9364 = vpop.permute.xlu0 %9363
  %9365 = vrot.lane.b32.xlu0 %v7821, 48
  %v9366 = vpop.permute.xlu0 %9365
  %9367 = vrot.lane.b32.xlu0 %v7822, 48
  %v9368 = vpop.permute.xlu0 %9367
  %v9435 = vrot.slane %v7767, 1
  %v9436 = vrot.slane %v7768, 1
  %v9437 = vsel %vm426, %v9435, %v9436
  %v9438 = vrot.slane %v7769, 1
  %v9439 = vsel %vm426, %v9436, %v9438
  %v9440 = vrot.slane %v7821, 1
  %v9441 = vrot.slane %v7822, 1
  %v9442 = vsel %vm426, %v9440, %v9441
  %v9443 = vrot.slane %v7823, 1
  %v9444 = vsel %vm426, %v9441, %v9443
  %9445 = vrot.lane.b32.xlu0 %v7943, 56
  %v9446 = vpop.permute.xlu0 %9445
  %9447 = vrot.lane.b32.xlu0 %v7945, 56
  %v9448 = vpop.permute.xlu0 %9447
  %9449 = vrot.lane.b32.xlu0 %v7948, 56
  %v9450 = vpop.permute.xlu0 %9449
  %9451 = vrot.lane.b32.xlu0 %v7950, 56
  %v9452 = vpop.permute.xlu0 %9451
  %9453 = vrot.lane.b32.xlu0 %v7953, 56
  %v9454 = vpop.permute.xlu0 %9453
  %9455 = vrot.lane.b32.xlu0 %v7955, 56
  %v9456 = vpop.permute.xlu0 %9455
  %9457 = vrot.lane.b32.xlu0 %v7958, 56
  %v9458 = vpop.permute.xlu0 %9457
  %9459 = vrot.lane.b32.xlu0 %v7960, 56
  %v9460 = vpop.permute.xlu0 %9459
  %9461 = vrot.lane.b32.xlu0 %v7963, 56
  %v9462 = vpop.permute.xlu0 %9461
  %9463 = vrot.lane.b32.xlu0 %v7965, 56
  %v9464 = vpop.permute.xlu0 %9463
  %9465 = vrot.lane.b32.xlu0 %v7968, 56
  %v9466 = vpop.permute.xlu0 %9465
  %9467 = vrot.lane.b32.xlu0 %v7970, 56
  %v9468 = vpop.permute.xlu0 %9467
  %9469 = vrot.lane.b32.xlu0 %v7973, 56
  %v9470 = vpop.permute.xlu0 %9469
  %9471 = vrot.lane.b32.xlu0 %v7975, 56
  %v9472 = vpop.permute.xlu0 %9471
  %9473 = vrot.lane.b32.xlu0 %v7978, 56
  %v9474 = vpop.permute.xlu0 %9473
  %9475 = vrot.lane.b32.xlu0 %v7980, 56
  %v9476 = vpop.permute.xlu0 %9475
  %9477 = vrot.lane.b32.xlu0 %v7983, 56
  %v9478 = vpop.permute.xlu0 %9477
  %9479 = vrot.lane.b32.xlu0 %v7985, 56
  %v9480 = vpop.permute.xlu0 %9479
  %9481 = vrot.lane.b32.xlu0 %v7988, 56
  %v9482 = vpop.permute.xlu0 %9481
  %9483 = vrot.lane.b32.xlu0 %v7990, 56
  %v9484 = vpop.permute.xlu0 %9483
  %9485 = vrot.lane.b32.xlu0 %v7993, 56
  %v9486 = vpop.permute.xlu0 %9485
  %9487 = vrot.lane.b32.xlu0 %v7995, 56
  %v9488 = vpop.permute.xlu0 %9487
  %9489 = vrot.lane.b32.xlu0 %v7998, 56
  %v9490 = vpop.permute.xlu0 %9489
  %9491 = vrot.lane.b32.xlu0 %v8000, 56
  %v9492 = vpop.permute.xlu0 %9491
  %9493 = vrot.lane.b32.xlu0 %v8003, 56
  %v9494 = vpop.permute.xlu0 %9493
  %9495 = vrot.lane.b32.xlu0 %v8005, 56
  %v9496 = vpop.permute.xlu0 %9495
  %9497 = vrot.lane.b32.xlu0 %v8008, 56
  %v9498 = vpop.permute.xlu0 %9497
  %9499 = vrot.lane.b32.xlu0 %v8010, 56
  %v9500 = vpop.permute.xlu0 %9499
  %9501 = vrot.lane.b32.xlu0 %v8835, 56
  %v9502 = vpop.permute.xlu0 %9501
  %9503 = vrot.lane.b32.xlu0 %v8837, 56
  %v9504 = vpop.permute.xlu0 %9503
  %9505 = vrot.lane.b32.xlu0 %v9437, 56
  %v9506 = vpop.permute.xlu0 %9505
  %9507 = vrot.lane.b32.xlu0 %v9439, 56
  %v9508 = vpop.permute.xlu0 %9507
  %9509 = vrot.lane.b32.xlu0 %v8023, 56
  %v9510 = vpop.permute.xlu0 %9509
  %9511 = vrot.lane.b32.xlu0 %v8025, 56
  %v9512 = vpop.permute.xlu0 %9511
  %9513 = vrot.lane.b32.xlu0 %v8028, 56
  %v9514 = vpop.permute.xlu0 %9513
  %9515 = vrot.lane.b32.xlu0 %v8030, 56
  %v9516 = vpop.permute.xlu0 %9515
  %9517 = vrot.lane.b32.xlu0 %v8033, 56
  %v9518 = vpop.permute.xlu0 %9517
  %9519 = vrot.lane.b32.xlu0 %v8035, 56
  %v9520 = vpop.permute.xlu0 %9519
  %9521 = vrot.lane.b32.xlu0 %v8038, 56
  %v9522 = vpop.permute.xlu0 %9521
  %9523 = vrot.lane.b32.xlu0 %v8040, 56
  %v9524 = vpop.permute.xlu0 %9523
  %9525 = vrot.lane.b32.xlu0 %v8043, 56
  %v9526 = vpop.permute.xlu0 %9525
  %9527 = vrot.lane.b32.xlu0 %v8045, 56
  %v9528 = vpop.permute.xlu0 %9527
  %9529 = vrot.lane.b32.xlu0 %v8048, 56
  %v9530 = vpop.permute.xlu0 %9529
  %9531 = vrot.lane.b32.xlu0 %v8050, 56
  %v9532 = vpop.permute.xlu0 %9531
  %9533 = vrot.lane.b32.xlu0 %v8053, 56
  %v9534 = vpop.permute.xlu0 %9533
  %9535 = vrot.lane.b32.xlu0 %v8055, 56
  %v9536 = vpop.permute.xlu0 %9535
  %9537 = vrot.lane.b32.xlu0 %v8058, 56
  %v9538 = vpop.permute.xlu0 %9537
  %9539 = vrot.lane.b32.xlu0 %v8060, 56
  %v9540 = vpop.permute.xlu0 %9539
  %9541 = vrot.lane.b32.xlu0 %v8063, 56
  %v9542 = vpop.permute.xlu0 %9541
  %9543 = vrot.lane.b32.xlu0 %v8065, 56
  %v9544 = vpop.permute.xlu0 %9543
  %9545 = vrot.lane.b32.xlu0 %v8068, 56
  %v9546 = vpop.permute.xlu0 %9545
  %9547 = vrot.lane.b32.xlu0 %v8070, 56
  %v9548 = vpop.permute.xlu0 %9547
  %9549 = vrot.lane.b32.xlu0 %v8073, 56
  %v9550 = vpop.permute.xlu0 %9549
  %9551 = vrot.lane.b32.xlu0 %v8075, 56
  %v9552 = vpop.permute.xlu0 %9551
  %9553 = vrot.lane.b32.xlu0 %v8078, 56
  %v9554 = vpop.permute.xlu0 %9553
  %9555 = vrot.lane.b32.xlu0 %v8080, 56
  %v9556 = vpop.permute.xlu0 %9555
  %9557 = vrot.lane.b32.xlu0 %v8083, 56
  %v9558 = vpop.permute.xlu0 %9557
  %9559 = vrot.lane.b32.xlu0 %v8085, 56
  %v9560 = vpop.permute.xlu0 %9559
  %9561 = vrot.lane.b32.xlu0 %v8088, 56
  %v9562 = vpop.permute.xlu0 %9561
  %9563 = vrot.lane.b32.xlu0 %v8090, 56
  %v9564 = vpop.permute.xlu0 %9563
  %9565 = vrot.lane.b32.xlu0 %v8840, 56
  %v9566 = vpop.permute.xlu0 %9565
  %9567 = vrot.lane.b32.xlu0 %v8842, 56
  %v9568 = vpop.permute.xlu0 %9567
  %9569 = vrot.lane.b32.xlu0 %v9442, 56
  %v9570 = vpop.permute.xlu0 %9569
  %9571 = vrot.lane.b32.xlu0 %v9444, 56
  %v9572 = vpop.permute.xlu0 %9571
  %v9637 = vrot.slane %v7767, 2
  %v9638 = vrot.slane %v7768, 2
  %v9639 = vsel %vm779, %v9637, %v9638
  %v9640 = vrot.slane %v7769, 2
  %v9641 = vsel %vm779, %v9638, %v9640
  %v9642 = vrot.slane %v7821, 2
  %v9643 = vrot.slane %v7822, 2
  %v9644 = vsel %vm779, %v9642, %v9643
  %v9645 = vrot.slane %v7823, 2
  %v9646 = vsel %vm779, %v9643, %v9645
  %9647 = vrot.lane.b32.xlu0 %v8295, 64
  %v9648 = vpop.permute.xlu0 %9647
  %9649 = vrot.lane.b32.xlu0 %v8297, 64
  %v9650 = vpop.permute.xlu0 %9649
  %9651 = vrot.lane.b32.xlu0 %v8300, 64
  %v9652 = vpop.permute.xlu0 %9651
  %9653 = vrot.lane.b32.xlu0 %v8302, 64
  %v9654 = vpop.permute.xlu0 %9653
  %9655 = vrot.lane.b32.xlu0 %v8305, 64
  %v9656 = vpop.permute.xlu0 %9655
  %9657 = vrot.lane.b32.xlu0 %v8307, 64
  %v9658 = vpop.permute.xlu0 %9657
  %9659 = vrot.lane.b32.xlu0 %v8310, 64
  %v9660 = vpop.permute.xlu0 %9659
  %9661 = vrot.lane.b32.xlu0 %v8312, 64
  %v9662 = vpop.permute.xlu0 %9661
  %9663 = vrot.lane.b32.xlu0 %v8315, 64
  %v9664 = vpop.permute.xlu0 %9663
  %9665 = vrot.lane.b32.xlu0 %v8317, 64
  %v9666 = vpop.permute.xlu0 %9665
  %9667 = vrot.lane.b32.xlu0 %v8320, 64
  %v9668 = vpop.permute.xlu0 %9667
  %9669 = vrot.lane.b32.xlu0 %v8322, 64
  %v9670 = vpop.permute.xlu0 %9669
  %9671 = vrot.lane.b32.xlu0 %v8325, 64
  %v9672 = vpop.permute.xlu0 %9671
  %9673 = vrot.lane.b32.xlu0 %v8327, 64
  %v9674 = vpop.permute.xlu0 %9673
  %9675 = vrot.lane.b32.xlu0 %v8330, 64
  %v9676 = vpop.permute.xlu0 %9675
  %9677 = vrot.lane.b32.xlu0 %v8332, 64
  %v9678 = vpop.permute.xlu0 %9677
  %9679 = vrot.lane.b32.xlu0 %v8335, 64
  %v9680 = vpop.permute.xlu0 %9679
  %9681 = vrot.lane.b32.xlu0 %v8337, 64
  %v9682 = vpop.permute.xlu0 %9681
  %9683 = vrot.lane.b32.xlu0 %v8340, 64
  %v9684 = vpop.permute.xlu0 %9683
  %9685 = vrot.lane.b32.xlu0 %v8342, 64
  %v9686 = vpop.permute.xlu0 %9685
  %9687 = vrot.lane.b32.xlu0 %v8345, 64
  %v9688 = vpop.permute.xlu0 %9687
  %9689 = vrot.lane.b32.xlu0 %v8347, 64
  %v9690 = vpop.permute.xlu0 %9689
  %9691 = vrot.lane.b32.xlu0 %v8350, 64
  %v9692 = vpop.permute.xlu0 %9691
  %9693 = vrot.lane.b32.xlu0 %v8352, 64
  %v9694 = vpop.permute.xlu0 %9693
  %9695 = vrot.lane.b32.xlu0 %v8355, 64
  %v9696 = vpop.permute.xlu0 %9695
  %9697 = vrot.lane.b32.xlu0 %v8357, 64
  %v9698 = vpop.permute.xlu0 %9697
  %9699 = vrot.lane.b32.xlu0 %v8360, 64
  %v9700 = vpop.permute.xlu0 %9699
  %9701 = vrot.lane.b32.xlu0 %v8362, 64
  %v9702 = vpop.permute.xlu0 %9701
  %9703 = vrot.lane.b32.xlu0 %v9037, 64
  %v9704 = vpop.permute.xlu0 %9703
  %9705 = vrot.lane.b32.xlu0 %v9039, 64
  %v9706 = vpop.permute.xlu0 %9705
  %9707 = vrot.lane.b32.xlu0 %v9639, 64
  %v9708 = vpop.permute.xlu0 %9707
  %9709 = vrot.lane.b32.xlu0 %v9641, 64
  %v9710 = vpop.permute.xlu0 %9709
  %9711 = vrot.lane.b32.xlu0 %v8375, 64
  %v9712 = vpop.permute.xlu0 %9711
  %9713 = vrot.lane.b32.xlu0 %v8377, 64
  %v9714 = vpop.permute.xlu0 %9713
  %9715 = vrot.lane.b32.xlu0 %v8380, 64
  %v9716 = vpop.permute.xlu0 %9715
  %9717 = vrot.lane.b32.xlu0 %v8382, 64
  %v9718 = vpop.permute.xlu0 %9717
  %9719 = vrot.lane.b32.xlu0 %v8385, 64
  %v9720 = vpop.permute.xlu0 %9719
  %9721 = vrot.lane.b32.xlu0 %v8387, 64
  %v9722 = vpop.permute.xlu0 %9721
  %9723 = vrot.lane.b32.xlu0 %v8390, 64
  %v9724 = vpop.permute.xlu0 %9723
  %9725 = vrot.lane.b32.xlu0 %v8392, 64
  %v9726 = vpop.permute.xlu0 %9725
  %9727 = vrot.lane.b32.xlu0 %v8395, 64
  %v9728 = vpop.permute.xlu0 %9727
  %9729 = vrot.lane.b32.xlu0 %v8397, 64
  %v9730 = vpop.permute.xlu0 %9729
  %9731 = vrot.lane.b32.xlu0 %v8400, 64
  %v9732 = vpop.permute.xlu0 %9731
  %9733 = vrot.lane.b32.xlu0 %v8402, 64
  %v9734 = vpop.permute.xlu0 %9733
  %9735 = vrot.lane.b32.xlu0 %v8405, 64
  %v9736 = vpop.permute.xlu0 %9735
  %9737 = vrot.lane.b32.xlu0 %v8407, 64
  %v9738 = vpop.permute.xlu0 %9737
  %9739 = vrot.lane.b32.xlu0 %v8410, 64
  %v9740 = vpop.permute.xlu0 %9739
  %9741 = vrot.lane.b32.xlu0 %v8412, 64
  %v9742 = vpop.permute.xlu0 %9741
  %9743 = vrot.lane.b32.xlu0 %v8415, 64
  %v9744 = vpop.permute.xlu0 %9743
  %9745 = vrot.lane.b32.xlu0 %v8417, 64
  %v9746 = vpop.permute.xlu0 %9745
  %9747 = vrot.lane.b32.xlu0 %v8420, 64
  %v9748 = vpop.permute.xlu0 %9747
  %9749 = vrot.lane.b32.xlu0 %v8422, 64
  %v9750 = vpop.permute.xlu0 %9749
  %9751 = vrot.lane.b32.xlu0 %v8425, 64
  %v9752 = vpop.permute.xlu0 %9751
  %9753 = vrot.lane.b32.xlu0 %v8427, 64
  %v9754 = vpop.permute.xlu0 %9753
  %9755 = vrot.lane.b32.xlu0 %v8430, 64
  %v9756 = vpop.permute.xlu0 %9755
  %9757 = vrot.lane.b32.xlu0 %v8432, 64
  %v9758 = vpop.permute.xlu0 %9757
  %9759 = vrot.lane.b32.xlu0 %v8435, 64
  %v9760 = vpop.permute.xlu0 %9759
  %9761 = vrot.lane.b32.xlu0 %v8437, 64
  %v9762 = vpop.permute.xlu0 %9761
  %9763 = vrot.lane.b32.xlu0 %v8440, 64
  %v9764 = vpop.permute.xlu0 %9763
  %9765 = vrot.lane.b32.xlu0 %v8442, 64
  %v9766 = vpop.permute.xlu0 %9765
  %9767 = vrot.lane.b32.xlu0 %v9042, 64
  %v9768 = vpop.permute.xlu0 %9767
  %9769 = vrot.lane.b32.xlu0 %v9044, 64
  %v9770 = vpop.permute.xlu0 %9769
  %9771 = vrot.lane.b32.xlu0 %v9644, 64
  %v9772 = vpop.permute.xlu0 %9771
  %9773 = vrot.lane.b32.xlu0 %v9646, 64
  %v9774 = vpop.permute.xlu0 %9773
  %v9839 = vsel %vm127, %v7716, %v8092
  %v9840 = vsel %vm127, %v7717, %v8094
  %v9841 = vsel %vm127, %v7719, %v8096
  %v9842 = vsel %vm127, %v7720, %v8098
  %v9843 = vsel %vm127, %v7722, %v8100
  %v9844 = vsel %vm127, %v7723, %v8102
  %v9845 = vsel %vm127, %v7725, %v8104
  %v9846 = vsel %vm127, %v7726, %v8106
  %v9847 = vsel %vm127, %v7728, %v8108
  %v9848 = vsel %vm127, %v7729, %v8110
  %v9849 = vsel %vm127, %v7731, %v8112
  %v9850 = vsel %vm127, %v7732, %v8114
  %v9851 = vsel %vm127, %v7734, %v8116
  %v9852 = vsel %vm127, %v7735, %v8118
  %v9853 = vsel %vm127, %v7737, %v8120
  %v9854 = vsel %vm127, %v7738, %v8122
  %v9855 = vsel %vm127, %v7740, %v8124
  %v9856 = vsel %vm127, %v7741, %v8126
  %v9857 = vsel %vm127, %v7743, %v8128
  %v9858 = vsel %vm127, %v7744, %v8130
  %v9859 = vsel %vm127, %v7746, %v8132
  %v9860 = vsel %vm127, %v7747, %v8134
  %v9861 = vsel %vm127, %v7749, %v8136
  %v9862 = vsel %vm127, %v7750, %v8138
  %v9863 = vsel %vm127, %v7752, %v8140
  %v9864 = vsel %vm127, %v7753, %v8142
  %v9865 = vsel %vm127, %v7755, %v8144
  %v9866 = vsel %vm127, %v7756, %v8146
  %v9867 = vsel %vm127, %v7758, %v8148
  %v9868 = vsel %vm127, %v7759, %v8150
  %v9869 = vsel %vm127, %v7761, %v8152
  %v9870 = vsel %vm127, %v7762, %v8154
  %v9871 = vsel %vm127, %v7770, %v8156
  %v9872 = vsel %vm127, %v7771, %v8158
  %v9873 = vsel %vm127, %v7773, %v8160
  %v9874 = vsel %vm127, %v7774, %v8162
  %v9875 = vsel %vm127, %v7776, %v8164
  %v9876 = vsel %vm127, %v7777, %v8166
  %v9877 = vsel %vm127, %v7779, %v8168
  %v9878 = vsel %vm127, %v7780, %v8170
  %v9879 = vsel %vm127, %v7782, %v8172
  %v9880 = vsel %vm127, %v7783, %v8174
  %v9881 = vsel %vm127, %v7785, %v8176
  %v9882 = vsel %vm127, %v7786, %v8178
  %v9883 = vsel %vm127, %v7788, %v8180
  %v9884 = vsel %vm127, %v7789, %v8182
  %v9885 = vsel %vm127, %v7791, %v8184
  %v9886 = vsel %vm127, %v7792, %v8186
  %v9887 = vsel %vm127, %v7794, %v8188
  %v9888 = vsel %vm127, %v7795, %v8190
  %v9889 = vsel %vm127, %v7797, %v8192
  %v9890 = vsel %vm127, %v7798, %v8194
  %v9891 = vsel %vm127, %v7800, %v8196
  %v9892 = vsel %vm127, %v7801, %v8198
  %v9893 = vsel %vm127, %v7803, %v8200
  %v9894 = vsel %vm127, %v7804, %v8202
  %v9895 = vsel %vm127, %v7806, %v8204
  %v9896 = vsel %vm127, %v7807, %v8206
  %v9897 = vsel %vm127, %v7809, %v8208
  %v9898 = vsel %vm127, %v7810, %v8210
  %v9899 = vsel %vm127, %v7812, %v8212
  %v9900 = vsel %vm127, %v7813, %v8214
  %v9901 = vsel %vm127, %v7815, %v8216
  %v9902 = vsel %vm127, %v7816, %v8218
  %v9903 = vsel %vm39, %v9839, %v8444
  %v9904 = vsel %vm39, %v9840, %v8446
  %v9905 = vsel %vm39, %v9841, %v8448
  %v9906 = vsel %vm39, %v9842, %v8450
  %v9907 = vsel %vm39, %v9843, %v8452
  %v9908 = vsel %vm39, %v9844, %v8454
  %v9909 = vsel %vm39, %v9845, %v8456
  %v9910 = vsel %vm39, %v9846, %v8458
  %v9911 = vsel %vm39, %v9847, %v8460
  %v9912 = vsel %vm39, %v9848, %v8462
  %v9913 = vsel %vm39, %v9849, %v8464
  %v9914 = vsel %vm39, %v9850, %v8466
  %v9915 = vsel %vm39, %v9851, %v8468
  %v9916 = vsel %vm39, %v9852, %v8470
  %v9917 = vsel %vm39, %v9853, %v8472
  %v9918 = vsel %vm39, %v9854, %v8474
  %v9919 = vsel %vm39, %v9855, %v8476
  %v9920 = vsel %vm39, %v9856, %v8478
  %v9921 = vsel %vm39, %v9857, %v8480
  %v9922 = vsel %vm39, %v9858, %v8482
  %v9923 = vsel %vm39, %v9859, %v8484
  %v9924 = vsel %vm39, %v9860, %v8486
  %v9925 = vsel %vm39, %v9861, %v8488
  %v9926 = vsel %vm39, %v9862, %v8490
  %v9927 = vsel %vm39, %v9863, %v8492
  %v9928 = vsel %vm39, %v9864, %v8494
  %v9929 = vsel %vm39, %v9865, %v8496
  %v9930 = vsel %vm39, %v9866, %v8498
  %v9931 = vsel %vm39, %v9867, %v8500
  %v9932 = vsel %vm39, %v9868, %v8502
  %v9933 = vsel %vm39, %v9869, %v8504
  %v9934 = vsel %vm39, %v9870, %v8506
  %v9935 = vsel %vm39, %v9871, %v8508
  %v9936 = vsel %vm39, %v9872, %v8510
  %v9937 = vsel %vm39, %v9873, %v8512
  %v9938 = vsel %vm39, %v9874, %v8514
  %v9939 = vsel %vm39, %v9875, %v8516
  %v9940 = vsel %vm39, %v9876, %v8518
  %v9941 = vsel %vm39, %v9877, %v8520
  %v9942 = vsel %vm39, %v9878, %v8522
  %v9943 = vsel %vm39, %v9879, %v8524
  %v9944 = vsel %vm39, %v9880, %v8526
  %v9945 = vsel %vm39, %v9881, %v8528
  %v9946 = vsel %vm39, %v9882, %v8530
  %v9947 = vsel %vm39, %v9883, %v8532
  %v9948 = vsel %vm39, %v9884, %v8534
  %v9949 = vsel %vm39, %v9885, %v8536
  %v9950 = vsel %vm39, %v9886, %v8538
  %v9951 = vsel %vm39, %v9887, %v8540
  %v9952 = vsel %vm39, %v9888, %v8542
  %v9953 = vsel %vm39, %v9889, %v8544
  %v9954 = vsel %vm39, %v9890, %v8546
  %v9955 = vsel %vm39, %v9891, %v8548
  %v9956 = vsel %vm39, %v9892, %v8550
  %v9957 = vsel %vm39, %v9893, %v8552
  %v9958 = vsel %vm39, %v9894, %v8554
  %v9959 = vsel %vm39, %v9895, %v8556
  %v9960 = vsel %vm39, %v9896, %v8558
  %v9961 = vsel %vm39, %v9897, %v8560
  %v9962 = vsel %vm39, %v9898, %v8562
  %v9963 = vsel %vm39, %v9899, %v8564
  %v9964 = vsel %vm39, %v9900, %v8566
  %v9965 = vsel %vm39, %v9901, %v8568
  %v9966 = vsel %vm39, %v9902, %v8570
  %v9967 = vsel %vm2659, %v9903, %v8640
  %v9968 = vsel %vm2659, %v9904, %v8642
  %v9969 = vsel %vm2659, %v9905, %v8644
  %v9970 = vsel %vm2659, %v9906, %v8646
  %v9971 = vsel %vm2659, %v9907, %v8648
  %v9972 = vsel %vm2659, %v9908, %v8650
  %v9973 = vsel %vm2659, %v9909, %v8652
  %v9974 = vsel %vm2659, %v9910, %v8654
  %v9975 = vsel %vm2659, %v9911, %v8656
  %v9976 = vsel %vm2659, %v9912, %v8658
  %v9977 = vsel %vm2659, %v9913, %v8660
  %v9978 = vsel %vm2659, %v9914, %v8662
  %v9979 = vsel %vm2659, %v9915, %v8664
  %v9980 = vsel %vm2659, %v9916, %v8666
  %v9981 = vsel %vm2659, %v9917, %v8668
  %v9982 = vsel %vm2659, %v9918, %v8670
  %v9983 = vsel %vm2659, %v9919, %v8672
  %v9984 = vsel %vm2659, %v9920, %v8674
  %v9985 = vsel %vm2659, %v9921, %v8676
  %v9986 = vsel %vm2659, %v9922, %v8678
  %v9987 = vsel %vm2659, %v9923, %v8680
  %v9988 = vsel %vm2659, %v9924, %v8682
  %v9989 = vsel %vm2659, %v9925, %v8684
  %v9990 = vsel %vm2659, %v9926, %v8686
  %v9991 = vsel %vm2659, %v9927, %v8688
  %v9992 = vsel %vm2659, %v9928, %v8690
  %v9993 = vsel %vm2659, %v9929, %v8692
  %v9994 = vsel %vm2659, %v9930, %v8694
  %v9995 = vsel %vm2659, %v9931, %v8696
  %v9996 = vsel %vm2659, %v9932, %v8698
  %v9997 = vsel %vm2659, %v9933, %v8700
  %v9998 = vsel %vm2659, %v9934, %v8702
  %v9999 = vsel %vm2659, %v9935, %v8704
  %v10000 = vsel %vm2659, %v9936, %v8706
  %v10001 = vsel %vm2659, %v9937, %v8708
  %v10002 = vsel %vm2659, %v9938, %v8710
  %v10003 = vsel %vm2659, %v9939, %v8712
  %v10004 = vsel %vm2659, %v9940, %v8714
  %v10005 = vsel %vm2659, %v9941, %v8716
  %v10006 = vsel %vm2659, %v9942, %v8718
  %v10007 = vsel %vm2659, %v9943, %v8720
  %v10008 = vsel %vm2659, %v9944, %v8722
  %v10009 = vsel %vm2659, %v9945, %v8724
  %v10010 = vsel %vm2659, %v9946, %v8726
  %v10011 = vsel %vm2659, %v9947, %v8728
  %v10012 = vsel %vm2659, %v9948, %v8730
  %v10013 = vsel %vm2659, %v9949, %v8732
  %v10014 = vsel %vm2659, %v9950, %v8734
  %v10015 = vsel %vm2659, %v9951, %v8736
  %v10016 = vsel %vm2659, %v9952, %v8738
  %v10017 = vsel %vm2659, %v9953, %v8740
  %v10018 = vsel %vm2659, %v9954, %v8742
  %v10019 = vsel %vm2659, %v9955, %v8744
  %v10020 = vsel %vm2659, %v9956, %v8746
  %v10021 = vsel %vm2659, %v9957, %v8748
  %v10022 = vsel %vm2659, %v9958, %v8750
  %v10023 = vsel %vm2659, %v9959, %v8752
  %v10024 = vsel %vm2659, %v9960, %v8754
  %v10025 = vsel %vm2659, %v9961, %v8756
  %v10026 = vsel %vm2659, %v9962, %v8758
  %v10027 = vsel %vm2659, %v9963, %v8760
  %v10028 = vsel %vm2659, %v9964, %v8762
  %v10029 = vsel %vm2659, %v9965, %v8764
  %v10030 = vsel %vm2659, %v9966, %v8766
  %v10031 = vsel %vm2789, %v9967, %v8844
  %v10032 = vsel %vm2789, %v9968, %v8846
  %v10033 = vsel %vm2789, %v9969, %v8848
  %v10034 = vsel %vm2789, %v9970, %v8850
  %v10035 = vsel %vm2789, %v9971, %v8852
  %v10036 = vsel %vm2789, %v9972, %v8854
  %v10037 = vsel %vm2789, %v9973, %v8856
  %v10038 = vsel %vm2789, %v9974, %v8858
  %v10039 = vsel %vm2789, %v9975, %v8860
  %v10040 = vsel %vm2789, %v9976, %v8862
  %v10041 = vsel %vm2789, %v9977, %v8864
  %v10042 = vsel %vm2789, %v9978, %v8866
  %v10043 = vsel %vm2789, %v9979, %v8868
  %v10044 = vsel %vm2789, %v9980, %v8870
  %v10045 = vsel %vm2789, %v9981, %v8872
  %v10046 = vsel %vm2789, %v9982, %v8874
  %v10047 = vsel %vm2789, %v9983, %v8876
  %v10048 = vsel %vm2789, %v9984, %v8878
  %v10049 = vsel %vm2789, %v9985, %v8880
  %v10050 = vsel %vm2789, %v9986, %v8882
  %v10051 = vsel %vm2789, %v9987, %v8884
  %v10052 = vsel %vm2789, %v9988, %v8886
  %v10053 = vsel %vm2789, %v9989, %v8888
  %v10054 = vsel %vm2789, %v9990, %v8890
  %v10055 = vsel %vm2789, %v9991, %v8892
  %v10056 = vsel %vm2789, %v9992, %v8894
  %v10057 = vsel %vm2789, %v9993, %v8896
  %v10058 = vsel %vm2789, %v9994, %v8898
  %v10059 = vsel %vm2789, %v9995, %v8900
  %v10060 = vsel %vm2789, %v9996, %v8902
  %v10061 = vsel %vm2789, %v9997, %v8904
  %v10062 = vsel %vm2789, %v9998, %v8906
  %v10063 = vsel %vm2789, %v9999, %v8908
  %v10064 = vsel %vm2789, %v10000, %v8910
  %v10065 = vsel %vm2789, %v10001, %v8912
  %v10066 = vsel %vm2789, %v10002, %v8914
  %v10067 = vsel %vm2789, %v10003, %v8916
  %v10068 = vsel %vm2789, %v10004, %v8918
  %v10069 = vsel %vm2789, %v10005, %v8920
  %v10070 = vsel %vm2789, %v10006, %v8922
  %v10071 = vsel %vm2789, %v10007, %v8924
  %v10072 = vsel %vm2789, %v10008, %v8926
  %v10073 = vsel %vm2789, %v10009, %v8928
  %v10074 = vsel %vm2789, %v10010, %v8930
  %v10075 = vsel %vm2789, %v10011, %v8932
  %v10076 = vsel %vm2789, %v10012, %v8934
  %v10077 = vsel %vm2789, %v10013, %v8936
  %v10078 = vsel %vm2789, %v10014, %v8938
  %v10079 = vsel %vm2789, %v10015, %v8940
  %v10080 = vsel %vm2789, %v10016, %v8942
  %v10081 = vsel %vm2789, %v10017, %v8944
  %v10082 = vsel %vm2789, %v10018, %v8946
  %v10083 = vsel %vm2789, %v10019, %v8948
  %v10084 = vsel %vm2789, %v10020, %v8950
  %v10085 = vsel %vm2789, %v10021, %v8952
  %v10086 = vsel %vm2789, %v10022, %v8954
  %v10087 = vsel %vm2789, %v10023, %v8956
  %v10088 = vsel %vm2789, %v10024, %v8958
  %v10089 = vsel %vm2789, %v10025, %v8960
  %v10090 = vsel %vm2789, %v10026, %v8962
  %v10091 = vsel %vm2789, %v10027, %v8964
  %v10092 = vsel %vm2789, %v10028, %v8966
  %v10093 = vsel %vm2789, %v10029, %v8968
  %v10094 = vsel %vm2789, %v10030, %v8970
  %vm10095 = vcmask 326656
  %v10096 = vsel %vm10095, %v10031, %v9046
  %v10097 = vsel %vm10095, %v10032, %v9048
  %v10098 = vsel %vm10095, %v10033, %v9050
  %v10099 = vsel %vm10095, %v10034, %v9052
  %v10100 = vsel %vm10095, %v10035, %v9054
  %v10101 = vsel %vm10095, %v10036, %v9056
  %v10102 = vsel %vm10095, %v10037, %v9058
  %v10103 = vsel %vm10095, %v10038, %v9060
  %v10104 = vsel %vm10095, %v10039, %v9062
  %v10105 = vsel %vm10095, %v10040, %v9064
  %v10106 = vsel %vm10095, %v10041, %v9066
  %v10107 = vsel %vm10095, %v10042, %v9068
  %v10108 = vsel %vm10095, %v10043, %v9070
  %v10109 = vsel %vm10095, %v10044, %v9072
  %v10110 = vsel %vm10095, %v10045, %v9074
  %v10111 = vsel %vm10095, %v10046, %v9076
  %v10112 = vsel %vm10095, %v10047, %v9078
  %v10113 = vsel %vm10095, %v10048, %v9080
  %v10114 = vsel %vm10095, %v10049, %v9082
  %v10115 = vsel %vm10095, %v10050, %v9084
  %v10116 = vsel %vm10095, %v10051, %v9086
  %v10117 = vsel %vm10095, %v10052, %v9088
  %v10118 = vsel %vm10095, %v10053, %v9090
  %v10119 = vsel %vm10095, %v10054, %v9092
  %v10120 = vsel %vm10095, %v10055, %v9094
  %v10121 = vsel %vm10095, %v10056, %v9096
  %v10122 = vsel %vm10095, %v10057, %v9098
  %v10123 = vsel %vm10095, %v10058, %v9100
  %v10124 = vsel %vm10095, %v10059, %v9102
  %v10125 = vsel %vm10095, %v10060, %v9104
  %v10126 = vsel %vm10095, %v10061, %v9106
  %v10127 = vsel %vm10095, %v10062, %v9108
  %v10128 = vsel %vm10095, %v10063, %v9110
  %v10129 = vsel %vm10095, %v10064, %v9112
  %v10130 = vsel %vm10095, %v10065, %v9114
  %v10131 = vsel %vm10095, %v10066, %v9116
  %v10132 = vsel %vm10095, %v10067, %v9118
  %v10133 = vsel %vm10095, %v10068, %v9120
  %v10134 = vsel %vm10095, %v10069, %v9122
  %v10135 = vsel %vm10095, %v10070, %v9124
  %v10136 = vsel %vm10095, %v10071, %v9126
  %v10137 = vsel %vm10095, %v10072, %v9128
  %v10138 = vsel %vm10095, %v10073, %v9130
  %v10139 = vsel %vm10095, %v10074, %v9132
  %v10140 = vsel %vm10095, %v10075, %v9134
  %v10141 = vsel %vm10095, %v10076, %v9136
  %v10142 = vsel %vm10095, %v10077, %v9138
  %v10143 = vsel %vm10095, %v10078, %v9140
  %v10144 = vsel %vm10095, %v10079, %v9142
  %v10145 = vsel %vm10095, %v10080, %v9144
  %v10146 = vsel %vm10095, %v10081, %v9146
  %v10147 = vsel %vm10095, %v10082, %v9148
  %v10148 = vsel %vm10095, %v10083, %v9150
  %v10149 = vsel %vm10095, %v10084, %v9152
  %v10150 = vsel %vm10095, %v10085, %v9154
  %v10151 = vsel %vm10095, %v10086, %v9156
  %v10152 = vsel %vm10095, %v10087, %v9158
  %v10153 = vsel %vm10095, %v10088, %v9160
  %v10154 = vsel %vm10095, %v10089, %v9162
  %v10155 = vsel %vm10095, %v10090, %v9164
  %v10156 = vsel %vm10095, %v10091, %v9166
  %v10157 = vsel %vm10095, %v10092, %v9168
  %v10158 = vsel %vm10095, %v10093, %v9170
  %v10159 = vsel %vm10095, %v10094, %v9172
  %v10160 = vsel %vm6348, %v10096, %v9242
  %v10161 = vsel %vm6348, %v10097, %v9244
  %v10162 = vsel %vm6348, %v10098, %v9246
  %v10163 = vsel %vm6348, %v10099, %v9248
  %v10164 = vsel %vm6348, %v10100, %v9250
  %v10165 = vsel %vm6348, %v10101, %v9252
  %v10166 = vsel %vm6348, %v10102, %v9254
  %v10167 = vsel %vm6348, %v10103, %v9256
  %v10168 = vsel %vm6348, %v10104, %v9258
  %v10169 = vsel %vm6348, %v10105, %v9260
  %v10170 = vsel %vm6348, %v10106, %v9262
  %v10171 = vsel %vm6348, %v10107, %v9264
  %v10172 = vsel %vm6348, %v10108, %v9266
  %v10173 = vsel %vm6348, %v10109, %v9268
  %v10174 = vsel %vm6348, %v10110, %v9270
  %v10175 = vsel %vm6348, %v10111, %v9272
  %v10176 = vsel %vm6348, %v10112, %v9274
  %v10177 = vsel %vm6348, %v10113, %v9276
  %v10178 = vsel %vm6348, %v10114, %v9278
  %v10179 = vsel %vm6348, %v10115, %v9280
  %v10180 = vsel %vm6348, %v10116, %v9282
  %v10181 = vsel %vm6348, %v10117, %v9284
  %v10182 = vsel %vm6348, %v10118, %v9286
  %v10183 = vsel %vm6348, %v10119, %v9288
  %v10184 = vsel %vm6348, %v10120, %v9290
  %v10185 = vsel %vm6348, %v10121, %v9292
  %v10186 = vsel %vm6348, %v10122, %v9294
  %v10187 = vsel %vm6348, %v10123, %v9296
  %v10188 = vsel %vm6348, %v10124, %v9298
  %v10189 = vsel %vm6348, %v10125, %v9300
  %v10190 = vsel %vm6348, %v10126, %v9302
  %v10191 = vsel %vm6348, %v10127, %v9304
  %v10192 = vsel %vm6348, %v10128, %v9306
  %v10193 = vsel %vm6348, %v10129, %v9308
  %v10194 = vsel %vm6348, %v10130, %v9310
  %v10195 = vsel %vm6348, %v10131, %v9312
  %v10196 = vsel %vm6348, %v10132, %v9314
  %v10197 = vsel %vm6348, %v10133, %v9316
  %v10198 = vsel %vm6348, %v10134, %v9318
  %v10199 = vsel %vm6348, %v10135, %v9320
  %v10200 = vsel %vm6348, %v10136, %v9322
  %v10201 = vsel %vm6348, %v10137, %v9324
  %v10202 = vsel %vm6348, %v10138, %v9326
  %v10203 = vsel %vm6348, %v10139, %v9328
  %v10204 = vsel %vm6348, %v10140, %v9330
  %v10205 = vsel %vm6348, %v10141, %v9332
  %v10206 = vsel %vm6348, %v10142, %v9334
  %v10207 = vsel %vm6348, %v10143, %v9336
  %v10208 = vsel %vm6348, %v10144, %v9338
  %v10209 = vsel %vm6348, %v10145, %v9340
  %v10210 = vsel %vm6348, %v10146, %v9342
  %v10211 = vsel %vm6348, %v10147, %v9344
  %v10212 = vsel %vm6348, %v10148, %v9346
  %v10213 = vsel %vm6348, %v10149, %v9348
  %v10214 = vsel %vm6348, %v10150, %v9350
  %v10215 = vsel %vm6348, %v10151, %v9352
  %v10216 = vsel %vm6348, %v10152, %v9354
  %v10217 = vsel %vm6348, %v10153, %v9356
  %v10218 = vsel %vm6348, %v10154, %v9358
  %v10219 = vsel %vm6348, %v10155, %v9360
  %v10220 = vsel %vm6348, %v10156, %v9362
  %v10221 = vsel %vm6348, %v10157, %v9364
  %v10222 = vsel %vm6348, %v10158, %v9366
  %v10223 = vsel %vm6348, %v10159, %v9368
  %vm10224 = vcmask 457728
  %v10225 = vsel %vm10224, %v10160, %v9446
  %v10226 = vsel %vm10224, %v10161, %v9448
  %v10227 = vsel %vm10224, %v10162, %v9450
  %v10228 = vsel %vm10224, %v10163, %v9452
  %v10229 = vsel %vm10224, %v10164, %v9454
  %v10230 = vsel %vm10224, %v10165, %v9456
  %v10231 = vsel %vm10224, %v10166, %v9458
  %v10232 = vsel %vm10224, %v10167, %v9460
  %v10233 = vsel %vm10224, %v10168, %v9462
  %v10234 = vsel %vm10224, %v10169, %v9464
  %v10235 = vsel %vm10224, %v10170, %v9466
  %v10236 = vsel %vm10224, %v10171, %v9468
  %v10237 = vsel %vm10224, %v10172, %v9470
  %v10238 = vsel %vm10224, %v10173, %v9472
  %v10239 = vsel %vm10224, %v10174, %v9474
  %v10240 = vsel %vm10224, %v10175, %v9476
  %v10241 = vsel %vm10224, %v10176, %v9478
  %v10242 = vsel %vm10224, %v10177, %v9480
  %v10243 = vsel %vm10224, %v10178, %v9482
  %v10244 = vsel %vm10224, %v10179, %v9484
  %v10245 = vsel %vm10224, %v10180, %v9486
  %v10246 = vsel %vm10224, %v10181, %v9488
  %v10247 = vsel %vm10224, %v10182, %v9490
  %v10248 = vsel %vm10224, %v10183, %v9492
  %v10249 = vsel %vm10224, %v10184, %v9494
  %v10250 = vsel %vm10224, %v10185, %v9496
  %v10251 = vsel %vm10224, %v10186, %v9498
  %v10252 = vsel %vm10224, %v10187, %v9500
  %v10253 = vsel %vm10224, %v10188, %v9502
  %v10254 = vsel %vm10224, %v10189, %v9504
  %v10255 = vsel %vm10224, %v10190, %v9506
  %v10256 = vsel %vm10224, %v10191, %v9508
  %v10257 = vsel %vm10224, %v10192, %v9510
  %v10258 = vsel %vm10224, %v10193, %v9512
  %v10259 = vsel %vm10224, %v10194, %v9514
  %v10260 = vsel %vm10224, %v10195, %v9516
  %v10261 = vsel %vm10224, %v10196, %v9518
  %v10262 = vsel %vm10224, %v10197, %v9520
  %v10263 = vsel %vm10224, %v10198, %v9522
  %v10264 = vsel %vm10224, %v10199, %v9524
  %v10265 = vsel %vm10224, %v10200, %v9526
  %v10266 = vsel %vm10224, %v10201, %v9528
  %v10267 = vsel %vm10224, %v10202, %v9530
  %v10268 = vsel %vm10224, %v10203, %v9532
  %v10269 = vsel %vm10224, %v10204, %v9534
  %v10270 = vsel %vm10224, %v10205, %v9536
  %v10271 = vsel %vm10224, %v10206, %v9538
  %v10272 = vsel %vm10224, %v10207, %v9540
  %v10273 = vsel %vm10224, %v10208, %v9542
  %v10274 = vsel %vm10224, %v10209, %v9544
  %v10275 = vsel %vm10224, %v10210, %v9546
  %v10276 = vsel %vm10224, %v10211, %v9548
  %v10277 = vsel %vm10224, %v10212, %v9550
  %v10278 = vsel %vm10224, %v10213, %v9552
  %v10279 = vsel %vm10224, %v10214, %v9554
  %v10280 = vsel %vm10224, %v10215, %v9556
  %v10281 = vsel %vm10224, %v10216, %v9558
  %v10282 = vsel %vm10224, %v10217, %v9560
  %v10283 = vsel %vm10224, %v10218, %v9562
  %v10284 = vsel %vm10224, %v10219, %v9564
  %v10285 = vsel %vm10224, %v10220, %v9566
  %v10286 = vsel %vm10224, %v10221, %v9568
  %v10287 = vsel %vm10224, %v10222, %v9570
  %v10288 = vsel %vm10224, %v10223, %v9572
  %v10289 = vsel %vm6413, %v10225, %v9648
  %v10290 = vsel %vm6413, %v10226, %v9650
  %v10291 = vsel %vm6413, %v10227, %v9652
  %v10292 = vsel %vm6413, %v10228, %v9654
  %v10293 = vsel %vm6413, %v10229, %v9656
  %v10294 = vsel %vm6413, %v10230, %v9658
  %v10295 = vsel %vm6413, %v10231, %v9660
  %v10296 = vsel %vm6413, %v10232, %v9662
  %v10297 = vsel %vm6413, %v10233, %v9664
  %v10298 = vsel %vm6413, %v10234, %v9666
  %v10299 = vsel %vm6413, %v10235, %v9668
  %v10300 = vsel %vm6413, %v10236, %v9670
  %v10301 = vsel %vm6413, %v10237, %v9672
  %v10302 = vsel %vm6413, %v10238, %v9674
  %v10303 = vsel %vm6413, %v10239, %v9676
  %v10304 = vsel %vm6413, %v10240, %v9678
  %v10305 = vsel %vm6413, %v10241, %v9680
  %v10306 = vsel %vm6413, %v10242, %v9682
  %v10307 = vsel %vm6413, %v10243, %v9684
  %v10308 = vsel %vm6413, %v10244, %v9686
  %v10309 = vsel %vm6413, %v10245, %v9688
  %v10310 = vsel %vm6413, %v10246, %v9690
  %v10311 = vsel %vm6413, %v10247, %v9692
  %v10312 = vsel %vm6413, %v10248, %v9694
  %v10313 = vsel %vm6413, %v10249, %v9696
  %v10314 = vsel %vm6413, %v10250, %v9698
  %v10315 = vsel %vm6413, %v10251, %v9700
  %v10316 = vsel %vm6413, %v10252, %v9702
  %v10317 = vsel %vm6413, %v10253, %v9704
  %v10318 = vsel %vm6413, %v10254, %v9706
  %v10319 = vsel %vm6413, %v10255, %v9708
  %v10320 = vsel %vm6413, %v10256, %v9710
  %v10321 = vsel %vm6413, %v10257, %v9712
  %v10322 = vsel %vm6413, %v10258, %v9714
  %v10323 = vsel %vm6413, %v10259, %v9716
  %v10324 = vsel %vm6413, %v10260, %v9718
  %v10325 = vsel %vm6413, %v10261, %v9720
  %v10326 = vsel %vm6413, %v10262, %v9722
  %v10327 = vsel %vm6413, %v10263, %v9724
  %v10328 = vsel %vm6413, %v10264, %v9726
  %v10329 = vsel %vm6413, %v10265, %v9728
  %v10330 = vsel %vm6413, %v10266, %v9730
  %v10331 = vsel %vm6413, %v10267, %v9732
  %v10332 = vsel %vm6413, %v10268, %v9734
  %v10333 = vsel %vm6413, %v10269, %v9736
  %v10334 = vsel %vm6413, %v10270, %v9738
  %v10335 = vsel %vm6413, %v10271, %v9740
  %v10336 = vsel %vm6413, %v10272, %v9742
  %v10337 = vsel %vm6413, %v10273, %v9744
  %v10338 = vsel %vm6413, %v10274, %v9746
  %v10339 = vsel %vm6413, %v10275, %v9748
  %v10340 = vsel %vm6413, %v10276, %v9750
  %v10341 = vsel %vm6413, %v10277, %v9752
  %v10342 = vsel %vm6413, %v10278, %v9754
  %v10343 = vsel %vm6413, %v10279, %v9756
  %v10344 = vsel %vm6413, %v10280, %v9758
  %v10345 = vsel %vm6413, %v10281, %v9760
  %v10346 = vsel %vm6413, %v10282, %v9762
  %v10347 = vsel %vm6413, %v10283, %v9764
  %v10348 = vsel %vm6413, %v10284, %v9766
  %v10349 = vsel %vm6413, %v10285, %v9768
  %v10350 = vsel %vm6413, %v10286, %v9770
  %v10351 = vsel %vm6413, %v10287, %v9772
  %v10352 = vsel %vm6413, %v10288, %v9774
  %v10353 = vpack.c.bf16 %v10290, %v10289
  %v10354 = vpack.c.bf16 %v10292, %v10291
  %v10355 = vpack.c.bf16 %v10294, %v10293
  %v10356 = vpack.c.bf16 %v10296, %v10295
  %v10357 = vpack.c.bf16 %v10298, %v10297
  %v10358 = vpack.c.bf16 %v10300, %v10299
  %v10359 = vpack.c.bf16 %v10302, %v10301
  %v10360 = vpack.c.bf16 %v10304, %v10303
  %v10361 = vpack.c.bf16 %v10306, %v10305
  %v10362 = vpack.c.bf16 %v10308, %v10307
  %v10363 = vpack.c.bf16 %v10310, %v10309
  %v10364 = vpack.c.bf16 %v10312, %v10311
  %v10365 = vpack.c.bf16 %v10314, %v10313
  %v10366 = vpack.c.bf16 %v10316, %v10315
  %v10367 = vpack.c.bf16 %v10318, %v10317
  %v10368 = vpack.c.bf16 %v10320, %v10319
  %v10369 = vpack.c.bf16 %v10322, %v10321
  %v10370 = vpack.c.bf16 %v10324, %v10323
  %v10371 = vpack.c.bf16 %v10326, %v10325
  %v10372 = vpack.c.bf16 %v10328, %v10327
  %v10373 = vpack.c.bf16 %v10330, %v10329
  %v10374 = vpack.c.bf16 %v10332, %v10331
  %v10375 = vpack.c.bf16 %v10334, %v10333
  %v10376 = vpack.c.bf16 %v10336, %v10335
  %v10377 = vpack.c.bf16 %v10338, %v10337
  %v10378 = vpack.c.bf16 %v10340, %v10339
  %v10379 = vpack.c.bf16 %v10342, %v10341
  %v10380 = vpack.c.bf16 %v10344, %v10343
  %v10381 = vpack.c.bf16 %v10346, %v10345
  %v10382 = vpack.c.bf16 %v10348, %v10347
  %v10383 = vpack.c.bf16 %v10350, %v10349
  %v10384 = vpack.c.bf16 %v10352, %v10351
  %v10394 = vunpack.c.l.b16 %v7824
  %v10395 = vunpack.c.l.b16 %v7825
  %v10396 = vunpack.c.l.b16 %v7826
  %v10397 = vunpack.c.l.b16 %v7827
  %v10398 = vunpack.c.l.b16 %v7828
  %v10399 = vunpack.c.l.b16 %v7829
  %v10400 = vunpack.c.l.b16 %v7830
  %v10401 = vunpack.c.l.b16 %v7831
  %v10402 = vunpack.c.l.b16 %v7832
  %v10403 = vpack.c.b16 %v10395, %v10394
  %v10404 = vpack.c.b16 %v10397, %v10396
  %v10405 = vpack.c.b16 %v10399, %v10398
  %v10406 = vpack.c.b16 %v10401, %v10400
  %v10407 = vpack.c.b16 %v10402, %v10402
  %vm10412 = vcmask 588800
  %v10414 = vsel %vm10412, %v10353, 0
  %v10417 = vsel %vm10412, %v10354, 0
  %v10420 = vsel %vm10412, %v10355, 0
  %v10423 = vsel %vm10412, %v10356, 0
  %v10426 = vsel %vm10412, %v10357, 0
  %v10429 = vsel %vm10412, %v10358, 0
  %v10432 = vsel %vm10412, %v10359, 0
  %v10435 = vsel %vm10412, %v10360, 0
  %v10438 = vsel %vm10412, %v10361, 0
  %v10441 = vsel %vm10412, %v10362, 0
  %v10444 = vsel %vm10412, %v10363, 0
  %v10447 = vsel %vm10412, %v10364, 0
  %v10450 = vsel %vm10412, %v10365, 0
  %v10453 = vsel %vm10412, %v10366, 0
  %v10456 = vsel %vm10412, %v10367, 0
  %v10459 = vsel %vm10412, %v10368, 0
  %v10462 = vsel %vm10412, %v10369, 0
  %v10465 = vsel %vm10412, %v10370, 0
  %v10468 = vsel %vm10412, %v10371, 0
  %v10471 = vsel %vm10412, %v10372, 0
  %v10474 = vsel %vm10412, %v10373, 0
  %v10477 = vsel %vm10412, %v10374, 0
  %v10480 = vsel %vm10412, %v10375, 0
  %v10483 = vsel %vm10412, %v10376, 0
  %v10486 = vsel %vm10412, %v10377, 0
  %v10489 = vsel %vm10412, %v10378, 0
  %v10492 = vsel %vm10412, %v10379, 0
  %v10495 = vsel %vm10412, %v10380, 0
  %v10498 = vsel %vm10412, %v10381, 0
  %v10501 = vsel %vm10412, %v10382, 0
  %v10504 = vsel %vm10412, %v10383, 0
  %v10507 = vsel %vm10412, %v10384, 0
  %vm10509 = vcmask 1043456
  %v10511 = vsel %vm10509, %v10407, 0
  %10513 = vmatprep.subr.bf16.mxu0 0
  %10514 = vmatpush1.bf16.msra.mxu0 %v10403
  %10515 = vmatprep.subr.bf16.mxu0 0
  %10516 = vmatpush1.bf16.msra.mxu0 %v10404
  %10517 = vmatprep.subr.bf16.mxu0 0
  %10518 = vmatpush1.bf16.msra.mxu0 %v10405
  %10519 = vmatprep.subr.bf16.mxu0 0
  %10520 = vmatpush1.bf16.msra.mxu0 %v10406
  %10521 = vmatprep.subr.bf16.mxu0 0
  %10522 = vmatpush1.bf16.msra.mxu0 %v10511
  %10523 = vmatprep.subr.bf16.mxu0 0
  %10524 = vmatpush1.bf16.msra.mxu0 0
  %10525 = vmatprep.subr.bf16.mxu0 0
  %10526 = vmatpush1.bf16.msra.mxu0 0
  %10527 = vmatprep.subr.bf16.mxu0 0
  %10528 = vmatpush1.bf16.msra.mxu0 0
  %10529 = vmatprep.subr.bf16.mxu0 0
  %10530 = vmatpush1.bf16.msra.mxu0 0
  %10531 = vmatprep.subr.bf16.mxu0 0
  %10532 = vmatpush1.bf16.msra.mxu0 0
  %10533 = vmatprep.subr.bf16.mxu0 0
  %10534 = vmatpush1.bf16.msra.mxu0 0
  %10535 = vmatprep.subr.bf16.mxu0 0
  %10536 = vmatpush1.bf16.msra.mxu0 0
  %10537 = vmatprep.subr.bf16.mxu0 0
  %10538 = vmatpush1.bf16.msra.mxu0 0
  %10539 = vmatprep.subr.bf16.mxu0 0
  %10540 = vmatpush1.bf16.msra.mxu0 0
  %10541 = vmatprep.subr.bf16.mxu0 0
  %10542 = vmatpush1.bf16.msra.mxu0 0
  %10543 = vmatprep.subr.bf16.mxu0 0
  %10544 = vmatpush1.bf16.msra.mxu0 0
  %10545 = vmatprep.mubr.bf16.mxu0 0
  %10546 = vmatmul.mubr.bf16.gmra.mrb[0].mxu0 %v10414
  %v10547 = vpop.f32.mrb[0].mxu0
  %v10548 = vadd.f32 0.0, %v10547
  %v10549 = vpop.f32.mrb[0].mxu0
  %v10550 = vpop.f32.mrb[0].mxu0
  %v10551 = vadd.f32 0.0, %v10550
  %v10552 = vpop.f32.mrb[0].mxu0
  %10553 = vmatprep.mubr.bf16.mxu0 0
  %10554 = vmatmul.mubr.bf16.gmra.mrb[0].mxu0 %v10417
  %v10555 = vpop.f32.mrb[0].mxu0
  %v10556 = vadd.f32 0.0, %v10555
  %v10557 = vpop.f32.mrb[0].mxu0
  %v10558 = vpop.f32.mrb[0].mxu0
  %v10559 = vadd.f32 0.0, %v10558
  %v10560 = vpop.f32.mrb[0].mxu0
  %10561 = vmatprep.mubr.bf16.mxu0 0
  %10562 = vmatmul.mubr.bf16.gmra.mrb[0].mxu0 %v10420
  %v10563 = vpop.f32.mrb[0].mxu0
  %v10564 = vadd.f32 0.0, %v10563
  %v10565 = vpop.f32.mrb[0].mxu0
  %v10566 = vpop.f32.mrb[0].mxu0
  %v10567 = vadd.f32 0.0, %v10566
  %v10568 = vpop.f32.mrb[0].mxu0
  %10569 = vmatprep.mubr.bf16.mxu0 0
  %10570 = vmatmul.mubr.bf16.gmra.mrb[0].mxu0 %v10423
  %v10571 = vpop.f32.mrb[0].mxu0
  %v10572 = vadd.f32 0.0, %v10571
  %v10573 = vpop.f32.mrb[0].mxu0
  %v10574 = vpop.f32.mrb[0].mxu0
  %v10575 = vadd.f32 0.0, %v10574
  %v10576 = vpop.f32.mrb[0].mxu0
  %10577 = vmatprep.mubr.bf16.mxu0 0
  %10578 = vmatmul.mubr.bf16.gmra.mrb[0].mxu0 %v10426
  %v10579 = vpop.f32.mrb[0].mxu0
  %v10580 = vadd.f32 0.0, %v10579
  %v10581 = vpop.f32.mrb[0].mxu0
  %v10582 = vpop.f32.mrb[0].mxu0
  %v10583 = vadd.f32 0.0, %v10582
  %v10584 = vpop.f32.mrb[0].mxu0
  %10585 = vmatprep.mubr.bf16.mxu0 0
  %10586 = vmatmul.mubr.bf16.gmra.mrb[0].mxu0 %v10429
  %v10587 = vpop.f32.mrb[0].mxu0
  %v10588 = vadd.f32 0.0, %v10587
  %v10589 = vpop.f32.mrb[0].mxu0
  %v10590 = vpop.f32.mrb[0].mxu0
  %v10591 = vadd.f32 0.0, %v10590
  %v10592 = vpop.f32.mrb[0].mxu0
  %10593 = vmatprep.mubr.bf16.mxu0 0
  %10594 = vmatmul.mubr.bf16.gmra.mrb[0].mxu0 %v10432
  %v10595 = vpop.f32.mrb[0].mxu0
  %v10596 = vadd.f32 0.0, %v10595
  %v10597 = vpop.f32.mrb[0].mxu0
  %v10598 = vpop.f32.mrb[0].mxu0
  %v10599 = vadd.f32 0.0, %v10598
  %v10600 = vpop.f32.mrb[0].mxu0
  %10601 = vmatprep.mubr.bf16.mxu0 0
  %10602 = vmatmul.mubr.bf16.gmra.mrb[0].mxu0 %v10435
  %v10603 = vpop.f32.mrb[0].mxu0
  %v10604 = vadd.f32 0.0, %v10603
  %v10605 = vpop.f32.mrb[0].mxu0
  %v10606 = vpop.f32.mrb[0].mxu0
  %v10607 = vadd.f32 0.0, %v10606
  %v10608 = vpop.f32.mrb[0].mxu0
  %10609 = vmatprep.mubr.bf16.mxu0 0
  %10610 = vmatmul.mubr.bf16.gmra.mrb[0].mxu0 %v10438
  %v10611 = vpop.f32.mrb[0].mxu0
  %v10612 = vadd.f32 0.0, %v10611
  %v10613 = vpop.f32.mrb[0].mxu0
  %v10614 = vpop.f32.mrb[0].mxu0
  %v10615 = vadd.f32 0.0, %v10614
  %v10616 = vpop.f32.mrb[0].mxu0
  %10617 = vmatprep.mubr.bf16.mxu0 0
  %10618 = vmatmul.mubr.bf16.gmra.mrb[0].mxu0 %v10441
  %v10619 = vpop.f32.mrb[0].mxu0
  %v10620 = vadd.f32 0.0, %v10619
  %v10621 = vpop.f32.mrb[0].mxu0
  %v10622 = vpop.f32.mrb[0].mxu0
  %v10623 = vadd.f32 0.0, %v10622
  %v10624 = vpop.f32.mrb[0].mxu0
  %10625 = vmatprep.mubr.bf16.mxu0 0
  %10626 = vmatmul.mubr.bf16.gmra.mrb[0].mxu0 %v10444
  %v10627 = vpop.f32.mrb[0].mxu0
  %v10628 = vadd.f32 0.0, %v10627
  %v10629 = vpop.f32.mrb[0].mxu0
  %v10630 = vpop.f32.mrb[0].mxu0
  %v10631 = vadd.f32 0.0, %v10630
  %v10632 = vpop.f32.mrb[0].mxu0
  %10633 = vmatprep.mubr.bf16.mxu0 0
  %10634 = vmatmul.mubr.bf16.gmra.mrb[0].mxu0 %v10447
  %v10635 = vpop.f32.mrb[0].mxu0
  %v10636 = vadd.f32 0.0, %v10635
  %v10637 = vpop.f32.mrb[0].mxu0
  %v10638 = vpop.f32.mrb[0].mxu0
  %v10639 = vadd.f32 0.0, %v10638
  %v10640 = vpop.f32.mrb[0].mxu0
  %10641 = vmatprep.mubr.bf16.mxu0 0
  %10642 = vmatmul.mubr.bf16.gmra.mrb[0].mxu0 %v10450
  %v10643 = vpop.f32.mrb[0].mxu0
  %v10644 = vadd.f32 0.0, %v10643
  %v10645 = vpop.f32.mrb[0].mxu0
  %v10646 = vpop.f32.mrb[0].mxu0
  %v10647 = vadd.f32 0.0, %v10646
  %v10648 = vpop.f32.mrb[0].mxu0
  %10649 = vmatprep.mubr.bf16.mxu0 0
  %10650 = vmatmul.mubr.bf16.gmra.mrb[0].mxu0 %v10453
  %v10651 = vpop.f32.mrb[0].mxu0
  %v10652 = vadd.f32 0.0, %v10651
  %v10653 = vpop.f32.mrb[0].mxu0
  %v10654 = vpop.f32.mrb[0].mxu0
  %v10655 = vadd.f32 0.0, %v10654
  %v10656 = vpop.f32.mrb[0].mxu0
  %10657 = vmatprep.mubr.bf16.mxu0 0
  %10658 = vmatmul.mubr.bf16.gmra.mrb[0].mxu0 %v10456
  %v10659 = vpop.f32.mrb[0].mxu0
  %v10660 = vadd.f32 0.0, %v10659
  %v10661 = vpop.f32.mrb[0].mxu0
  %v10662 = vpop.f32.mrb[0].mxu0
  %v10663 = vadd.f32 0.0, %v10662
  %v10664 = vpop.f32.mrb[0].mxu0
  %10665 = vmatprep.mubr.bf16.mxu0 0
  %10666 = vmatmul.mubr.bf16.gmra.mrb[0].mxu0 %v10459
  %v10667 = vpop.f32.mrb[0].mxu0
  %v10668 = vadd.f32 0.0, %v10667
  %v10669 = vpop.f32.mrb[0].mxu0
  %v10670 = vpop.f32.mrb[0].mxu0
  %v10671 = vadd.f32 0.0, %v10670
  %v10672 = vpop.f32.mrb[0].mxu0
  %10673 = vmatprep.mubr.bf16.mxu0 0
  %10674 = vmatmul.mubr.bf16.gmra.mrb[0].mxu0 %v10462
  %v10675 = vpop.f32.mrb[0].mxu0
  %v10676 = vadd.f32 0.0, %v10675
  %v10677 = vpop.f32.mrb[0].mxu0
  %v10678 = vpop.f32.mrb[0].mxu0
  %v10679 = vadd.f32 0.0, %v10678
  %v10680 = vpop.f32.mrb[0].mxu0
  %10681 = vmatprep.mubr.bf16.mxu0 0
  %10682 = vmatmul.mubr.bf16.gmra.mrb[0].mxu0 %v10465
  %v10683 = vpop.f32.mrb[0].mxu0
  %v10684 = vadd.f32 0.0, %v10683
  %v10685 = vpop.f32.mrb[0].mxu0
  %v10686 = vpop.f32.mrb[0].mxu0
  %v10687 = vadd.f32 0.0, %v10686
  %v10688 = vpop.f32.mrb[0].mxu0
  %10689 = vmatprep.mubr.bf16.mxu0 0
  %10690 = vmatmul.mubr.bf16.gmra.mrb[0].mxu0 %v10468
  %v10691 = vpop.f32.mrb[0].mxu0
  %v10692 = vadd.f32 0.0, %v10691
  %v10693 = vpop.f32.mrb[0].mxu0
  %v10694 = vpop.f32.mrb[0].mxu0
  %v10695 = vadd.f32 0.0, %v10694
  %v10696 = vpop.f32.mrb[0].mxu0
  %10697 = vmatprep.mubr.bf16.mxu0 0
  %10698 = vmatmul.mubr.bf16.gmra.mrb[0].mxu0 %v10471
  %v10699 = vpop.f32.mrb[0].mxu0
  %v10700 = vadd.f32 0.0, %v10699
  %v10701 = vpop.f32.mrb[0].mxu0
  %v10702 = vpop.f32.mrb[0].mxu0
  %v10703 = vadd.f32 0.0, %v10702
  %v10704 = vpop.f32.mrb[0].mxu0
  %10705 = vmatprep.mubr.bf16.mxu0 0
  %10706 = vmatmul.mubr.bf16.gmra.mrb[0].mxu0 %v10474
  %v10707 = vpop.f32.mrb[0].mxu0
  %v10708 = vadd.f32 0.0, %v10707
  %v10709 = vpop.f32.mrb[0].mxu0
  %v10710 = vpop.f32.mrb[0].mxu0
  %v10711 = vadd.f32 0.0, %v10710
  %v10712 = vpop.f32.mrb[0].mxu0
  %10713 = vmatprep.mubr.bf16.mxu0 0
  %10714 = vmatmul.mubr.bf16.gmra.mrb[0].mxu0 %v10477
  %v10715 = vpop.f32.mrb[0].mxu0
  %v10716 = vadd.f32 0.0, %v10715
  %v10717 = vpop.f32.mrb[0].mxu0
  %v10718 = vpop.f32.mrb[0].mxu0
  %v10719 = vadd.f32 0.0, %v10718
  %v10720 = vpop.f32.mrb[0].mxu0
  %10721 = vmatprep.mubr.bf16.mxu0 0
  %10722 = vmatmul.mubr.bf16.gmra.mrb[0].mxu0 %v10480
  %v10723 = vpop.f32.mrb[0].mxu0
  %v10724 = vadd.f32 0.0, %v10723
  %v10725 = vpop.f32.mrb[0].mxu0
  %v10726 = vpop.f32.mrb[0].mxu0
  %v10727 = vadd.f32 0.0, %v10726
  %v10728 = vpop.f32.mrb[0].mxu0
  %10729 = vmatprep.mubr.bf16.mxu0 0
  %10730 = vmatmul.mubr.bf16.gmra.mrb[0].mxu0 %v10483
  %v10731 = vpop.f32.mrb[0].mxu0
  %v10732 = vadd.f32 0.0, %v10731
  %v10733 = vpop.f32.mrb[0].mxu0
  %v10734 = vpop.f32.mrb[0].mxu0
  %v10735 = vadd.f32 0.0, %v10734
  %v10736 = vpop.f32.mrb[0].mxu0
  %10737 = vmatprep.mubr.bf16.mxu0 0
  %10738 = vmatmul.mubr.bf16.gmra.mrb[0].mxu0 %v10486
  %v10739 = vpop.f32.mrb[0].mxu0
  %v10740 = vadd.f32 0.0, %v10739
  %v10741 = vpop.f32.mrb[0].mxu0
  %v10742 = vpop.f32.mrb[0].mxu0
  %v10743 = vadd.f32 0.0, %v10742
  %v10744 = vpop.f32.mrb[0].mxu0
  %10745 = vmatprep.mubr.bf16.mxu0 0
  %10746 = vmatmul.mubr.bf16.gmra.mrb[0].mxu0 %v10489
  %v10747 = vpop.f32.mrb[0].mxu0
  %v10748 = vadd.f32 0.0, %v10747
  %v10749 = vpop.f32.mrb[0].mxu0
  %v10750 = vpop.f32.mrb[0].mxu0
  %v10751 = vadd.f32 0.0, %v10750
  %v10752 = vpop.f32.mrb[0].mxu0
  %10753 = vmatprep.mubr.bf16.mxu0 0
  %10754 = vmatmul.mubr.bf16.gmra.mrb[0].mxu0 %v10492
  %v10755 = vpop.f32.mrb[0].mxu0
  %v10756 = vadd.f32 0.0, %v10755
  %v10757 = vpop.f32.mrb[0].mxu0
  %v10758 = vpop.f32.mrb[0].mxu0
  %v10759 = vadd.f32 0.0, %v10758
  %v10760 = vpop.f32.mrb[0].mxu0
  %10761 = vmatprep.mubr.bf16.mxu0 0
  %10762 = vmatmul.mubr.bf16.gmra.mrb[0].mxu0 %v10495
  %v10763 = vpop.f32.mrb[0].mxu0
  %v10764 = vadd.f32 0.0, %v10763
  %v10765 = vpop.f32.mrb[0].mxu0
  %v10766 = vpop.f32.mrb[0].mxu0
  %v10767 = vadd.f32 0.0, %v10766
  %v10768 = vpop.f32.mrb[0].mxu0
  %10769 = vmatprep.mubr.bf16.mxu0 0
  %10770 = vmatmul.mubr.bf16.gmra.mrb[0].mxu0 %v10498
  %v10771 = vpop.f32.mrb[0].mxu0
  %v10772 = vadd.f32 0.0, %v10771
  %v10773 = vpop.f32.mrb[0].mxu0
  %v10774 = vpop.f32.mrb[0].mxu0
  %v10775 = vadd.f32 0.0, %v10774
  %v10776 = vpop.f32.mrb[0].mxu0
  %10777 = vmatprep.mubr.bf16.mxu0 0
  %10778 = vmatmul.mubr.bf16.gmra.mrb[0].mxu0 %v10501
  %v10779 = vpop.f32.mrb[0].mxu0
  %v10780 = vadd.f32 0.0, %v10779
  %v10781 = vpop.f32.mrb[0].mxu0
  %v10782 = vpop.f32.mrb[0].mxu0
  %v10783 = vadd.f32 0.0, %v10782
  %v10784 = vpop.f32.mrb[0].mxu0
  %10785 = vmatprep.mubr.bf16.mxu0 0
  %10786 = vmatmul.mubr.bf16.gmra.mrb[0].mxu0 %v10504
  %v10787 = vpop.f32.mrb[0].mxu0
  %v10788 = vadd.f32 0.0, %v10787
  %v10789 = vpop.f32.mrb[0].mxu0
  %v10790 = vpop.f32.mrb[0].mxu0
  %v10791 = vadd.f32 0.0, %v10790
  %v10792 = vpop.f32.mrb[0].mxu0
  %10793 = vmatprep.mubr.bf16.mxu0 0
  %10794 = vmatmul.mubr.bf16.gmra.mrb[0].mxu0 %v10507
  %v10795 = vpop.f32.mrb[0].mxu0
  %v10796 = vadd.f32 0.0, %v10795
  %v10797 = vpop.f32.mrb[0].mxu0
  %v10798 = vpop.f32.mrb[0].mxu0
  %v10799 = vadd.f32 0.0, %v10798
  %v10800 = vpop.f32.mrb[0].mxu0
  %10801 = vdwg.mxu0
  %v10802 = vadd.f32 %v10548, %v10551
  %v10803 = vadd.f32 %v10802, %v10556
  %v10804 = vadd.f32 %v10803, %v10559
  %v10805 = vadd.f32 %v10804, %v10564
  %v10806 = vadd.f32 %v10805, %v10567
  %v10807 = vadd.f32 %v10806, %v10572
  %v10808 = vadd.f32 %v10807, %v10575
  %v10809 = vadd.f32 %v10808, %v10580
  %v10810 = vadd.f32 %v10809, %v10583
  %v10811 = vadd.f32 %v10810, %v10588
  %v10812 = vadd.f32 %v10811, %v10591
  %v10813 = vadd.f32 %v10812, %v10596
  %v10814 = vadd.f32 %v10813, %v10599
  %v10815 = vadd.f32 %v10814, %v10604
  %v10816 = vadd.f32 %v10815, %v10607
  %v10817 = vadd.f32 %v10816, %v10612
  %v10818 = vadd.f32 %v10817, %v10615
  %v10819 = vadd.f32 %v10818, %v10620
  %v10820 = vadd.f32 %v10819, %v10623
  %v10821 = vadd.f32 %v10820, %v10628
  %v10822 = vadd.f32 %v10821, %v10631
  %v10823 = vadd.f32 %v10822, %v10636
  %v10824 = vadd.f32 %v10823, %v10639
  %v10825 = vadd.f32 %v10824, %v10644
  %v10826 = vadd.f32 %v10825, %v10647
  %v10827 = vadd.f32 %v10826, %v10652
  %v10828 = vadd.f32 %v10827, %v10655
  %v10829 = vadd.f32 %v10828, %v10660
  %v10830 = vadd.f32 %v10829, %v10663
  %v10831 = vadd.f32 %v10830, %v10668
  %v10832 = vadd.f32 %v10831, %v10671
  %v10833 = vadd.f32 %v10832, %v10676
  %v10834 = vadd.f32 %v10833, %v10679
  %v10835 = vadd.f32 %v10834, %v10684
  %v10836 = vadd.f32 %v10835, %v10687
  %v10837 = vadd.f32 %v10836, %v10692
  %v10838 = vadd.f32 %v10837, %v10695
  %v10839 = vadd.f32 %v10838, %v10700
  %v10840 = vadd.f32 %v10839, %v10703
  %v10841 = vadd.f32 %v10840, %v10708
  %v10842 = vadd.f32 %v10841, %v10711
  %v10843 = vadd.f32 %v10842, %v10716
  %v10844 = vadd.f32 %v10843, %v10719
  %v10845 = vadd.f32 %v10844, %v10724
  %v10846 = vadd.f32 %v10845, %v10727
  %v10847 = vadd.f32 %v10846, %v10732
  %v10848 = vadd.f32 %v10847, %v10735
  %v10849 = vadd.f32 %v10848, %v10740
  %v10850 = vadd.f32 %v10849, %v10743
  %v10851 = vadd.f32 %v10850, %v10748
  %v10852 = vadd.f32 %v10851, %v10751
  %v10853 = vadd.f32 %v10852, %v10756
  %v10854 = vadd.f32 %v10853, %v10759
  %v10855 = vadd.f32 %v10854, %v10764
  %v10856 = vadd.f32 %v10855, %v10767
  %v10857 = vadd.f32 %v10856, %v10772
  %v10858 = vadd.f32 %v10857, %v10775
  %v10859 = vadd.f32 %v10858, %v10780
  %v10860 = vadd.f32 %v10859, %v10783
  %v10861 = vadd.f32 %v10860, %v10788
  %v10862 = vadd.f32 %v10861, %v10791
  %v10863 = vadd.f32 %v10862, %v10796
  %v10864 = vadd.f32 %v10863, %v10799
  %v10865 = vrot.slane %v10864, 4
  %v10866 = vadd.f32 %v10864, %v10865
  %v10867 = vrot.slane %v10866, 2
  %v10868 = vadd.f32 %v10866, %v10867
  %v10869 = vrot.slane %v10868, 1
  %v10870 = vadd.f32 %v10868, %v10869
  %v10871 = vmul.f32 %v10870, 0.001953125
  %v10872 = vsub.f32 %v10548, %v10871
  %v10873 = vsub.f32 %v10551, %v10871
  %v10874 = vsub.f32 %v10556, %v10871
  %v10875 = vsub.f32 %v10559, %v10871
  %v10876 = vsub.f32 %v10564, %v10871
  %v10877 = vsub.f32 %v10567, %v10871
  %v10878 = vsub.f32 %v10572, %v10871
  %v10879 = vsub.f32 %v10575, %v10871
  %v10880 = vsub.f32 %v10580, %v10871
  %v10881 = vsub.f32 %v10583, %v10871
  %v10882 = vsub.f32 %v10588, %v10871
  %v10883 = vsub.f32 %v10591, %v10871
  %v10884 = vsub.f32 %v10596, %v10871
  %v10885 = vsub.f32 %v10599, %v10871
  %v10886 = vsub.f32 %v10604, %v10871
  %v10887 = vsub.f32 %v10607, %v10871
  %v10888 = vsub.f32 %v10612, %v10871
  %v10889 = vsub.f32 %v10615, %v10871
  %v10890 = vsub.f32 %v10620, %v10871
  %v10891 = vsub.f32 %v10623, %v10871
  %v10892 = vsub.f32 %v10628, %v10871
  %v10893 = vsub.f32 %v10631, %v10871
  %v10894 = vsub.f32 %v10636, %v10871
  %v10895 = vsub.f32 %v10639, %v10871
  %v10896 = vsub.f32 %v10644, %v10871
  %v10897 = vsub.f32 %v10647, %v10871
  %v10898 = vsub.f32 %v10652, %v10871
  %v10899 = vsub.f32 %v10655, %v10871
  %v10900 = vsub.f32 %v10660, %v10871
  %v10901 = vsub.f32 %v10663, %v10871
  %v10902 = vsub.f32 %v10668, %v10871
  %v10903 = vsub.f32 %v10671, %v10871
  %v10904 = vsub.f32 %v10676, %v10871
  %v10905 = vsub.f32 %v10679, %v10871
  %v10906 = vsub.f32 %v10684, %v10871
  %v10907 = vsub.f32 %v10687, %v10871
  %v10908 = vsub.f32 %v10692, %v10871
  %v10909 = vsub.f32 %v10695, %v10871
  %v10910 = vsub.f32 %v10700, %v10871
  %v10911 = vsub.f32 %v10703, %v10871
  %v10912 = vsub.f32 %v10708, %v10871
  %v10913 = vsub.f32 %v10711, %v10871
  %v10914 = vsub.f32 %v10716, %v10871
  %v10915 = vsub.f32 %v10719, %v10871
  %v10916 = vsub.f32 %v10724, %v10871
  %v10917 = vsub.f32 %v10727, %v10871
  %v10918 = vsub.f32 %v10732, %v10871
  %v10919 = vsub.f32 %v10735, %v10871
  %v10920 = vsub.f32 %v10740, %v10871
  %v10921 = vsub.f32 %v10743, %v10871
  %v10922 = vsub.f32 %v10748, %v10871
  %v10923 = vsub.f32 %v10751, %v10871
  %v10924 = vsub.f32 %v10756, %v10871
  %v10925 = vsub.f32 %v10759, %v10871
  %v10926 = vsub.f32 %v10764, %v10871
  %v10927 = vsub.f32 %v10767, %v10871
  %v10928 = vsub.f32 %v10772, %v10871
  %v10929 = vsub.f32 %v10775, %v10871
  %v10930 = vsub.f32 %v10780, %v10871
  %v10931 = vsub.f32 %v10783, %v10871
  %v10932 = vsub.f32 %v10788, %v10871
  %v10933 = vsub.f32 %v10791, %v10871
  %v10934 = vsub.f32 %v10796, %v10871
  %v10935 = vsub.f32 %v10799, %v10871
  %v10936 = vmul.f32 %v10872, %v10872
  %v10937 = vmul.f32 %v10873, %v10873
  %v10938 = vmul.f32 %v10874, %v10874
  %v10939 = vmul.f32 %v10875, %v10875
  %v10940 = vmul.f32 %v10876, %v10876
  %v10941 = vmul.f32 %v10877, %v10877
  %v10942 = vmul.f32 %v10878, %v10878
  %v10943 = vmul.f32 %v10879, %v10879
  %v10944 = vmul.f32 %v10880, %v10880
  %v10945 = vmul.f32 %v10881, %v10881
  %v10946 = vmul.f32 %v10882, %v10882
  %v10947 = vmul.f32 %v10883, %v10883
  %v10948 = vmul.f32 %v10884, %v10884
  %v10949 = vmul.f32 %v10885, %v10885
  %v10950 = vmul.f32 %v10886, %v10886
  %v10951 = vmul.f32 %v10887, %v10887
  %v10952 = vmul.f32 %v10888, %v10888
  %v10953 = vmul.f32 %v10889, %v10889
  %v10954 = vmul.f32 %v10890, %v10890
  %v10955 = vmul.f32 %v10891, %v10891
  %v10956 = vmul.f32 %v10892, %v10892
  %v10957 = vmul.f32 %v10893, %v10893
  %v10958 = vmul.f32 %v10894, %v10894
  %v10959 = vmul.f32 %v10895, %v10895
  %v10960 = vmul.f32 %v10896, %v10896
  %v10961 = vmul.f32 %v10897, %v10897
  %v10962 = vmul.f32 %v10898, %v10898
  %v10963 = vmul.f32 %v10899, %v10899
  %v10964 = vmul.f32 %v10900, %v10900
  %v10965 = vmul.f32 %v10901, %v10901
  %v10966 = vmul.f32 %v10902, %v10902
  %v10967 = vmul.f32 %v10903, %v10903
  %v10968 = vmul.f32 %v10904, %v10904
  %v10969 = vmul.f32 %v10905, %v10905
  %v10970 = vmul.f32 %v10906, %v10906
  %v10971 = vmul.f32 %v10907, %v10907
  %v10972 = vmul.f32 %v10908, %v10908
  %v10973 = vmul.f32 %v10909, %v10909
  %v10974 = vmul.f32 %v10910, %v10910
  %v10975 = vmul.f32 %v10911, %v10911
  %v10976 = vmul.f32 %v10912, %v10912
  %v10977 = vmul.f32 %v10913, %v10913
  %v10978 = vmul.f32 %v10914, %v10914
  %v10979 = vmul.f32 %v10915, %v10915
  %v10980 = vmul.f32 %v10916, %v10916
  %v10981 = vmul.f32 %v10917, %v10917
  %v10982 = vmul.f32 %v10918, %v10918
  %v10983 = vmul.f32 %v10919, %v10919
  %v10984 = vmul.f32 %v10920, %v10920
  %v10985 = vmul.f32 %v10921, %v10921
  %v10986 = vmul.f32 %v10922, %v10922
  %v10987 = vmul.f32 %v10923, %v10923
  %v10988 = vmul.f32 %v10924, %v10924
  %v10989 = vmul.f32 %v10925, %v10925
  %v10990 = vmul.f32 %v10926, %v10926
  %v10991 = vmul.f32 %v10927, %v10927
  %v10992 = vmul.f32 %v10928, %v10928
  %v10993 = vmul.f32 %v10929, %v10929
  %v10994 = vmul.f32 %v10930, %v10930
  %v10995 = vmul.f32 %v10931, %v10931
  %v10996 = vmul.f32 %v10932, %v10932
  %v10997 = vmul.f32 %v10933, %v10933
  %v10998 = vmul.f32 %v10934, %v10934
  %v10999 = vmul.f32 %v10935, %v10935
  %v11000 = vadd.f32 %v10936, %v10937
  %v11001 = vadd.f32 %v11000, %v10938
  %v11002 = vadd.f32 %v11001, %v10939
  %v11003 = vadd.f32 %v11002, %v10940
  %v11004 = vadd.f32 %v11003, %v10941
  %v11005 = vadd.f32 %v11004, %v10942
  %v11006 = vadd.f32 %v11005, %v10943
  %v11007 = vadd.f32 %v11006, %v10944
  %v11008 = vadd.f32 %v11007, %v10945
  %v11009 = vadd.f32 %v11008, %v10946
  %v11010 = vadd.f32 %v11009, %v10947
  %v11011 = vadd.f32 %v11010, %v10948
  %v11012 = vadd.f32 %v11011, %v10949
  %v11013 = vadd.f32 %v11012, %v10950
  %v11014 = vadd.f32 %v11013, %v10951
  %v11015 = vadd.f32 %v11014, %v10952
  %v11016 = vadd.f32 %v11015, %v10953
  %v11017 = vadd.f32 %v11016, %v10954
  %v11018 = vadd.f32 %v11017, %v10955
  %v11019 = vadd.f32 %v11018, %v10956
  %v11020 = vadd.f32 %v11019, %v10957
  %v11021 = vadd.f32 %v11020, %v10958
  %v11022 = vadd.f32 %v11021, %v10959
  %v11023 = vadd.f32 %v11022, %v10960
  %v11024 = vadd.f32 %v11023, %v10961
  %v11025 = vadd.f32 %v11024, %v10962
  %v11026 = vadd.f32 %v11025, %v10963
  %v11027 = vadd.f32 %v11026, %v10964
  %v11028 = vadd.f32 %v11027, %v10965
  %v11029 = vadd.f32 %v11028, %v10966
  %v11030 = vadd.f32 %v11029, %v10967
  %v11031 = vadd.f32 %v11030, %v10968
  %v11032 = vadd.f32 %v11031, %v10969
  %v11033 = vadd.f32 %v11032, %v10970
  %v11034 = vadd.f32 %v11033, %v10971
  %v11035 = vadd.f32 %v11034, %v10972
  %v11036 = vadd.f32 %v11035, %v10973
  %v11037 = vadd.f32 %v11036, %v10974
  %v11038 = vadd.f32 %v11037, %v10975
  %v11039 = vadd.f32 %v11038, %v10976
  %v11040 = vadd.f32 %v11039, %v10977
  %v11041 = vadd.f32 %v11040, %v10978
  %v11042 = vadd.f32 %v11041, %v10979
  %v11043 = vadd.f32 %v11042, %v10980
  %v11044 = vadd.f32 %v11043, %v10981
  %v11045 = vadd.f32 %v11044, %v10982
  %v11046 = vadd.f32 %v11045, %v10983
  %v11047 = vadd.f32 %v11046, %v10984
  %v11048 = vadd.f32 %v11047, %v10985
  %v11049 = vadd.f32 %v11048, %v10986
  %v11050 = vadd.f32 %v11049, %v10987
  %v11051 = vadd.f32 %v11050, %v10988
  %v11052 = vadd.f32 %v11051, %v10989
  %v11053 = vadd.f32 %v11052, %v10990
  %v11054 = vadd.f32 %v11053, %v10991
  %v11055 = vadd.f32 %v11054, %v10992
  %v11056 = vadd.f32 %v11055, %v10993
  %v11057 = vadd.f32 %v11056, %v10994
  %v11058 = vadd.f32 %v11057, %v10995
  %v11059 = vadd.f32 %v11058, %v10996
  %v11060 = vadd.f32 %v11059, %v10997
  %v11061 = vadd.f32 %v11060, %v10998
  %v11062 = vadd.f32 %v11061, %v10999
  %v11063 = vrot.slane %v11062, 4
  %v11064 = vadd.f32 %v11062, %v11063
  %v11065 = vrot.slane %v11064, 2
  %v11066 = vadd.f32 %v11064, %v11065
  %v11067 = vrot.slane %v11066, 1
  %v11068 = vadd.f32 %v11066, %v11067
  %v11069 = vmul.f32 %v11068, 0.001953125
  %v11070 = vadd.f32 %v11069, 1e-05
  %v11071 = vrsqrt.pop %v11070
  %v11072 = vmul.f32 %v7833, %v11071
  %v11074 = vlaneseq
  %v11075 = vshrl.u32 %v11074, 7
  %v11076 = vsub.s32 0, %v11075
  %v11077 = vrot.slane %v11072, %v11076
  %v11079 = vmul.f32 %v10872, %v11077
  %v11080 = vmul.f32 %v10873, %v11077
  %v11081 = vmul.f32 %v10874, %v11077
  %v11082 = vmul.f32 %v10875, %v11077
  %v11083 = vmul.f32 %v10876, %v11077
  %v11084 = vmul.f32 %v10877, %v11077
  %v11085 = vmul.f32 %v10878, %v11077
  %v11086 = vmul.f32 %v10879, %v11077
  %v11087 = vmul.f32 %v10880, %v11077
  %v11088 = vmul.f32 %v10881, %v11077
  %v11089 = vmul.f32 %v10882, %v11077
  %v11090 = vmul.f32 %v10883, %v11077
  %v11091 = vmul.f32 %v10884, %v11077
  %v11092 = vmul.f32 %v10885, %v11077
  %v11093 = vmul.f32 %v10886, %v11077
  %v11094 = vmul.f32 %v10887, %v11077
  %v11095 = vmul.f32 %v10888, %v11077
  %v11096 = vmul.f32 %v10889, %v11077
  %v11097 = vmul.f32 %v10890, %v11077
  %v11098 = vmul.f32 %v10891, %v11077
  %v11099 = vmul.f32 %v10892, %v11077
  %v11100 = vmul.f32 %v10893, %v11077
  %v11101 = vmul.f32 %v10894, %v11077
  %v11102 = vmul.f32 %v10895, %v11077
  %v11103 = vmul.f32 %v10896, %v11077
  %v11104 = vmul.f32 %v10897, %v11077
  %v11105 = vmul.f32 %v10898, %v11077
  %v11106 = vmul.f32 %v10899, %v11077
  %v11107 = vmul.f32 %v10900, %v11077
  %v11108 = vmul.f32 %v10901, %v11077
  %v11109 = vmul.f32 %v10902, %v11077
  %v11110 = vmul.f32 %v10903, %v11077
  %v11111 = vmul.f32 %v10904, %v11077
  %v11112 = vmul.f32 %v10905, %v11077
  %v11113 = vmul.f32 %v10906, %v11077
  %v11114 = vmul.f32 %v10907, %v11077
  %v11115 = vmul.f32 %v10908, %v11077
  %v11116 = vmul.f32 %v10909, %v11077
  %v11117 = vmul.f32 %v10910, %v11077
  %v11118 = vmul.f32 %v10911, %v11077
  %v11119 = vmul.f32 %v10912, %v11077
  %v11120 = vmul.f32 %v10913, %v11077
  %v11121 = vmul.f32 %v10914, %v11077
  %v11122 = vmul.f32 %v10915, %v11077
  %v11123 = vmul.f32 %v10916, %v11077
  %v11124 = vmul.f32 %v10917, %v11077
  %v11125 = vmul.f32 %v10918, %v11077
  %v11126 = vmul.f32 %v10919, %v11077
  %v11127 = vmul.f32 %v10920, %v11077
  %v11128 = vmul.f32 %v10921, %v11077
  %v11129 = vmul.f32 %v10922, %v11077
  %v11130 = vmul.f32 %v10923, %v11077
  %v11131 = vmul.f32 %v10924, %v11077
  %v11132 = vmul.f32 %v10925, %v11077
  %v11133 = vmul.f32 %v10926, %v11077
  %v11134 = vmul.f32 %v10927, %v11077
  %v11135 = vmul.f32 %v10928, %v11077
  %v11136 = vmul.f32 %v10929, %v11077
  %v11137 = vmul.f32 %v10930, %v11077
  %v11138 = vmul.f32 %v10931, %v11077
  %v11139 = vmul.f32 %v10932, %v11077
  %v11140 = vmul.f32 %v10933, %v11077
  %v11141 = vmul.f32 %v10934, %v11077
  %v11142 = vmul.f32 %v10935, %v11077
  %v11144 = vlaneseq
  %v11145 = vshrl.u32 %v11144, 7
  %v11146 = vsub.s32 0, %v11145
  %v11147 = vrot.slane %v7834, %v11146
  %v11149 = vadd.f32 %v11079, %v11147
  %v11150 = vadd.f32 %v11080, %v11147
  %v11151 = vadd.f32 %v11081, %v11147
  %v11152 = vadd.f32 %v11082, %v11147
  %v11153 = vadd.f32 %v11083, %v11147
  %v11154 = vadd.f32 %v11084, %v11147
  %v11155 = vadd.f32 %v11085, %v11147
  %v11156 = vadd.f32 %v11086, %v11147
  %v11157 = vadd.f32 %v11087, %v11147
  %v11158 = vadd.f32 %v11088, %v11147
  %v11159 = vadd.f32 %v11089, %v11147
  %v11160 = vadd.f32 %v11090, %v11147
  %v11161 = vadd.f32 %v11091, %v11147
  %v11162 = vadd.f32 %v11092, %v11147
  %v11163 = vadd.f32 %v11093, %v11147
  %v11164 = vadd.f32 %v11094, %v11147
  %v11165 = vadd.f32 %v11095, %v11147
  %v11166 = vadd.f32 %v11096, %v11147
  %v11167 = vadd.f32 %v11097, %v11147
  %v11168 = vadd.f32 %v11098, %v11147
  %v11169 = vadd.f32 %v11099, %v11147
  %v11170 = vadd.f32 %v11100, %v11147
  %v11171 = vadd.f32 %v11101, %v11147
  %v11172 = vadd.f32 %v11102, %v11147
  %v11173 = vadd.f32 %v11103, %v11147
  %v11174 = vadd.f32 %v11104, %v11147
  %v11175 = vadd.f32 %v11105, %v11147
  %v11176 = vadd.f32 %v11106, %v11147
  %v11177 = vadd.f32 %v11107, %v11147
  %v11178 = vadd.f32 %v11108, %v11147
  %v11179 = vadd.f32 %v11109, %v11147
  %v11180 = vadd.f32 %v11110, %v11147
  %v11181 = vadd.f32 %v11111, %v11147
  %v11182 = vadd.f32 %v11112, %v11147
  %v11183 = vadd.f32 %v11113, %v11147
  %v11184 = vadd.f32 %v11114, %v11147
  %v11185 = vadd.f32 %v11115, %v11147
  %v11186 = vadd.f32 %v11116, %v11147
  %v11187 = vadd.f32 %v11117, %v11147
  %v11188 = vadd.f32 %v11118, %v11147
  %v11189 = vadd.f32 %v11119, %v11147
  %v11190 = vadd.f32 %v11120, %v11147
  %v11191 = vadd.f32 %v11121, %v11147
  %v11192 = vadd.f32 %v11122, %v11147
  %v11193 = vadd.f32 %v11123, %v11147
  %v11194 = vadd.f32 %v11124, %v11147
  %v11195 = vadd.f32 %v11125, %v11147
  %v11196 = vadd.f32 %v11126, %v11147
  %v11197 = vadd.f32 %v11127, %v11147
  %v11198 = vadd.f32 %v11128, %v11147
  %v11199 = vadd.f32 %v11129, %v11147
  %v11200 = vadd.f32 %v11130, %v11147
  %v11201 = vadd.f32 %v11131, %v11147
  %v11202 = vadd.f32 %v11132, %v11147
  %v11203 = vadd.f32 %v11133, %v11147
  %v11204 = vadd.f32 %v11134, %v11147
  %v11205 = vadd.f32 %v11135, %v11147
  %v11206 = vadd.f32 %v11136, %v11147
  %v11207 = vadd.f32 %v11137, %v11147
  %v11208 = vadd.f32 %v11138, %v11147
  %v11209 = vadd.f32 %v11139, %v11147
  %v11210 = vadd.f32 %v11140, %v11147
  %v11211 = vadd.f32 %v11141, %v11147
  %v11212 = vadd.f32 %v11142, %v11147
  %v11213 = vmax.f32 %v11149, 0.0
  %v11214 = vmax.f32 %v11150, 0.0
  %v11215 = vmax.f32 %v11151, 0.0
  %v11216 = vmax.f32 %v11152, 0.0
  %v11217 = vmax.f32 %v11153, 0.0
  %v11218 = vmax.f32 %v11154, 0.0
  %v11219 = vmax.f32 %v11155, 0.0
  %v11220 = vmax.f32 %v11156, 0.0
  %v11221 = vmax.f32 %v11157, 0.0
  %v11222 = vmax.f32 %v11158, 0.0
  %v11223 = vmax.f32 %v11159, 0.0
  %v11224 = vmax.f32 %v11160, 0.0
  %v11225 = vmax.f32 %v11161, 0.0
  %v11226 = vmax.f32 %v11162, 0.0
  %v11227 = vmax.f32 %v11163, 0.0
  %v11228 = vmax.f32 %v11164, 0.0
  %v11229 = vmax.f32 %v11165, 0.0
  %v11230 = vmax.f32 %v11166, 0.0
  %v11231 = vmax.f32 %v11167, 0.0
  %v11232 = vmax.f32 %v11168, 0.0
  %v11233 = vmax.f32 %v11169, 0.0
  %v11234 = vmax.f32 %v11170, 0.0
  %v11235 = vmax.f32 %v11171, 0.0
  %v11236 = vmax.f32 %v11172, 0.0
  %v11237 = vmax.f32 %v11173, 0.0
  %v11238 = vmax.f32 %v11174, 0.0
  %v11239 = vmax.f32 %v11175, 0.0
  %v11240 = vmax.f32 %v11176, 0.0
  %v11241 = vmax.f32 %v11177, 0.0
  %v11242 = vmax.f32 %v11178, 0.0
  %v11243 = vmax.f32 %v11179, 0.0
  %v11244 = vmax.f32 %v11180, 0.0
  %v11245 = vmax.f32 %v11181, 0.0
  %v11246 = vmax.f32 %v11182, 0.0
  %v11247 = vmax.f32 %v11183, 0.0
  %v11248 = vmax.f32 %v11184, 0.0
  %v11249 = vmax.f32 %v11185, 0.0
  %v11250 = vmax.f32 %v11186, 0.0
  %v11251 = vmax.f32 %v11187, 0.0
  %v11252 = vmax.f32 %v11188, 0.0
  %v11253 = vmax.f32 %v11189, 0.0
  %v11254 = vmax.f32 %v11190, 0.0
  %v11255 = vmax.f32 %v11191, 0.0
  %v11256 = vmax.f32 %v11192, 0.0
  %v11257 = vmax.f32 %v11193, 0.0
  %v11258 = vmax.f32 %v11194, 0.0
  %v11259 = vmax.f32 %v11195, 0.0
  %v11260 = vmax.f32 %v11196, 0.0
  %v11261 = vmax.f32 %v11197, 0.0
  %v11262 = vmax.f32 %v11198, 0.0
  %v11263 = vmax.f32 %v11199, 0.0
  %v11264 = vmax.f32 %v11200, 0.0
  %v11265 = vmax.f32 %v11201, 0.0
  %v11266 = vmax.f32 %v11202, 0.0
  %v11267 = vmax.f32 %v11203, 0.0
  %v11268 = vmax.f32 %v11204, 0.0
  %v11269 = vmax.f32 %v11205, 0.0
  %v11270 = vmax.f32 %v11206, 0.0
  %v11271 = vmax.f32 %v11207, 0.0
  %v11272 = vmax.f32 %v11208, 0.0
  %v11273 = vmax.f32 %v11209, 0.0
  %v11274 = vmax.f32 %v11210, 0.0
  %v11275 = vmax.f32 %v11211, 0.0
  %v11276 = vmax.f32 %v11212, 0.0
  %11277 = vst.msk [vmem:[%s11] sm:$0xff] %vm127, %v11213
  %11278 = vst.msk [vmem:[%s11 + $0x8] sm:$0xff] %vm127, %v11214
  %11279 = vst.msk [vmem:[%s11 + $0x10] sm:$0xff] %vm127, %v11215
  %11280 = vst.msk [vmem:[%s11 + $0x18] sm:$0xff] %vm127, %v11216
  %11281 = vst.msk [vmem:[%s11 + $0x20] sm:$0xff] %vm127, %v11217
  %11282 = vst.msk [vmem:[%s11 + $0x28] sm:$0xff] %vm127, %v11218
  %11283 = vst.msk [vmem:[%s11 + $0x30] sm:$0xff] %vm127, %v11219
  %11284 = vst.msk [vmem:[%s11 + $0x38] sm:$0xff] %vm127, %v11220
  %11285 = vst.msk [vmem:[%s11 + $0x40] sm:$0xff] %vm127, %v11221
  %11286 = vst.msk [vmem:[%s11 + $0x48] sm:$0xff] %vm127, %v11222
  %11287 = vst.msk [vmem:[%s11 + $0x50] sm:$0xff] %vm127, %v11223
  %11288 = vst.msk [vmem:[%s11 + $0x58] sm:$0xff] %vm127, %v11224
  %11289 = vst.msk [vmem:[%s11 + $0x60] sm:$0xff] %vm127, %v11225
  %11290 = vst.msk [vmem:[%s11 + $0x68] sm:$0xff] %vm127, %v11226
  %11291 = vst.msk [vmem:[%s11 + $0x70] sm:$0xff] %vm127, %v11227
  %11292 = vst.msk [vmem:[%s11 + $0x78] sm:$0xff] %vm127, %v11228
  %11293 = vst.msk [vmem:[%s11 + $0x80] sm:$0xff] %vm127, %v11229
  %11294 = vst.msk [vmem:[%s11 + $0x88] sm:$0xff] %vm127, %v11230
  %11295 = vst.msk [vmem:[%s11 + $0x90] sm:$0xff] %vm127, %v11231
  %11296 = vst.msk [vmem:[%s11 + $0x98] sm:$0xff] %vm127, %v11232
  %11297 = vst.msk [vmem:[%s11 + $0xa0] sm:$0xff] %vm127, %v11233
  %11298 = vst.msk [vmem:[%s11 + $0xa8] sm:$0xff] %vm127, %v11234
  %11299 = vst.msk [vmem:[%s11 + $0xb0] sm:$0xff] %vm127, %v11235
  %11300 = vst.msk [vmem:[%s11 + $0xb8] sm:$0xff] %vm127, %v11236
  %11301 = vst.msk [vmem:[%s11 + $0xc0] sm:$0xff] %vm127, %v11237
  %11302 = vst.msk [vmem:[%s11 + $0xc8] sm:$0xff] %vm127, %v11238
  %11303 = vst.msk [vmem:[%s11 + $0xd0] sm:$0xff] %vm127, %v11239
  %11304 = vst.msk [vmem:[%s11 + $0xd8] sm:$0xff] %vm127, %v11240
  %11305 = vst.msk [vmem:[%s11 + $0xe0] sm:$0xff] %vm127, %v11241
  %11306 = vst.msk [vmem:[%s11 + $0xe8] sm:$0xff] %vm127, %v11242
  %11307 = vst.msk [vmem:[%s11 + $0xf0] sm:$0xff] %vm127, %v11243
  %11308 = vst.msk [vmem:[%s11 + $0xf8] sm:$0xff] %vm127, %v11244
  %11309 = vst.msk [vmem:[%s11 + $0x100] sm:$0xff] %vm127, %v11245
  %11310 = vst.msk [vmem:[%s11 + $0x108] sm:$0xff] %vm127, %v11246
  %11311 = vst.msk [vmem:[%s11 + $0x110] sm:$0xff] %vm127, %v11247
  %11312 = vst.msk [vmem:[%s11 + $0x118] sm:$0xff] %vm127, %v11248
  %11313 = vst.msk [vmem:[%s11 + $0x120] sm:$0xff] %vm127, %v11249
  %11314 = vst.msk [vmem:[%s11 + $0x128] sm:$0xff] %vm127, %v11250
  %11315 = vst.msk [vmem:[%s11 + $0x130] sm:$0xff] %vm127, %v11251
  %11316 = vst.msk [vmem:[%s11 + $0x138] sm:$0xff] %vm127, %v11252
  %11317 = vst.msk [vmem:[%s11 + $0x140] sm:$0xff] %vm127, %v11253
  %11318 = vst.msk [vmem:[%s11 + $0x148] sm:$0xff] %vm127, %v11254
  %11319 = vst.msk [vmem:[%s11 + $0x150] sm:$0xff] %vm127, %v11255
  %11320 = vst.msk [vmem:[%s11 + $0x158] sm:$0xff] %vm127, %v11256
  %11321 = vst.msk [vmem:[%s11 + $0x160] sm:$0xff] %vm127, %v11257
  %11322 = vst.msk [vmem:[%s11 + $0x168] sm:$0xff] %vm127, %v11258
  %11323 = vst.msk [vmem:[%s11 + $0x170] sm:$0xff] %vm127, %v11259
  %11324 = vst.msk [vmem:[%s11 + $0x178] sm:$0xff] %vm127, %v11260
  %11325 = vst.msk [vmem:[%s11 + $0x180] sm:$0xff] %vm127, %v11261
  %11326 = vst.msk [vmem:[%s11 + $0x188] sm:$0xff] %vm127, %v11262
  %11327 = vst.msk [vmem:[%s11 + $0x190] sm:$0xff] %vm127, %v11263
  %11328 = vst.msk [vmem:[%s11 + $0x198] sm:$0xff] %vm127, %v11264
  %11329 = vst.msk [vmem:[%s11 + $0x1a0] sm:$0xff] %vm127, %v11265
  %11330 = vst.msk [vmem:[%s11 + $0x1a8] sm:$0xff] %vm127, %v11266
  %11331 = vst.msk [vmem:[%s11 + $0x1b0] sm:$0xff] %vm127, %v11267
  %11332 = vst.msk [vmem:[%s11 + $0x1b8] sm:$0xff] %vm127, %v11268
  %11333 = vst.msk [vmem:[%s11 + $0x1c0] sm:$0xff] %vm127, %v11269
  %11334 = vst.msk [vmem:[%s11 + $0x1c8] sm:$0xff] %vm127, %v11270
  %11335 = vst.msk [vmem:[%s11 + $0x1d0] sm:$0xff] %vm127, %v11271
  %11336 = vst.msk [vmem:[%s11 + $0x1d8] sm:$0xff] %vm127, %v11272
  %11337 = vst.msk [vmem:[%s11 + $0x1e0] sm:$0xff] %vm127, %v11273
  %11338 = vst.msk [vmem:[%s11 + $0x1e8] sm:$0xff] %vm127, %v11274
  %11339 = vst.msk [vmem:[%s11 + $0x1f0] sm:$0xff] %vm127, %v11275
  %11340 = vst.msk [vmem:[%s11 + $0x1f8] sm:$0xff] %vm127, %v11276
  // Predicated region
  $region46: #{upblock2d.1} parent=0 // pred_check
    _
  $region47: #{upblock2d.1} parent=0 // pred_check_branch
    %11342 = sbr.rel (0) target = $region49
  $region48: #{upblock2d.1} parent=0 // pred_region
    _
  $region49: #{upblock2d.1} parent=0 // pred_fallthru
    _
  // Predicated region
  $region50: #{upblock2d.1} parent=0 // pred_check
    _
  $region51: #{upblock2d.1} parent=0 // pred_check_branch
    %11344 = sbr.rel (0) target = $region53
  $region52: #{upblock2d.1} parent=0 // pred_region
    _
  $region53: #{upblock2d.1} parent=0 // pred_fallthru
    _

</llo_original>
